<compile_context>
chip_gen: v6e
topology: v6e:2x2x1
jax: 0.10.0
libtpu: 0.0.40
codegen_flags: <defaults>
</compile_context>

<pallas_src>
import math

import jax
import jax.numpy as jnp
from jax.experimental import pallas as pl
from jax.experimental.pallas import tpu as pltpu

# ----------------------------- config ---------------------------------------
EMBED_DIM = 32              # embed_dim
NUM_HEADS = 8               # heads inside each transformer block
HEAD_DIM = EMBED_DIM // NUM_HEADS
FF_DIM = 4 * EMBED_DIM      # FFN hidden dim
NUM_BLOCKS = 2              # num_transformer_block (small for the demo; default is 6)
NUM_CAT_COLS = 8
NUM_CONT_COLS = 4
COL_EMBED_ROWS = 100
MLP_HIDDEN = 64
NUM_CLASSES = 2
BATCH = 2
LN_EPS = 1e-5
ATTN_SCALE = 1.0 / math.sqrt(HEAD_DIM)


def _layernorm(x, gamma, beta, eps=LN_EPS):
    mu = jnp.mean(x, axis=-1, keepdims=True)
    var = jnp.mean((x - mu) ** 2, axis=-1, keepdims=True)
    return (x - mu) * jax.lax.rsqrt(var + eps) * gamma + beta


# ----------------------- fused forward kernel --------------------------------
def fused_tab_transformer_kernel(
        # VMEM inputs
        xcat_ref, embed_ref, xcont_ref,
        wqkv_ref, bqkv_ref, wo_ref, bo_ref, ln1g_ref, ln1b_ref,
        w1_ref, b1_ref, w2_ref, b2_ref, ln2g_ref, ln2b_ref,
        hlng_ref, hlnb_ref, w1cat_ref, w1cont_ref, hb1_ref, hw2_ref, hb2_ref,
        # output
        out_ref):
    BN = xcat_ref.shape[0]
    R, E = embed_ref.shape
    B = xcont_ref.shape[0]
    N = BN // B

    # ---- embedding gather: one-hot matmul on the MXU ------------------------
    idx = xcat_ref[...]                                            # (B*N, 1) i32
    onehot = (idx == jax.lax.broadcasted_iota(jnp.int32, (BN, R), 1)
              ).astype(jnp.float32)                                # (B*N, R)
    x = jnp.dot(onehot, embed_ref[...],
                preferred_element_type=jnp.float32)                # (B*N, E)

    # ---- transformer blocks (statically unrolled, VMEM/vreg resident) ------
    num_blocks = wqkv_ref.shape[0]
    for l in range(num_blocks):
        # fused QKV projection: one lane-dense (E, 3E) matmul
        qkv = (jnp.dot(x, wqkv_ref[l], preferred_element_type=jnp.float32)
               + bqkv_ref[l]).reshape(B, N, 3 * E)                 # (B, N, 3E)
        head_outs = []
        for h in range(NUM_HEADS):                                 # static unroll
            lo = h * HEAD_DIM
            qh = qkv[:, :, lo:lo + HEAD_DIM]                       # (B, N, d)
            kh = qkv[:, :, E + lo:E + lo + HEAD_DIM]
            vh = qkv[:, :, 2 * E + lo:2 * E + lo + HEAD_DIM]
            s = jnp.einsum('bnd,bmd->bnm', qh, kh,
                           preferred_element_type=jnp.float32) * ATTN_SCALE
            s = s - jnp.max(s, axis=-1, keepdims=True)
            p = jnp.exp(s)
            p = p * pl.reciprocal(jnp.sum(p, axis=-1, keepdims=True), approx=True)
            oh = jnp.einsum('bnm,bmd->bnd', p, vh,
                            preferred_element_type=jnp.float32)    # (B, N, d)
            head_outs.append(oh)
        attn = jnp.concatenate(head_outs, axis=-1).reshape(BN, E)  # (B*N, E)
        attn = jnp.dot(attn, wo_ref[l],
                       preferred_element_type=jnp.float32) + bo_ref[l]

        y = _layernorm(x + attn, ln1g_ref[l], ln1b_ref[l])         # post-norm

        hdn = jnp.dot(y, w1_ref[l], preferred_element_type=jnp.float32) + b1_ref[l]
        hdn = jnp.maximum(hdn, 0.0)
        ff = jnp.dot(hdn, w2_ref[l], preferred_element_type=jnp.float32) + b2_ref[l]

        x = _layernorm(y + ff, ln2g_ref[l], ln2b_ref[l])

    # ---- cont LayerNorm + MLP head ------------------------------------------
    xcont = xcont_ref[...]                                         # (B, C)
    xn = _layernorm(xcont, hlng_ref[...], hlnb_ref[...])
    # concat([flatten(x_cat), xn]) @ W1 == sum_n x[:, n, :] @ W1cat[n] + xn @ W1cont
    x3 = x.reshape(B, N, E)
    hid = jnp.dot(xn, w1cont_ref[...], preferred_element_type=jnp.float32)
    for n in range(N):                                             # static unroll
        hid = hid + jnp.dot(x3[:, n, :], w1cat_ref[n],
                            preferred_element_type=jnp.float32)
    hid = jnp.maximum(hid + hb1_ref[...], 0.0)                     # ReLU
    out_ref[...] = (jnp.dot(hid, hw2_ref[...],
                            preferred_element_type=jnp.float32) + hb2_ref[...])


# ----------------------------- wrapper ----------------------------------------
@jax.jit
def tab_transformer_forward(x_cat, x_cont, embed_table, block_w, head_w):
    B = x_cat.shape[0]
    # Lane-dense (B*N, 1) index column; reshape is free in the XLA wrapper.
    x_cat_flat = x_cat.reshape(B * NUM_CAT_COLS, 1).astype(jnp.int32)
    operands = [x_cat_flat, embed_table, x_cont] + list(block_w) + list(head_w)

    def full_spec(a):
        nd = a.ndim
        return pl.BlockSpec(a.shape, lambda i, nd=nd: (0,) * nd)

    return pl.pallas_call(
        fused_tab_transformer_kernel,
        grid=(1,),
        in_specs=[full_spec(a) for a in operands],
        out_specs=pl.BlockSpec((B, NUM_CLASSES), lambda i: (0, 0)),
        out_shape=jax.ShapeDtypeStruct((B, NUM_CLASSES), jnp.float32),
        compiler_params=pltpu.CompilerParams(dimension_semantics=("arbitrary",)),
    )(*operands)


# ----------------------------- parameters ------------------------------------
def init_params(key):
    keys = jax.random.split(key, 4 * NUM_BLOCKS + 8)
    ki = iter(keys)

    def dense(k, fan_in, fan_out):
        s = 1.0 / math.sqrt(fan_in)
        return jax.random.uniform(k, (fan_in, fan_out), jnp.float32, -s, s)

    embed_table = jax.random.normal(next(ki), (COL_EMBED_ROWS, EMBED_DIM),
                                    jnp.float32) * 0.02

    wqkv, wo, w1, w2 = [], [], [], []
    for _ in range(NUM_BLOCKS):
        wqkv.append(dense(next(ki), EMBED_DIM, 3 * EMBED_DIM))   # fused Wq|Wk|Wv
        wo.append(dense(next(ki), EMBED_DIM, EMBED_DIM))
        w1.append(dense(next(ki), EMBED_DIM, FF_DIM))
        w2.append(dense(next(ki), FF_DIM, EMBED_DIM))
    L = NUM_BLOCKS
    block_w = [
        jnp.stack(wqkv),                                   # (L, E, 3E)
        jnp.zeros((L, 1, 3 * EMBED_DIM), jnp.float32),     # bqkv
        jnp.stack(wo),                                     # (L, E, E)
        jnp.zeros((L, 1, EMBED_DIM), jnp.float32),         # bo
        jnp.ones((L, 1, EMBED_DIM), jnp.float32),          # LN1 gamma
        jnp.zeros((L, 1, EMBED_DIM), jnp.float32),         # LN1 beta
        jnp.stack(w1),                                     # (L, E, FF)
        jnp.zeros((L, 1, FF_DIM), jnp.float32),            # b1
        jnp.stack(w2),                                     # (L, FF, E)
        jnp.zeros((L, 1, EMBED_DIM), jnp.float32),         # b2
        jnp.ones((L, 1, EMBED_DIM), jnp.float32),          # LN2 gamma
        jnp.zeros((L, 1, EMBED_DIM), jnp.float32),         # LN2 beta
    ]

    d_in = NUM_CAT_COLS * EMBED_DIM + NUM_CONT_COLS
    w1_full = dense(next(ki), d_in, MLP_HIDDEN)
    head_w = [
        jnp.ones((1, NUM_CONT_COLS), jnp.float32),         # cont LayerNorm gamma
        jnp.zeros((1, NUM_CONT_COLS), jnp.float32),        # cont LayerNorm beta
        w1_full[:NUM_CAT_COLS * EMBED_DIM, :].reshape(
            NUM_CAT_COLS, EMBED_DIM, MLP_HIDDEN),          # W1 (cat part, per token)
        w1_full[NUM_CAT_COLS * EMBED_DIM:, :],             # W1 (cont part)
        jnp.zeros((1, MLP_HIDDEN), jnp.float32),           # b1
        dense(next(ki), MLP_HIDDEN, NUM_CLASSES),          # W2
        jnp.zeros((1, NUM_CLASSES), jnp.float32),          # b2
    ]
    return embed_table, block_w, head_w


if __name__ == "__main__":
    key = jax.random.PRNGKey(0)
    k_param, k_cat, k_cont = jax.random.split(key, 3)

    embed_table, block_w, head_w = init_params(k_param)

    x_cat = jax.random.randint(k_cat, (BATCH, NUM_CAT_COLS), 0, COL_EMBED_ROWS,
                               dtype=jnp.int32)
    x_cont = jax.random.normal(k_cont, (BATCH, NUM_CONT_COLS), jnp.float32)

    out = tab_transformer_forward(x_cat, x_cont, embed_table, block_w, head_w)
    jax.block_until_ready(out)
    assert out.shape == (BATCH, NUM_CLASSES)
    assert bool(jnp.all(jnp.isfinite(out)))
    print("KERNEL_OK")
</pallas_src>

<mosaic_0001>
module attributes {stable_mosaic.version = 11 : i64} {
  func.func @fused_tab_transformer_kernel(%arg0: i32, %arg1: memref<16x1xi32, #tpu.memory_space<vmem>>, %arg2: memref<100x32xf32, #tpu.memory_space<vmem>>, %arg3: memref<2x4xf32, #tpu.memory_space<vmem>>, %arg4: memref<2x32x96xf32, #tpu.memory_space<vmem>>, %arg5: memref<2x1x96xf32, #tpu.memory_space<vmem>>, %arg6: memref<2x32x32xf32, #tpu.memory_space<vmem>>, %arg7: memref<2x1x32xf32, #tpu.memory_space<vmem>>, %arg8: memref<2x1x32xf32, #tpu.memory_space<vmem>>, %arg9: memref<2x1x32xf32, #tpu.memory_space<vmem>>, %arg10: memref<2x32x128xf32, #tpu.memory_space<vmem>>, %arg11: memref<2x1x128xf32, #tpu.memory_space<vmem>>, %arg12: memref<2x128x32xf32, #tpu.memory_space<vmem>>, %arg13: memref<2x1x32xf32, #tpu.memory_space<vmem>>, %arg14: memref<2x1x32xf32, #tpu.memory_space<vmem>>, %arg15: memref<2x1x32xf32, #tpu.memory_space<vmem>>, %arg16: memref<1x4xf32, #tpu.memory_space<vmem>>, %arg17: memref<1x4xf32, #tpu.memory_space<vmem>>, %arg18: memref<8x32x64xf32, #tpu.memory_space<vmem>>, %arg19: memref<4x64xf32, #tpu.memory_space<vmem>>, %arg20: memref<1x64xf32, #tpu.memory_space<vmem>>, %arg21: memref<64x2xf32, #tpu.memory_space<vmem>>, %arg22: memref<1x2xf32, #tpu.memory_space<vmem>>, %arg23: memref<2x2xf32, #tpu.memory_space<vmem>>) attributes {dimension_semantics = [#tpu.dimension_semantics<arbitrary>], iteration_bounds = array<i64: 1>, scalar_prefetch = 0 : i64, scratch_operands = 0 : i64, tpu.core_type = #tpu.core_type<tc>, window_params = [{pipeline_mode = #tpu.pipeline_mode<synchronous>, transform_indices = @transform_0, window_bounds = array<i64: 16, 1>}, {pipeline_mode = #tpu.pipeline_mode<synchronous>, transform_indices = @transform_1, window_bounds = array<i64: 100, 32>}, {pipeline_mode = #tpu.pipeline_mode<synchronous>, transform_indices = @transform_2, window_bounds = array<i64: 2, 4>}, {pipeline_mode = #tpu.pipeline_mode<synchronous>, transform_indices = @transform_3, window_bounds = array<i64: 2, 32, 96>}, {pipeline_mode = #tpu.pipeline_mode<synchronous>, transform_indices = @transform_4, window_bounds = array<i64: 2, 1, 96>}, {pipeline_mode = #tpu.pipeline_mode<synchronous>, transform_indices = @transform_5, window_bounds = array<i64: 2, 32, 32>}, {pipeline_mode = #tpu.pipeline_mode<synchronous>, transform_indices = @transform_6, window_bounds = array<i64: 2, 1, 32>}, {pipeline_mode = #tpu.pipeline_mode<synchronous>, transform_indices = @transform_7, window_bounds = array<i64: 2, 1, 32>}, {pipeline_mode = #tpu.pipeline_mode<synchronous>, transform_indices = @transform_8, window_bounds = array<i64: 2, 1, 32>}, {pipeline_mode = #tpu.pipeline_mode<synchronous>, transform_indices = @transform_9, window_bounds = array<i64: 2, 32, 128>}, {pipeline_mode = #tpu.pipeline_mode<synchronous>, transform_indices = @transform_10, window_bounds = array<i64: 2, 1, 128>}, {pipeline_mode = #tpu.pipeline_mode<synchronous>, transform_indices = @transform_11, window_bounds = array<i64: 2, 128, 32>}, {pipeline_mode = #tpu.pipeline_mode<synchronous>, transform_indices = @transform_12, window_bounds = array<i64: 2, 1, 32>}, {pipeline_mode = #tpu.pipeline_mode<synchronous>, transform_indices = @transform_13, window_bounds = array<i64: 2, 1, 32>}, {pipeline_mode = #tpu.pipeline_mode<synchronous>, transform_indices = @transform_14, window_bounds = array<i64: 2, 1, 32>}, {pipeline_mode = #tpu.pipeline_mode<synchronous>, transform_indices = @transform_15, window_bounds = array<i64: 1, 4>}, {pipeline_mode = #tpu.pipeline_mode<synchronous>, transform_indices = @transform_16, window_bounds = array<i64: 1, 4>}, {pipeline_mode = #tpu.pipeline_mode<synchronous>, transform_indices = @transform_17, window_bounds = array<i64: 8, 32, 64>}, {pipeline_mode = #tpu.pipeline_mode<synchronous>, transform_indices = @transform_18, window_bounds = array<i64: 4, 64>}, {pipeline_mode = #tpu.pipeline_mode<synchronous>, transform_indices = @transform_19, window_bounds = array<i64: 1, 64>}, {pipeline_mode = #tpu.pipeline_mode<synchronous>, transform_indices = @transform_20, window_bounds = array<i64: 64, 2>}, {pipeline_mode = #tpu.pipeline_mode<synchronous>, transform_indices = @transform_21, window_bounds = array<i64: 1, 2>}, {pipeline_mode = #tpu.pipeline_mode<synchronous>, transform_indices = @transform_22, window_bounds = array<i64: 2, 2>}]} {
    %c0 = arith.constant 0 : index
    %c0_0 = arith.constant 0 : index
    %0 = vector.load %arg1[%c0, %c0_0] : memref<16x1xi32, #tpu.memory_space<vmem>>, vector<16x1xi32>
    %1 = tpu.iota {dimensions = array<i32: 1>} : vector<16x100xi32>
    %2 = vector.broadcast %0 : vector<16x1xi32> to vector<16x100xi32>
    %3 = arith.cmpi eq, %2, %1 : vector<16x100xi32>
    %4 = arith.extui %3 : vector<16x100xi1> to vector<16x100xi32>
    %5 = arith.sitofp %4 : vector<16x100xi32> to vector<16x100xf32>
    %c0_1 = arith.constant 0 : index
    %c0_2 = arith.constant 0 : index
    %6 = vector.load %arg2[%c0_1, %c0_2] : memref<100x32xf32, #tpu.memory_space<vmem>>, vector<100x32xf32>
    %cst = arith.constant dense<0.000000e+00> : vector<16x32xf32>
    %7 = tpu.matmul %5, %6, %cst {dimension_numbers = #tpu.dot_dimension_numbers<[1], [0], [0], [1], [0, 0, 1, 1], [], []>} : vector<16x100xf32>, vector<100x32xf32>, vector<16x32xf32> -> vector<16x32xf32>
    %c0_3 = arith.constant 0 : index
    %c0_4 = arith.constant 0 : index
    %c0_5 = arith.constant 0 : index
    %8 = vector.load %arg4[%c0_3, %c0_4, %c0_5] : memref<2x32x96xf32, #tpu.memory_space<vmem>>, vector<1x32x96xf32>
    %9 = vector.shape_cast %8 : vector<1x32x96xf32> to vector<32x96xf32>
    %cst_6 = arith.constant dense<0.000000e+00> : vector<16x96xf32>
    %10 = tpu.matmul %7, %9, %cst_6 {dimension_numbers = #tpu.dot_dimension_numbers<[1], [0], [0], [1], [0, 0, 1, 1], [], []>} : vector<16x32xf32>, vector<32x96xf32>, vector<16x96xf32> -> vector<16x96xf32>
    %c0_7 = arith.constant 0 : index
    %c0_8 = arith.constant 0 : index
    %c0_9 = arith.constant 0 : index
    %11 = vector.load %arg5[%c0_7, %c0_8, %c0_9] : memref<2x1x96xf32, #tpu.memory_space<vmem>>, vector<1x1x96xf32>
    %12 = vector.shape_cast %11 : vector<1x1x96xf32> to vector<1x96xf32>
    %13 = vector.broadcast %12 : vector<1x96xf32> to vector<16x96xf32>
    %14 = arith.addf %10, %13 : vector<16x96xf32>
    %15 = vector.shape_cast %14 : vector<16x96xf32> to vector<2x8x96xf32>
    %16 = vector.extract_strided_slice %15 {offsets = [0, 0, 0], sizes = [2, 8, 4], strides = [1, 1, 1]} : vector<2x8x96xf32> to vector<2x8x4xf32>
    %17 = vector.extract_strided_slice %15 {offsets = [0, 0, 32], sizes = [2, 8, 4], strides = [1, 1, 1]} : vector<2x8x96xf32> to vector<2x8x4xf32>
    %18 = vector.extract_strided_slice %15 {offsets = [0, 0, 64], sizes = [2, 8, 4], strides = [1, 1, 1]} : vector<2x8x96xf32> to vector<2x8x4xf32>
    "tpu.trace_start"() <{level = 10 : i32, message = "bnd,bmd->bnm"}> : () -> ()
    %cst_10 = arith.constant dense<0.000000e+00> : vector<2x8x8xf32>
    %19 = tpu.matmul %16, %17, %cst_10 {dimension_numbers = #tpu.dot_dimension_numbers<[2], [2], [1], [1], [0, 0, 0, 1, 1, 1], [0], [0]>} : vector<2x8x4xf32>, vector<2x8x4xf32>, vector<2x8x8xf32> -> vector<2x8x8xf32>
    "tpu.trace_stop"() : () -> ()
    %cst_11 = arith.constant 5.000000e-01 : f32
    %20 = vector.broadcast %cst_11 : f32 to vector<2x8x8xf32>
    %21 = arith.mulf %19, %20 : vector<2x8x8xf32>
    %cst_12 = arith.constant dense<0xFF800000> : vector<2x8xf32>
    %22 = vector.multi_reduction <maximumf>, %21, %cst_12 [2] : vector<2x8x8xf32> to vector<2x8xf32>
    %23 = vector.shape_cast %22 : vector<2x8xf32> to vector<2x8x1xf32>
    %24 = vector.broadcast %23 : vector<2x8x1xf32> to vector<2x8x8xf32>
    %25 = arith.subf %21, %24 : vector<2x8x8xf32>
    %26 = math.exp %25 : vector<2x8x8xf32>
    %cst_13 = arith.constant dense<0.000000e+00> : vector<2x8xf32>
    %27 = vector.multi_reduction <add>, %26, %cst_13 [2] : vector<2x8x8xf32> to vector<2x8xf32>
    %28 = vector.shape_cast %27 : vector<2x8xf32> to vector<2x8x1xf32>
    %29 = tpu.reciprocal %28 {approx = true} : vector<2x8x1xf32> -> vector<2x8x1xf32>
    %30 = vector.broadcast %29 : vector<2x8x1xf32> to vector<2x8x8xf32>
    %31 = arith.mulf %26, %30 : vector<2x8x8xf32>
    "tpu.trace_start"() <{level = 10 : i32, message = "bnm,bmd->bnd"}> : () -> ()
    %cst_14 = arith.constant dense<0.000000e+00> : vector<2x8x4xf32>
    %32 = tpu.matmul %31, %18, %cst_14 {dimension_numbers = #tpu.dot_dimension_numbers<[2], [1], [1], [2], [0, 0, 0, 1, 1, 2], [0], [0]>} : vector<2x8x8xf32>, vector<2x8x4xf32>, vector<2x8x4xf32> -> vector<2x8x4xf32>
    "tpu.trace_stop"() : () -> ()
    %33 = vector.extract_strided_slice %15 {offsets = [0, 0, 4], sizes = [2, 8, 4], strides = [1, 1, 1]} : vector<2x8x96xf32> to vector<2x8x4xf32>
    %34 = vector.extract_strided_slice %15 {offsets = [0, 0, 36], sizes = [2, 8, 4], strides = [1, 1, 1]} : vector<2x8x96xf32> to vector<2x8x4xf32>
    %35 = vector.extract_strided_slice %15 {offsets = [0, 0, 68], sizes = [2, 8, 4], strides = [1, 1, 1]} : vector<2x8x96xf32> to vector<2x8x4xf32>
    "tpu.trace_start"() <{level = 10 : i32, message = "bnd,bmd->bnm"}> : () -> ()
    %cst_15 = arith.constant dense<0.000000e+00> : vector<2x8x8xf32>
    %36 = tpu.matmul %33, %34, %cst_15 {dimension_numbers = #tpu.dot_dimension_numbers<[2], [2], [1], [1], [0, 0, 0, 1, 1, 1], [0], [0]>} : vector<2x8x4xf32>, vector<2x8x4xf32>, vector<2x8x8xf32> -> vector<2x8x8xf32>
    "tpu.trace_stop"() : () -> ()
    %cst_16 = arith.constant 5.000000e-01 : f32
    %37 = vector.broadcast %cst_16 : f32 to vector<2x8x8xf32>
    %38 = arith.mulf %36, %37 : vector<2x8x8xf32>
    %cst_17 = arith.constant dense<0xFF800000> : vector<2x8xf32>
    %39 = vector.multi_reduction <maximumf>, %38, %cst_17 [2] : vector<2x8x8xf32> to vector<2x8xf32>
    %40 = vector.shape_cast %39 : vector<2x8xf32> to vector<2x8x1xf32>
    %41 = vector.broadcast %40 : vector<2x8x1xf32> to vector<2x8x8xf32>
    %42 = arith.subf %38, %41 : vector<2x8x8xf32>
    %43 = math.exp %42 : vector<2x8x8xf32>
    %cst_18 = arith.constant dense<0.000000e+00> : vector<2x8xf32>
    %44 = vector.multi_reduction <add>, %43, %cst_18 [2] : vector<2x8x8xf32> to vector<2x8xf32>
    %45 = vector.shape_cast %44 : vector<2x8xf32> to vector<2x8x1xf32>
    %46 = tpu.reciprocal %45 {approx = true} : vector<2x8x1xf32> -> vector<2x8x1xf32>
    %47 = vector.broadcast %46 : vector<2x8x1xf32> to vector<2x8x8xf32>
    %48 = arith.mulf %43, %47 : vector<2x8x8xf32>
    "tpu.trace_start"() <{level = 10 : i32, message = "bnm,bmd->bnd"}> : () -> ()
    %cst_19 = arith.constant dense<0.000000e+00> : vector<2x8x4xf32>
    %49 = tpu.matmul %48, %35, %cst_19 {dimension_numbers = #tpu.dot_dimension_numbers<[2], [1], [1], [2], [0, 0, 0, 1, 1, 2], [0], [0]>} : vector<2x8x8xf32>, vector<2x8x4xf32>, vector<2x8x4xf32> -> vector<2x8x4xf32>
    "tpu.trace_stop"() : () -> ()
    %50 = vector.extract_strided_slice %15 {offsets = [0, 0, 8], sizes = [2, 8, 4], strides = [1, 1, 1]} : vector<2x8x96xf32> to vector<2x8x4xf32>
    %51 = vector.extract_strided_slice %15 {offsets = [0, 0, 40], sizes = [2, 8, 4], strides = [1, 1, 1]} : vector<2x8x96xf32> to vector<2x8x4xf32>
    %52 = vector.extract_strided_slice %15 {offsets = [0, 0, 72], sizes = [2, 8, 4], strides = [1, 1, 1]} : vector<2x8x96xf32> to vector<2x8x4xf32>
    "tpu.trace_start"() <{level = 10 : i32, message = "bnd,bmd->bnm"}> : () -> ()
    %cst_20 = arith.constant dense<0.000000e+00> : vector<2x8x8xf32>
    %53 = tpu.matmul %50, %51, %cst_20 {dimension_numbers = #tpu.dot_dimension_numbers<[2], [2], [1], [1], [0, 0, 0, 1, 1, 1], [0], [0]>} : vector<2x8x4xf32>, vector<2x8x4xf32>, vector<2x8x8xf32> -> vector<2x8x8xf32>
    "tpu.trace_stop"() : () -> ()
    %cst_21 = arith.constant 5.000000e-01 : f32
    %54 = vector.broadcast %cst_21 : f32 to vector<2x8x8xf32>
    %55 = arith.mulf %53, %54 : vector<2x8x8xf32>
    %cst_22 = arith.constant dense<0xFF800000> : vector<2x8xf32>
    %56 = vector.multi_reduction <maximumf>, %55, %cst_22 [2] : vector<2x8x8xf32> to vector<2x8xf32>
    %57 = vector.shape_cast %56 : vector<2x8xf32> to vector<2x8x1xf32>
    %58 = vector.broadcast %57 : vector<2x8x1xf32> to vector<2x8x8xf32>
    %59 = arith.subf %55, %58 : vector<2x8x8xf32>
    %60 = math.exp %59 : vector<2x8x8xf32>
    %cst_23 = arith.constant dense<0.000000e+00> : vector<2x8xf32>
    %61 = vector.multi_reduction <add>, %60, %cst_23 [2] : vector<2x8x8xf32> to vector<2x8xf32>
    %62 = vector.shape_cast %61 : vector<2x8xf32> to vector<2x8x1xf32>
    %63 = tpu.reciprocal %62 {approx = true} : vector<2x8x1xf32> -> vector<2x8x1xf32>
    %64 = vector.broadcast %63 : vector<2x8x1xf32> to vector<2x8x8xf32>
    %65 = arith.mulf %60, %64 : vector<2x8x8xf32>
    "tpu.trace_start"() <{level = 10 : i32, message = "bnm,bmd->bnd"}> : () -> ()
    %cst_24 = arith.constant dense<0.000000e+00> : vector<2x8x4xf32>
    %66 = tpu.matmul %65, %52, %cst_24 {dimension_numbers = #tpu.dot_dimension_numbers<[2], [1], [1], [2], [0, 0, 0, 1, 1, 2], [0], [0]>} : vector<2x8x8xf32>, vector<2x8x4xf32>, vector<2x8x4xf32> -> vector<2x8x4xf32>
    "tpu.trace_stop"() : () -> ()
    %67 = vector.extract_strided_slice %15 {offsets = [0, 0, 12], sizes = [2, 8, 4], strides = [1, 1, 1]} : vector<2x8x96xf32> to vector<2x8x4xf32>
    %68 = vector.extract_strided_slice %15 {offsets = [0, 0, 44], sizes = [2, 8, 4], strides = [1, 1, 1]} : vector<2x8x96xf32> to vector<2x8x4xf32>
    %69 = vector.extract_strided_slice %15 {offsets = [0, 0, 76], sizes = [2, 8, 4], strides = [1, 1, 1]} : vector<2x8x96xf32> to vector<2x8x4xf32>
    "tpu.trace_start"() <{level = 10 : i32, message = "bnd,bmd->bnm"}> : () -> ()
    %cst_25 = arith.constant dense<0.000000e+00> : vector<2x8x8xf32>
    %70 = tpu.matmul %67, %68, %cst_25 {dimension_numbers = #tpu.dot_dimension_numbers<[2], [2], [1], [1], [0, 0, 0, 1, 1, 1], [0], [0]>} : vector<2x8x4xf32>, vector<2x8x4xf32>, vector<2x8x8xf32> -> vector<2x8x8xf32>
    "tpu.trace_stop"() : () -> ()
    %cst_26 = arith.constant 5.000000e-01 : f32
    %71 = vector.broadcast %cst_26 : f32 to vector<2x8x8xf32>
    %72 = arith.mulf %70, %71 : vector<2x8x8xf32>
    %cst_27 = arith.constant dense<0xFF800000> : vector<2x8xf32>
    %73 = vector.multi_reduction <maximumf>, %72, %cst_27 [2] : vector<2x8x8xf32> to vector<2x8xf32>
    %74 = vector.shape_cast %73 : vector<2x8xf32> to vector<2x8x1xf32>
    %75 = vector.broadcast %74 : vector<2x8x1xf32> to vector<2x8x8xf32>
    %76 = arith.subf %72, %75 : vector<2x8x8xf32>
    %77 = math.exp %76 : vector<2x8x8xf32>
    %cst_28 = arith.constant dense<0.000000e+00> : vector<2x8xf32>
    %78 = vector.multi_reduction <add>, %77, %cst_28 [2] : vector<2x8x8xf32> to vector<2x8xf32>
    %79 = vector.shape_cast %78 : vector<2x8xf32> to vector<2x8x1xf32>
    %80 = tpu.reciprocal %79 {approx = true} : vector<2x8x1xf32> -> vector<2x8x1xf32>
    %81 = vector.broadcast %80 : vector<2x8x1xf32> to vector<2x8x8xf32>
    %82 = arith.mulf %77, %81 : vector<2x8x8xf32>
    "tpu.trace_start"() <{level = 10 : i32, message = "bnm,bmd->bnd"}> : () -> ()
    %cst_29 = arith.constant dense<0.000000e+00> : vector<2x8x4xf32>
    %83 = tpu.matmul %82, %69, %cst_29 {dimension_numbers = #tpu.dot_dimension_numbers<[2], [1], [1], [2], [0, 0, 0, 1, 1, 2], [0], [0]>} : vector<2x8x8xf32>, vector<2x8x4xf32>, vector<2x8x4xf32> -> vector<2x8x4xf32>
    "tpu.trace_stop"() : () -> ()
    %84 = vector.extract_strided_slice %15 {offsets = [0, 0, 16], sizes = [2, 8, 4], strides = [1, 1, 1]} : vector<2x8x96xf32> to vector<2x8x4xf32>
    %85 = vector.extract_strided_slice %15 {offsets = [0, 0, 48], sizes = [2, 8, 4], strides = [1, 1, 1]} : vector<2x8x96xf32> to vector<2x8x4xf32>
    %86 = vector.extract_strided_slice %15 {offsets = [0, 0, 80], sizes = [2, 8, 4], strides = [1, 1, 1]} : vector<2x8x96xf32> to vector<2x8x4xf32>
    "tpu.trace_start"() <{level = 10 : i32, message = "bnd,bmd->bnm"}> : () -> ()
    %cst_30 = arith.constant dense<0.000000e+00> : vector<2x8x8xf32>
    %87 = tpu.matmul %84, %85, %cst_30 {dimension_numbers = #tpu.dot_dimension_numbers<[2], [2], [1], [1], [0, 0, 0, 1, 1, 1], [0], [0]>} : vector<2x8x4xf32>, vector<2x8x4xf32>, vector<2x8x8xf32> -> vector<2x8x8xf32>
    "tpu.trace_stop"() : () -> ()
    %cst_31 = arith.constant 5.000000e-01 : f32
    %88 = vector.broadcast %cst_31 : f32 to vector<2x8x8xf32>
    %89 = arith.mulf %87, %88 : vector<2x8x8xf32>
    %cst_32 = arith.constant dense<0xFF800000> : vector<2x8xf32>
    %90 = vector.multi_reduction <maximumf>, %89, %cst_32 [2] : vector<2x8x8xf32> to vector<2x8xf32>
    %91 = vector.shape_cast %90 : vector<2x8xf32> to vector<2x8x1xf32>
    %92 = vector.broadcast %91 : vector<2x8x1xf32> to vector<2x8x8xf32>
    %93 = arith.subf %89, %92 : vector<2x8x8xf32>
    %94 = math.exp %93 : vector<2x8x8xf32>
    %cst_33 = arith.constant dense<0.000000e+00> : vector<2x8xf32>
    %95 = vector.multi_reduction <add>, %94, %cst_33 [2] : vector<2x8x8xf32> to vector<2x8xf32>
    %96 = vector.shape_cast %95 : vector<2x8xf32> to vector<2x8x1xf32>
    %97 = tpu.reciprocal %96 {approx = true} : vector<2x8x1xf32> -> vector<2x8x1xf32>
    %98 = vector.broadcast %97 : vector<2x8x1xf32> to vector<2x8x8xf32>
    %99 = arith.mulf %94, %98 : vector<2x8x8xf32>
    "tpu.trace_start"() <{level = 10 : i32, message = "bnm,bmd->bnd"}> : () -> ()
    %cst_34 = arith.constant dense<0.000000e+00> : vector<2x8x4xf32>
    %100 = tpu.matmul %99, %86, %cst_34 {dimension_numbers = #tpu.dot_dimension_numbers<[2], [1], [1], [2], [0, 0, 0, 1, 1, 2], [0], [0]>} : vector<2x8x8xf32>, vector<2x8x4xf32>, vector<2x8x4xf32> -> vector<2x8x4xf32>
    "tpu.trace_stop"() : () -> ()
    %101 = vector.extract_strided_slice %15 {offsets = [0, 0, 20], sizes = [2, 8, 4], strides = [1, 1, 1]} : vector<2x8x96xf32> to vector<2x8x4xf32>
    %102 = vector.extract_strided_slice %15 {offsets = [0, 0, 52], sizes = [2, 8, 4], strides = [1, 1, 1]} : vector<2x8x96xf32> to vector<2x8x4xf32>
    %103 = vector.extract_strided_slice %15 {offsets = [0, 0, 84], sizes = [2, 8, 4], strides = [1, 1, 1]} : vector<2x8x96xf32> to vector<2x8x4xf32>
    "tpu.trace_start"() <{level = 10 : i32, message = "bnd,bmd->bnm"}> : () -> ()
    %cst_35 = arith.constant dense<0.000000e+00> : vector<2x8x8xf32>
    %104 = tpu.matmul %101, %102, %cst_35 {dimension_numbers = #tpu.dot_dimension_numbers<[2], [2], [1], [1], [0, 0, 0, 1, 1, 1], [0], [0]>} : vector<2x8x4xf32>, vector<2x8x4xf32>, vector<2x8x8xf32> -> vector<2x8x8xf32>
    "tpu.trace_stop"() : () -> ()
    %cst_36 = arith.constant 5.000000e-01 : f32
    %105 = vector.broadcast %cst_36 : f32 to vector<2x8x8xf32>
    %106 = arith.mulf %104, %105 : vector<2x8x8xf32>
    %cst_37 = arith.constant dense<0xFF800000> : vector<2x8xf32>
    %107 = vector.multi_reduction <maximumf>, %106, %cst_37 [2] : vector<2x8x8xf32> to vector<2x8xf32>
    %108 = vector.shape_cast %107 : vector<2x8xf32> to vector<2x8x1xf32>
    %109 = vector.broadcast %108 : vector<2x8x1xf32> to vector<2x8x8xf32>
    %110 = arith.subf %106, %109 : vector<2x8x8xf32>
    %111 = math.exp %110 : vector<2x8x8xf32>
    %cst_38 = arith.constant dense<0.000000e+00> : vector<2x8xf32>
    %112 = vector.multi_reduction <add>, %111, %cst_38 [2] : vector<2x8x8xf32> to vector<2x8xf32>
    %113 = vector.shape_cast %112 : vector<2x8xf32> to vector<2x8x1xf32>
    %114 = tpu.reciprocal %113 {approx = true} : vector<2x8x1xf32> -> vector<2x8x1xf32>
    %115 = vector.broadcast %114 : vector<2x8x1xf32> to vector<2x8x8xf32>
    %116 = arith.mulf %111, %115 : vector<2x8x8xf32>
    "tpu.trace_start"() <{level = 10 : i32, message = "bnm,bmd->bnd"}> : () -> ()
    %cst_39 = arith.constant dense<0.000000e+00> : vector<2x8x4xf32>
    %117 = tpu.matmul %116, %103, %cst_39 {dimension_numbers = #tpu.dot_dimension_numbers<[2], [1], [1], [2], [0, 0, 0, 1, 1, 2], [0], [0]>} : vector<2x8x8xf32>, vector<2x8x4xf32>, vector<2x8x4xf32> -> vector<2x8x4xf32>
    "tpu.trace_stop"() : () -> ()
    %118 = vector.extract_strided_slice %15 {offsets = [0, 0, 24], sizes = [2, 8, 4], strides = [1, 1, 1]} : vector<2x8x96xf32> to vector<2x8x4xf32>
    %119 = vector.extract_strided_slice %15 {offsets = [0, 0, 56], sizes = [2, 8, 4], strides = [1, 1, 1]} : vector<2x8x96xf32> to vector<2x8x4xf32>
    %120 = vector.extract_strided_slice %15 {offsets = [0, 0, 88], sizes = [2, 8, 4], strides = [1, 1, 1]} : vector<2x8x96xf32> to vector<2x8x4xf32>
    "tpu.trace_start"() <{level = 10 : i32, message = "bnd,bmd->bnm"}> : () -> ()
    %cst_40 = arith.constant dense<0.000000e+00> : vector<2x8x8xf32>
    %121 = tpu.matmul %118, %119, %cst_40 {dimension_numbers = #tpu.dot_dimension_numbers<[2], [2], [1], [1], [0, 0, 0, 1, 1, 1], [0], [0]>} : vector<2x8x4xf32>, vector<2x8x4xf32>, vector<2x8x8xf32> -> vector<2x8x8xf32>
    "tpu.trace_stop"() : () -> ()
    %cst_41 = arith.constant 5.000000e-01 : f32
    %122 = vector.broadcast %cst_41 : f32 to vector<2x8x8xf32>
    %123 = arith.mulf %121, %122 : vector<2x8x8xf32>
    %cst_42 = arith.constant dense<0xFF800000> : vector<2x8xf32>
    %124 = vector.multi_reduction <maximumf>, %123, %cst_42 [2] : vector<2x8x8xf32> to vector<2x8xf32>
    %125 = vector.shape_cast %124 : vector<2x8xf32> to vector<2x8x1xf32>
    %126 = vector.broadcast %125 : vector<2x8x1xf32> to vector<2x8x8xf32>
    %127 = arith.subf %123, %126 : vector<2x8x8xf32>
    %128 = math.exp %127 : vector<2x8x8xf32>
    %cst_43 = arith.constant dense<0.000000e+00> : vector<2x8xf32>
    %129 = vector.multi_reduction <add>, %128, %cst_43 [2] : vector<2x8x8xf32> to vector<2x8xf32>
    %130 = vector.shape_cast %129 : vector<2x8xf32> to vector<2x8x1xf32>
    %131 = tpu.reciprocal %130 {approx = true} : vector<2x8x1xf32> -> vector<2x8x1xf32>
    %132 = vector.broadcast %131 : vector<2x8x1xf32> to vector<2x8x8xf32>
    %133 = arith.mulf %128, %132 : vector<2x8x8xf32>
    "tpu.trace_start"() <{level = 10 : i32, message = "bnm,bmd->bnd"}> : () -> ()
    %cst_44 = arith.constant dense<0.000000e+00> : vector<2x8x4xf32>
    %134 = tpu.matmul %133, %120, %cst_44 {dimension_numbers = #tpu.dot_dimension_numbers<[2], [1], [1], [2], [0, 0, 0, 1, 1, 2], [0], [0]>} : vector<2x8x8xf32>, vector<2x8x4xf32>, vector<2x8x4xf32> -> vector<2x8x4xf32>
    "tpu.trace_stop"() : () -> ()
    %135 = vector.extract_strided_slice %15 {offsets = [0, 0, 28], sizes = [2, 8, 4], strides = [1, 1, 1]} : vector<2x8x96xf32> to vector<2x8x4xf32>
    %136 = vector.extract_strided_slice %15 {offsets = [0, 0, 60], sizes = [2, 8, 4], strides = [1, 1, 1]} : vector<2x8x96xf32> to vector<2x8x4xf32>
    %137 = vector.extract_strided_slice %15 {offsets = [0, 0, 92], sizes = [2, 8, 4], strides = [1, 1, 1]} : vector<2x8x96xf32> to vector<2x8x4xf32>
    "tpu.trace_start"() <{level = 10 : i32, message = "bnd,bmd->bnm"}> : () -> ()
    %cst_45 = arith.constant dense<0.000000e+00> : vector<2x8x8xf32>
    %138 = tpu.matmul %135, %136, %cst_45 {dimension_numbers = #tpu.dot_dimension_numbers<[2], [2], [1], [1], [0, 0, 0, 1, 1, 1], [0], [0]>} : vector<2x8x4xf32>, vector<2x8x4xf32>, vector<2x8x8xf32> -> vector<2x8x8xf32>
    "tpu.trace_stop"() : () -> ()
    %cst_46 = arith.constant 5.000000e-01 : f32
    %139 = vector.broadcast %cst_46 : f32 to vector<2x8x8xf32>
    %140 = arith.mulf %138, %139 : vector<2x8x8xf32>
    %cst_47 = arith.constant dense<0xFF800000> : vector<2x8xf32>
    %141 = vector.multi_reduction <maximumf>, %140, %cst_47 [2] : vector<2x8x8xf32> to vector<2x8xf32>
    %142 = vector.shape_cast %141 : vector<2x8xf32> to vector<2x8x1xf32>
    %143 = vector.broadcast %142 : vector<2x8x1xf32> to vector<2x8x8xf32>
    %144 = arith.subf %140, %143 : vector<2x8x8xf32>
    %145 = math.exp %144 : vector<2x8x8xf32>
    %cst_48 = arith.constant dense<0.000000e+00> : vector<2x8xf32>
    %146 = vector.multi_reduction <add>, %145, %cst_48 [2] : vector<2x8x8xf32> to vector<2x8xf32>
    %147 = vector.shape_cast %146 : vector<2x8xf32> to vector<2x8x1xf32>
    %148 = tpu.reciprocal %147 {approx = true} : vector<2x8x1xf32> -> vector<2x8x1xf32>
    %149 = vector.broadcast %148 : vector<2x8x1xf32> to vector<2x8x8xf32>
    %150 = arith.mulf %145, %149 : vector<2x8x8xf32>
    "tpu.trace_start"() <{level = 10 : i32, message = "bnm,bmd->bnd"}> : () -> ()
    %cst_49 = arith.constant dense<0.000000e+00> : vector<2x8x4xf32>
    %151 = tpu.matmul %150, %137, %cst_49 {dimension_numbers = #tpu.dot_dimension_numbers<[2], [1], [1], [2], [0, 0, 0, 1, 1, 2], [0], [0]>} : vector<2x8x8xf32>, vector<2x8x4xf32>, vector<2x8x4xf32> -> vector<2x8x4xf32>
    "tpu.trace_stop"() : () -> ()
    %152 = tpu.concatenate %32, %49, %66, %83, %100, %117, %134, %151 in 2 : vector<2x8x4xf32>, vector<2x8x4xf32>, vector<2x8x4xf32>, vector<2x8x4xf32>, vector<2x8x4xf32>, vector<2x8x4xf32>, vector<2x8x4xf32>, vector<2x8x4xf32> -> vector<2x8x32xf32>
    %153 = vector.shape_cast %152 : vector<2x8x32xf32> to vector<16x32xf32>
    %c0_50 = arith.constant 0 : index
    %c0_51 = arith.constant 0 : index
    %c0_52 = arith.constant 0 : index
    %154 = vector.load %arg6[%c0_50, %c0_51, %c0_52] : memref<2x32x32xf32, #tpu.memory_space<vmem>>, vector<1x32x32xf32>
    %155 = vector.shape_cast %154 : vector<1x32x32xf32> to vector<32x32xf32>
    %cst_53 = arith.constant dense<0.000000e+00> : vector<16x32xf32>
    %156 = tpu.matmul %153, %155, %cst_53 {dimension_numbers = #tpu.dot_dimension_numbers<[1], [0], [0], [1], [0, 0, 1, 1], [], []>} : vector<16x32xf32>, vector<32x32xf32>, vector<16x32xf32> -> vector<16x32xf32>
    %c0_54 = arith.constant 0 : index
    %c0_55 = arith.constant 0 : index
    %c0_56 = arith.constant 0 : index
    %157 = vector.load %arg7[%c0_54, %c0_55, %c0_56] : memref<2x1x32xf32, #tpu.memory_space<vmem>>, vector<1x1x32xf32>
    %158 = vector.shape_cast %157 : vector<1x1x32xf32> to vector<1x32xf32>
    %159 = vector.broadcast %158 : vector<1x32xf32> to vector<16x32xf32>
    %160 = arith.addf %156, %159 : vector<16x32xf32>
    %161 = arith.addf %7, %160 : vector<16x32xf32>
    %c0_57 = arith.constant 0 : index
    %c0_58 = arith.constant 0 : index
    %c0_59 = arith.constant 0 : index
    %162 = vector.load %arg8[%c0_57, %c0_58, %c0_59] : memref<2x1x32xf32, #tpu.memory_space<vmem>>, vector<1x1x32xf32>
    %163 = vector.shape_cast %162 : vector<1x1x32xf32> to vector<1x32xf32>
    %c0_60 = arith.constant 0 : index
    %c0_61 = arith.constant 0 : index
    %c0_62 = arith.constant 0 : index
    %164 = vector.load %arg9[%c0_60, %c0_61, %c0_62] : memref<2x1x32xf32, #tpu.memory_space<vmem>>, vector<1x1x32xf32>
    %165 = vector.shape_cast %164 : vector<1x1x32xf32> to vector<1x32xf32>
    %cst_63 = arith.constant dense<0.000000e+00> : vector<16xf32>
    %166 = vector.multi_reduction <add>, %161, %cst_63 [1] : vector<16x32xf32> to vector<16xf32>
    %167 = vector.shape_cast %166 : vector<16xf32> to vector<16x1xf32>
    %cst_64 = arith.constant 3.200000e+01 : f32
    %168 = vector.broadcast %cst_64 : f32 to vector<16x1xf32>
    %169 = arith.divf %167, %168 : vector<16x1xf32>
    %170 = vector.broadcast %169 : vector<16x1xf32> to vector<16x32xf32>
    %171 = arith.subf %161, %170 : vector<16x32xf32>
    %172 = arith.mulf %171, %171 : vector<16x32xf32>
    %cst_65 = arith.constant dense<0.000000e+00> : vector<16xf32>
    %173 = vector.multi_reduction <add>, %172, %cst_65 [1] : vector<16x32xf32> to vector<16xf32>
    %174 = vector.shape_cast %173 : vector<16xf32> to vector<16x1xf32>
    %cst_66 = arith.constant 3.200000e+01 : f32
    %175 = vector.broadcast %cst_66 : f32 to vector<16x1xf32>
    %176 = arith.divf %174, %175 : vector<16x1xf32>
    %177 = vector.broadcast %169 : vector<16x1xf32> to vector<16x32xf32>
    %178 = arith.subf %161, %177 : vector<16x32xf32>
    %cst_67 = arith.constant 9.99999974E-6 : f32
    %179 = vector.broadcast %cst_67 : f32 to vector<16x1xf32>
    %180 = arith.addf %176, %179 : vector<16x1xf32>
    %181 = math.rsqrt %180 : vector<16x1xf32>
    %182 = vector.broadcast %181 : vector<16x1xf32> to vector<16x32xf32>
    %183 = arith.mulf %178, %182 : vector<16x32xf32>
    %184 = vector.broadcast %163 : vector<1x32xf32> to vector<16x32xf32>
    %185 = arith.mulf %183, %184 : vector<16x32xf32>
    %186 = vector.broadcast %165 : vector<1x32xf32> to vector<16x32xf32>
    %187 = arith.addf %185, %186 : vector<16x32xf32>
    %c0_68 = arith.constant 0 : index
    %c0_69 = arith.constant 0 : index
    %c0_70 = arith.constant 0 : index
    %188 = vector.load %arg10[%c0_68, %c0_69, %c0_70] : memref<2x32x128xf32, #tpu.memory_space<vmem>>, vector<1x32x128xf32>
    %189 = vector.shape_cast %188 : vector<1x32x128xf32> to vector<32x128xf32>
    %cst_71 = arith.constant dense<0.000000e+00> : vector<16x128xf32>
    %190 = tpu.matmul %187, %189, %cst_71 {dimension_numbers = #tpu.dot_dimension_numbers<[1], [0], [0], [1], [0, 0, 1, 1], [], []>} : vector<16x32xf32>, vector<32x128xf32>, vector<16x128xf32> -> vector<16x128xf32>
    %c0_72 = arith.constant 0 : index
    %c0_73 = arith.constant 0 : index
    %c0_74 = arith.constant 0 : index
    %191 = vector.load %arg11[%c0_72, %c0_73, %c0_74] : memref<2x1x128xf32, #tpu.memory_space<vmem>>, vector<1x1x128xf32>
    %192 = vector.shape_cast %191 : vector<1x1x128xf32> to vector<1x128xf32>
    %193 = vector.broadcast %192 : vector<1x128xf32> to vector<16x128xf32>
    %194 = arith.addf %190, %193 : vector<16x128xf32>
    %cst_75 = arith.constant 0.000000e+00 : f32
    %195 = vector.broadcast %cst_75 : f32 to vector<16x128xf32>
    %196 = arith.maximumf %194, %195 : vector<16x128xf32>
    %c0_76 = arith.constant 0 : index
    %c0_77 = arith.constant 0 : index
    %c0_78 = arith.constant 0 : index
    %197 = vector.load %arg12[%c0_76, %c0_77, %c0_78] : memref<2x128x32xf32, #tpu.memory_space<vmem>>, vector<1x128x32xf32>
    %198 = vector.shape_cast %197 : vector<1x128x32xf32> to vector<128x32xf32>
    %cst_79 = arith.constant dense<0.000000e+00> : vector<16x32xf32>
    %199 = tpu.matmul %196, %198, %cst_79 {dimension_numbers = #tpu.dot_dimension_numbers<[1], [0], [0], [1], [0, 0, 1, 1], [], []>} : vector<16x128xf32>, vector<128x32xf32>, vector<16x32xf32> -> vector<16x32xf32>
    %c0_80 = arith.constant 0 : index
    %c0_81 = arith.constant 0 : index
    %c0_82 = arith.constant 0 : index
    %200 = vector.load %arg13[%c0_80, %c0_81, %c0_82] : memref<2x1x32xf32, #tpu.memory_space<vmem>>, vector<1x1x32xf32>
    %201 = vector.shape_cast %200 : vector<1x1x32xf32> to vector<1x32xf32>
    %202 = vector.broadcast %201 : vector<1x32xf32> to vector<16x32xf32>
    %203 = arith.addf %199, %202 : vector<16x32xf32>
    %204 = arith.addf %187, %203 : vector<16x32xf32>
    %c0_83 = arith.constant 0 : index
    %c0_84 = arith.constant 0 : index
    %c0_85 = arith.constant 0 : index
    %205 = vector.load %arg14[%c0_83, %c0_84, %c0_85] : memref<2x1x32xf32, #tpu.memory_space<vmem>>, vector<1x1x32xf32>
    %206 = vector.shape_cast %205 : vector<1x1x32xf32> to vector<1x32xf32>
    %c0_86 = arith.constant 0 : index
    %c0_87 = arith.constant 0 : index
    %c0_88 = arith.constant 0 : index
    %207 = vector.load %arg15[%c0_86, %c0_87, %c0_88] : memref<2x1x32xf32, #tpu.memory_space<vmem>>, vector<1x1x32xf32>
    %208 = vector.shape_cast %207 : vector<1x1x32xf32> to vector<1x32xf32>
    %cst_89 = arith.constant dense<0.000000e+00> : vector<16xf32>
    %209 = vector.multi_reduction <add>, %204, %cst_89 [1] : vector<16x32xf32> to vector<16xf32>
    %210 = vector.shape_cast %209 : vector<16xf32> to vector<16x1xf32>
    %cst_90 = arith.constant 3.200000e+01 : f32
    %211 = vector.broadcast %cst_90 : f32 to vector<16x1xf32>
    %212 = arith.divf %210, %211 : vector<16x1xf32>
    %213 = vector.broadcast %212 : vector<16x1xf32> to vector<16x32xf32>
    %214 = arith.subf %204, %213 : vector<16x32xf32>
    %215 = arith.mulf %214, %214 : vector<16x32xf32>
    %cst_91 = arith.constant dense<0.000000e+00> : vector<16xf32>
    %216 = vector.multi_reduction <add>, %215, %cst_91 [1] : vector<16x32xf32> to vector<16xf32>
    %217 = vector.shape_cast %216 : vector<16xf32> to vector<16x1xf32>
    %cst_92 = arith.constant 3.200000e+01 : f32
    %218 = vector.broadcast %cst_92 : f32 to vector<16x1xf32>
    %219 = arith.divf %217, %218 : vector<16x1xf32>
    %220 = vector.broadcast %212 : vector<16x1xf32> to vector<16x32xf32>
    %221 = arith.subf %204, %220 : vector<16x32xf32>
    %cst_93 = arith.constant 9.99999974E-6 : f32
    %222 = vector.broadcast %cst_93 : f32 to vector<16x1xf32>
    %223 = arith.addf %219, %222 : vector<16x1xf32>
    %224 = math.rsqrt %223 : vector<16x1xf32>
    %225 = vector.broadcast %224 : vector<16x1xf32> to vector<16x32xf32>
    %226 = arith.mulf %221, %225 : vector<16x32xf32>
    %227 = vector.broadcast %206 : vector<1x32xf32> to vector<16x32xf32>
    %228 = arith.mulf %226, %227 : vector<16x32xf32>
    %229 = vector.broadcast %208 : vector<1x32xf32> to vector<16x32xf32>
    %230 = arith.addf %228, %229 : vector<16x32xf32>
    %c1 = arith.constant 1 : index
    %c0_94 = arith.constant 0 : index
    %c0_95 = arith.constant 0 : index
    %231 = vector.load %arg4[%c1, %c0_94, %c0_95] : memref<2x32x96xf32, #tpu.memory_space<vmem>>, vector<1x32x96xf32>
    %232 = vector.shape_cast %231 : vector<1x32x96xf32> to vector<32x96xf32>
    %cst_96 = arith.constant dense<0.000000e+00> : vector<16x96xf32>
    %233 = tpu.matmul %230, %232, %cst_96 {dimension_numbers = #tpu.dot_dimension_numbers<[1], [0], [0], [1], [0, 0, 1, 1], [], []>} : vector<16x32xf32>, vector<32x96xf32>, vector<16x96xf32> -> vector<16x96xf32>
    %c1_97 = arith.constant 1 : index
    %c0_98 = arith.constant 0 : index
    %c0_99 = arith.constant 0 : index
    %234 = vector.load %arg5[%c1_97, %c0_98, %c0_99] : memref<2x1x96xf32, #tpu.memory_space<vmem>>, vector<1x1x96xf32>
    %235 = vector.shape_cast %234 : vector<1x1x96xf32> to vector<1x96xf32>
    %236 = vector.broadcast %235 : vector<1x96xf32> to vector<16x96xf32>
    %237 = arith.addf %233, %236 : vector<16x96xf32>
    %238 = vector.shape_cast %237 : vector<16x96xf32> to vector<2x8x96xf32>
    %239 = vector.extract_strided_slice %238 {offsets = [0, 0, 0], sizes = [2, 8, 4], strides = [1, 1, 1]} : vector<2x8x96xf32> to vector<2x8x4xf32>
    %240 = vector.extract_strided_slice %238 {offsets = [0, 0, 32], sizes = [2, 8, 4], strides = [1, 1, 1]} : vector<2x8x96xf32> to vector<2x8x4xf32>
    %241 = vector.extract_strided_slice %238 {offsets = [0, 0, 64], sizes = [2, 8, 4], strides = [1, 1, 1]} : vector<2x8x96xf32> to vector<2x8x4xf32>
    "tpu.trace_start"() <{level = 10 : i32, message = "bnd,bmd->bnm"}> : () -> ()
    %cst_100 = arith.constant dense<0.000000e+00> : vector<2x8x8xf32>
    %242 = tpu.matmul %239, %240, %cst_100 {dimension_numbers = #tpu.dot_dimension_numbers<[2], [2], [1], [1], [0, 0, 0, 1, 1, 1], [0], [0]>} : vector<2x8x4xf32>, vector<2x8x4xf32>, vector<2x8x8xf32> -> vector<2x8x8xf32>
    "tpu.trace_stop"() : () -> ()
    %cst_101 = arith.constant 5.000000e-01 : f32
    %243 = vector.broadcast %cst_101 : f32 to vector<2x8x8xf32>
    %244 = arith.mulf %242, %243 : vector<2x8x8xf32>
    %cst_102 = arith.constant dense<0xFF800000> : vector<2x8xf32>
    %245 = vector.multi_reduction <maximumf>, %244, %cst_102 [2] : vector<2x8x8xf32> to vector<2x8xf32>
    %246 = vector.shape_cast %245 : vector<2x8xf32> to vector<2x8x1xf32>
    %247 = vector.broadcast %246 : vector<2x8x1xf32> to vector<2x8x8xf32>
    %248 = arith.subf %244, %247 : vector<2x8x8xf32>
    %249 = math.exp %248 : vector<2x8x8xf32>
    %cst_103 = arith.constant dense<0.000000e+00> : vector<2x8xf32>
    %250 = vector.multi_reduction <add>, %249, %cst_103 [2] : vector<2x8x8xf32> to vector<2x8xf32>
    %251 = vector.shape_cast %250 : vector<2x8xf32> to vector<2x8x1xf32>
    %252 = tpu.reciprocal %251 {approx = true} : vector<2x8x1xf32> -> vector<2x8x1xf32>
    %253 = vector.broadcast %252 : vector<2x8x1xf32> to vector<2x8x8xf32>
    %254 = arith.mulf %249, %253 : vector<2x8x8xf32>
    "tpu.trace_start"() <{level = 10 : i32, message = "bnm,bmd->bnd"}> : () -> ()
    %cst_104 = arith.constant dense<0.000000e+00> : vector<2x8x4xf32>
    %255 = tpu.matmul %254, %241, %cst_104 {dimension_numbers = #tpu.dot_dimension_numbers<[2], [1], [1], [2], [0, 0, 0, 1, 1, 2], [0], [0]>} : vector<2x8x8xf32>, vector<2x8x4xf32>, vector<2x8x4xf32> -> vector<2x8x4xf32>
    "tpu.trace_stop"() : () -> ()
    %256 = vector.extract_strided_slice %238 {offsets = [0, 0, 4], sizes = [2, 8, 4], strides = [1, 1, 1]} : vector<2x8x96xf32> to vector<2x8x4xf32>
    %257 = vector.extract_strided_slice %238 {offsets = [0, 0, 36], sizes = [2, 8, 4], strides = [1, 1, 1]} : vector<2x8x96xf32> to vector<2x8x4xf32>
    %258 = vector.extract_strided_slice %238 {offsets = [0, 0, 68], sizes = [2, 8, 4], strides = [1, 1, 1]} : vector<2x8x96xf32> to vector<2x8x4xf32>
    "tpu.trace_start"() <{level = 10 : i32, message = "bnd,bmd->bnm"}> : () -> ()
    %cst_105 = arith.constant dense<0.000000e+00> : vector<2x8x8xf32>
    %259 = tpu.matmul %256, %257, %cst_105 {dimension_numbers = #tpu.dot_dimension_numbers<[2], [2], [1], [1], [0, 0, 0, 1, 1, 1], [0], [0]>} : vector<2x8x4xf32>, vector<2x8x4xf32>, vector<2x8x8xf32> -> vector<2x8x8xf32>
    "tpu.trace_stop"() : () -> ()
    %cst_106 = arith.constant 5.000000e-01 : f32
    %260 = vector.broadcast %cst_106 : f32 to vector<2x8x8xf32>
    %261 = arith.mulf %259, %260 : vector<2x8x8xf32>
    %cst_107 = arith.constant dense<0xFF800000> : vector<2x8xf32>
    %262 = vector.multi_reduction <maximumf>, %261, %cst_107 [2] : vector<2x8x8xf32> to vector<2x8xf32>
    %263 = vector.shape_cast %262 : vector<2x8xf32> to vector<2x8x1xf32>
    %264 = vector.broadcast %263 : vector<2x8x1xf32> to vector<2x8x8xf32>
    %265 = arith.subf %261, %264 : vector<2x8x8xf32>
    %266 = math.exp %265 : vector<2x8x8xf32>
    %cst_108 = arith.constant dense<0.000000e+00> : vector<2x8xf32>
    %267 = vector.multi_reduction <add>, %266, %cst_108 [2] : vector<2x8x8xf32> to vector<2x8xf32>
    %268 = vector.shape_cast %267 : vector<2x8xf32> to vector<2x8x1xf32>
    %269 = tpu.reciprocal %268 {approx = true} : vector<2x8x1xf32> -> vector<2x8x1xf32>
    %270 = vector.broadcast %269 : vector<2x8x1xf32> to vector<2x8x8xf32>
    %271 = arith.mulf %266, %270 : vector<2x8x8xf32>
    "tpu.trace_start"() <{level = 10 : i32, message = "bnm,bmd->bnd"}> : () -> ()
    %cst_109 = arith.constant dense<0.000000e+00> : vector<2x8x4xf32>
    %272 = tpu.matmul %271, %258, %cst_109 {dimension_numbers = #tpu.dot_dimension_numbers<[2], [1], [1], [2], [0, 0, 0, 1, 1, 2], [0], [0]>} : vector<2x8x8xf32>, vector<2x8x4xf32>, vector<2x8x4xf32> -> vector<2x8x4xf32>
    "tpu.trace_stop"() : () -> ()
    %273 = vector.extract_strided_slice %238 {offsets = [0, 0, 8], sizes = [2, 8, 4], strides = [1, 1, 1]} : vector<2x8x96xf32> to vector<2x8x4xf32>
    %274 = vector.extract_strided_slice %238 {offsets = [0, 0, 40], sizes = [2, 8, 4], strides = [1, 1, 1]} : vector<2x8x96xf32> to vector<2x8x4xf32>
    %275 = vector.extract_strided_slice %238 {offsets = [0, 0, 72], sizes = [2, 8, 4], strides = [1, 1, 1]} : vector<2x8x96xf32> to vector<2x8x4xf32>
    "tpu.trace_start"() <{level = 10 : i32, message = "bnd,bmd->bnm"}> : () -> ()
    %cst_110 = arith.constant dense<0.000000e+00> : vector<2x8x8xf32>
    %276 = tpu.matmul %273, %274, %cst_110 {dimension_numbers = #tpu.dot_dimension_numbers<[2], [2], [1], [1], [0, 0, 0, 1, 1, 1], [0], [0]>} : vector<2x8x4xf32>, vector<2x8x4xf32>, vector<2x8x8xf32> -> vector<2x8x8xf32>
    "tpu.trace_stop"() : () -> ()
    %cst_111 = arith.constant 5.000000e-01 : f32
    %277 = vector.broadcast %cst_111 : f32 to vector<2x8x8xf32>
    %278 = arith.mulf %276, %277 : vector<2x8x8xf32>
    %cst_112 = arith.constant dense<0xFF800000> : vector<2x8xf32>
    %279 = vector.multi_reduction <maximumf>, %278, %cst_112 [2] : vector<2x8x8xf32> to vector<2x8xf32>
    %280 = vector.shape_cast %279 : vector<2x8xf32> to vector<2x8x1xf32>
    %281 = vector.broadcast %280 : vector<2x8x1xf32> to vector<2x8x8xf32>
    %282 = arith.subf %278, %281 : vector<2x8x8xf32>
    %283 = math.exp %282 : vector<2x8x8xf32>
    %cst_113 = arith.constant dense<0.000000e+00> : vector<2x8xf32>
    %284 = vector.multi_reduction <add>, %283, %cst_113 [2] : vector<2x8x8xf32> to vector<2x8xf32>
    %285 = vector.shape_cast %284 : vector<2x8xf32> to vector<2x8x1xf32>
    %286 = tpu.reciprocal %285 {approx = true} : vector<2x8x1xf32> -> vector<2x8x1xf32>
    %287 = vector.broadcast %286 : vector<2x8x1xf32> to vector<2x8x8xf32>
    %288 = arith.mulf %283, %287 : vector<2x8x8xf32>
    "tpu.trace_start"() <{level = 10 : i32, message = "bnm,bmd->bnd"}> : () -> ()
    %cst_114 = arith.constant dense<0.000000e+00> : vector<2x8x4xf32>
    %289 = tpu.matmul %288, %275, %cst_114 {dimension_numbers = #tpu.dot_dimension_numbers<[2], [1], [1], [2], [0, 0, 0, 1, 1, 2], [0], [0]>} : vector<2x8x8xf32>, vector<2x8x4xf32>, vector<2x8x4xf32> -> vector<2x8x4xf32>
    "tpu.trace_stop"() : () -> ()
    %290 = vector.extract_strided_slice %238 {offsets = [0, 0, 12], sizes = [2, 8, 4], strides = [1, 1, 1]} : vector<2x8x96xf32> to vector<2x8x4xf32>
    %291 = vector.extract_strided_slice %238 {offsets = [0, 0, 44], sizes = [2, 8, 4], strides = [1, 1, 1]} : vector<2x8x96xf32> to vector<2x8x4xf32>
    %292 = vector.extract_strided_slice %238 {offsets = [0, 0, 76], sizes = [2, 8, 4], strides = [1, 1, 1]} : vector<2x8x96xf32> to vector<2x8x4xf32>
    "tpu.trace_start"() <{level = 10 : i32, message = "bnd,bmd->bnm"}> : () -> ()
    %cst_115 = arith.constant dense<0.000000e+00> : vector<2x8x8xf32>
    %293 = tpu.matmul %290, %291, %cst_115 {dimension_numbers = #tpu.dot_dimension_numbers<[2], [2], [1], [1], [0, 0, 0, 1, 1, 1], [0], [0]>} : vector<2x8x4xf32>, vector<2x8x4xf32>, vector<2x8x8xf32> -> vector<2x8x8xf32>
    "tpu.trace_stop"() : () -> ()
    %cst_116 = arith.constant 5.000000e-01 : f32
    %294 = vector.broadcast %cst_116 : f32 to vector<2x8x8xf32>
    %295 = arith.mulf %293, %294 : vector<2x8x8xf32>
    %cst_117 = arith.constant dense<0xFF800000> : vector<2x8xf32>
    %296 = vector.multi_reduction <maximumf>, %295, %cst_117 [2] : vector<2x8x8xf32> to vector<2x8xf32>
    %297 = vector.shape_cast %296 : vector<2x8xf32> to vector<2x8x1xf32>
    %298 = vector.broadcast %297 : vector<2x8x1xf32> to vector<2x8x8xf32>
    %299 = arith.subf %295, %298 : vector<2x8x8xf32>
    %300 = math.exp %299 : vector<2x8x8xf32>
    %cst_118 = arith.constant dense<0.000000e+00> : vector<2x8xf32>
    %301 = vector.multi_reduction <add>, %300, %cst_118 [2] : vector<2x8x8xf32> to vector<2x8xf32>
    %302 = vector.shape_cast %301 : vector<2x8xf32> to vector<2x8x1xf32>
    %303 = tpu.reciprocal %302 {approx = true} : vector<2x8x1xf32> -> vector<2x8x1xf32>
    %304 = vector.broadcast %303 : vector<2x8x1xf32> to vector<2x8x8xf32>
    %305 = arith.mulf %300, %304 : vector<2x8x8xf32>
    "tpu.trace_start"() <{level = 10 : i32, message = "bnm,bmd->bnd"}> : () -> ()
    %cst_119 = arith.constant dense<0.000000e+00> : vector<2x8x4xf32>
    %306 = tpu.matmul %305, %292, %cst_119 {dimension_numbers = #tpu.dot_dimension_numbers<[2], [1], [1], [2], [0, 0, 0, 1, 1, 2], [0], [0]>} : vector<2x8x8xf32>, vector<2x8x4xf32>, vector<2x8x4xf32> -> vector<2x8x4xf32>
    "tpu.trace_stop"() : () -> ()
    %307 = vector.extract_strided_slice %238 {offsets = [0, 0, 16], sizes = [2, 8, 4], strides = [1, 1, 1]} : vector<2x8x96xf32> to vector<2x8x4xf32>
    %308 = vector.extract_strided_slice %238 {offsets = [0, 0, 48], sizes = [2, 8, 4], strides = [1, 1, 1]} : vector<2x8x96xf32> to vector<2x8x4xf32>
    %309 = vector.extract_strided_slice %238 {offsets = [0, 0, 80], sizes = [2, 8, 4], strides = [1, 1, 1]} : vector<2x8x96xf32> to vector<2x8x4xf32>
    "tpu.trace_start"() <{level = 10 : i32, message = "bnd,bmd->bnm"}> : () -> ()
    %cst_120 = arith.constant dense<0.000000e+00> : vector<2x8x8xf32>
    %310 = tpu.matmul %307, %308, %cst_120 {dimension_numbers = #tpu.dot_dimension_numbers<[2], [2], [1], [1], [0, 0, 0, 1, 1, 1], [0], [0]>} : vector<2x8x4xf32>, vector<2x8x4xf32>, vector<2x8x8xf32> -> vector<2x8x8xf32>
    "tpu.trace_stop"() : () -> ()
    %cst_121 = arith.constant 5.000000e-01 : f32
    %311 = vector.broadcast %cst_121 : f32 to vector<2x8x8xf32>
    %312 = arith.mulf %310, %311 : vector<2x8x8xf32>
    %cst_122 = arith.constant dense<0xFF800000> : vector<2x8xf32>
    %313 = vector.multi_reduction <maximumf>, %312, %cst_122 [2] : vector<2x8x8xf32> to vector<2x8xf32>
    %314 = vector.shape_cast %313 : vector<2x8xf32> to vector<2x8x1xf32>
    %315 = vector.broadcast %314 : vector<2x8x1xf32> to vector<2x8x8xf32>
    %316 = arith.subf %312, %315 : vector<2x8x8xf32>
    %317 = math.exp %316 : vector<2x8x8xf32>
    %cst_123 = arith.constant dense<0.000000e+00> : vector<2x8xf32>
    %318 = vector.multi_reduction <add>, %317, %cst_123 [2] : vector<2x8x8xf32> to vector<2x8xf32>
    %319 = vector.shape_cast %318 : vector<2x8xf32> to vector<2x8x1xf32>
    %320 = tpu.reciprocal %319 {approx = true} : vector<2x8x1xf32> -> vector<2x8x1xf32>
    %321 = vector.broadcast %320 : vector<2x8x1xf32> to vector<2x8x8xf32>
    %322 = arith.mulf %317, %321 : vector<2x8x8xf32>
    "tpu.trace_start"() <{level = 10 : i32, message = "bnm,bmd->bnd"}> : () -> ()
    %cst_124 = arith.constant dense<0.000000e+00> : vector<2x8x4xf32>
    %323 = tpu.matmul %322, %309, %cst_124 {dimension_numbers = #tpu.dot_dimension_numbers<[2], [1], [1], [2], [0, 0, 0, 1, 1, 2], [0], [0]>} : vector<2x8x8xf32>, vector<2x8x4xf32>, vector<2x8x4xf32> -> vector<2x8x4xf32>
    "tpu.trace_stop"() : () -> ()
    %324 = vector.extract_strided_slice %238 {offsets = [0, 0, 20], sizes = [2, 8, 4], strides = [1, 1, 1]} : vector<2x8x96xf32> to vector<2x8x4xf32>
    %325 = vector.extract_strided_slice %238 {offsets = [0, 0, 52], sizes = [2, 8, 4], strides = [1, 1, 1]} : vector<2x8x96xf32> to vector<2x8x4xf32>
    %326 = vector.extract_strided_slice %238 {offsets = [0, 0, 84], sizes = [2, 8, 4], strides = [1, 1, 1]} : vector<2x8x96xf32> to vector<2x8x4xf32>
    "tpu.trace_start"() <{level = 10 : i32, message = "bnd,bmd->bnm"}> : () -> ()
    %cst_125 = arith.constant dense<0.000000e+00> : vector<2x8x8xf32>
    %327 = tpu.matmul %324, %325, %cst_125 {dimension_numbers = #tpu.dot_dimension_numbers<[2], [2], [1], [1], [0, 0, 0, 1, 1, 1], [0], [0]>} : vector<2x8x4xf32>, vector<2x8x4xf32>, vector<2x8x8xf32> -> vector<2x8x8xf32>
    "tpu.trace_stop"() : () -> ()
    %cst_126 = arith.constant 5.000000e-01 : f32
    %328 = vector.broadcast %cst_126 : f32 to vector<2x8x8xf32>
    %329 = arith.mulf %327, %328 : vector<2x8x8xf32>
    %cst_127 = arith.constant dense<0xFF800000> : vector<2x8xf32>
    %330 = vector.multi_reduction <maximumf>, %329, %cst_127 [2] : vector<2x8x8xf32> to vector<2x8xf32>
    %331 = vector.shape_cast %330 : vector<2x8xf32> to vector<2x8x1xf32>
    %332 = vector.broadcast %331 : vector<2x8x1xf32> to vector<2x8x8xf32>
    %333 = arith.subf %329, %332 : vector<2x8x8xf32>
    %334 = math.exp %333 : vector<2x8x8xf32>
    %cst_128 = arith.constant dense<0.000000e+00> : vector<2x8xf32>
    %335 = vector.multi_reduction <add>, %334, %cst_128 [2] : vector<2x8x8xf32> to vector<2x8xf32>
    %336 = vector.shape_cast %335 : vector<2x8xf32> to vector<2x8x1xf32>
    %337 = tpu.reciprocal %336 {approx = true} : vector<2x8x1xf32> -> vector<2x8x1xf32>
    %338 = vector.broadcast %337 : vector<2x8x1xf32> to vector<2x8x8xf32>
    %339 = arith.mulf %334, %338 : vector<2x8x8xf32>
    "tpu.trace_start"() <{level = 10 : i32, message = "bnm,bmd->bnd"}> : () -> ()
    %cst_129 = arith.constant dense<0.000000e+00> : vector<2x8x4xf32>
    %340 = tpu.matmul %339, %326, %cst_129 {dimension_numbers = #tpu.dot_dimension_numbers<[2], [1], [1], [2], [0, 0, 0, 1, 1, 2], [0], [0]>} : vector<2x8x8xf32>, vector<2x8x4xf32>, vector<2x8x4xf32> -> vector<2x8x4xf32>
    "tpu.trace_stop"() : () -> ()
    %341 = vector.extract_strided_slice %238 {offsets = [0, 0, 24], sizes = [2, 8, 4], strides = [1, 1, 1]} : vector<2x8x96xf32> to vector<2x8x4xf32>
    %342 = vector.extract_strided_slice %238 {offsets = [0, 0, 56], sizes = [2, 8, 4], strides = [1, 1, 1]} : vector<2x8x96xf32> to vector<2x8x4xf32>
    %343 = vector.extract_strided_slice %238 {offsets = [0, 0, 88], sizes = [2, 8, 4], strides = [1, 1, 1]} : vector<2x8x96xf32> to vector<2x8x4xf32>
    "tpu.trace_start"() <{level = 10 : i32, message = "bnd,bmd->bnm"}> : () -> ()
    %cst_130 = arith.constant dense<0.000000e+00> : vector<2x8x8xf32>
    %344 = tpu.matmul %341, %342, %cst_130 {dimension_numbers = #tpu.dot_dimension_numbers<[2], [2], [1], [1], [0, 0, 0, 1, 1, 1], [0], [0]>} : vector<2x8x4xf32>, vector<2x8x4xf32>, vector<2x8x8xf32> -> vector<2x8x8xf32>
    "tpu.trace_stop"() : () -> ()
    %cst_131 = arith.constant 5.000000e-01 : f32
    %345 = vector.broadcast %cst_131 : f32 to vector<2x8x8xf32>
    %346 = arith.mulf %344, %345 : vector<2x8x8xf32>
    %cst_132 = arith.constant dense<0xFF800000> : vector<2x8xf32>
    %347 = vector.multi_reduction <maximumf>, %346, %cst_132 [2] : vector<2x8x8xf32> to vector<2x8xf32>
    %348 = vector.shape_cast %347 : vector<2x8xf32> to vector<2x8x1xf32>
    %349 = vector.broadcast %348 : vector<2x8x1xf32> to vector<2x8x8xf32>
    %350 = arith.subf %346, %349 : vector<2x8x8xf32>
    %351 = math.exp %350 : vector<2x8x8xf32>
    %cst_133 = arith.constant dense<0.000000e+00> : vector<2x8xf32>
    %352 = vector.multi_reduction <add>, %351, %cst_133 [2] : vector<2x8x8xf32> to vector<2x8xf32>
    %353 = vector.shape_cast %352 : vector<2x8xf32> to vector<2x8x1xf32>
    %354 = tpu.reciprocal %353 {approx = true} : vector<2x8x1xf32> -> vector<2x8x1xf32>
    %355 = vector.broadcast %354 : vector<2x8x1xf32> to vector<2x8x8xf32>
    %356 = arith.mulf %351, %355 : vector<2x8x8xf32>
    "tpu.trace_start"() <{level = 10 : i32, message = "bnm,bmd->bnd"}> : () -> ()
    %cst_134 = arith.constant dense<0.000000e+00> : vector<2x8x4xf32>
    %357 = tpu.matmul %356, %343, %cst_134 {dimension_numbers = #tpu.dot_dimension_numbers<[2], [1], [1], [2], [0, 0, 0, 1, 1, 2], [0], [0]>} : vector<2x8x8xf32>, vector<2x8x4xf32>, vector<2x8x4xf32> -> vector<2x8x4xf32>
    "tpu.trace_stop"() : () -> ()
    %358 = vector.extract_strided_slice %238 {offsets = [0, 0, 28], sizes = [2, 8, 4], strides = [1, 1, 1]} : vector<2x8x96xf32> to vector<2x8x4xf32>
    %359 = vector.extract_strided_slice %238 {offsets = [0, 0, 60], sizes = [2, 8, 4], strides = [1, 1, 1]} : vector<2x8x96xf32> to vector<2x8x4xf32>
    %360 = vector.extract_strided_slice %238 {offsets = [0, 0, 92], sizes = [2, 8, 4], strides = [1, 1, 1]} : vector<2x8x96xf32> to vector<2x8x4xf32>
    "tpu.trace_start"() <{level = 10 : i32, message = "bnd,bmd->bnm"}> : () -> ()
    %cst_135 = arith.constant dense<0.000000e+00> : vector<2x8x8xf32>
    %361 = tpu.matmul %358, %359, %cst_135 {dimension_numbers = #tpu.dot_dimension_numbers<[2], [2], [1], [1], [0, 0, 0, 1, 1, 1], [0], [0]>} : vector<2x8x4xf32>, vector<2x8x4xf32>, vector<2x8x8xf32> -> vector<2x8x8xf32>
    "tpu.trace_stop"() : () -> ()
    %cst_136 = arith.constant 5.000000e-01 : f32
    %362 = vector.broadcast %cst_136 : f32 to vector<2x8x8xf32>
    %363 = arith.mulf %361, %362 : vector<2x8x8xf32>
    %cst_137 = arith.constant dense<0xFF800000> : vector<2x8xf32>
    %364 = vector.multi_reduction <maximumf>, %363, %cst_137 [2] : vector<2x8x8xf32> to vector<2x8xf32>
    %365 = vector.shape_cast %364 : vector<2x8xf32> to vector<2x8x1xf32>
    %366 = vector.broadcast %365 : vector<2x8x1xf32> to vector<2x8x8xf32>
    %367 = arith.subf %363, %366 : vector<2x8x8xf32>
    %368 = math.exp %367 : vector<2x8x8xf32>
    %cst_138 = arith.constant dense<0.000000e+00> : vector<2x8xf32>
    %369 = vector.multi_reduction <add>, %368, %cst_138 [2] : vector<2x8x8xf32> to vector<2x8xf32>
    %370 = vector.shape_cast %369 : vector<2x8xf32> to vector<2x8x1xf32>
    %371 = tpu.reciprocal %370 {approx = true} : vector<2x8x1xf32> -> vector<2x8x1xf32>
    %372 = vector.broadcast %371 : vector<2x8x1xf32> to vector<2x8x8xf32>
    %373 = arith.mulf %368, %372 : vector<2x8x8xf32>
    "tpu.trace_start"() <{level = 10 : i32, message = "bnm,bmd->bnd"}> : () -> ()
    %cst_139 = arith.constant dense<0.000000e+00> : vector<2x8x4xf32>
    %374 = tpu.matmul %373, %360, %cst_139 {dimension_numbers = #tpu.dot_dimension_numbers<[2], [1], [1], [2], [0, 0, 0, 1, 1, 2], [0], [0]>} : vector<2x8x8xf32>, vector<2x8x4xf32>, vector<2x8x4xf32> -> vector<2x8x4xf32>
    "tpu.trace_stop"() : () -> ()
    %375 = tpu.concatenate %255, %272, %289, %306, %323, %340, %357, %374 in 2 : vector<2x8x4xf32>, vector<2x8x4xf32>, vector<2x8x4xf32>, vector<2x8x4xf32>, vector<2x8x4xf32>, vector<2x8x4xf32>, vector<2x8x4xf32>, vector<2x8x4xf32> -> vector<2x8x32xf32>
    %376 = vector.shape_cast %375 : vector<2x8x32xf32> to vector<16x32xf32>
    %c1_140 = arith.constant 1 : index
    %c0_141 = arith.constant 0 : index
    %c0_142 = arith.constant 0 : index
    %377 = vector.load %arg6[%c1_140, %c0_141, %c0_142] : memref<2x32x32xf32, #tpu.memory_space<vmem>>, vector<1x32x32xf32>
    %378 = vector.shape_cast %377 : vector<1x32x32xf32> to vector<32x32xf32>
    %cst_143 = arith.constant dense<0.000000e+00> : vector<16x32xf32>
    %379 = tpu.matmul %376, %378, %cst_143 {dimension_numbers = #tpu.dot_dimension_numbers<[1], [0], [0], [1], [0, 0, 1, 1], [], []>} : vector<16x32xf32>, vector<32x32xf32>, vector<16x32xf32> -> vector<16x32xf32>
    %c1_144 = arith.constant 1 : index
    %c0_145 = arith.constant 0 : index
    %c0_146 = arith.constant 0 : index
    %380 = vector.load %arg7[%c1_144, %c0_145, %c0_146] : memref<2x1x32xf32, #tpu.memory_space<vmem>>, vector<1x1x32xf32>
    %381 = vector.shape_cast %380 : vector<1x1x32xf32> to vector<1x32xf32>
    %382 = vector.broadcast %381 : vector<1x32xf32> to vector<16x32xf32>
    %383 = arith.addf %379, %382 : vector<16x32xf32>
    %384 = arith.addf %230, %383 : vector<16x32xf32>
    %c1_147 = arith.constant 1 : index
    %c0_148 = arith.constant 0 : index
    %c0_149 = arith.constant 0 : index
    %385 = vector.load %arg8[%c1_147, %c0_148, %c0_149] : memref<2x1x32xf32, #tpu.memory_space<vmem>>, vector<1x1x32xf32>
    %386 = vector.shape_cast %385 : vector<1x1x32xf32> to vector<1x32xf32>
    %c1_150 = arith.constant 1 : index
    %c0_151 = arith.constant 0 : index
    %c0_152 = arith.constant 0 : index
    %387 = vector.load %arg9[%c1_150, %c0_151, %c0_152] : memref<2x1x32xf32, #tpu.memory_space<vmem>>, vector<1x1x32xf32>
    %388 = vector.shape_cast %387 : vector<1x1x32xf32> to vector<1x32xf32>
    %cst_153 = arith.constant dense<0.000000e+00> : vector<16xf32>
    %389 = vector.multi_reduction <add>, %384, %cst_153 [1] : vector<16x32xf32> to vector<16xf32>
    %390 = vector.shape_cast %389 : vector<16xf32> to vector<16x1xf32>
    %cst_154 = arith.constant 3.200000e+01 : f32
    %391 = vector.broadcast %cst_154 : f32 to vector<16x1xf32>
    %392 = arith.divf %390, %391 : vector<16x1xf32>
    %393 = vector.broadcast %392 : vector<16x1xf32> to vector<16x32xf32>
    %394 = arith.subf %384, %393 : vector<16x32xf32>
    %395 = arith.mulf %394, %394 : vector<16x32xf32>
    %cst_155 = arith.constant dense<0.000000e+00> : vector<16xf32>
    %396 = vector.multi_reduction <add>, %395, %cst_155 [1] : vector<16x32xf32> to vector<16xf32>
    %397 = vector.shape_cast %396 : vector<16xf32> to vector<16x1xf32>
    %cst_156 = arith.constant 3.200000e+01 : f32
    %398 = vector.broadcast %cst_156 : f32 to vector<16x1xf32>
    %399 = arith.divf %397, %398 : vector<16x1xf32>
    %400 = vector.broadcast %392 : vector<16x1xf32> to vector<16x32xf32>
    %401 = arith.subf %384, %400 : vector<16x32xf32>
    %cst_157 = arith.constant 9.99999974E-6 : f32
    %402 = vector.broadcast %cst_157 : f32 to vector<16x1xf32>
    %403 = arith.addf %399, %402 : vector<16x1xf32>
    %404 = math.rsqrt %403 : vector<16x1xf32>
    %405 = vector.broadcast %404 : vector<16x1xf32> to vector<16x32xf32>
    %406 = arith.mulf %401, %405 : vector<16x32xf32>
    %407 = vector.broadcast %386 : vector<1x32xf32> to vector<16x32xf32>
    %408 = arith.mulf %406, %407 : vector<16x32xf32>
    %409 = vector.broadcast %388 : vector<1x32xf32> to vector<16x32xf32>
    %410 = arith.addf %408, %409 : vector<16x32xf32>
    %c1_158 = arith.constant 1 : index
    %c0_159 = arith.constant 0 : index
    %c0_160 = arith.constant 0 : index
    %411 = vector.load %arg10[%c1_158, %c0_159, %c0_160] : memref<2x32x128xf32, #tpu.memory_space<vmem>>, vector<1x32x128xf32>
    %412 = vector.shape_cast %411 : vector<1x32x128xf32> to vector<32x128xf32>
    %cst_161 = arith.constant dense<0.000000e+00> : vector<16x128xf32>
    %413 = tpu.matmul %410, %412, %cst_161 {dimension_numbers = #tpu.dot_dimension_numbers<[1], [0], [0], [1], [0, 0, 1, 1], [], []>} : vector<16x32xf32>, vector<32x128xf32>, vector<16x128xf32> -> vector<16x128xf32>
    %c1_162 = arith.constant 1 : index
    %c0_163 = arith.constant 0 : index
    %c0_164 = arith.constant 0 : index
    %414 = vector.load %arg11[%c1_162, %c0_163, %c0_164] : memref<2x1x128xf32, #tpu.memory_space<vmem>>, vector<1x1x128xf32>
    %415 = vector.shape_cast %414 : vector<1x1x128xf32> to vector<1x128xf32>
    %416 = vector.broadcast %415 : vector<1x128xf32> to vector<16x128xf32>
    %417 = arith.addf %413, %416 : vector<16x128xf32>
    %cst_165 = arith.constant 0.000000e+00 : f32
    %418 = vector.broadcast %cst_165 : f32 to vector<16x128xf32>
    %419 = arith.maximumf %417, %418 : vector<16x128xf32>
    %c1_166 = arith.constant 1 : index
    %c0_167 = arith.constant 0 : index
    %c0_168 = arith.constant 0 : index
    %420 = vector.load %arg12[%c1_166, %c0_167, %c0_168] : memref<2x128x32xf32, #tpu.memory_space<vmem>>, vector<1x128x32xf32>
    %421 = vector.shape_cast %420 : vector<1x128x32xf32> to vector<128x32xf32>
    %cst_169 = arith.constant dense<0.000000e+00> : vector<16x32xf32>
    %422 = tpu.matmul %419, %421, %cst_169 {dimension_numbers = #tpu.dot_dimension_numbers<[1], [0], [0], [1], [0, 0, 1, 1], [], []>} : vector<16x128xf32>, vector<128x32xf32>, vector<16x32xf32> -> vector<16x32xf32>
    %c1_170 = arith.constant 1 : index
    %c0_171 = arith.constant 0 : index
    %c0_172 = arith.constant 0 : index
    %423 = vector.load %arg13[%c1_170, %c0_171, %c0_172] : memref<2x1x32xf32, #tpu.memory_space<vmem>>, vector<1x1x32xf32>
    %424 = vector.shape_cast %423 : vector<1x1x32xf32> to vector<1x32xf32>
    %425 = vector.broadcast %424 : vector<1x32xf32> to vector<16x32xf32>
    %426 = arith.addf %422, %425 : vector<16x32xf32>
    %427 = arith.addf %410, %426 : vector<16x32xf32>
    %c1_173 = arith.constant 1 : index
    %c0_174 = arith.constant 0 : index
    %c0_175 = arith.constant 0 : index
    %428 = vector.load %arg14[%c1_173, %c0_174, %c0_175] : memref<2x1x32xf32, #tpu.memory_space<vmem>>, vector<1x1x32xf32>
    %429 = vector.shape_cast %428 : vector<1x1x32xf32> to vector<1x32xf32>
    %c1_176 = arith.constant 1 : index
    %c0_177 = arith.constant 0 : index
    %c0_178 = arith.constant 0 : index
    %430 = vector.load %arg15[%c1_176, %c0_177, %c0_178] : memref<2x1x32xf32, #tpu.memory_space<vmem>>, vector<1x1x32xf32>
    %431 = vector.shape_cast %430 : vector<1x1x32xf32> to vector<1x32xf32>
    %cst_179 = arith.constant dense<0.000000e+00> : vector<16xf32>
    %432 = vector.multi_reduction <add>, %427, %cst_179 [1] : vector<16x32xf32> to vector<16xf32>
    %433 = vector.shape_cast %432 : vector<16xf32> to vector<16x1xf32>
    %cst_180 = arith.constant 3.200000e+01 : f32
    %434 = vector.broadcast %cst_180 : f32 to vector<16x1xf32>
    %435 = arith.divf %433, %434 : vector<16x1xf32>
    %436 = vector.broadcast %435 : vector<16x1xf32> to vector<16x32xf32>
    %437 = arith.subf %427, %436 : vector<16x32xf32>
    %438 = arith.mulf %437, %437 : vector<16x32xf32>
    %cst_181 = arith.constant dense<0.000000e+00> : vector<16xf32>
    %439 = vector.multi_reduction <add>, %438, %cst_181 [1] : vector<16x32xf32> to vector<16xf32>
    %440 = vector.shape_cast %439 : vector<16xf32> to vector<16x1xf32>
    %cst_182 = arith.constant 3.200000e+01 : f32
    %441 = vector.broadcast %cst_182 : f32 to vector<16x1xf32>
    %442 = arith.divf %440, %441 : vector<16x1xf32>
    %443 = vector.broadcast %435 : vector<16x1xf32> to vector<16x32xf32>
    %444 = arith.subf %427, %443 : vector<16x32xf32>
    %cst_183 = arith.constant 9.99999974E-6 : f32
    %445 = vector.broadcast %cst_183 : f32 to vector<16x1xf32>
    %446 = arith.addf %442, %445 : vector<16x1xf32>
    %447 = math.rsqrt %446 : vector<16x1xf32>
    %448 = vector.broadcast %447 : vector<16x1xf32> to vector<16x32xf32>
    %449 = arith.mulf %444, %448 : vector<16x32xf32>
    %450 = vector.broadcast %429 : vector<1x32xf32> to vector<16x32xf32>
    %451 = arith.mulf %449, %450 : vector<16x32xf32>
    %452 = vector.broadcast %431 : vector<1x32xf32> to vector<16x32xf32>
    %453 = arith.addf %451, %452 : vector<16x32xf32>
    %c0_184 = arith.constant 0 : index
    %c0_185 = arith.constant 0 : index
    %454 = vector.load %arg3[%c0_184, %c0_185] : memref<2x4xf32, #tpu.memory_space<vmem>>, vector<2x4xf32>
    %c0_186 = arith.constant 0 : index
    %c0_187 = arith.constant 0 : index
    %455 = vector.load %arg16[%c0_186, %c0_187] : memref<1x4xf32, #tpu.memory_space<vmem>>, vector<1x4xf32>
    %c0_188 = arith.constant 0 : index
    %c0_189 = arith.constant 0 : index
    %456 = vector.load %arg17[%c0_188, %c0_189] : memref<1x4xf32, #tpu.memory_space<vmem>>, vector<1x4xf32>
    %cst_190 = arith.constant dense<0.000000e+00> : vector<2xf32>
    %457 = vector.multi_reduction <add>, %454, %cst_190 [1] : vector<2x4xf32> to vector<2xf32>
    %458 = vector.shape_cast %457 : vector<2xf32> to vector<2x1xf32>
    %cst_191 = arith.constant 4.000000e+00 : f32
    %459 = vector.broadcast %cst_191 : f32 to vector<2x1xf32>
    %460 = arith.divf %458, %459 : vector<2x1xf32>
    %461 = vector.broadcast %460 : vector<2x1xf32> to vector<2x4xf32>
    %462 = arith.subf %454, %461 : vector<2x4xf32>
    %463 = arith.mulf %462, %462 : vector<2x4xf32>
    %cst_192 = arith.constant dense<0.000000e+00> : vector<2xf32>
    %464 = vector.multi_reduction <add>, %463, %cst_192 [1] : vector<2x4xf32> to vector<2xf32>
    %465 = vector.shape_cast %464 : vector<2xf32> to vector<2x1xf32>
    %cst_193 = arith.constant 4.000000e+00 : f32
    %466 = vector.broadcast %cst_193 : f32 to vector<2x1xf32>
    %467 = arith.divf %465, %466 : vector<2x1xf32>
    %468 = vector.broadcast %460 : vector<2x1xf32> to vector<2x4xf32>
    %469 = arith.subf %454, %468 : vector<2x4xf32>
    %cst_194 = arith.constant 9.99999974E-6 : f32
    %470 = vector.broadcast %cst_194 : f32 to vector<2x1xf32>
    %471 = arith.addf %467, %470 : vector<2x1xf32>
    %472 = math.rsqrt %471 : vector<2x1xf32>
    %473 = vector.broadcast %472 : vector<2x1xf32> to vector<2x4xf32>
    %474 = arith.mulf %469, %473 : vector<2x4xf32>
    %475 = vector.broadcast %455 : vector<1x4xf32> to vector<2x4xf32>
    %476 = arith.mulf %474, %475 : vector<2x4xf32>
    %477 = vector.broadcast %456 : vector<1x4xf32> to vector<2x4xf32>
    %478 = arith.addf %476, %477 : vector<2x4xf32>
    %479 = vector.shape_cast %453 : vector<16x32xf32> to vector<2x8x32xf32>
    %c0_195 = arith.constant 0 : index
    %c0_196 = arith.constant 0 : index
    %480 = vector.load %arg19[%c0_195, %c0_196] : memref<4x64xf32, #tpu.memory_space<vmem>>, vector<4x64xf32>
    %cst_197 = arith.constant dense<0.000000e+00> : vector<2x64xf32>
    %481 = tpu.matmul %478, %480, %cst_197 {dimension_numbers = #tpu.dot_dimension_numbers<[1], [0], [0], [1], [0, 0, 1, 1], [], []>} : vector<2x4xf32>, vector<4x64xf32>, vector<2x64xf32> -> vector<2x64xf32>
    %482 = vector.extract_strided_slice %479 {offsets = [0, 0, 0], sizes = [2, 1, 32], strides = [1, 1, 1]} : vector<2x8x32xf32> to vector<2x1x32xf32>
    %483 = vector.shape_cast %482 : vector<2x1x32xf32> to vector<2x32xf32>
    %c0_198 = arith.constant 0 : index
    %c0_199 = arith.constant 0 : index
    %c0_200 = arith.constant 0 : index
    %484 = vector.load %arg18[%c0_198, %c0_199, %c0_200] : memref<8x32x64xf32, #tpu.memory_space<vmem>>, vector<1x32x64xf32>
    %485 = vector.shape_cast %484 : vector<1x32x64xf32> to vector<32x64xf32>
    %cst_201 = arith.constant dense<0.000000e+00> : vector<2x64xf32>
    %486 = tpu.matmul %483, %485, %cst_201 {dimension_numbers = #tpu.dot_dimension_numbers<[1], [0], [0], [1], [0, 0, 1, 1], [], []>} : vector<2x32xf32>, vector<32x64xf32>, vector<2x64xf32> -> vector<2x64xf32>
    %487 = arith.addf %481, %486 : vector<2x64xf32>
    %488 = vector.extract_strided_slice %479 {offsets = [0, 1, 0], sizes = [2, 1, 32], strides = [1, 1, 1]} : vector<2x8x32xf32> to vector<2x1x32xf32>
    %489 = vector.shape_cast %488 : vector<2x1x32xf32> to vector<2x32xf32>
    %c1_202 = arith.constant 1 : index
    %c0_203 = arith.constant 0 : index
    %c0_204 = arith.constant 0 : index
    %490 = vector.load %arg18[%c1_202, %c0_203, %c0_204] : memref<8x32x64xf32, #tpu.memory_space<vmem>>, vector<1x32x64xf32>
    %491 = vector.shape_cast %490 : vector<1x32x64xf32> to vector<32x64xf32>
    %cst_205 = arith.constant dense<0.000000e+00> : vector<2x64xf32>
    %492 = tpu.matmul %489, %491, %cst_205 {dimension_numbers = #tpu.dot_dimension_numbers<[1], [0], [0], [1], [0, 0, 1, 1], [], []>} : vector<2x32xf32>, vector<32x64xf32>, vector<2x64xf32> -> vector<2x64xf32>
    %493 = arith.addf %487, %492 : vector<2x64xf32>
    %494 = vector.extract_strided_slice %479 {offsets = [0, 2, 0], sizes = [2, 1, 32], strides = [1, 1, 1]} : vector<2x8x32xf32> to vector<2x1x32xf32>
    %495 = vector.shape_cast %494 : vector<2x1x32xf32> to vector<2x32xf32>
    %c2 = arith.constant 2 : index
    %c0_206 = arith.constant 0 : index
    %c0_207 = arith.constant 0 : index
    %496 = vector.load %arg18[%c2, %c0_206, %c0_207] : memref<8x32x64xf32, #tpu.memory_space<vmem>>, vector<1x32x64xf32>
    %497 = vector.shape_cast %496 : vector<1x32x64xf32> to vector<32x64xf32>
    %cst_208 = arith.constant dense<0.000000e+00> : vector<2x64xf32>
    %498 = tpu.matmul %495, %497, %cst_208 {dimension_numbers = #tpu.dot_dimension_numbers<[1], [0], [0], [1], [0, 0, 1, 1], [], []>} : vector<2x32xf32>, vector<32x64xf32>, vector<2x64xf32> -> vector<2x64xf32>
    %499 = arith.addf %493, %498 : vector<2x64xf32>
    %500 = vector.extract_strided_slice %479 {offsets = [0, 3, 0], sizes = [2, 1, 32], strides = [1, 1, 1]} : vector<2x8x32xf32> to vector<2x1x32xf32>
    %501 = vector.shape_cast %500 : vector<2x1x32xf32> to vector<2x32xf32>
    %c3 = arith.constant 3 : index
    %c0_209 = arith.constant 0 : index
    %c0_210 = arith.constant 0 : index
    %502 = vector.load %arg18[%c3, %c0_209, %c0_210] : memref<8x32x64xf32, #tpu.memory_space<vmem>>, vector<1x32x64xf32>
    %503 = vector.shape_cast %502 : vector<1x32x64xf32> to vector<32x64xf32>
    %cst_211 = arith.constant dense<0.000000e+00> : vector<2x64xf32>
    %504 = tpu.matmul %501, %503, %cst_211 {dimension_numbers = #tpu.dot_dimension_numbers<[1], [0], [0], [1], [0, 0, 1, 1], [], []>} : vector<2x32xf32>, vector<32x64xf32>, vector<2x64xf32> -> vector<2x64xf32>
    %505 = arith.addf %499, %504 : vector<2x64xf32>
    %506 = vector.extract_strided_slice %479 {offsets = [0, 4, 0], sizes = [2, 1, 32], strides = [1, 1, 1]} : vector<2x8x32xf32> to vector<2x1x32xf32>
    %507 = vector.shape_cast %506 : vector<2x1x32xf32> to vector<2x32xf32>
    %c4 = arith.constant 4 : index
    %c0_212 = arith.constant 0 : index
    %c0_213 = arith.constant 0 : index
    %508 = vector.load %arg18[%c4, %c0_212, %c0_213] : memref<8x32x64xf32, #tpu.memory_space<vmem>>, vector<1x32x64xf32>
    %509 = vector.shape_cast %508 : vector<1x32x64xf32> to vector<32x64xf32>
    %cst_214 = arith.constant dense<0.000000e+00> : vector<2x64xf32>
    %510 = tpu.matmul %507, %509, %cst_214 {dimension_numbers = #tpu.dot_dimension_numbers<[1], [0], [0], [1], [0, 0, 1, 1], [], []>} : vector<2x32xf32>, vector<32x64xf32>, vector<2x64xf32> -> vector<2x64xf32>
    %511 = arith.addf %505, %510 : vector<2x64xf32>
    %512 = vector.extract_strided_slice %479 {offsets = [0, 5, 0], sizes = [2, 1, 32], strides = [1, 1, 1]} : vector<2x8x32xf32> to vector<2x1x32xf32>
    %513 = vector.shape_cast %512 : vector<2x1x32xf32> to vector<2x32xf32>
    %c5 = arith.constant 5 : index
    %c0_215 = arith.constant 0 : index
    %c0_216 = arith.constant 0 : index
    %514 = vector.load %arg18[%c5, %c0_215, %c0_216] : memref<8x32x64xf32, #tpu.memory_space<vmem>>, vector<1x32x64xf32>
    %515 = vector.shape_cast %514 : vector<1x32x64xf32> to vector<32x64xf32>
    %cst_217 = arith.constant dense<0.000000e+00> : vector<2x64xf32>
    %516 = tpu.matmul %513, %515, %cst_217 {dimension_numbers = #tpu.dot_dimension_numbers<[1], [0], [0], [1], [0, 0, 1, 1], [], []>} : vector<2x32xf32>, vector<32x64xf32>, vector<2x64xf32> -> vector<2x64xf32>
    %517 = arith.addf %511, %516 : vector<2x64xf32>
    %518 = vector.extract_strided_slice %479 {offsets = [0, 6, 0], sizes = [2, 1, 32], strides = [1, 1, 1]} : vector<2x8x32xf32> to vector<2x1x32xf32>
    %519 = vector.shape_cast %518 : vector<2x1x32xf32> to vector<2x32xf32>
    %c6 = arith.constant 6 : index
    %c0_218 = arith.constant 0 : index
    %c0_219 = arith.constant 0 : index
    %520 = vector.load %arg18[%c6, %c0_218, %c0_219] : memref<8x32x64xf32, #tpu.memory_space<vmem>>, vector<1x32x64xf32>
    %521 = vector.shape_cast %520 : vector<1x32x64xf32> to vector<32x64xf32>
    %cst_220 = arith.constant dense<0.000000e+00> : vector<2x64xf32>
    %522 = tpu.matmul %519, %521, %cst_220 {dimension_numbers = #tpu.dot_dimension_numbers<[1], [0], [0], [1], [0, 0, 1, 1], [], []>} : vector<2x32xf32>, vector<32x64xf32>, vector<2x64xf32> -> vector<2x64xf32>
    %523 = arith.addf %517, %522 : vector<2x64xf32>
    %524 = vector.extract_strided_slice %479 {offsets = [0, 7, 0], sizes = [2, 1, 32], strides = [1, 1, 1]} : vector<2x8x32xf32> to vector<2x1x32xf32>
    %525 = vector.shape_cast %524 : vector<2x1x32xf32> to vector<2x32xf32>
    %c7 = arith.constant 7 : index
    %c0_221 = arith.constant 0 : index
    %c0_222 = arith.constant 0 : index
    %526 = vector.load %arg18[%c7, %c0_221, %c0_222] : memref<8x32x64xf32, #tpu.memory_space<vmem>>, vector<1x32x64xf32>
    %527 = vector.shape_cast %526 : vector<1x32x64xf32> to vector<32x64xf32>
    %cst_223 = arith.constant dense<0.000000e+00> : vector<2x64xf32>
    %528 = tpu.matmul %525, %527, %cst_223 {dimension_numbers = #tpu.dot_dimension_numbers<[1], [0], [0], [1], [0, 0, 1, 1], [], []>} : vector<2x32xf32>, vector<32x64xf32>, vector<2x64xf32> -> vector<2x64xf32>
    %529 = arith.addf %523, %528 : vector<2x64xf32>
    %c0_224 = arith.constant 0 : index
    %c0_225 = arith.constant 0 : index
    %530 = vector.load %arg20[%c0_224, %c0_225] : memref<1x64xf32, #tpu.memory_space<vmem>>, vector<1x64xf32>
    %531 = vector.broadcast %530 : vector<1x64xf32> to vector<2x64xf32>
    %532 = arith.addf %529, %531 : vector<2x64xf32>
    %cst_226 = arith.constant 0.000000e+00 : f32
    %533 = vector.broadcast %cst_226 : f32 to vector<2x64xf32>
    %534 = arith.maximumf %532, %533 : vector<2x64xf32>
    %c0_227 = arith.constant 0 : index
    %c0_228 = arith.constant 0 : index
    %535 = vector.load %arg21[%c0_227, %c0_228] : memref<64x2xf32, #tpu.memory_space<vmem>>, vector<64x2xf32>
    %cst_229 = arith.constant dense<0.000000e+00> : vector<2x2xf32>
    %536 = tpu.matmul %534, %535, %cst_229 {dimension_numbers = #tpu.dot_dimension_numbers<[1], [0], [0], [1], [0, 0, 1, 1], [], []>} : vector<2x64xf32>, vector<64x2xf32>, vector<2x2xf32> -> vector<2x2xf32>
    %c0_230 = arith.constant 0 : index
    %c0_231 = arith.constant 0 : index
    %537 = vector.load %arg22[%c0_230, %c0_231] : memref<1x2xf32, #tpu.memory_space<vmem>>, vector<1x2xf32>
    %538 = vector.broadcast %537 : vector<1x2xf32> to vector<2x2xf32>
    %539 = arith.addf %536, %538 : vector<2x2xf32>
    %c0_232 = arith.constant 0 : index
    %c0_233 = arith.constant 0 : index
    %540 = vector.load %arg23[%c0_232, %c0_233] : memref<2x2xf32, #tpu.memory_space<vmem>>, vector<2x2xf32>
    tpu.vector_store %arg23[%c0_232, %c0_233], %539 {strides = array<i32>} : memref<2x2xf32, #tpu.memory_space<vmem>>, vector<2x2xf32>,
    return
  }
  func.func @transform_0(%arg0: i32) -> (i32, i32) {
    %c0_i32 = arith.constant 0 : i32
    %c0_i32_0 = arith.constant 0 : i32
    %c0_i32_1 = arith.constant 0 : i32
    return %c0_i32, %c0_i32_0 : i32, i32
  }
  func.func @transform_1(%arg0: i32) -> (i32, i32) {
    %c0_i32 = arith.constant 0 : i32
    %c0_i32_0 = arith.constant 0 : i32
    %c0_i32_1 = arith.constant 0 : i32
    return %c0_i32, %c0_i32_0 : i32, i32
  }
  func.func @transform_2(%arg0: i32) -> (i32, i32) {
    %c0_i32 = arith.constant 0 : i32
    %c0_i32_0 = arith.constant 0 : i32
    %c0_i32_1 = arith.constant 0 : i32
    return %c0_i32, %c0_i32_0 : i32, i32
  }
  func.func @transform_3(%arg0: i32) -> (i32, i32, i32) {
    %c0_i32 = arith.constant 0 : i32
    %c0_i32_0 = arith.constant 0 : i32
    %c0_i32_1 = arith.constant 0 : i32
    %c0_i32_2 = arith.constant 0 : i32
    return %c0_i32, %c0_i32_0, %c0_i32_1 : i32, i32, i32
  }
  func.func @transform_4(%arg0: i32) -> (i32, i32, i32) {
    %c0_i32 = arith.constant 0 : i32
    %c0_i32_0 = arith.constant 0 : i32
    %c0_i32_1 = arith.constant 0 : i32
    %c0_i32_2 = arith.constant 0 : i32
    return %c0_i32, %c0_i32_0, %c0_i32_1 : i32, i32, i32
  }
  func.func @transform_5(%arg0: i32) -> (i32, i32, i32) {
    %c0_i32 = arith.constant 0 : i32
    %c0_i32_0 = arith.constant 0 : i32
    %c0_i32_1 = arith.constant 0 : i32
    %c0_i32_2 = arith.constant 0 : i32
    return %c0_i32, %c0_i32_0, %c0_i32_1 : i32, i32, i32
  }
  func.func @transform_6(%arg0: i32) -> (i32, i32, i32) {
    %c0_i32 = arith.constant 0 : i32
    %c0_i32_0 = arith.constant 0 : i32
    %c0_i32_1 = arith.constant 0 : i32
    %c0_i32_2 = arith.constant 0 : i32
    return %c0_i32, %c0_i32_0, %c0_i32_1 : i32, i32, i32
  }
  func.func @transform_7(%arg0: i32) -> (i32, i32, i32) {
    %c0_i32 = arith.constant 0 : i32
    %c0_i32_0 = arith.constant 0 : i32
    %c0_i32_1 = arith.constant 0 : i32
    %c0_i32_2 = arith.constant 0 : i32
    return %c0_i32, %c0_i32_0, %c0_i32_1 : i32, i32, i32
  }
  func.func @transform_8(%arg0: i32) -> (i32, i32, i32) {
    %c0_i32 = arith.constant 0 : i32
    %c0_i32_0 = arith.constant 0 : i32
    %c0_i32_1 = arith.constant 0 : i32
    %c0_i32_2 = arith.constant 0 : i32
    return %c0_i32, %c0_i32_0, %c0_i32_1 : i32, i32, i32
  }
  func.func @transform_9(%arg0: i32) -> (i32, i32, i32) {
    %c0_i32 = arith.constant 0 : i32
    %c0_i32_0 = arith.constant 0 : i32
    %c0_i32_1 = arith.constant 0 : i32
    %c0_i32_2 = arith.constant 0 : i32
    return %c0_i32, %c0_i32_0, %c0_i32_1 : i32, i32, i32
  }
  func.func @transform_10(%arg0: i32) -> (i32, i32, i32) {
    %c0_i32 = arith.constant 0 : i32
    %c0_i32_0 = arith.constant 0 : i32
    %c0_i32_1 = arith.constant 0 : i32
    %c0_i32_2 = arith.constant 0 : i32
    return %c0_i32, %c0_i32_0, %c0_i32_1 : i32, i32, i32
  }
  func.func @transform_11(%arg0: i32) -> (i32, i32, i32) {
    %c0_i32 = arith.constant 0 : i32
    %c0_i32_0 = arith.constant 0 : i32
    %c0_i32_1 = arith.constant 0 : i32
    %c0_i32_2 = arith.constant 0 : i32
    return %c0_i32, %c0_i32_0, %c0_i32_1 : i32, i32, i32
  }
  func.func @transform_12(%arg0: i32) -> (i32, i32, i32) {
    %c0_i32 = arith.constant 0 : i32
    %c0_i32_0 = arith.constant 0 : i32
    %c0_i32_1 = arith.constant 0 : i32
    %c0_i32_2 = arith.constant 0 : i32
    return %c0_i32, %c0_i32_0, %c0_i32_1 : i32, i32, i32
  }
  func.func @transform_13(%arg0: i32) -> (i32, i32, i32) {
    %c0_i32 = arith.constant 0 : i32
    %c0_i32_0 = arith.constant 0 : i32
    %c0_i32_1 = arith.constant 0 : i32
    %c0_i32_2 = arith.constant 0 : i32
    return %c0_i32, %c0_i32_0, %c0_i32_1 : i32, i32, i32
  }
  func.func @transform_14(%arg0: i32) -> (i32, i32, i32) {
    %c0_i32 = arith.constant 0 : i32
    %c0_i32_0 = arith.constant 0 : i32
    %c0_i32_1 = arith.constant 0 : i32
    %c0_i32_2 = arith.constant 0 : i32
    return %c0_i32, %c0_i32_0, %c0_i32_1 : i32, i32, i32
  }
  func.func @transform_15(%arg0: i32) -> (i32, i32) {
    %c0_i32 = arith.constant 0 : i32
    %c0_i32_0 = arith.constant 0 : i32
    %c0_i32_1 = arith.constant 0 : i32
    return %c0_i32, %c0_i32_0 : i32, i32
  }
  func.func @transform_16(%arg0: i32) -> (i32, i32) {
    %c0_i32 = arith.constant 0 : i32
    %c0_i32_0 = arith.constant 0 : i32
    %c0_i32_1 = arith.constant 0 : i32
    return %c0_i32, %c0_i32_0 : i32, i32
  }
  func.func @transform_17(%arg0: i32) -> (i32, i32, i32) {
    %c0_i32 = arith.constant 0 : i32
    %c0_i32_0 = arith.constant 0 : i32
    %c0_i32_1 = arith.constant 0 : i32
    %c0_i32_2 = arith.constant 0 : i32
    return %c0_i32, %c0_i32_0, %c0_i32_1 : i32, i32, i32
  }
  func.func @transform_18(%arg0: i32) -> (i32, i32) {
    %c0_i32 = arith.constant 0 : i32
    %c0_i32_0 = arith.constant 0 : i32
    %c0_i32_1 = arith.constant 0 : i32
    return %c0_i32, %c0_i32_0 : i32, i32
  }
  func.func @transform_19(%arg0: i32) -> (i32, i32) {
    %c0_i32 = arith.constant 0 : i32
    %c0_i32_0 = arith.constant 0 : i32
    %c0_i32_1 = arith.constant 0 : i32
    return %c0_i32, %c0_i32_0 : i32, i32
  }
  func.func @transform_20(%arg0: i32) -> (i32, i32) {
    %c0_i32 = arith.constant 0 : i32
    %c0_i32_0 = arith.constant 0 : i32
    %c0_i32_1 = arith.constant 0 : i32
    return %c0_i32, %c0_i32_0 : i32, i32
  }
  func.func @transform_21(%arg0: i32) -> (i32, i32) {
    %c0_i32 = arith.constant 0 : i32
    %c0_i32_0 = arith.constant 0 : i32
    %c0_i32_1 = arith.constant 0 : i32
    return %c0_i32, %c0_i32_0 : i32, i32
  }
  func.func @transform_22(%arg0: i32) -> (i32, i32) {
    %c0_i32 = arith.constant 0 : i32
    %c0_i32_0 = arith.constant 0 : i32
    %c0_i32_1 = arith.constant 0 : i32
    return %c0_i32, %c0_i32_0 : i32, i32
  }
}

</mosaic_0001>

<llo_original>
// kernel: tab_transformer_forward.1
$region0: #{tab_transformer_forward.1}
  #allocation0 [shape = 'u32[]', space=smem, size = 0x4, offset = 0x4, fixed_abs, tag = 'smem constant byte address 0x4 - core index']
  #allocation1 [shape = 'u32[144,128]{1,0:T(1,128)}', space=vmem, size = 0x12000, scoped, tag = 'internal scratch']
  %s0 = inlined_call_operand.vmem [shape: s32[16,1], index: 0, kind: input, shape index: {}]
  %s1 = inlined_call_operand.vmem [shape: f32[100,32], index: 1, kind: input, shape index: {}]
  %s2 = inlined_call_operand.vmem [shape: f32[2,4], index: 2, kind: input, shape index: {}]
  %s3 = inlined_call_operand.vmem [shape: f32[2,32,96], index: 3, kind: input, shape index: {}]
  %s4 = inlined_call_operand.vmem [shape: f32[2,1,96], index: 4, kind: input, shape index: {}]
  %s5 = inlined_call_operand.vmem [shape: f32[2,32,32], index: 5, kind: input, shape index: {}]
  %s6 = inlined_call_operand.vmem [shape: f32[2,1,32], index: 6, kind: input, shape index: {}]
  %s7 = inlined_call_operand.vmem [shape: f32[2,1,32], index: 7, kind: input, shape index: {}]
  %s8 = inlined_call_operand.vmem [shape: f32[2,1,32], index: 8, kind: input, shape index: {}]
  %s9 = inlined_call_operand.vmem [shape: f32[2,32,128], index: 9, kind: input, shape index: {}]
  %s10 = inlined_call_operand.vmem [shape: f32[2,1,128], index: 10, kind: input, shape index: {}]
  %s11 = inlined_call_operand.vmem [shape: f32[2,128,32], index: 11, kind: input, shape index: {}]
  %s12 = inlined_call_operand.vmem [shape: f32[2,1,32], index: 12, kind: input, shape index: {}]
  %s13 = inlined_call_operand.vmem [shape: f32[2,1,32], index: 13, kind: input, shape index: {}]
  %s14 = inlined_call_operand.vmem [shape: f32[2,1,32], index: 14, kind: input, shape index: {}]
  %s15 = inlined_call_operand.vmem [shape: f32[1,4], index: 15, kind: input, shape index: {}]
  %s16 = inlined_call_operand.vmem [shape: f32[1,4], index: 16, kind: input, shape index: {}]
  %s17 = inlined_call_operand.vmem [shape: f32[8,32,64], index: 17, kind: input, shape index: {}]
  %s18 = inlined_call_operand.vmem [shape: f32[4,64], index: 18, kind: input, shape index: {}]
  %s19 = inlined_call_operand.vmem [shape: f32[1,64], index: 19, kind: input, shape index: {}]
  %s20 = inlined_call_operand.vmem [shape: f32[64,2], index: 20, kind: input, shape index: {}]
  %s21 = inlined_call_operand.vmem [shape: f32[1,2], index: 21, kind: input, shape index: {}]
  %s22 = inlined_call_operand.hbm [shape: f32[2,2], index: 22, kind: output, shape index: {}]
  %s23 = sld [smem:[#allocation0]]
  $region98: #{tab_transformer_forward.1} parent=0
    _
  %s25 = ssub.s32 1, %s23
  %s26 = scalar_select 0, %s25, %s23
  $region1: #{tab_transformer_forward.1} parent=0
    #allocation2 [shape = 'u8[1024]{0}', space=vmem, size = 0x400, scoped, tag = 'output window, operand 0, single buffered']
    #allocation3 [shape = 's32[1]{0}', space=sflag, size = 0x4, scoped, tag = 'scoped memory for tab_transformer_forward.1']
    %27 = vsyncpa [#allocation3], 0
    // Predicated region
    $region2: #{tab_transformer_forward.1} parent=1 // pred_check
      _
    $region3: #{tab_transformer_forward.1} parent=1 // pred_check_branch
      %29 = sbr.rel (0) target = $region5
    $region4: #{tab_transformer_forward.1} parent=1 // pred_region
      _
    $region5: #{tab_transformer_forward.1} parent=1 // pred_fallthru
      _
    // Predicated region
    $region6: #{tab_transformer_forward.1} parent=1 // pred_check
      _
    $region7: #{tab_transformer_forward.1} parent=1 // pred_check_branch
      %31 = sbr.rel (0) target = $region9
    $region8: #{tab_transformer_forward.1} parent=1 // pred_region
      _
    $region9: #{tab_transformer_forward.1} parent=1 // pred_fallthru
      _
    // Predicated region
    $region10: #{tab_transformer_forward.1} parent=1 // pred_check
      _
    $region11: #{tab_transformer_forward.1} parent=1 // pred_check_branch
      %33 = sbr.rel (0) target = $region13
    $region12: #{tab_transformer_forward.1} parent=1 // pred_region
      _
    $region13: #{tab_transformer_forward.1} parent=1 // pred_fallthru
      _
    // Predicated region
    $region14: #{tab_transformer_forward.1} parent=1 // pred_check
      _
    $region15: #{tab_transformer_forward.1} parent=1 // pred_check_branch
      %35 = sbr.rel (0) target = $region17
    $region16: #{tab_transformer_forward.1} parent=1 // pred_region
      _
    $region17: #{tab_transformer_forward.1} parent=1 // pred_fallthru
      _
    // Predicated region
    $region18: #{tab_transformer_forward.1} parent=1 // pred_check
      _
    $region19: #{tab_transformer_forward.1} parent=1 // pred_check_branch
      %37 = sbr.rel (0) target = $region21
    $region20: #{tab_transformer_forward.1} parent=1 // pred_region
      _
    $region21: #{tab_transformer_forward.1} parent=1 // pred_fallthru
      _
    // Predicated region
    $region22: #{tab_transformer_forward.1} parent=1 // pred_check
      _
    $region23: #{tab_transformer_forward.1} parent=1 // pred_check_branch
      %39 = sbr.rel (0) target = $region25
    $region24: #{tab_transformer_forward.1} parent=1 // pred_region
      _
    $region25: #{tab_transformer_forward.1} parent=1 // pred_fallthru
      _
    // Predicated region
    $region26: #{tab_transformer_forward.1} parent=1 // pred_check
      _
    $region27: #{tab_transformer_forward.1} parent=1 // pred_check_branch
      %41 = sbr.rel (0) target = $region29
    $region28: #{tab_transformer_forward.1} parent=1 // pred_region
      _
    $region29: #{tab_transformer_forward.1} parent=1 // pred_fallthru
      _
    // Predicated region
    $region30: #{tab_transformer_forward.1} parent=1 // pred_check
      _
    $region31: #{tab_transformer_forward.1} parent=1 // pred_check_branch
      %43 = sbr.rel (0) target = $region33
    $region32: #{tab_transformer_forward.1} parent=1 // pred_region
      _
    $region33: #{tab_transformer_forward.1} parent=1 // pred_fallthru
      _
    // Predicated region
    $region34: #{tab_transformer_forward.1} parent=1 // pred_check
      _
    $region35: #{tab_transformer_forward.1} parent=1 // pred_check_branch
      %45 = sbr.rel (0) target = $region37
    $region36: #{tab_transformer_forward.1} parent=1 // pred_region
      _
    $region37: #{tab_transformer_forward.1} parent=1 // pred_fallthru
      _
    // Predicated region
    $region38: #{tab_transformer_forward.1} parent=1 // pred_check
      _
    $region39: #{tab_transformer_forward.1} parent=1 // pred_check_branch
      %47 = sbr.rel (0) target = $region41
    $region40: #{tab_transformer_forward.1} parent=1 // pred_region
      _
    $region41: #{tab_transformer_forward.1} parent=1 // pred_fallthru
      _
    // Predicated region
    $region42: #{tab_transformer_forward.1} parent=1 // pred_check
      _
    $region43: #{tab_transformer_forward.1} parent=1 // pred_check_branch
      %49 = sbr.rel (0) target = $region45
    $region44: #{tab_transformer_forward.1} parent=1 // pred_region
      _
    $region45: #{tab_transformer_forward.1} parent=1 // pred_fallthru
      _
    // Predicated region
    $region46: #{tab_transformer_forward.1} parent=1 // pred_check
      _
    $region47: #{tab_transformer_forward.1} parent=1 // pred_check_branch
      %51 = sbr.rel (0) target = $region49
    $region48: #{tab_transformer_forward.1} parent=1 // pred_region
      _
    $region49: #{tab_transformer_forward.1} parent=1 // pred_fallthru
      _
    // Predicated region
    $region50: #{tab_transformer_forward.1} parent=1 // pred_check
      _
    $region51: #{tab_transformer_forward.1} parent=1 // pred_check_branch
      %53 = sbr.rel (0) target = $region53
    $region52: #{tab_transformer_forward.1} parent=1 // pred_region
      _
    $region53: #{tab_transformer_forward.1} parent=1 // pred_fallthru
      _
    // Predicated region
    $region54: #{tab_transformer_forward.1} parent=1 // pred_check
      _
    $region55: #{tab_transformer_forward.1} parent=1 // pred_check_branch
      %55 = sbr.rel (0) target = $region57
    $region56: #{tab_transformer_forward.1} parent=1 // pred_region
      _
    $region57: #{tab_transformer_forward.1} parent=1 // pred_fallthru
      _
    // Predicated region
    $region58: #{tab_transformer_forward.1} parent=1 // pred_check
      _
    $region59: #{tab_transformer_forward.1} parent=1 // pred_check_branch
      %57 = sbr.rel (0) target = $region61
    $region60: #{tab_transformer_forward.1} parent=1 // pred_region
      _
    $region61: #{tab_transformer_forward.1} parent=1 // pred_fallthru
      _
    // Predicated region
    $region62: #{tab_transformer_forward.1} parent=1 // pred_check
      _
    $region63: #{tab_transformer_forward.1} parent=1 // pred_check_branch
      %59 = sbr.rel (0) target = $region65
    $region64: #{tab_transformer_forward.1} parent=1 // pred_region
      _
    $region65: #{tab_transformer_forward.1} parent=1 // pred_fallthru
      _
    // Predicated region
    $region66: #{tab_transformer_forward.1} parent=1 // pred_check
      _
    $region67: #{tab_transformer_forward.1} parent=1 // pred_check_branch
      %61 = sbr.rel (0) target = $region69
    $region68: #{tab_transformer_forward.1} parent=1 // pred_region
      _
    $region69: #{tab_transformer_forward.1} parent=1 // pred_fallthru
      _
    // Predicated region
    $region70: #{tab_transformer_forward.1} parent=1 // pred_check
      _
    $region71: #{tab_transformer_forward.1} parent=1 // pred_check_branch
      %63 = sbr.rel (0) target = $region73
    $region72: #{tab_transformer_forward.1} parent=1 // pred_region
      _
    $region73: #{tab_transformer_forward.1} parent=1 // pred_fallthru
      _
    // Predicated region
    $region74: #{tab_transformer_forward.1} parent=1 // pred_check
      _
    $region75: #{tab_transformer_forward.1} parent=1 // pred_check_branch
      %65 = sbr.rel (0) target = $region77
    $region76: #{tab_transformer_forward.1} parent=1 // pred_region
      _
    $region77: #{tab_transformer_forward.1} parent=1 // pred_fallthru
      _
    // Predicated region
    $region78: #{tab_transformer_forward.1} parent=1 // pred_check
      _
    $region79: #{tab_transformer_forward.1} parent=1 // pred_check_branch
      %67 = sbr.rel (0) target = $region81
    $region80: #{tab_transformer_forward.1} parent=1 // pred_region
      _
    $region81: #{tab_transformer_forward.1} parent=1 // pred_fallthru
      _
    // Predicated region
    $region82: #{tab_transformer_forward.1} parent=1 // pred_check
      _
    $region83: #{tab_transformer_forward.1} parent=1 // pred_check_branch
      %69 = sbr.rel (0) target = $region85
    $region84: #{tab_transformer_forward.1} parent=1 // pred_region
      _
    $region85: #{tab_transformer_forward.1} parent=1 // pred_fallthru
      _
    // Predicated region
    $region86: #{tab_transformer_forward.1} parent=1 // pred_check
      _
    $region87: #{tab_transformer_forward.1} parent=1 // pred_check_branch
      %71 = sbr.rel (0) target = $region89
    $region88: #{tab_transformer_forward.1} parent=1 // pred_region
      _
    $region89: #{tab_transformer_forward.1} parent=1 // pred_fallthru
      _
    %v72 = vld [vmem:[%s0] sm:$0xff]
    %v73 = vld [vmem:[%s0 + $0x8] sm:$0xff]
    %v74 = vlaneseq
    %v75 = vand.u32 %v74, 127
    %76 = vset.pattern.permute.xlu0 0
    %77 = vperm.xlu0 %76, %v72
    %v78 = vpop.permute.xlu0 %77
    %79 = vset.pattern.permute.xlu0 0
    %80 = vperm.xlu0 %79, %v73
    %v81 = vpop.permute.xlu0 %80
    %vm82 = vcmp.eq.s32.totalorder %v78, %v75
    %vm83 = vcmp.eq.s32.totalorder %v81, %v75
    %v84 = vsel %vm82, 1, 0
    %v85 = vsel %vm83, 1, 0
    %v86 = vcvt.s32.f32 %v84
    %v87 = vcvt.s32.f32 %v85
    %v88 = vld [vmem:[%s1] sm:$0xff]
    %v89 = vld [vmem:[%s1 + $0x8] sm:$0xff]
    %v90 = vld [vmem:[%s1 + $0x10] sm:$0xff]
    %v91 = vld [vmem:[%s1 + $0x18] sm:$0xff]
    %v92 = vld [vmem:[%s1 + $0x20] sm:$0xff]
    %v93 = vld [vmem:[%s1 + $0x28] sm:$0xff]
    %v94 = vld [vmem:[%s1 + $0x30] sm:$0xff]
    %v95 = vld [vmem:[%s1 + $0x38] sm:$0xff]
    %v96 = vld [vmem:[%s1 + $0x40] sm:$0xff]
    %v97 = vld [vmem:[%s1 + $0x48] sm:$0xff]
    %v98 = vld [vmem:[%s1 + $0x50] sm:$0xff]
    %v99 = vld [vmem:[%s1 + $0x58] sm:$0xff]
    %v100 = vld [vmem:[%s1 + $0x60] sm:$0xf]
    %vm101 = vcmask 818176
    %v103 = vsel %vm101, %v86, 0
    %v106 = vsel %vm101, %v87, 0
    %vm108 = vcmask 1043456
    %v110 = vsel %vm108, %v100, 0
    %112 = vmatprep.subr.mxu0 0.0
    %113 = vmatpush1.msra.mxu0 0.0
    %114 = vmatprep.subr.mxu0 0.0
    %115 = vmatpush1.msra.mxu0 0.0
    %116 = vmatprep.subr.mxu0 0.0
    %117 = vmatpush1.msra.mxu0 0.0
    %118 = vmatprep.subr.mxu0 0.0
    %119 = vmatpush1.msra.mxu0 %v110
    %120 = vmatprep.subr.mxu0 0.0
    %121 = vmatpush1.msra.mxu0 %v99
    %122 = vmatprep.subr.mxu0 0.0
    %123 = vmatpush1.msra.mxu0 %v98
    %124 = vmatprep.subr.mxu0 0.0
    %125 = vmatpush1.msra.mxu0 %v97
    %126 = vmatprep.subr.mxu0 0.0
    %127 = vmatpush1.msra.mxu0 %v96
    %128 = vmatprep.subr.mxu0 0.0
    %129 = vmatpush1.msra.mxu0 %v95
    %130 = vmatprep.subr.mxu0 0.0
    %131 = vmatpush1.msra.mxu0 %v94
    %132 = vmatprep.subr.mxu0 0.0
    %133 = vmatpush1.msra.mxu0 %v93
    %134 = vmatprep.subr.mxu0 0.0
    %135 = vmatpush1.msra.mxu0 %v92
    %136 = vmatprep.subr.mxu0 0.0
    %137 = vmatpush1.msra.mxu0 %v91
    %138 = vmatprep.subr.mxu0 0.0
    %139 = vmatpush1.msra.mxu0 %v90
    %140 = vmatprep.subr.mxu0 0.0
    %141 = vmatpush1.msra.mxu0 %v89
    %142 = vmatprep.subr.mxu0 0.0
    %143 = vmatpush1.msra.mxu0 %v88
    %144 = vmatprep.subr.mxu0 0.0
    %145 = vmatpush2.msra.mxu0 0.0
    %146 = vmatprep.subr.mxu0 0.0
    %147 = vmatpush2.msra.mxu0 0.0
    %148 = vmatprep.subr.mxu0 0.0
    %149 = vmatpush2.msra.mxu0 0.0
    %150 = vmatprep.subr.mxu0 0.0
    %151 = vmatpush2.msra.mxu0 0.0
    %152 = vmatprep.subr.mxu0 0.0
    %153 = vmatpush2.msra.mxu0 0.0
    %154 = vmatprep.subr.mxu0 0.0
    %155 = vmatpush2.msra.mxu0 0.0
    %156 = vmatprep.subr.mxu0 0.0
    %157 = vmatpush2.msra.mxu0 0.0
    %158 = vmatprep.subr.mxu0 0.0
    %159 = vmatpush2.msra.mxu0 0.0
    %160 = vmatprep.subr.mxu0 0.0
    %161 = vmatpush2.msra.mxu0 0.0
    %162 = vmatprep.subr.mxu0 0.0
    %163 = vmatpush2.msra.mxu0 0.0
    %164 = vmatprep.subr.mxu0 0.0
    %165 = vmatpush2.msra.mxu0 0.0
    %166 = vmatprep.subr.mxu0 0.0
    %167 = vmatpush2.msra.mxu0 0.0
    %168 = vmatprep.subr.mxu0 0.0
    %169 = vmatpush2.msra.mxu0 0.0
    %170 = vmatprep.subr.mxu0 0.0
    %171 = vmatpush2.msra.mxu0 0.0
    %172 = vmatprep.subr.mxu0 0.0
    %173 = vmatpush2.msra.mxu0 0.0
    %174 = vmatprep.subr.mxu0 0.0
    %175 = vmatpush2.msra.mxu0 0.0
    %176 = vmatprep.mubr.f32.mxu0 0.0
    %177 = vmatmul.mubr.f32.gmra.mxu0 %v103
    %v178 = vpop.f32.mrf.mxu0
    %v179 = vadd.f32 0.0, %v178
    %v180 = vpop.f32.mrf.mxu0
    %181 = vmatprep.mubr.f32.mxu0 0.0
    %182 = vmatmul.mubr.f32.gmra.mxu0 %v106
    %v183 = vpop.f32.mrf.mxu0
    %v184 = vadd.f32 0.0, %v183
    %v185 = vpop.f32.mrf.mxu0
    %186 = vdwg.mxu0
    %v187 = vld [vmem:[%s3] sm:$0xff]
    %v188 = vld [vmem:[%s3 + $0x8] sm:$0xff]
    %v189 = vld [vmem:[%s3 + $0x10] sm:$0xff]
    %v190 = vld [vmem:[%s3 + $0x18] sm:$0xff]
    %v191 = vld [vmem:[%s4] sm:$0x1]
    %v193 = vlaneseq
    %v194 = vshrl.u32 %v193, 7
    %v195 = vsub.s32 0, %v194
    %v196 = vrot.slane %v191, %v195
    %vm198 = vcmask 261120
    %v200 = vsel %vm198, %v179, 0
    %v203 = vsel %vm198, %v184, 0
    %205 = vmatprep.subr.mxu0 0.0
    %206 = vmatpush1.msra.mxu0 0.0
    %207 = vmatprep.subr.mxu0 0.0
    %208 = vmatpush1.msra.mxu0 0.0
    %209 = vmatprep.subr.mxu0 0.0
    %210 = vmatpush1.msra.mxu0 0.0
    %211 = vmatprep.subr.mxu0 0.0
    %212 = vmatpush1.msra.mxu0 0.0
    %213 = vmatprep.subr.mxu0 0.0
    %214 = vmatpush1.msra.mxu0 0.0
    %215 = vmatprep.subr.mxu0 0.0
    %216 = vmatpush1.msra.mxu0 0.0
    %217 = vmatprep.subr.mxu0 0.0
    %218 = vmatpush1.msra.mxu0 0.0
    %219 = vmatprep.subr.mxu0 0.0
    %220 = vmatpush1.msra.mxu0 0.0
    %221 = vmatprep.subr.mxu0 0.0
    %222 = vmatpush1.msra.mxu0 0.0
    %223 = vmatprep.subr.mxu0 0.0
    %224 = vmatpush1.msra.mxu0 0.0
    %225 = vmatprep.subr.mxu0 0.0
    %226 = vmatpush1.msra.mxu0 0.0
    %227 = vmatprep.subr.mxu0 0.0
    %228 = vmatpush1.msra.mxu0 0.0
    %229 = vmatprep.subr.mxu0 0.0
    %230 = vmatpush1.msra.mxu0 %v190
    %231 = vmatprep.subr.mxu0 0.0
    %232 = vmatpush1.msra.mxu0 %v189
    %233 = vmatprep.subr.mxu0 0.0
    %234 = vmatpush1.msra.mxu0 %v188
    %235 = vmatprep.subr.mxu0 0.0
    %236 = vmatpush1.msra.mxu0 %v187
    %237 = vmatprep.subr.mxu0 0.0
    %238 = vmatpush2.msra.mxu0 0.0
    %239 = vmatprep.subr.mxu0 0.0
    %240 = vmatpush2.msra.mxu0 0.0
    %241 = vmatprep.subr.mxu0 0.0
    %242 = vmatpush2.msra.mxu0 0.0
    %243 = vmatprep.subr.mxu0 0.0
    %244 = vmatpush2.msra.mxu0 0.0
    %245 = vmatprep.subr.mxu0 0.0
    %246 = vmatpush2.msra.mxu0 0.0
    %247 = vmatprep.subr.mxu0 0.0
    %248 = vmatpush2.msra.mxu0 0.0
    %249 = vmatprep.subr.mxu0 0.0
    %250 = vmatpush2.msra.mxu0 0.0
    %251 = vmatprep.subr.mxu0 0.0
    %252 = vmatpush2.msra.mxu0 0.0
    %253 = vmatprep.subr.mxu0 0.0
    %254 = vmatpush2.msra.mxu0 0.0
    %255 = vmatprep.subr.mxu0 0.0
    %256 = vmatpush2.msra.mxu0 0.0
    %257 = vmatprep.subr.mxu0 0.0
    %258 = vmatpush2.msra.mxu0 0.0
    %259 = vmatprep.subr.mxu0 0.0
    %260 = vmatpush2.msra.mxu0 0.0
    %261 = vmatprep.subr.mxu0 0.0
    %262 = vmatpush2.msra.mxu0 0.0
    %263 = vmatprep.subr.mxu0 0.0
    %264 = vmatpush2.msra.mxu0 0.0
    %265 = vmatprep.subr.mxu0 0.0
    %266 = vmatpush2.msra.mxu0 0.0
    %267 = vmatprep.subr.mxu0 0.0
    %268 = vmatpush2.msra.mxu0 0.0
    %269 = vmatprep.mubr.f32.mxu0 0.0
    %270 = vmatmul.mubr.f32.gmra.mxu0 %v200
    %v271 = vpop.f32.mrf.mxu0
    %v272 = vadd.f32 %v196, %v271
    %v273 = vpop.f32.mrf.mxu0
    %274 = vmatprep.mubr.f32.mxu0 0.0
    %275 = vmatmul.mubr.f32.gmra.mxu0 %v203
    %v276 = vpop.f32.mrf.mxu0
    %v277 = vadd.f32 %v196, %v276
    %v278 = vpop.f32.mrf.mxu0
    %279 = vdwg.mxu0
    %281 = vrot.lane.b32.xlu0 %v272, 96
    %v282 = vpop.permute.xlu0 %281
    %vm283 = vcmask 31744
    %v284 = vsel %vm283, %v272, 0
    %v286 = vsel %vm283, %v282, 0
    %288 = vmatprep.subr.mxu0 0.0
    %289 = vmatpush1.xpose.msra.mxu0 0.0
    %290 = vmatprep.subr.mxu0 0.0
    %291 = vmatpush1.xpose.msra.mxu0 0.0
    %292 = vmatprep.subr.mxu0 0.0
    %293 = vmatpush1.xpose.msra.mxu0 0.0
    %294 = vmatprep.subr.mxu0 0.0
    %295 = vmatpush1.xpose.msra.mxu0 0.0
    %296 = vmatprep.subr.mxu0 0.0
    %297 = vmatpush1.xpose.msra.mxu0 0.0
    %298 = vmatprep.subr.mxu0 0.0
    %299 = vmatpush1.xpose.msra.mxu0 0.0
    %300 = vmatprep.subr.mxu0 0.0
    %301 = vmatpush1.xpose.msra.mxu0 0.0
    %302 = vmatprep.subr.mxu0 0.0
    %303 = vmatpush1.xpose.msra.mxu0 0.0
    %304 = vmatprep.subr.mxu0 0.0
    %305 = vmatpush1.xpose.msra.mxu0 0.0
    %306 = vmatprep.subr.mxu0 0.0
    %307 = vmatpush1.xpose.msra.mxu0 0.0
    %308 = vmatprep.subr.mxu0 0.0
    %309 = vmatpush1.xpose.msra.mxu0 0.0
    %310 = vmatprep.subr.mxu0 0.0
    %311 = vmatpush1.xpose.msra.mxu0 0.0
    %312 = vmatprep.subr.mxu0 0.0
    %313 = vmatpush1.xpose.msra.mxu0 0.0
    %314 = vmatprep.subr.mxu0 0.0
    %315 = vmatpush1.xpose.msra.mxu0 0.0
    %316 = vmatprep.subr.mxu0 0.0
    %317 = vmatpush1.xpose.msra.mxu0 0.0
    %318 = vmatprep.subr.mxu0 0.0
    %319 = vmatpush1.xpose.msra.mxu0 %v286
    %320 = vmatprep.subr.mxu0 0.0
    %321 = vmatpush2.xpose.msra.mxu0 0.0
    %322 = vmatprep.subr.mxu0 0.0
    %323 = vmatpush2.xpose.msra.mxu0 0.0
    %324 = vmatprep.subr.mxu0 0.0
    %325 = vmatpush2.xpose.msra.mxu0 0.0
    %326 = vmatprep.subr.mxu0 0.0
    %327 = vmatpush2.xpose.msra.mxu0 0.0
    %328 = vmatprep.subr.mxu0 0.0
    %329 = vmatpush2.xpose.msra.mxu0 0.0
    %330 = vmatprep.subr.mxu0 0.0
    %331 = vmatpush2.xpose.msra.mxu0 0.0
    %332 = vmatprep.subr.mxu0 0.0
    %333 = vmatpush2.xpose.msra.mxu0 0.0
    %334 = vmatprep.subr.mxu0 0.0
    %335 = vmatpush2.xpose.msra.mxu0 0.0
    %336 = vmatprep.subr.mxu0 0.0
    %337 = vmatpush2.xpose.msra.mxu0 0.0
    %338 = vmatprep.subr.mxu0 0.0
    %339 = vmatpush2.xpose.msra.mxu0 0.0
    %340 = vmatprep.subr.mxu0 0.0
    %341 = vmatpush2.xpose.msra.mxu0 0.0
    %342 = vmatprep.subr.mxu0 0.0
    %343 = vmatpush2.xpose.msra.mxu0 0.0
    %344 = vmatprep.subr.mxu0 0.0
    %345 = vmatpush2.xpose.msra.mxu0 0.0
    %346 = vmatprep.subr.mxu0 0.0
    %347 = vmatpush2.xpose.msra.mxu0 0.0
    %348 = vmatprep.subr.mxu0 0.0
    %349 = vmatpush2.xpose.msra.mxu0 0.0
    %350 = vmatprep.subr.mxu0 0.0
    %351 = vmatpush2.xpose.msra.mxu0 0.0
    %352 = vmatprep.mubr.f32.mxu0 0.0
    %353 = vmatmul.mubr.f32.gmra.mxu0 %v284
    %v354 = vpop.f32.mrf.mxu0
    %v355 = vadd.f32 0.0, %v354
    %v356 = vpop.f32.mrf.mxu0
    %357 = vdwg.mxu0
    %359 = vrot.lane.b32.xlu0 %v277, 96
    %v360 = vpop.permute.xlu0 %359
    %v361 = vsel %vm283, %v277, 0
    %v363 = vsel %vm283, %v360, 0
    %365 = vmatprep.subr.mxu0 0.0
    %366 = vmatpush1.xpose.msra.mxu0 0.0
    %367 = vmatprep.subr.mxu0 0.0
    %368 = vmatpush1.xpose.msra.mxu0 0.0
    %369 = vmatprep.subr.mxu0 0.0
    %370 = vmatpush1.xpose.msra.mxu0 0.0
    %371 = vmatprep.subr.mxu0 0.0
    %372 = vmatpush1.xpose.msra.mxu0 0.0
    %373 = vmatprep.subr.mxu0 0.0
    %374 = vmatpush1.xpose.msra.mxu0 0.0
    %375 = vmatprep.subr.mxu0 0.0
    %376 = vmatpush1.xpose.msra.mxu0 0.0
    %377 = vmatprep.subr.mxu0 0.0
    %378 = vmatpush1.xpose.msra.mxu0 0.0
    %379 = vmatprep.subr.mxu0 0.0
    %380 = vmatpush1.xpose.msra.mxu0 0.0
    %381 = vmatprep.subr.mxu0 0.0
    %382 = vmatpush1.xpose.msra.mxu0 0.0
    %383 = vmatprep.subr.mxu0 0.0
    %384 = vmatpush1.xpose.msra.mxu0 0.0
    %385 = vmatprep.subr.mxu0 0.0
    %386 = vmatpush1.xpose.msra.mxu0 0.0
    %387 = vmatprep.subr.mxu0 0.0
    %388 = vmatpush1.xpose.msra.mxu0 0.0
    %389 = vmatprep.subr.mxu0 0.0
    %390 = vmatpush1.xpose.msra.mxu0 0.0
    %391 = vmatprep.subr.mxu0 0.0
    %392 = vmatpush1.xpose.msra.mxu0 0.0
    %393 = vmatprep.subr.mxu0 0.0
    %394 = vmatpush1.xpose.msra.mxu0 0.0
    %395 = vmatprep.subr.mxu0 0.0
    %396 = vmatpush1.xpose.msra.mxu0 %v363
    %397 = vmatprep.subr.mxu0 0.0
    %398 = vmatpush2.xpose.msra.mxu0 0.0
    %399 = vmatprep.subr.mxu0 0.0
    %400 = vmatpush2.xpose.msra.mxu0 0.0
    %401 = vmatprep.subr.mxu0 0.0
    %402 = vmatpush2.xpose.msra.mxu0 0.0
    %403 = vmatprep.subr.mxu0 0.0
    %404 = vmatpush2.xpose.msra.mxu0 0.0
    %405 = vmatprep.subr.mxu0 0.0
    %406 = vmatpush2.xpose.msra.mxu0 0.0
    %407 = vmatprep.subr.mxu0 0.0
    %408 = vmatpush2.xpose.msra.mxu0 0.0
    %409 = vmatprep.subr.mxu0 0.0
    %410 = vmatpush2.xpose.msra.mxu0 0.0
    %411 = vmatprep.subr.mxu0 0.0
    %412 = vmatpush2.xpose.msra.mxu0 0.0
    %413 = vmatprep.subr.mxu0 0.0
    %414 = vmatpush2.xpose.msra.mxu0 0.0
    %415 = vmatprep.subr.mxu0 0.0
    %416 = vmatpush2.xpose.msra.mxu0 0.0
    %417 = vmatprep.subr.mxu0 0.0
    %418 = vmatpush2.xpose.msra.mxu0 0.0
    %419 = vmatprep.subr.mxu0 0.0
    %420 = vmatpush2.xpose.msra.mxu0 0.0
    %421 = vmatprep.subr.mxu0 0.0
    %422 = vmatpush2.xpose.msra.mxu0 0.0
    %423 = vmatprep.subr.mxu0 0.0
    %424 = vmatpush2.xpose.msra.mxu0 0.0
    %425 = vmatprep.subr.mxu0 0.0
    %426 = vmatpush2.xpose.msra.mxu0 0.0
    %427 = vmatprep.subr.mxu0 0.0
    %428 = vmatpush2.xpose.msra.mxu0 0.0
    %429 = vmatprep.mubr.f32.mxu0 0.0
    %430 = vmatmul.mubr.f32.gmra.mxu0 %v361
    %v431 = vpop.f32.mrf.mxu0
    %v432 = vadd.f32 0.0, %v431
    %v433 = vpop.f32.mrf.mxu0
    %434 = vdwg.mxu0
    %v435 = vmul.f32 %v355, 0.5
    %v436 = vmul.f32 %v432, 0.5
    %vm437 = vcmask 64512
    %v438 = vsel %vm437, %v435, -inf
    %439 = vmax.xlane.f32.xlu0 %v438
    %v440 = vpop.xlane.xlu0 %439
    %v441 = vsel %vm437, %v436, -inf
    %442 = vmax.xlane.f32.xlu0 %v441
    %v443 = vpop.xlane.xlu0 %442
    %v444 = vsub.f32 %v435, %v440
    %v445 = vsub.f32 %v436, %v443
    %v446 = vmul.f32 %v444, 1.442695
    %v447 = vpow.pop %v446
    %v448 = vmul.f32 %v445, 1.442695
    %v449 = vpow.pop %v448
    %v450 = vsel %vm437, %v447, 0.0
    %451 = vadd.xlane.f32.xlu0 %v450
    %v452 = vpop.xlane.xlu0 %451
    %v453 = vsel %vm437, %v449, 0.0
    %454 = vadd.xlane.f32.xlu0 %v453
    %v455 = vpop.xlane.xlu0 %454
    %v456 = vrcp.pop %v452
    %v457 = vrcp.pop %v455
    %v458 = vmul.f32 %v447, %v456
    %v459 = vmul.f32 %v449, %v457
    %460 = vrot.lane.b32.xlu0 %v272, 64
    %v461 = vpop.permute.xlu0 %460
    %v464 = vsel %vm437, %v458, 0
    %466 = vmatprep.subr.mxu0 0.0
    %467 = vmatpush1.msra.mxu0 0.0
    %468 = vmatprep.subr.mxu0 0.0
    %469 = vmatpush1.msra.mxu0 0.0
    %470 = vmatprep.subr.mxu0 0.0
    %471 = vmatpush1.msra.mxu0 0.0
    %472 = vmatprep.subr.mxu0 0.0
    %473 = vmatpush1.msra.mxu0 0.0
    %474 = vmatprep.subr.mxu0 0.0
    %475 = vmatpush1.msra.mxu0 0.0
    %476 = vmatprep.subr.mxu0 0.0
    %477 = vmatpush1.msra.mxu0 0.0
    %478 = vmatprep.subr.mxu0 0.0
    %479 = vmatpush1.msra.mxu0 0.0
    %480 = vmatprep.subr.mxu0 0.0
    %481 = vmatpush1.msra.mxu0 0.0
    %482 = vmatprep.subr.mxu0 0.0
    %483 = vmatpush1.msra.mxu0 0.0
    %484 = vmatprep.subr.mxu0 0.0
    %485 = vmatpush1.msra.mxu0 0.0
    %486 = vmatprep.subr.mxu0 0.0
    %487 = vmatpush1.msra.mxu0 0.0
    %488 = vmatprep.subr.mxu0 0.0
    %489 = vmatpush1.msra.mxu0 0.0
    %490 = vmatprep.subr.mxu0 0.0
    %491 = vmatpush1.msra.mxu0 0.0
    %492 = vmatprep.subr.mxu0 0.0
    %493 = vmatpush1.msra.mxu0 0.0
    %494 = vmatprep.subr.mxu0 0.0
    %495 = vmatpush1.msra.mxu0 0.0
    %496 = vmatprep.subr.mxu0 0.0
    %497 = vmatpush1.msra.mxu0 %v461
    %498 = vmatprep.subr.mxu0 0.0
    %499 = vmatpush2.msra.mxu0 0.0
    %500 = vmatprep.subr.mxu0 0.0
    %501 = vmatpush2.msra.mxu0 0.0
    %502 = vmatprep.subr.mxu0 0.0
    %503 = vmatpush2.msra.mxu0 0.0
    %504 = vmatprep.subr.mxu0 0.0
    %505 = vmatpush2.msra.mxu0 0.0
    %506 = vmatprep.subr.mxu0 0.0
    %507 = vmatpush2.msra.mxu0 0.0
    %508 = vmatprep.subr.mxu0 0.0
    %509 = vmatpush2.msra.mxu0 0.0
    %510 = vmatprep.subr.mxu0 0.0
    %511 = vmatpush2.msra.mxu0 0.0
    %512 = vmatprep.subr.mxu0 0.0
    %513 = vmatpush2.msra.mxu0 0.0
    %514 = vmatprep.subr.mxu0 0.0
    %515 = vmatpush2.msra.mxu0 0.0
    %516 = vmatprep.subr.mxu0 0.0
    %517 = vmatpush2.msra.mxu0 0.0
    %518 = vmatprep.subr.mxu0 0.0
    %519 = vmatpush2.msra.mxu0 0.0
    %520 = vmatprep.subr.mxu0 0.0
    %521 = vmatpush2.msra.mxu0 0.0
    %522 = vmatprep.subr.mxu0 0.0
    %523 = vmatpush2.msra.mxu0 0.0
    %524 = vmatprep.subr.mxu0 0.0
    %525 = vmatpush2.msra.mxu0 0.0
    %526 = vmatprep.subr.mxu0 0.0
    %527 = vmatpush2.msra.mxu0 0.0
    %528 = vmatprep.subr.mxu0 0.0
    %529 = vmatpush2.msra.mxu0 0.0
    %530 = vmatprep.mubr.f32.mxu0 0.0
    %531 = vmatmul.mubr.f32.gmra.mxu0 %v464
    %v532 = vpop.f32.mrf.mxu0
    %v533 = vadd.f32 0.0, %v532
    %v534 = vpop.f32.mrf.mxu0
    %535 = vdwg.mxu0
    %536 = vrot.lane.b32.xlu0 %v277, 64
    %v537 = vpop.permute.xlu0 %536
    %v540 = vsel %vm437, %v459, 0
    %542 = vmatprep.subr.mxu0 0.0
    %543 = vmatpush1.msra.mxu0 0.0
    %544 = vmatprep.subr.mxu0 0.0
    %545 = vmatpush1.msra.mxu0 0.0
    %546 = vmatprep.subr.mxu0 0.0
    %547 = vmatpush1.msra.mxu0 0.0
    %548 = vmatprep.subr.mxu0 0.0
    %549 = vmatpush1.msra.mxu0 0.0
    %550 = vmatprep.subr.mxu0 0.0
    %551 = vmatpush1.msra.mxu0 0.0
    %552 = vmatprep.subr.mxu0 0.0
    %553 = vmatpush1.msra.mxu0 0.0
    %554 = vmatprep.subr.mxu0 0.0
    %555 = vmatpush1.msra.mxu0 0.0
    %556 = vmatprep.subr.mxu0 0.0
    %557 = vmatpush1.msra.mxu0 0.0
    %558 = vmatprep.subr.mxu0 0.0
    %559 = vmatpush1.msra.mxu0 0.0
    %560 = vmatprep.subr.mxu0 0.0
    %561 = vmatpush1.msra.mxu0 0.0
    %562 = vmatprep.subr.mxu0 0.0
    %563 = vmatpush1.msra.mxu0 0.0
    %564 = vmatprep.subr.mxu0 0.0
    %565 = vmatpush1.msra.mxu0 0.0
    %566 = vmatprep.subr.mxu0 0.0
    %567 = vmatpush1.msra.mxu0 0.0
    %568 = vmatprep.subr.mxu0 0.0
    %569 = vmatpush1.msra.mxu0 0.0
    %570 = vmatprep.subr.mxu0 0.0
    %571 = vmatpush1.msra.mxu0 0.0
    %572 = vmatprep.subr.mxu0 0.0
    %573 = vmatpush1.msra.mxu0 %v537
    %574 = vmatprep.subr.mxu0 0.0
    %575 = vmatpush2.msra.mxu0 0.0
    %576 = vmatprep.subr.mxu0 0.0
    %577 = vmatpush2.msra.mxu0 0.0
    %578 = vmatprep.subr.mxu0 0.0
    %579 = vmatpush2.msra.mxu0 0.0
    %580 = vmatprep.subr.mxu0 0.0
    %581 = vmatpush2.msra.mxu0 0.0
    %582 = vmatprep.subr.mxu0 0.0
    %583 = vmatpush2.msra.mxu0 0.0
    %584 = vmatprep.subr.mxu0 0.0
    %585 = vmatpush2.msra.mxu0 0.0
    %586 = vmatprep.subr.mxu0 0.0
    %587 = vmatpush2.msra.mxu0 0.0
    %588 = vmatprep.subr.mxu0 0.0
    %589 = vmatpush2.msra.mxu0 0.0
    %590 = vmatprep.subr.mxu0 0.0
    %591 = vmatpush2.msra.mxu0 0.0
    %592 = vmatprep.subr.mxu0 0.0
    %593 = vmatpush2.msra.mxu0 0.0
    %594 = vmatprep.subr.mxu0 0.0
    %595 = vmatpush2.msra.mxu0 0.0
    %596 = vmatprep.subr.mxu0 0.0
    %597 = vmatpush2.msra.mxu0 0.0
    %598 = vmatprep.subr.mxu0 0.0
    %599 = vmatpush2.msra.mxu0 0.0
    %600 = vmatprep.subr.mxu0 0.0
    %601 = vmatpush2.msra.mxu0 0.0
    %602 = vmatprep.subr.mxu0 0.0
    %603 = vmatpush2.msra.mxu0 0.0
    %604 = vmatprep.subr.mxu0 0.0
    %605 = vmatpush2.msra.mxu0 0.0
    %606 = vmatprep.mubr.f32.mxu0 0.0
    %607 = vmatmul.mubr.f32.gmra.mxu0 %v540
    %v608 = vpop.f32.mrf.mxu0
    %v609 = vadd.f32 0.0, %v608
    %v610 = vpop.f32.mrf.mxu0
    %611 = vdwg.mxu0
    %612 = vrot.lane.b32.xlu0 %v272, 124
    %v613 = vpop.permute.xlu0 %612
    %614 = vrot.lane.b32.xlu0 %v272, 92
    %v615 = vpop.permute.xlu0 %614
    %v616 = vsel %vm283, %v613, 0
    %v618 = vsel %vm283, %v615, 0
    %620 = vmatprep.subr.mxu0 0.0
    %621 = vmatpush1.xpose.msra.mxu0 0.0
    %622 = vmatprep.subr.mxu0 0.0
    %623 = vmatpush1.xpose.msra.mxu0 0.0
    %624 = vmatprep.subr.mxu0 0.0
    %625 = vmatpush1.xpose.msra.mxu0 0.0
    %626 = vmatprep.subr.mxu0 0.0
    %627 = vmatpush1.xpose.msra.mxu0 0.0
    %628 = vmatprep.subr.mxu0 0.0
    %629 = vmatpush1.xpose.msra.mxu0 0.0
    %630 = vmatprep.subr.mxu0 0.0
    %631 = vmatpush1.xpose.msra.mxu0 0.0
    %632 = vmatprep.subr.mxu0 0.0
    %633 = vmatpush1.xpose.msra.mxu0 0.0
    %634 = vmatprep.subr.mxu0 0.0
    %635 = vmatpush1.xpose.msra.mxu0 0.0
    %636 = vmatprep.subr.mxu0 0.0
    %637 = vmatpush1.xpose.msra.mxu0 0.0
    %638 = vmatprep.subr.mxu0 0.0
    %639 = vmatpush1.xpose.msra.mxu0 0.0
    %640 = vmatprep.subr.mxu0 0.0
    %641 = vmatpush1.xpose.msra.mxu0 0.0
    %642 = vmatprep.subr.mxu0 0.0
    %643 = vmatpush1.xpose.msra.mxu0 0.0
    %644 = vmatprep.subr.mxu0 0.0
    %645 = vmatpush1.xpose.msra.mxu0 0.0
    %646 = vmatprep.subr.mxu0 0.0
    %647 = vmatpush1.xpose.msra.mxu0 0.0
    %648 = vmatprep.subr.mxu0 0.0
    %649 = vmatpush1.xpose.msra.mxu0 0.0
    %650 = vmatprep.subr.mxu0 0.0
    %651 = vmatpush1.xpose.msra.mxu0 %v618
    %652 = vmatprep.subr.mxu0 0.0
    %653 = vmatpush2.xpose.msra.mxu0 0.0
    %654 = vmatprep.subr.mxu0 0.0
    %655 = vmatpush2.xpose.msra.mxu0 0.0
    %656 = vmatprep.subr.mxu0 0.0
    %657 = vmatpush2.xpose.msra.mxu0 0.0
    %658 = vmatprep.subr.mxu0 0.0
    %659 = vmatpush2.xpose.msra.mxu0 0.0
    %660 = vmatprep.subr.mxu0 0.0
    %661 = vmatpush2.xpose.msra.mxu0 0.0
    %662 = vmatprep.subr.mxu0 0.0
    %663 = vmatpush2.xpose.msra.mxu0 0.0
    %664 = vmatprep.subr.mxu0 0.0
    %665 = vmatpush2.xpose.msra.mxu0 0.0
    %666 = vmatprep.subr.mxu0 0.0
    %667 = vmatpush2.xpose.msra.mxu0 0.0
    %668 = vmatprep.subr.mxu0 0.0
    %669 = vmatpush2.xpose.msra.mxu0 0.0
    %670 = vmatprep.subr.mxu0 0.0
    %671 = vmatpush2.xpose.msra.mxu0 0.0
    %672 = vmatprep.subr.mxu0 0.0
    %673 = vmatpush2.xpose.msra.mxu0 0.0
    %674 = vmatprep.subr.mxu0 0.0
    %675 = vmatpush2.xpose.msra.mxu0 0.0
    %676 = vmatprep.subr.mxu0 0.0
    %677 = vmatpush2.xpose.msra.mxu0 0.0
    %678 = vmatprep.subr.mxu0 0.0
    %679 = vmatpush2.xpose.msra.mxu0 0.0
    %680 = vmatprep.subr.mxu0 0.0
    %681 = vmatpush2.xpose.msra.mxu0 0.0
    %682 = vmatprep.subr.mxu0 0.0
    %683 = vmatpush2.xpose.msra.mxu0 0.0
    %684 = vmatprep.mubr.f32.mxu0 0.0
    %685 = vmatmul.mubr.f32.gmra.mxu0 %v616
    %v686 = vpop.f32.mrf.mxu0
    %v687 = vadd.f32 0.0, %v686
    %v688 = vpop.f32.mrf.mxu0
    %689 = vdwg.mxu0
    %690 = vrot.lane.b32.xlu0 %v277, 124
    %v691 = vpop.permute.xlu0 %690
    %692 = vrot.lane.b32.xlu0 %v277, 92
    %v693 = vpop.permute.xlu0 %692
    %v694 = vsel %vm283, %v691, 0
    %v696 = vsel %vm283, %v693, 0
    %698 = vmatprep.subr.mxu0 0.0
    %699 = vmatpush1.xpose.msra.mxu0 0.0
    %700 = vmatprep.subr.mxu0 0.0
    %701 = vmatpush1.xpose.msra.mxu0 0.0
    %702 = vmatprep.subr.mxu0 0.0
    %703 = vmatpush1.xpose.msra.mxu0 0.0
    %704 = vmatprep.subr.mxu0 0.0
    %705 = vmatpush1.xpose.msra.mxu0 0.0
    %706 = vmatprep.subr.mxu0 0.0
    %707 = vmatpush1.xpose.msra.mxu0 0.0
    %708 = vmatprep.subr.mxu0 0.0
    %709 = vmatpush1.xpose.msra.mxu0 0.0
    %710 = vmatprep.subr.mxu0 0.0
    %711 = vmatpush1.xpose.msra.mxu0 0.0
    %712 = vmatprep.subr.mxu0 0.0
    %713 = vmatpush1.xpose.msra.mxu0 0.0
    %714 = vmatprep.subr.mxu0 0.0
    %715 = vmatpush1.xpose.msra.mxu0 0.0
    %716 = vmatprep.subr.mxu0 0.0
    %717 = vmatpush1.xpose.msra.mxu0 0.0
    %718 = vmatprep.subr.mxu0 0.0
    %719 = vmatpush1.xpose.msra.mxu0 0.0
    %720 = vmatprep.subr.mxu0 0.0
    %721 = vmatpush1.xpose.msra.mxu0 0.0
    %722 = vmatprep.subr.mxu0 0.0
    %723 = vmatpush1.xpose.msra.mxu0 0.0
    %724 = vmatprep.subr.mxu0 0.0
    %725 = vmatpush1.xpose.msra.mxu0 0.0
    %726 = vmatprep.subr.mxu0 0.0
    %727 = vmatpush1.xpose.msra.mxu0 0.0
    %728 = vmatprep.subr.mxu0 0.0
    %729 = vmatpush1.xpose.msra.mxu0 %v696
    %730 = vmatprep.subr.mxu0 0.0
    %731 = vmatpush2.xpose.msra.mxu0 0.0
    %732 = vmatprep.subr.mxu0 0.0
    %733 = vmatpush2.xpose.msra.mxu0 0.0
    %734 = vmatprep.subr.mxu0 0.0
    %735 = vmatpush2.xpose.msra.mxu0 0.0
    %736 = vmatprep.subr.mxu0 0.0
    %737 = vmatpush2.xpose.msra.mxu0 0.0
    %738 = vmatprep.subr.mxu0 0.0
    %739 = vmatpush2.xpose.msra.mxu0 0.0
    %740 = vmatprep.subr.mxu0 0.0
    %741 = vmatpush2.xpose.msra.mxu0 0.0
    %742 = vmatprep.subr.mxu0 0.0
    %743 = vmatpush2.xpose.msra.mxu0 0.0
    %744 = vmatprep.subr.mxu0 0.0
    %745 = vmatpush2.xpose.msra.mxu0 0.0
    %746 = vmatprep.subr.mxu0 0.0
    %747 = vmatpush2.xpose.msra.mxu0 0.0
    %748 = vmatprep.subr.mxu0 0.0
    %749 = vmatpush2.xpose.msra.mxu0 0.0
    %750 = vmatprep.subr.mxu0 0.0
    %751 = vmatpush2.xpose.msra.mxu0 0.0
    %752 = vmatprep.subr.mxu0 0.0
    %753 = vmatpush2.xpose.msra.mxu0 0.0
    %754 = vmatprep.subr.mxu0 0.0
    %755 = vmatpush2.xpose.msra.mxu0 0.0
    %756 = vmatprep.subr.mxu0 0.0
    %757 = vmatpush2.xpose.msra.mxu0 0.0
    %758 = vmatprep.subr.mxu0 0.0
    %759 = vmatpush2.xpose.msra.mxu0 0.0
    %760 = vmatprep.subr.mxu0 0.0
    %761 = vmatpush2.xpose.msra.mxu0 0.0
    %762 = vmatprep.mubr.f32.mxu0 0.0
    %763 = vmatmul.mubr.f32.gmra.mxu0 %v694
    %v764 = vpop.f32.mrf.mxu0
    %v765 = vadd.f32 0.0, %v764
    %v766 = vpop.f32.mrf.mxu0
    %767 = vdwg.mxu0
    %v768 = vmul.f32 %v687, 0.5
    %v769 = vmul.f32 %v765, 0.5
    %v770 = vsel %vm437, %v768, -inf
    %771 = vmax.xlane.f32.xlu0 %v770
    %v772 = vpop.xlane.xlu0 %771
    %v773 = vsel %vm437, %v769, -inf
    %774 = vmax.xlane.f32.xlu0 %v773
    %v775 = vpop.xlane.xlu0 %774
    %v776 = vsub.f32 %v768, %v772
    %v777 = vsub.f32 %v769, %v775
    %v778 = vmul.f32 %v776, 1.442695
    %v779 = vpow.pop %v778
    %v780 = vmul.f32 %v777, 1.442695
    %v781 = vpow.pop %v780
    %v782 = vsel %vm437, %v779, 0.0
    %783 = vadd.xlane.f32.xlu0 %v782
    %v784 = vpop.xlane.xlu0 %783
    %v785 = vsel %vm437, %v781, 0.0
    %786 = vadd.xlane.f32.xlu0 %v785
    %v787 = vpop.xlane.xlu0 %786
    %v788 = vrcp.pop %v784
    %v789 = vrcp.pop %v787
    %v790 = vmul.f32 %v779, %v788
    %v791 = vmul.f32 %v781, %v789
    %792 = vrot.lane.b32.xlu0 %v272, 60
    %v793 = vpop.permute.xlu0 %792
    %v796 = vsel %vm437, %v790, 0
    %798 = vmatprep.subr.mxu0 0.0
    %799 = vmatpush1.msra.mxu0 0.0
    %800 = vmatprep.subr.mxu0 0.0
    %801 = vmatpush1.msra.mxu0 0.0
    %802 = vmatprep.subr.mxu0 0.0
    %803 = vmatpush1.msra.mxu0 0.0
    %804 = vmatprep.subr.mxu0 0.0
    %805 = vmatpush1.msra.mxu0 0.0
    %806 = vmatprep.subr.mxu0 0.0
    %807 = vmatpush1.msra.mxu0 0.0
    %808 = vmatprep.subr.mxu0 0.0
    %809 = vmatpush1.msra.mxu0 0.0
    %810 = vmatprep.subr.mxu0 0.0
    %811 = vmatpush1.msra.mxu0 0.0
    %812 = vmatprep.subr.mxu0 0.0
    %813 = vmatpush1.msra.mxu0 0.0
    %814 = vmatprep.subr.mxu0 0.0
    %815 = vmatpush1.msra.mxu0 0.0
    %816 = vmatprep.subr.mxu0 0.0
    %817 = vmatpush1.msra.mxu0 0.0
    %818 = vmatprep.subr.mxu0 0.0
    %819 = vmatpush1.msra.mxu0 0.0
    %820 = vmatprep.subr.mxu0 0.0
    %821 = vmatpush1.msra.mxu0 0.0
    %822 = vmatprep.subr.mxu0 0.0
    %823 = vmatpush1.msra.mxu0 0.0
    %824 = vmatprep.subr.mxu0 0.0
    %825 = vmatpush1.msra.mxu0 0.0
    %826 = vmatprep.subr.mxu0 0.0
    %827 = vmatpush1.msra.mxu0 0.0
    %828 = vmatprep.subr.mxu0 0.0
    %829 = vmatpush1.msra.mxu0 %v793
    %830 = vmatprep.subr.mxu0 0.0
    %831 = vmatpush2.msra.mxu0 0.0
    %832 = vmatprep.subr.mxu0 0.0
    %833 = vmatpush2.msra.mxu0 0.0
    %834 = vmatprep.subr.mxu0 0.0
    %835 = vmatpush2.msra.mxu0 0.0
    %836 = vmatprep.subr.mxu0 0.0
    %837 = vmatpush2.msra.mxu0 0.0
    %838 = vmatprep.subr.mxu0 0.0
    %839 = vmatpush2.msra.mxu0 0.0
    %840 = vmatprep.subr.mxu0 0.0
    %841 = vmatpush2.msra.mxu0 0.0
    %842 = vmatprep.subr.mxu0 0.0
    %843 = vmatpush2.msra.mxu0 0.0
    %844 = vmatprep.subr.mxu0 0.0
    %845 = vmatpush2.msra.mxu0 0.0
    %846 = vmatprep.subr.mxu0 0.0
    %847 = vmatpush2.msra.mxu0 0.0
    %848 = vmatprep.subr.mxu0 0.0
    %849 = vmatpush2.msra.mxu0 0.0
    %850 = vmatprep.subr.mxu0 0.0
    %851 = vmatpush2.msra.mxu0 0.0
    %852 = vmatprep.subr.mxu0 0.0
    %853 = vmatpush2.msra.mxu0 0.0
    %854 = vmatprep.subr.mxu0 0.0
    %855 = vmatpush2.msra.mxu0 0.0
    %856 = vmatprep.subr.mxu0 0.0
    %857 = vmatpush2.msra.mxu0 0.0
    %858 = vmatprep.subr.mxu0 0.0
    %859 = vmatpush2.msra.mxu0 0.0
    %860 = vmatprep.subr.mxu0 0.0
    %861 = vmatpush2.msra.mxu0 0.0
    %862 = vmatprep.mubr.f32.mxu0 0.0
    %863 = vmatmul.mubr.f32.gmra.mxu0 %v796
    %v864 = vpop.f32.mrf.mxu0
    %v865 = vadd.f32 0.0, %v864
    %v866 = vpop.f32.mrf.mxu0
    %867 = vdwg.mxu0
    %868 = vrot.lane.b32.xlu0 %v277, 60
    %v869 = vpop.permute.xlu0 %868
    %v872 = vsel %vm437, %v791, 0
    %874 = vmatprep.subr.mxu0 0.0
    %875 = vmatpush1.msra.mxu0 0.0
    %876 = vmatprep.subr.mxu0 0.0
    %877 = vmatpush1.msra.mxu0 0.0
    %878 = vmatprep.subr.mxu0 0.0
    %879 = vmatpush1.msra.mxu0 0.0
    %880 = vmatprep.subr.mxu0 0.0
    %881 = vmatpush1.msra.mxu0 0.0
    %882 = vmatprep.subr.mxu0 0.0
    %883 = vmatpush1.msra.mxu0 0.0
    %884 = vmatprep.subr.mxu0 0.0
    %885 = vmatpush1.msra.mxu0 0.0
    %886 = vmatprep.subr.mxu0 0.0
    %887 = vmatpush1.msra.mxu0 0.0
    %888 = vmatprep.subr.mxu0 0.0
    %889 = vmatpush1.msra.mxu0 0.0
    %890 = vmatprep.subr.mxu0 0.0
    %891 = vmatpush1.msra.mxu0 0.0
    %892 = vmatprep.subr.mxu0 0.0
    %893 = vmatpush1.msra.mxu0 0.0
    %894 = vmatprep.subr.mxu0 0.0
    %895 = vmatpush1.msra.mxu0 0.0
    %896 = vmatprep.subr.mxu0 0.0
    %897 = vmatpush1.msra.mxu0 0.0
    %898 = vmatprep.subr.mxu0 0.0
    %899 = vmatpush1.msra.mxu0 0.0
    %900 = vmatprep.subr.mxu0 0.0
    %901 = vmatpush1.msra.mxu0 0.0
    %902 = vmatprep.subr.mxu0 0.0
    %903 = vmatpush1.msra.mxu0 0.0
    %904 = vmatprep.subr.mxu0 0.0
    %905 = vmatpush1.msra.mxu0 %v869
    %906 = vmatprep.subr.mxu0 0.0
    %907 = vmatpush2.msra.mxu0 0.0
    %908 = vmatprep.subr.mxu0 0.0
    %909 = vmatpush2.msra.mxu0 0.0
    %910 = vmatprep.subr.mxu0 0.0
    %911 = vmatpush2.msra.mxu0 0.0
    %912 = vmatprep.subr.mxu0 0.0
    %913 = vmatpush2.msra.mxu0 0.0
    %914 = vmatprep.subr.mxu0 0.0
    %915 = vmatpush2.msra.mxu0 0.0
    %916 = vmatprep.subr.mxu0 0.0
    %917 = vmatpush2.msra.mxu0 0.0
    %918 = vmatprep.subr.mxu0 0.0
    %919 = vmatpush2.msra.mxu0 0.0
    %920 = vmatprep.subr.mxu0 0.0
    %921 = vmatpush2.msra.mxu0 0.0
    %922 = vmatprep.subr.mxu0 0.0
    %923 = vmatpush2.msra.mxu0 0.0
    %924 = vmatprep.subr.mxu0 0.0
    %925 = vmatpush2.msra.mxu0 0.0
    %926 = vmatprep.subr.mxu0 0.0
    %927 = vmatpush2.msra.mxu0 0.0
    %928 = vmatprep.subr.mxu0 0.0
    %929 = vmatpush2.msra.mxu0 0.0
    %930 = vmatprep.subr.mxu0 0.0
    %931 = vmatpush2.msra.mxu0 0.0
    %932 = vmatprep.subr.mxu0 0.0
    %933 = vmatpush2.msra.mxu0 0.0
    %934 = vmatprep.subr.mxu0 0.0
    %935 = vmatpush2.msra.mxu0 0.0
    %936 = vmatprep.subr.mxu0 0.0
    %937 = vmatpush2.msra.mxu0 0.0
    %938 = vmatprep.mubr.f32.mxu0 0.0
    %939 = vmatmul.mubr.f32.gmra.mxu0 %v872
    %v940 = vpop.f32.mrf.mxu0
    %v941 = vadd.f32 0.0, %v940
    %v942 = vpop.f32.mrf.mxu0
    %943 = vdwg.mxu0
    %944 = vrot.lane.b32.xlu0 %v272, 120
    %v945 = vpop.permute.xlu0 %944
    %946 = vrot.lane.b32.xlu0 %v272, 88
    %v947 = vpop.permute.xlu0 %946
    %v948 = vsel %vm283, %v945, 0
    %v950 = vsel %vm283, %v947, 0
    %952 = vmatprep.subr.mxu0 0.0
    %953 = vmatpush1.xpose.msra.mxu0 0.0
    %954 = vmatprep.subr.mxu0 0.0
    %955 = vmatpush1.xpose.msra.mxu0 0.0
    %956 = vmatprep.subr.mxu0 0.0
    %957 = vmatpush1.xpose.msra.mxu0 0.0
    %958 = vmatprep.subr.mxu0 0.0
    %959 = vmatpush1.xpose.msra.mxu0 0.0
    %960 = vmatprep.subr.mxu0 0.0
    %961 = vmatpush1.xpose.msra.mxu0 0.0
    %962 = vmatprep.subr.mxu0 0.0
    %963 = vmatpush1.xpose.msra.mxu0 0.0
    %964 = vmatprep.subr.mxu0 0.0
    %965 = vmatpush1.xpose.msra.mxu0 0.0
    %966 = vmatprep.subr.mxu0 0.0
    %967 = vmatpush1.xpose.msra.mxu0 0.0
    %968 = vmatprep.subr.mxu0 0.0
    %969 = vmatpush1.xpose.msra.mxu0 0.0
    %970 = vmatprep.subr.mxu0 0.0
    %971 = vmatpush1.xpose.msra.mxu0 0.0
    %972 = vmatprep.subr.mxu0 0.0
    %973 = vmatpush1.xpose.msra.mxu0 0.0
    %974 = vmatprep.subr.mxu0 0.0
    %975 = vmatpush1.xpose.msra.mxu0 0.0
    %976 = vmatprep.subr.mxu0 0.0
    %977 = vmatpush1.xpose.msra.mxu0 0.0
    %978 = vmatprep.subr.mxu0 0.0
    %979 = vmatpush1.xpose.msra.mxu0 0.0
    %980 = vmatprep.subr.mxu0 0.0
    %981 = vmatpush1.xpose.msra.mxu0 0.0
    %982 = vmatprep.subr.mxu0 0.0
    %983 = vmatpush1.xpose.msra.mxu0 %v950
    %984 = vmatprep.subr.mxu0 0.0
    %985 = vmatpush2.xpose.msra.mxu0 0.0
    %986 = vmatprep.subr.mxu0 0.0
    %987 = vmatpush2.xpose.msra.mxu0 0.0
    %988 = vmatprep.subr.mxu0 0.0
    %989 = vmatpush2.xpose.msra.mxu0 0.0
    %990 = vmatprep.subr.mxu0 0.0
    %991 = vmatpush2.xpose.msra.mxu0 0.0
    %992 = vmatprep.subr.mxu0 0.0
    %993 = vmatpush2.xpose.msra.mxu0 0.0
    %994 = vmatprep.subr.mxu0 0.0
    %995 = vmatpush2.xpose.msra.mxu0 0.0
    %996 = vmatprep.subr.mxu0 0.0
    %997 = vmatpush2.xpose.msra.mxu0 0.0
    %998 = vmatprep.subr.mxu0 0.0
    %999 = vmatpush2.xpose.msra.mxu0 0.0
    %1000 = vmatprep.subr.mxu0 0.0
    %1001 = vmatpush2.xpose.msra.mxu0 0.0
    %1002 = vmatprep.subr.mxu0 0.0
    %1003 = vmatpush2.xpose.msra.mxu0 0.0
    %1004 = vmatprep.subr.mxu0 0.0
    %1005 = vmatpush2.xpose.msra.mxu0 0.0
    %1006 = vmatprep.subr.mxu0 0.0
    %1007 = vmatpush2.xpose.msra.mxu0 0.0
    %1008 = vmatprep.subr.mxu0 0.0
    %1009 = vmatpush2.xpose.msra.mxu0 0.0
    %1010 = vmatprep.subr.mxu0 0.0
    %1011 = vmatpush2.xpose.msra.mxu0 0.0
    %1012 = vmatprep.subr.mxu0 0.0
    %1013 = vmatpush2.xpose.msra.mxu0 0.0
    %1014 = vmatprep.subr.mxu0 0.0
    %1015 = vmatpush2.xpose.msra.mxu0 0.0
    %1016 = vmatprep.mubr.f32.mxu0 0.0
    %1017 = vmatmul.mubr.f32.gmra.mxu0 %v948
    %v1018 = vpop.f32.mrf.mxu0
    %v1019 = vadd.f32 0.0, %v1018
    %v1020 = vpop.f32.mrf.mxu0
    %1021 = vdwg.mxu0
    %1022 = vrot.lane.b32.xlu0 %v277, 120
    %v1023 = vpop.permute.xlu0 %1022
    %1024 = vrot.lane.b32.xlu0 %v277, 88
    %v1025 = vpop.permute.xlu0 %1024
    %v1026 = vsel %vm283, %v1023, 0
    %v1028 = vsel %vm283, %v1025, 0
    %1030 = vmatprep.subr.mxu0 0.0
    %1031 = vmatpush1.xpose.msra.mxu0 0.0
    %1032 = vmatprep.subr.mxu0 0.0
    %1033 = vmatpush1.xpose.msra.mxu0 0.0
    %1034 = vmatprep.subr.mxu0 0.0
    %1035 = vmatpush1.xpose.msra.mxu0 0.0
    %1036 = vmatprep.subr.mxu0 0.0
    %1037 = vmatpush1.xpose.msra.mxu0 0.0
    %1038 = vmatprep.subr.mxu0 0.0
    %1039 = vmatpush1.xpose.msra.mxu0 0.0
    %1040 = vmatprep.subr.mxu0 0.0
    %1041 = vmatpush1.xpose.msra.mxu0 0.0
    %1042 = vmatprep.subr.mxu0 0.0
    %1043 = vmatpush1.xpose.msra.mxu0 0.0
    %1044 = vmatprep.subr.mxu0 0.0
    %1045 = vmatpush1.xpose.msra.mxu0 0.0
    %1046 = vmatprep.subr.mxu0 0.0
    %1047 = vmatpush1.xpose.msra.mxu0 0.0
    %1048 = vmatprep.subr.mxu0 0.0
    %1049 = vmatpush1.xpose.msra.mxu0 0.0
    %1050 = vmatprep.subr.mxu0 0.0
    %1051 = vmatpush1.xpose.msra.mxu0 0.0
    %1052 = vmatprep.subr.mxu0 0.0
    %1053 = vmatpush1.xpose.msra.mxu0 0.0
    %1054 = vmatprep.subr.mxu0 0.0
    %1055 = vmatpush1.xpose.msra.mxu0 0.0
    %1056 = vmatprep.subr.mxu0 0.0
    %1057 = vmatpush1.xpose.msra.mxu0 0.0
    %1058 = vmatprep.subr.mxu0 0.0
    %1059 = vmatpush1.xpose.msra.mxu0 0.0
    %1060 = vmatprep.subr.mxu0 0.0
    %1061 = vmatpush1.xpose.msra.mxu0 %v1028
    %1062 = vmatprep.subr.mxu0 0.0
    %1063 = vmatpush2.xpose.msra.mxu0 0.0
    %1064 = vmatprep.subr.mxu0 0.0
    %1065 = vmatpush2.xpose.msra.mxu0 0.0
    %1066 = vmatprep.subr.mxu0 0.0
    %1067 = vmatpush2.xpose.msra.mxu0 0.0
    %1068 = vmatprep.subr.mxu0 0.0
    %1069 = vmatpush2.xpose.msra.mxu0 0.0
    %1070 = vmatprep.subr.mxu0 0.0
    %1071 = vmatpush2.xpose.msra.mxu0 0.0
    %1072 = vmatprep.subr.mxu0 0.0
    %1073 = vmatpush2.xpose.msra.mxu0 0.0
    %1074 = vmatprep.subr.mxu0 0.0
    %1075 = vmatpush2.xpose.msra.mxu0 0.0
    %1076 = vmatprep.subr.mxu0 0.0
    %1077 = vmatpush2.xpose.msra.mxu0 0.0
    %1078 = vmatprep.subr.mxu0 0.0
    %1079 = vmatpush2.xpose.msra.mxu0 0.0
    %1080 = vmatprep.subr.mxu0 0.0
    %1081 = vmatpush2.xpose.msra.mxu0 0.0
    %1082 = vmatprep.subr.mxu0 0.0
    %1083 = vmatpush2.xpose.msra.mxu0 0.0
    %1084 = vmatprep.subr.mxu0 0.0
    %1085 = vmatpush2.xpose.msra.mxu0 0.0
    %1086 = vmatprep.subr.mxu0 0.0
    %1087 = vmatpush2.xpose.msra.mxu0 0.0
    %1088 = vmatprep.subr.mxu0 0.0
    %1089 = vmatpush2.xpose.msra.mxu0 0.0
    %1090 = vmatprep.subr.mxu0 0.0
    %1091 = vmatpush2.xpose.msra.mxu0 0.0
    %1092 = vmatprep.subr.mxu0 0.0
    %1093 = vmatpush2.xpose.msra.mxu0 0.0
    %1094 = vmatprep.mubr.f32.mxu0 0.0
    %1095 = vmatmul.mubr.f32.gmra.mxu0 %v1026
    %v1096 = vpop.f32.mrf.mxu0
    %v1097 = vadd.f32 0.0, %v1096
    %v1098 = vpop.f32.mrf.mxu0
    %1099 = vdwg.mxu0
    %v1100 = vmul.f32 %v1019, 0.5
    %v1101 = vmul.f32 %v1097, 0.5
    %v1102 = vsel %vm437, %v1100, -inf
    %1103 = vmax.xlane.f32.xlu0 %v1102
    %v1104 = vpop.xlane.xlu0 %1103
    %v1105 = vsel %vm437, %v1101, -inf
    %1106 = vmax.xlane.f32.xlu0 %v1105
    %v1107 = vpop.xlane.xlu0 %1106
    %v1108 = vsub.f32 %v1100, %v1104
    %v1109 = vsub.f32 %v1101, %v1107
    %v1110 = vmul.f32 %v1108, 1.442695
    %v1111 = vpow.pop %v1110
    %v1112 = vmul.f32 %v1109, 1.442695
    %v1113 = vpow.pop %v1112
    %v1114 = vsel %vm437, %v1111, 0.0
    %1115 = vadd.xlane.f32.xlu0 %v1114
    %v1116 = vpop.xlane.xlu0 %1115
    %v1117 = vsel %vm437, %v1113, 0.0
    %1118 = vadd.xlane.f32.xlu0 %v1117
    %v1119 = vpop.xlane.xlu0 %1118
    %v1120 = vrcp.pop %v1116
    %v1121 = vrcp.pop %v1119
    %v1122 = vmul.f32 %v1111, %v1120
    %v1123 = vmul.f32 %v1113, %v1121
    %1124 = vrot.lane.b32.xlu0 %v272, 56
    %v1125 = vpop.permute.xlu0 %1124
    %v1128 = vsel %vm437, %v1122, 0
    %1130 = vmatprep.subr.mxu0 0.0
    %1131 = vmatpush1.msra.mxu0 0.0
    %1132 = vmatprep.subr.mxu0 0.0
    %1133 = vmatpush1.msra.mxu0 0.0
    %1134 = vmatprep.subr.mxu0 0.0
    %1135 = vmatpush1.msra.mxu0 0.0
    %1136 = vmatprep.subr.mxu0 0.0
    %1137 = vmatpush1.msra.mxu0 0.0
    %1138 = vmatprep.subr.mxu0 0.0
    %1139 = vmatpush1.msra.mxu0 0.0
    %1140 = vmatprep.subr.mxu0 0.0
    %1141 = vmatpush1.msra.mxu0 0.0
    %1142 = vmatprep.subr.mxu0 0.0
    %1143 = vmatpush1.msra.mxu0 0.0
    %1144 = vmatprep.subr.mxu0 0.0
    %1145 = vmatpush1.msra.mxu0 0.0
    %1146 = vmatprep.subr.mxu0 0.0
    %1147 = vmatpush1.msra.mxu0 0.0
    %1148 = vmatprep.subr.mxu0 0.0
    %1149 = vmatpush1.msra.mxu0 0.0
    %1150 = vmatprep.subr.mxu0 0.0
    %1151 = vmatpush1.msra.mxu0 0.0
    %1152 = vmatprep.subr.mxu0 0.0
    %1153 = vmatpush1.msra.mxu0 0.0
    %1154 = vmatprep.subr.mxu0 0.0
    %1155 = vmatpush1.msra.mxu0 0.0
    %1156 = vmatprep.subr.mxu0 0.0
    %1157 = vmatpush1.msra.mxu0 0.0
    %1158 = vmatprep.subr.mxu0 0.0
    %1159 = vmatpush1.msra.mxu0 0.0
    %1160 = vmatprep.subr.mxu0 0.0
    %1161 = vmatpush1.msra.mxu0 %v1125
    %1162 = vmatprep.subr.mxu0 0.0
    %1163 = vmatpush2.msra.mxu0 0.0
    %1164 = vmatprep.subr.mxu0 0.0
    %1165 = vmatpush2.msra.mxu0 0.0
    %1166 = vmatprep.subr.mxu0 0.0
    %1167 = vmatpush2.msra.mxu0 0.0
    %1168 = vmatprep.subr.mxu0 0.0
    %1169 = vmatpush2.msra.mxu0 0.0
    %1170 = vmatprep.subr.mxu0 0.0
    %1171 = vmatpush2.msra.mxu0 0.0
    %1172 = vmatprep.subr.mxu0 0.0
    %1173 = vmatpush2.msra.mxu0 0.0
    %1174 = vmatprep.subr.mxu0 0.0
    %1175 = vmatpush2.msra.mxu0 0.0
    %1176 = vmatprep.subr.mxu0 0.0
    %1177 = vmatpush2.msra.mxu0 0.0
    %1178 = vmatprep.subr.mxu0 0.0
    %1179 = vmatpush2.msra.mxu0 0.0
    %1180 = vmatprep.subr.mxu0 0.0
    %1181 = vmatpush2.msra.mxu0 0.0
    %1182 = vmatprep.subr.mxu0 0.0
    %1183 = vmatpush2.msra.mxu0 0.0
    %1184 = vmatprep.subr.mxu0 0.0
    %1185 = vmatpush2.msra.mxu0 0.0
    %1186 = vmatprep.subr.mxu0 0.0
    %1187 = vmatpush2.msra.mxu0 0.0
    %1188 = vmatprep.subr.mxu0 0.0
    %1189 = vmatpush2.msra.mxu0 0.0
    %1190 = vmatprep.subr.mxu0 0.0
    %1191 = vmatpush2.msra.mxu0 0.0
    %1192 = vmatprep.subr.mxu0 0.0
    %1193 = vmatpush2.msra.mxu0 0.0
    %1194 = vmatprep.mubr.f32.mxu0 0.0
    %1195 = vmatmul.mubr.f32.gmra.mxu0 %v1128
    %v1196 = vpop.f32.mrf.mxu0
    %v1197 = vadd.f32 0.0, %v1196
    %v1198 = vpop.f32.mrf.mxu0
    %1199 = vdwg.mxu0
    %1200 = vrot.lane.b32.xlu0 %v277, 56
    %v1201 = vpop.permute.xlu0 %1200
    %v1204 = vsel %vm437, %v1123, 0
    %1206 = vmatprep.subr.mxu0 0.0
    %1207 = vmatpush1.msra.mxu0 0.0
    %1208 = vmatprep.subr.mxu0 0.0
    %1209 = vmatpush1.msra.mxu0 0.0
    %1210 = vmatprep.subr.mxu0 0.0
    %1211 = vmatpush1.msra.mxu0 0.0
    %1212 = vmatprep.subr.mxu0 0.0
    %1213 = vmatpush1.msra.mxu0 0.0
    %1214 = vmatprep.subr.mxu0 0.0
    %1215 = vmatpush1.msra.mxu0 0.0
    %1216 = vmatprep.subr.mxu0 0.0
    %1217 = vmatpush1.msra.mxu0 0.0
    %1218 = vmatprep.subr.mxu0 0.0
    %1219 = vmatpush1.msra.mxu0 0.0
    %1220 = vmatprep.subr.mxu0 0.0
    %1221 = vmatpush1.msra.mxu0 0.0
    %1222 = vmatprep.subr.mxu0 0.0
    %1223 = vmatpush1.msra.mxu0 0.0
    %1224 = vmatprep.subr.mxu0 0.0
    %1225 = vmatpush1.msra.mxu0 0.0
    %1226 = vmatprep.subr.mxu0 0.0
    %1227 = vmatpush1.msra.mxu0 0.0
    %1228 = vmatprep.subr.mxu0 0.0
    %1229 = vmatpush1.msra.mxu0 0.0
    %1230 = vmatprep.subr.mxu0 0.0
    %1231 = vmatpush1.msra.mxu0 0.0
    %1232 = vmatprep.subr.mxu0 0.0
    %1233 = vmatpush1.msra.mxu0 0.0
    %1234 = vmatprep.subr.mxu0 0.0
    %1235 = vmatpush1.msra.mxu0 0.0
    %1236 = vmatprep.subr.mxu0 0.0
    %1237 = vmatpush1.msra.mxu0 %v1201
    %1238 = vmatprep.subr.mxu0 0.0
    %1239 = vmatpush2.msra.mxu0 0.0
    %1240 = vmatprep.subr.mxu0 0.0
    %1241 = vmatpush2.msra.mxu0 0.0
    %1242 = vmatprep.subr.mxu0 0.0
    %1243 = vmatpush2.msra.mxu0 0.0
    %1244 = vmatprep.subr.mxu0 0.0
    %1245 = vmatpush2.msra.mxu0 0.0
    %1246 = vmatprep.subr.mxu0 0.0
    %1247 = vmatpush2.msra.mxu0 0.0
    %1248 = vmatprep.subr.mxu0 0.0
    %1249 = vmatpush2.msra.mxu0 0.0
    %1250 = vmatprep.subr.mxu0 0.0
    %1251 = vmatpush2.msra.mxu0 0.0
    %1252 = vmatprep.subr.mxu0 0.0
    %1253 = vmatpush2.msra.mxu0 0.0
    %1254 = vmatprep.subr.mxu0 0.0
    %1255 = vmatpush2.msra.mxu0 0.0
    %1256 = vmatprep.subr.mxu0 0.0
    %1257 = vmatpush2.msra.mxu0 0.0
    %1258 = vmatprep.subr.mxu0 0.0
    %1259 = vmatpush2.msra.mxu0 0.0
    %1260 = vmatprep.subr.mxu0 0.0
    %1261 = vmatpush2.msra.mxu0 0.0
    %1262 = vmatprep.subr.mxu0 0.0
    %1263 = vmatpush2.msra.mxu0 0.0
    %1264 = vmatprep.subr.mxu0 0.0
    %1265 = vmatpush2.msra.mxu0 0.0
    %1266 = vmatprep.subr.mxu0 0.0
    %1267 = vmatpush2.msra.mxu0 0.0
    %1268 = vmatprep.subr.mxu0 0.0
    %1269 = vmatpush2.msra.mxu0 0.0
    %1270 = vmatprep.mubr.f32.mxu0 0.0
    %1271 = vmatmul.mubr.f32.gmra.mxu0 %v1204
    %v1272 = vpop.f32.mrf.mxu0
    %v1273 = vadd.f32 0.0, %v1272
    %v1274 = vpop.f32.mrf.mxu0
    %1275 = vdwg.mxu0
    %1276 = vrot.lane.b32.xlu0 %v272, 116
    %v1277 = vpop.permute.xlu0 %1276
    %1278 = vrot.lane.b32.xlu0 %v272, 84
    %v1279 = vpop.permute.xlu0 %1278
    %v1280 = vsel %vm283, %v1277, 0
    %v1282 = vsel %vm283, %v1279, 0
    %1284 = vmatprep.subr.mxu0 0.0
    %1285 = vmatpush1.xpose.msra.mxu0 0.0
    %1286 = vmatprep.subr.mxu0 0.0
    %1287 = vmatpush1.xpose.msra.mxu0 0.0
    %1288 = vmatprep.subr.mxu0 0.0
    %1289 = vmatpush1.xpose.msra.mxu0 0.0
    %1290 = vmatprep.subr.mxu0 0.0
    %1291 = vmatpush1.xpose.msra.mxu0 0.0
    %1292 = vmatprep.subr.mxu0 0.0
    %1293 = vmatpush1.xpose.msra.mxu0 0.0
    %1294 = vmatprep.subr.mxu0 0.0
    %1295 = vmatpush1.xpose.msra.mxu0 0.0
    %1296 = vmatprep.subr.mxu0 0.0
    %1297 = vmatpush1.xpose.msra.mxu0 0.0
    %1298 = vmatprep.subr.mxu0 0.0
    %1299 = vmatpush1.xpose.msra.mxu0 0.0
    %1300 = vmatprep.subr.mxu0 0.0
    %1301 = vmatpush1.xpose.msra.mxu0 0.0
    %1302 = vmatprep.subr.mxu0 0.0
    %1303 = vmatpush1.xpose.msra.mxu0 0.0
    %1304 = vmatprep.subr.mxu0 0.0
    %1305 = vmatpush1.xpose.msra.mxu0 0.0
    %1306 = vmatprep.subr.mxu0 0.0
    %1307 = vmatpush1.xpose.msra.mxu0 0.0
    %1308 = vmatprep.subr.mxu0 0.0
    %1309 = vmatpush1.xpose.msra.mxu0 0.0
    %1310 = vmatprep.subr.mxu0 0.0
    %1311 = vmatpush1.xpose.msra.mxu0 0.0
    %1312 = vmatprep.subr.mxu0 0.0
    %1313 = vmatpush1.xpose.msra.mxu0 0.0
    %1314 = vmatprep.subr.mxu0 0.0
    %1315 = vmatpush1.xpose.msra.mxu0 %v1282
    %1316 = vmatprep.subr.mxu0 0.0
    %1317 = vmatpush2.xpose.msra.mxu0 0.0
    %1318 = vmatprep.subr.mxu0 0.0
    %1319 = vmatpush2.xpose.msra.mxu0 0.0
    %1320 = vmatprep.subr.mxu0 0.0
    %1321 = vmatpush2.xpose.msra.mxu0 0.0
    %1322 = vmatprep.subr.mxu0 0.0
    %1323 = vmatpush2.xpose.msra.mxu0 0.0
    %1324 = vmatprep.subr.mxu0 0.0
    %1325 = vmatpush2.xpose.msra.mxu0 0.0
    %1326 = vmatprep.subr.mxu0 0.0
    %1327 = vmatpush2.xpose.msra.mxu0 0.0
    %1328 = vmatprep.subr.mxu0 0.0
    %1329 = vmatpush2.xpose.msra.mxu0 0.0
    %1330 = vmatprep.subr.mxu0 0.0
    %1331 = vmatpush2.xpose.msra.mxu0 0.0
    %1332 = vmatprep.subr.mxu0 0.0
    %1333 = vmatpush2.xpose.msra.mxu0 0.0
    %1334 = vmatprep.subr.mxu0 0.0
    %1335 = vmatpush2.xpose.msra.mxu0 0.0
    %1336 = vmatprep.subr.mxu0 0.0
    %1337 = vmatpush2.xpose.msra.mxu0 0.0
    %1338 = vmatprep.subr.mxu0 0.0
    %1339 = vmatpush2.xpose.msra.mxu0 0.0
    %1340 = vmatprep.subr.mxu0 0.0
    %1341 = vmatpush2.xpose.msra.mxu0 0.0
    %1342 = vmatprep.subr.mxu0 0.0
    %1343 = vmatpush2.xpose.msra.mxu0 0.0
    %1344 = vmatprep.subr.mxu0 0.0
    %1345 = vmatpush2.xpose.msra.mxu0 0.0
    %1346 = vmatprep.subr.mxu0 0.0
    %1347 = vmatpush2.xpose.msra.mxu0 0.0
    %1348 = vmatprep.mubr.f32.mxu0 0.0
    %1349 = vmatmul.mubr.f32.gmra.mxu0 %v1280
    %v1350 = vpop.f32.mrf.mxu0
    %v1351 = vadd.f32 0.0, %v1350
    %v1352 = vpop.f32.mrf.mxu0
    %1353 = vdwg.mxu0
    %1354 = vrot.lane.b32.xlu0 %v277, 116
    %v1355 = vpop.permute.xlu0 %1354
    %1356 = vrot.lane.b32.xlu0 %v277, 84
    %v1357 = vpop.permute.xlu0 %1356
    %v1358 = vsel %vm283, %v1355, 0
    %v1360 = vsel %vm283, %v1357, 0
    %1362 = vmatprep.subr.mxu0 0.0
    %1363 = vmatpush1.xpose.msra.mxu0 0.0
    %1364 = vmatprep.subr.mxu0 0.0
    %1365 = vmatpush1.xpose.msra.mxu0 0.0
    %1366 = vmatprep.subr.mxu0 0.0
    %1367 = vmatpush1.xpose.msra.mxu0 0.0
    %1368 = vmatprep.subr.mxu0 0.0
    %1369 = vmatpush1.xpose.msra.mxu0 0.0
    %1370 = vmatprep.subr.mxu0 0.0
    %1371 = vmatpush1.xpose.msra.mxu0 0.0
    %1372 = vmatprep.subr.mxu0 0.0
    %1373 = vmatpush1.xpose.msra.mxu0 0.0
    %1374 = vmatprep.subr.mxu0 0.0
    %1375 = vmatpush1.xpose.msra.mxu0 0.0
    %1376 = vmatprep.subr.mxu0 0.0
    %1377 = vmatpush1.xpose.msra.mxu0 0.0
    %1378 = vmatprep.subr.mxu0 0.0
    %1379 = vmatpush1.xpose.msra.mxu0 0.0
    %1380 = vmatprep.subr.mxu0 0.0
    %1381 = vmatpush1.xpose.msra.mxu0 0.0
    %1382 = vmatprep.subr.mxu0 0.0
    %1383 = vmatpush1.xpose.msra.mxu0 0.0
    %1384 = vmatprep.subr.mxu0 0.0
    %1385 = vmatpush1.xpose.msra.mxu0 0.0
    %1386 = vmatprep.subr.mxu0 0.0
    %1387 = vmatpush1.xpose.msra.mxu0 0.0
    %1388 = vmatprep.subr.mxu0 0.0
    %1389 = vmatpush1.xpose.msra.mxu0 0.0
    %1390 = vmatprep.subr.mxu0 0.0
    %1391 = vmatpush1.xpose.msra.mxu0 0.0
    %1392 = vmatprep.subr.mxu0 0.0
    %1393 = vmatpush1.xpose.msra.mxu0 %v1360
    %1394 = vmatprep.subr.mxu0 0.0
    %1395 = vmatpush2.xpose.msra.mxu0 0.0
    %1396 = vmatprep.subr.mxu0 0.0
    %1397 = vmatpush2.xpose.msra.mxu0 0.0
    %1398 = vmatprep.subr.mxu0 0.0
    %1399 = vmatpush2.xpose.msra.mxu0 0.0
    %1400 = vmatprep.subr.mxu0 0.0
    %1401 = vmatpush2.xpose.msra.mxu0 0.0
    %1402 = vmatprep.subr.mxu0 0.0
    %1403 = vmatpush2.xpose.msra.mxu0 0.0
    %1404 = vmatprep.subr.mxu0 0.0
    %1405 = vmatpush2.xpose.msra.mxu0 0.0
    %1406 = vmatprep.subr.mxu0 0.0
    %1407 = vmatpush2.xpose.msra.mxu0 0.0
    %1408 = vmatprep.subr.mxu0 0.0
    %1409 = vmatpush2.xpose.msra.mxu0 0.0
    %1410 = vmatprep.subr.mxu0 0.0
    %1411 = vmatpush2.xpose.msra.mxu0 0.0
    %1412 = vmatprep.subr.mxu0 0.0
    %1413 = vmatpush2.xpose.msra.mxu0 0.0
    %1414 = vmatprep.subr.mxu0 0.0
    %1415 = vmatpush2.xpose.msra.mxu0 0.0
    %1416 = vmatprep.subr.mxu0 0.0
    %1417 = vmatpush2.xpose.msra.mxu0 0.0
    %1418 = vmatprep.subr.mxu0 0.0
    %1419 = vmatpush2.xpose.msra.mxu0 0.0
    %1420 = vmatprep.subr.mxu0 0.0
    %1421 = vmatpush2.xpose.msra.mxu0 0.0
    %1422 = vmatprep.subr.mxu0 0.0
    %1423 = vmatpush2.xpose.msra.mxu0 0.0
    %1424 = vmatprep.subr.mxu0 0.0
    %1425 = vmatpush2.xpose.msra.mxu0 0.0
    %1426 = vmatprep.mubr.f32.mxu0 0.0
    %1427 = vmatmul.mubr.f32.gmra.mxu0 %v1358
    %v1428 = vpop.f32.mrf.mxu0
    %v1429 = vadd.f32 0.0, %v1428
    %v1430 = vpop.f32.mrf.mxu0
    %1431 = vdwg.mxu0
    %v1432 = vmul.f32 %v1351, 0.5
    %v1433 = vmul.f32 %v1429, 0.5
    %v1434 = vsel %vm437, %v1432, -inf
    %1435 = vmax.xlane.f32.xlu0 %v1434
    %v1436 = vpop.xlane.xlu0 %1435
    %v1437 = vsel %vm437, %v1433, -inf
    %1438 = vmax.xlane.f32.xlu0 %v1437
    %v1439 = vpop.xlane.xlu0 %1438
    %v1440 = vsub.f32 %v1432, %v1436
    %v1441 = vsub.f32 %v1433, %v1439
    %v1442 = vmul.f32 %v1440, 1.442695
    %v1443 = vpow.pop %v1442
    %v1444 = vmul.f32 %v1441, 1.442695
    %v1445 = vpow.pop %v1444
    %v1446 = vsel %vm437, %v1443, 0.0
    %1447 = vadd.xlane.f32.xlu0 %v1446
    %v1448 = vpop.xlane.xlu0 %1447
    %v1449 = vsel %vm437, %v1445, 0.0
    %1450 = vadd.xlane.f32.xlu0 %v1449
    %v1451 = vpop.xlane.xlu0 %1450
    %v1452 = vrcp.pop %v1448
    %v1453 = vrcp.pop %v1451
    %v1454 = vmul.f32 %v1443, %v1452
    %v1455 = vmul.f32 %v1445, %v1453
    %1456 = vrot.lane.b32.xlu0 %v272, 52
    %v1457 = vpop.permute.xlu0 %1456
    %v1460 = vsel %vm437, %v1454, 0
    %1462 = vmatprep.subr.mxu0 0.0
    %1463 = vmatpush1.msra.mxu0 0.0
    %1464 = vmatprep.subr.mxu0 0.0
    %1465 = vmatpush1.msra.mxu0 0.0
    %1466 = vmatprep.subr.mxu0 0.0
    %1467 = vmatpush1.msra.mxu0 0.0
    %1468 = vmatprep.subr.mxu0 0.0
    %1469 = vmatpush1.msra.mxu0 0.0
    %1470 = vmatprep.subr.mxu0 0.0
    %1471 = vmatpush1.msra.mxu0 0.0
    %1472 = vmatprep.subr.mxu0 0.0
    %1473 = vmatpush1.msra.mxu0 0.0
    %1474 = vmatprep.subr.mxu0 0.0
    %1475 = vmatpush1.msra.mxu0 0.0
    %1476 = vmatprep.subr.mxu0 0.0
    %1477 = vmatpush1.msra.mxu0 0.0
    %1478 = vmatprep.subr.mxu0 0.0
    %1479 = vmatpush1.msra.mxu0 0.0
    %1480 = vmatprep.subr.mxu0 0.0
    %1481 = vmatpush1.msra.mxu0 0.0
    %1482 = vmatprep.subr.mxu0 0.0
    %1483 = vmatpush1.msra.mxu0 0.0
    %1484 = vmatprep.subr.mxu0 0.0
    %1485 = vmatpush1.msra.mxu0 0.0
    %1486 = vmatprep.subr.mxu0 0.0
    %1487 = vmatpush1.msra.mxu0 0.0
    %1488 = vmatprep.subr.mxu0 0.0
    %1489 = vmatpush1.msra.mxu0 0.0
    %1490 = vmatprep.subr.mxu0 0.0
    %1491 = vmatpush1.msra.mxu0 0.0
    %1492 = vmatprep.subr.mxu0 0.0
    %1493 = vmatpush1.msra.mxu0 %v1457
    %1494 = vmatprep.subr.mxu0 0.0
    %1495 = vmatpush2.msra.mxu0 0.0
    %1496 = vmatprep.subr.mxu0 0.0
    %1497 = vmatpush2.msra.mxu0 0.0
    %1498 = vmatprep.subr.mxu0 0.0
    %1499 = vmatpush2.msra.mxu0 0.0
    %1500 = vmatprep.subr.mxu0 0.0
    %1501 = vmatpush2.msra.mxu0 0.0
    %1502 = vmatprep.subr.mxu0 0.0
    %1503 = vmatpush2.msra.mxu0 0.0
    %1504 = vmatprep.subr.mxu0 0.0
    %1505 = vmatpush2.msra.mxu0 0.0
    %1506 = vmatprep.subr.mxu0 0.0
    %1507 = vmatpush2.msra.mxu0 0.0
    %1508 = vmatprep.subr.mxu0 0.0
    %1509 = vmatpush2.msra.mxu0 0.0
    %1510 = vmatprep.subr.mxu0 0.0
    %1511 = vmatpush2.msra.mxu0 0.0
    %1512 = vmatprep.subr.mxu0 0.0
    %1513 = vmatpush2.msra.mxu0 0.0
    %1514 = vmatprep.subr.mxu0 0.0
    %1515 = vmatpush2.msra.mxu0 0.0
    %1516 = vmatprep.subr.mxu0 0.0
    %1517 = vmatpush2.msra.mxu0 0.0
    %1518 = vmatprep.subr.mxu0 0.0
    %1519 = vmatpush2.msra.mxu0 0.0
    %1520 = vmatprep.subr.mxu0 0.0
    %1521 = vmatpush2.msra.mxu0 0.0
    %1522 = vmatprep.subr.mxu0 0.0
    %1523 = vmatpush2.msra.mxu0 0.0
    %1524 = vmatprep.subr.mxu0 0.0
    %1525 = vmatpush2.msra.mxu0 0.0
    %1526 = vmatprep.mubr.f32.mxu0 0.0
    %1527 = vmatmul.mubr.f32.gmra.mxu0 %v1460
    %v1528 = vpop.f32.mrf.mxu0
    %v1529 = vadd.f32 0.0, %v1528
    %v1530 = vpop.f32.mrf.mxu0
    %1531 = vdwg.mxu0
    %1532 = vrot.lane.b32.xlu0 %v277, 52
    %v1533 = vpop.permute.xlu0 %1532
    %v1536 = vsel %vm437, %v1455, 0
    %1538 = vmatprep.subr.mxu0 0.0
    %1539 = vmatpush1.msra.mxu0 0.0
    %1540 = vmatprep.subr.mxu0 0.0
    %1541 = vmatpush1.msra.mxu0 0.0
    %1542 = vmatprep.subr.mxu0 0.0
    %1543 = vmatpush1.msra.mxu0 0.0
    %1544 = vmatprep.subr.mxu0 0.0
    %1545 = vmatpush1.msra.mxu0 0.0
    %1546 = vmatprep.subr.mxu0 0.0
    %1547 = vmatpush1.msra.mxu0 0.0
    %1548 = vmatprep.subr.mxu0 0.0
    %1549 = vmatpush1.msra.mxu0 0.0
    %1550 = vmatprep.subr.mxu0 0.0
    %1551 = vmatpush1.msra.mxu0 0.0
    %1552 = vmatprep.subr.mxu0 0.0
    %1553 = vmatpush1.msra.mxu0 0.0
    %1554 = vmatprep.subr.mxu0 0.0
    %1555 = vmatpush1.msra.mxu0 0.0
    %1556 = vmatprep.subr.mxu0 0.0
    %1557 = vmatpush1.msra.mxu0 0.0
    %1558 = vmatprep.subr.mxu0 0.0
    %1559 = vmatpush1.msra.mxu0 0.0
    %1560 = vmatprep.subr.mxu0 0.0
    %1561 = vmatpush1.msra.mxu0 0.0
    %1562 = vmatprep.subr.mxu0 0.0
    %1563 = vmatpush1.msra.mxu0 0.0
    %1564 = vmatprep.subr.mxu0 0.0
    %1565 = vmatpush1.msra.mxu0 0.0
    %1566 = vmatprep.subr.mxu0 0.0
    %1567 = vmatpush1.msra.mxu0 0.0
    %1568 = vmatprep.subr.mxu0 0.0
    %1569 = vmatpush1.msra.mxu0 %v1533
    %1570 = vmatprep.subr.mxu0 0.0
    %1571 = vmatpush2.msra.mxu0 0.0
    %1572 = vmatprep.subr.mxu0 0.0
    %1573 = vmatpush2.msra.mxu0 0.0
    %1574 = vmatprep.subr.mxu0 0.0
    %1575 = vmatpush2.msra.mxu0 0.0
    %1576 = vmatprep.subr.mxu0 0.0
    %1577 = vmatpush2.msra.mxu0 0.0
    %1578 = vmatprep.subr.mxu0 0.0
    %1579 = vmatpush2.msra.mxu0 0.0
    %1580 = vmatprep.subr.mxu0 0.0
    %1581 = vmatpush2.msra.mxu0 0.0
    %1582 = vmatprep.subr.mxu0 0.0
    %1583 = vmatpush2.msra.mxu0 0.0
    %1584 = vmatprep.subr.mxu0 0.0
    %1585 = vmatpush2.msra.mxu0 0.0
    %1586 = vmatprep.subr.mxu0 0.0
    %1587 = vmatpush2.msra.mxu0 0.0
    %1588 = vmatprep.subr.mxu0 0.0
    %1589 = vmatpush2.msra.mxu0 0.0
    %1590 = vmatprep.subr.mxu0 0.0
    %1591 = vmatpush2.msra.mxu0 0.0
    %1592 = vmatprep.subr.mxu0 0.0
    %1593 = vmatpush2.msra.mxu0 0.0
    %1594 = vmatprep.subr.mxu0 0.0
    %1595 = vmatpush2.msra.mxu0 0.0
    %1596 = vmatprep.subr.mxu0 0.0
    %1597 = vmatpush2.msra.mxu0 0.0
    %1598 = vmatprep.subr.mxu0 0.0
    %1599 = vmatpush2.msra.mxu0 0.0
    %1600 = vmatprep.subr.mxu0 0.0
    %1601 = vmatpush2.msra.mxu0 0.0
    %1602 = vmatprep.mubr.f32.mxu0 0.0
    %1603 = vmatmul.mubr.f32.gmra.mxu0 %v1536
    %v1604 = vpop.f32.mrf.mxu0
    %v1605 = vadd.f32 0.0, %v1604
    %v1606 = vpop.f32.mrf.mxu0
    %1607 = vdwg.mxu0
    %1608 = vrot.lane.b32.xlu0 %v272, 112
    %v1609 = vpop.permute.xlu0 %1608
    %1610 = vrot.lane.b32.xlu0 %v272, 80
    %v1611 = vpop.permute.xlu0 %1610
    %v1612 = vsel %vm283, %v1609, 0
    %v1614 = vsel %vm283, %v1611, 0
    %1616 = vmatprep.subr.mxu0 0.0
    %1617 = vmatpush1.xpose.msra.mxu0 0.0
    %1618 = vmatprep.subr.mxu0 0.0
    %1619 = vmatpush1.xpose.msra.mxu0 0.0
    %1620 = vmatprep.subr.mxu0 0.0
    %1621 = vmatpush1.xpose.msra.mxu0 0.0
    %1622 = vmatprep.subr.mxu0 0.0
    %1623 = vmatpush1.xpose.msra.mxu0 0.0
    %1624 = vmatprep.subr.mxu0 0.0
    %1625 = vmatpush1.xpose.msra.mxu0 0.0
    %1626 = vmatprep.subr.mxu0 0.0
    %1627 = vmatpush1.xpose.msra.mxu0 0.0
    %1628 = vmatprep.subr.mxu0 0.0
    %1629 = vmatpush1.xpose.msra.mxu0 0.0
    %1630 = vmatprep.subr.mxu0 0.0
    %1631 = vmatpush1.xpose.msra.mxu0 0.0
    %1632 = vmatprep.subr.mxu0 0.0
    %1633 = vmatpush1.xpose.msra.mxu0 0.0
    %1634 = vmatprep.subr.mxu0 0.0
    %1635 = vmatpush1.xpose.msra.mxu0 0.0
    %1636 = vmatprep.subr.mxu0 0.0
    %1637 = vmatpush1.xpose.msra.mxu0 0.0
    %1638 = vmatprep.subr.mxu0 0.0
    %1639 = vmatpush1.xpose.msra.mxu0 0.0
    %1640 = vmatprep.subr.mxu0 0.0
    %1641 = vmatpush1.xpose.msra.mxu0 0.0
    %1642 = vmatprep.subr.mxu0 0.0
    %1643 = vmatpush1.xpose.msra.mxu0 0.0
    %1644 = vmatprep.subr.mxu0 0.0
    %1645 = vmatpush1.xpose.msra.mxu0 0.0
    %1646 = vmatprep.subr.mxu0 0.0
    %1647 = vmatpush1.xpose.msra.mxu0 %v1614
    %1648 = vmatprep.subr.mxu0 0.0
    %1649 = vmatpush2.xpose.msra.mxu0 0.0
    %1650 = vmatprep.subr.mxu0 0.0
    %1651 = vmatpush2.xpose.msra.mxu0 0.0
    %1652 = vmatprep.subr.mxu0 0.0
    %1653 = vmatpush2.xpose.msra.mxu0 0.0
    %1654 = vmatprep.subr.mxu0 0.0
    %1655 = vmatpush2.xpose.msra.mxu0 0.0
    %1656 = vmatprep.subr.mxu0 0.0
    %1657 = vmatpush2.xpose.msra.mxu0 0.0
    %1658 = vmatprep.subr.mxu0 0.0
    %1659 = vmatpush2.xpose.msra.mxu0 0.0
    %1660 = vmatprep.subr.mxu0 0.0
    %1661 = vmatpush2.xpose.msra.mxu0 0.0
    %1662 = vmatprep.subr.mxu0 0.0
    %1663 = vmatpush2.xpose.msra.mxu0 0.0
    %1664 = vmatprep.subr.mxu0 0.0
    %1665 = vmatpush2.xpose.msra.mxu0 0.0
    %1666 = vmatprep.subr.mxu0 0.0
    %1667 = vmatpush2.xpose.msra.mxu0 0.0
    %1668 = vmatprep.subr.mxu0 0.0
    %1669 = vmatpush2.xpose.msra.mxu0 0.0
    %1670 = vmatprep.subr.mxu0 0.0
    %1671 = vmatpush2.xpose.msra.mxu0 0.0
    %1672 = vmatprep.subr.mxu0 0.0
    %1673 = vmatpush2.xpose.msra.mxu0 0.0
    %1674 = vmatprep.subr.mxu0 0.0
    %1675 = vmatpush2.xpose.msra.mxu0 0.0
    %1676 = vmatprep.subr.mxu0 0.0
    %1677 = vmatpush2.xpose.msra.mxu0 0.0
    %1678 = vmatprep.subr.mxu0 0.0
    %1679 = vmatpush2.xpose.msra.mxu0 0.0
    %1680 = vmatprep.mubr.f32.mxu0 0.0
    %1681 = vmatmul.mubr.f32.gmra.mxu0 %v1612
    %v1682 = vpop.f32.mrf.mxu0
    %v1683 = vadd.f32 0.0, %v1682
    %v1684 = vpop.f32.mrf.mxu0
    %1685 = vdwg.mxu0
    %1686 = vrot.lane.b32.xlu0 %v277, 112
    %v1687 = vpop.permute.xlu0 %1686
    %1688 = vrot.lane.b32.xlu0 %v277, 80
    %v1689 = vpop.permute.xlu0 %1688
    %v1690 = vsel %vm283, %v1687, 0
    %v1692 = vsel %vm283, %v1689, 0
    %1694 = vmatprep.subr.mxu0 0.0
    %1695 = vmatpush1.xpose.msra.mxu0 0.0
    %1696 = vmatprep.subr.mxu0 0.0
    %1697 = vmatpush1.xpose.msra.mxu0 0.0
    %1698 = vmatprep.subr.mxu0 0.0
    %1699 = vmatpush1.xpose.msra.mxu0 0.0
    %1700 = vmatprep.subr.mxu0 0.0
    %1701 = vmatpush1.xpose.msra.mxu0 0.0
    %1702 = vmatprep.subr.mxu0 0.0
    %1703 = vmatpush1.xpose.msra.mxu0 0.0
    %1704 = vmatprep.subr.mxu0 0.0
    %1705 = vmatpush1.xpose.msra.mxu0 0.0
    %1706 = vmatprep.subr.mxu0 0.0
    %1707 = vmatpush1.xpose.msra.mxu0 0.0
    %1708 = vmatprep.subr.mxu0 0.0
    %1709 = vmatpush1.xpose.msra.mxu0 0.0
    %1710 = vmatprep.subr.mxu0 0.0
    %1711 = vmatpush1.xpose.msra.mxu0 0.0
    %1712 = vmatprep.subr.mxu0 0.0
    %1713 = vmatpush1.xpose.msra.mxu0 0.0
    %1714 = vmatprep.subr.mxu0 0.0
    %1715 = vmatpush1.xpose.msra.mxu0 0.0
    %1716 = vmatprep.subr.mxu0 0.0
    %1717 = vmatpush1.xpose.msra.mxu0 0.0
    %1718 = vmatprep.subr.mxu0 0.0
    %1719 = vmatpush1.xpose.msra.mxu0 0.0
    %1720 = vmatprep.subr.mxu0 0.0
    %1721 = vmatpush1.xpose.msra.mxu0 0.0
    %1722 = vmatprep.subr.mxu0 0.0
    %1723 = vmatpush1.xpose.msra.mxu0 0.0
    %1724 = vmatprep.subr.mxu0 0.0
    %1725 = vmatpush1.xpose.msra.mxu0 %v1692
    %1726 = vmatprep.subr.mxu0 0.0
    %1727 = vmatpush2.xpose.msra.mxu0 0.0
    %1728 = vmatprep.subr.mxu0 0.0
    %1729 = vmatpush2.xpose.msra.mxu0 0.0
    %1730 = vmatprep.subr.mxu0 0.0
    %1731 = vmatpush2.xpose.msra.mxu0 0.0
    %1732 = vmatprep.subr.mxu0 0.0
    %1733 = vmatpush2.xpose.msra.mxu0 0.0
    %1734 = vmatprep.subr.mxu0 0.0
    %1735 = vmatpush2.xpose.msra.mxu0 0.0
    %1736 = vmatprep.subr.mxu0 0.0
    %1737 = vmatpush2.xpose.msra.mxu0 0.0
    %1738 = vmatprep.subr.mxu0 0.0
    %1739 = vmatpush2.xpose.msra.mxu0 0.0
    %1740 = vmatprep.subr.mxu0 0.0
    %1741 = vmatpush2.xpose.msra.mxu0 0.0
    %1742 = vmatprep.subr.mxu0 0.0
    %1743 = vmatpush2.xpose.msra.mxu0 0.0
    %1744 = vmatprep.subr.mxu0 0.0
    %1745 = vmatpush2.xpose.msra.mxu0 0.0
    %1746 = vmatprep.subr.mxu0 0.0
    %1747 = vmatpush2.xpose.msra.mxu0 0.0
    %1748 = vmatprep.subr.mxu0 0.0
    %1749 = vmatpush2.xpose.msra.mxu0 0.0
    %1750 = vmatprep.subr.mxu0 0.0
    %1751 = vmatpush2.xpose.msra.mxu0 0.0
    %1752 = vmatprep.subr.mxu0 0.0
    %1753 = vmatpush2.xpose.msra.mxu0 0.0
    %1754 = vmatprep.subr.mxu0 0.0
    %1755 = vmatpush2.xpose.msra.mxu0 0.0
    %1756 = vmatprep.subr.mxu0 0.0
    %1757 = vmatpush2.xpose.msra.mxu0 0.0
    %1758 = vmatprep.mubr.f32.mxu0 0.0
    %1759 = vmatmul.mubr.f32.gmra.mxu0 %v1690
    %v1760 = vpop.f32.mrf.mxu0
    %v1761 = vadd.f32 0.0, %v1760
    %v1762 = vpop.f32.mrf.mxu0
    %1763 = vdwg.mxu0
    %v1764 = vmul.f32 %v1683, 0.5
    %v1765 = vmul.f32 %v1761, 0.5
    %v1766 = vsel %vm437, %v1764, -inf
    %1767 = vmax.xlane.f32.xlu0 %v1766
    %v1768 = vpop.xlane.xlu0 %1767
    %v1769 = vsel %vm437, %v1765, -inf
    %1770 = vmax.xlane.f32.xlu0 %v1769
    %v1771 = vpop.xlane.xlu0 %1770
    %v1772 = vsub.f32 %v1764, %v1768
    %v1773 = vsub.f32 %v1765, %v1771
    %v1774 = vmul.f32 %v1772, 1.442695
    %v1775 = vpow.pop %v1774
    %v1776 = vmul.f32 %v1773, 1.442695
    %v1777 = vpow.pop %v1776
    %v1778 = vsel %vm437, %v1775, 0.0
    %1779 = vadd.xlane.f32.xlu0 %v1778
    %v1780 = vpop.xlane.xlu0 %1779
    %v1781 = vsel %vm437, %v1777, 0.0
    %1782 = vadd.xlane.f32.xlu0 %v1781
    %v1783 = vpop.xlane.xlu0 %1782
    %v1784 = vrcp.pop %v1780
    %v1785 = vrcp.pop %v1783
    %v1786 = vmul.f32 %v1775, %v1784
    %v1787 = vmul.f32 %v1777, %v1785
    %1788 = vrot.lane.b32.xlu0 %v272, 48
    %v1789 = vpop.permute.xlu0 %1788
    %v1792 = vsel %vm437, %v1786, 0
    %1794 = vmatprep.subr.mxu0 0.0
    %1795 = vmatpush1.msra.mxu0 0.0
    %1796 = vmatprep.subr.mxu0 0.0
    %1797 = vmatpush1.msra.mxu0 0.0
    %1798 = vmatprep.subr.mxu0 0.0
    %1799 = vmatpush1.msra.mxu0 0.0
    %1800 = vmatprep.subr.mxu0 0.0
    %1801 = vmatpush1.msra.mxu0 0.0
    %1802 = vmatprep.subr.mxu0 0.0
    %1803 = vmatpush1.msra.mxu0 0.0
    %1804 = vmatprep.subr.mxu0 0.0
    %1805 = vmatpush1.msra.mxu0 0.0
    %1806 = vmatprep.subr.mxu0 0.0
    %1807 = vmatpush1.msra.mxu0 0.0
    %1808 = vmatprep.subr.mxu0 0.0
    %1809 = vmatpush1.msra.mxu0 0.0
    %1810 = vmatprep.subr.mxu0 0.0
    %1811 = vmatpush1.msra.mxu0 0.0
    %1812 = vmatprep.subr.mxu0 0.0
    %1813 = vmatpush1.msra.mxu0 0.0
    %1814 = vmatprep.subr.mxu0 0.0
    %1815 = vmatpush1.msra.mxu0 0.0
    %1816 = vmatprep.subr.mxu0 0.0
    %1817 = vmatpush1.msra.mxu0 0.0
    %1818 = vmatprep.subr.mxu0 0.0
    %1819 = vmatpush1.msra.mxu0 0.0
    %1820 = vmatprep.subr.mxu0 0.0
    %1821 = vmatpush1.msra.mxu0 0.0
    %1822 = vmatprep.subr.mxu0 0.0
    %1823 = vmatpush1.msra.mxu0 0.0
    %1824 = vmatprep.subr.mxu0 0.0
    %1825 = vmatpush1.msra.mxu0 %v1789
    %1826 = vmatprep.subr.mxu0 0.0
    %1827 = vmatpush2.msra.mxu0 0.0
    %1828 = vmatprep.subr.mxu0 0.0
    %1829 = vmatpush2.msra.mxu0 0.0
    %1830 = vmatprep.subr.mxu0 0.0
    %1831 = vmatpush2.msra.mxu0 0.0
    %1832 = vmatprep.subr.mxu0 0.0
    %1833 = vmatpush2.msra.mxu0 0.0
    %1834 = vmatprep.subr.mxu0 0.0
    %1835 = vmatpush2.msra.mxu0 0.0
    %1836 = vmatprep.subr.mxu0 0.0
    %1837 = vmatpush2.msra.mxu0 0.0
    %1838 = vmatprep.subr.mxu0 0.0
    %1839 = vmatpush2.msra.mxu0 0.0
    %1840 = vmatprep.subr.mxu0 0.0
    %1841 = vmatpush2.msra.mxu0 0.0
    %1842 = vmatprep.subr.mxu0 0.0
    %1843 = vmatpush2.msra.mxu0 0.0
    %1844 = vmatprep.subr.mxu0 0.0
    %1845 = vmatpush2.msra.mxu0 0.0
    %1846 = vmatprep.subr.mxu0 0.0
    %1847 = vmatpush2.msra.mxu0 0.0
    %1848 = vmatprep.subr.mxu0 0.0
    %1849 = vmatpush2.msra.mxu0 0.0
    %1850 = vmatprep.subr.mxu0 0.0
    %1851 = vmatpush2.msra.mxu0 0.0
    %1852 = vmatprep.subr.mxu0 0.0
    %1853 = vmatpush2.msra.mxu0 0.0
    %1854 = vmatprep.subr.mxu0 0.0
    %1855 = vmatpush2.msra.mxu0 0.0
    %1856 = vmatprep.subr.mxu0 0.0
    %1857 = vmatpush2.msra.mxu0 0.0
    %1858 = vmatprep.mubr.f32.mxu0 0.0
    %1859 = vmatmul.mubr.f32.gmra.mxu0 %v1792
    %v1860 = vpop.f32.mrf.mxu0
    %v1861 = vadd.f32 0.0, %v1860
    %v1862 = vpop.f32.mrf.mxu0
    %1863 = vdwg.mxu0
    %1864 = vrot.lane.b32.xlu0 %v277, 48
    %v1865 = vpop.permute.xlu0 %1864
    %v1868 = vsel %vm437, %v1787, 0
    %1870 = vmatprep.subr.mxu0 0.0
    %1871 = vmatpush1.msra.mxu0 0.0
    %1872 = vmatprep.subr.mxu0 0.0
    %1873 = vmatpush1.msra.mxu0 0.0
    %1874 = vmatprep.subr.mxu0 0.0
    %1875 = vmatpush1.msra.mxu0 0.0
    %1876 = vmatprep.subr.mxu0 0.0
    %1877 = vmatpush1.msra.mxu0 0.0
    %1878 = vmatprep.subr.mxu0 0.0
    %1879 = vmatpush1.msra.mxu0 0.0
    %1880 = vmatprep.subr.mxu0 0.0
    %1881 = vmatpush1.msra.mxu0 0.0
    %1882 = vmatprep.subr.mxu0 0.0
    %1883 = vmatpush1.msra.mxu0 0.0
    %1884 = vmatprep.subr.mxu0 0.0
    %1885 = vmatpush1.msra.mxu0 0.0
    %1886 = vmatprep.subr.mxu0 0.0
    %1887 = vmatpush1.msra.mxu0 0.0
    %1888 = vmatprep.subr.mxu0 0.0
    %1889 = vmatpush1.msra.mxu0 0.0
    %1890 = vmatprep.subr.mxu0 0.0
    %1891 = vmatpush1.msra.mxu0 0.0
    %1892 = vmatprep.subr.mxu0 0.0
    %1893 = vmatpush1.msra.mxu0 0.0
    %1894 = vmatprep.subr.mxu0 0.0
    %1895 = vmatpush1.msra.mxu0 0.0
    %1896 = vmatprep.subr.mxu0 0.0
    %1897 = vmatpush1.msra.mxu0 0.0
    %1898 = vmatprep.subr.mxu0 0.0
    %1899 = vmatpush1.msra.mxu0 0.0
    %1900 = vmatprep.subr.mxu0 0.0
    %1901 = vmatpush1.msra.mxu0 %v1865
    %1902 = vmatprep.subr.mxu0 0.0
    %1903 = vmatpush2.msra.mxu0 0.0
    %1904 = vmatprep.subr.mxu0 0.0
    %1905 = vmatpush2.msra.mxu0 0.0
    %1906 = vmatprep.subr.mxu0 0.0
    %1907 = vmatpush2.msra.mxu0 0.0
    %1908 = vmatprep.subr.mxu0 0.0
    %1909 = vmatpush2.msra.mxu0 0.0
    %1910 = vmatprep.subr.mxu0 0.0
    %1911 = vmatpush2.msra.mxu0 0.0
    %1912 = vmatprep.subr.mxu0 0.0
    %1913 = vmatpush2.msra.mxu0 0.0
    %1914 = vmatprep.subr.mxu0 0.0
    %1915 = vmatpush2.msra.mxu0 0.0
    %1916 = vmatprep.subr.mxu0 0.0
    %1917 = vmatpush2.msra.mxu0 0.0
    %1918 = vmatprep.subr.mxu0 0.0
    %1919 = vmatpush2.msra.mxu0 0.0
    %1920 = vmatprep.subr.mxu0 0.0
    %1921 = vmatpush2.msra.mxu0 0.0
    %1922 = vmatprep.subr.mxu0 0.0
    %1923 = vmatpush2.msra.mxu0 0.0
    %1924 = vmatprep.subr.mxu0 0.0
    %1925 = vmatpush2.msra.mxu0 0.0
    %1926 = vmatprep.subr.mxu0 0.0
    %1927 = vmatpush2.msra.mxu0 0.0
    %1928 = vmatprep.subr.mxu0 0.0
    %1929 = vmatpush2.msra.mxu0 0.0
    %1930 = vmatprep.subr.mxu0 0.0
    %1931 = vmatpush2.msra.mxu0 0.0
    %1932 = vmatprep.subr.mxu0 0.0
    %1933 = vmatpush2.msra.mxu0 0.0
    %1934 = vmatprep.mubr.f32.mxu0 0.0
    %1935 = vmatmul.mubr.f32.gmra.mxu0 %v1868
    %v1936 = vpop.f32.mrf.mxu0
    %v1937 = vadd.f32 0.0, %v1936
    %v1938 = vpop.f32.mrf.mxu0
    %1939 = vdwg.mxu0
    %1940 = vrot.lane.b32.xlu0 %v272, 108
    %v1941 = vpop.permute.xlu0 %1940
    %1942 = vrot.lane.b32.xlu0 %v272, 76
    %v1943 = vpop.permute.xlu0 %1942
    %v1944 = vsel %vm283, %v1941, 0
    %v1946 = vsel %vm283, %v1943, 0
    %1948 = vmatprep.subr.mxu0 0.0
    %1949 = vmatpush1.xpose.msra.mxu0 0.0
    %1950 = vmatprep.subr.mxu0 0.0
    %1951 = vmatpush1.xpose.msra.mxu0 0.0
    %1952 = vmatprep.subr.mxu0 0.0
    %1953 = vmatpush1.xpose.msra.mxu0 0.0
    %1954 = vmatprep.subr.mxu0 0.0
    %1955 = vmatpush1.xpose.msra.mxu0 0.0
    %1956 = vmatprep.subr.mxu0 0.0
    %1957 = vmatpush1.xpose.msra.mxu0 0.0
    %1958 = vmatprep.subr.mxu0 0.0
    %1959 = vmatpush1.xpose.msra.mxu0 0.0
    %1960 = vmatprep.subr.mxu0 0.0
    %1961 = vmatpush1.xpose.msra.mxu0 0.0
    %1962 = vmatprep.subr.mxu0 0.0
    %1963 = vmatpush1.xpose.msra.mxu0 0.0
    %1964 = vmatprep.subr.mxu0 0.0
    %1965 = vmatpush1.xpose.msra.mxu0 0.0
    %1966 = vmatprep.subr.mxu0 0.0
    %1967 = vmatpush1.xpose.msra.mxu0 0.0
    %1968 = vmatprep.subr.mxu0 0.0
    %1969 = vmatpush1.xpose.msra.mxu0 0.0
    %1970 = vmatprep.subr.mxu0 0.0
    %1971 = vmatpush1.xpose.msra.mxu0 0.0
    %1972 = vmatprep.subr.mxu0 0.0
    %1973 = vmatpush1.xpose.msra.mxu0 0.0
    %1974 = vmatprep.subr.mxu0 0.0
    %1975 = vmatpush1.xpose.msra.mxu0 0.0
    %1976 = vmatprep.subr.mxu0 0.0
    %1977 = vmatpush1.xpose.msra.mxu0 0.0
    %1978 = vmatprep.subr.mxu0 0.0
    %1979 = vmatpush1.xpose.msra.mxu0 %v1946
    %1980 = vmatprep.subr.mxu0 0.0
    %1981 = vmatpush2.xpose.msra.mxu0 0.0
    %1982 = vmatprep.subr.mxu0 0.0
    %1983 = vmatpush2.xpose.msra.mxu0 0.0
    %1984 = vmatprep.subr.mxu0 0.0
    %1985 = vmatpush2.xpose.msra.mxu0 0.0
    %1986 = vmatprep.subr.mxu0 0.0
    %1987 = vmatpush2.xpose.msra.mxu0 0.0
    %1988 = vmatprep.subr.mxu0 0.0
    %1989 = vmatpush2.xpose.msra.mxu0 0.0
    %1990 = vmatprep.subr.mxu0 0.0
    %1991 = vmatpush2.xpose.msra.mxu0 0.0
    %1992 = vmatprep.subr.mxu0 0.0
    %1993 = vmatpush2.xpose.msra.mxu0 0.0
    %1994 = vmatprep.subr.mxu0 0.0
    %1995 = vmatpush2.xpose.msra.mxu0 0.0
    %1996 = vmatprep.subr.mxu0 0.0
    %1997 = vmatpush2.xpose.msra.mxu0 0.0
    %1998 = vmatprep.subr.mxu0 0.0
    %1999 = vmatpush2.xpose.msra.mxu0 0.0
    %2000 = vmatprep.subr.mxu0 0.0
    %2001 = vmatpush2.xpose.msra.mxu0 0.0
    %2002 = vmatprep.subr.mxu0 0.0
    %2003 = vmatpush2.xpose.msra.mxu0 0.0
    %2004 = vmatprep.subr.mxu0 0.0
    %2005 = vmatpush2.xpose.msra.mxu0 0.0
    %2006 = vmatprep.subr.mxu0 0.0
    %2007 = vmatpush2.xpose.msra.mxu0 0.0
    %2008 = vmatprep.subr.mxu0 0.0
    %2009 = vmatpush2.xpose.msra.mxu0 0.0
    %2010 = vmatprep.subr.mxu0 0.0
    %2011 = vmatpush2.xpose.msra.mxu0 0.0
    %2012 = vmatprep.mubr.f32.mxu0 0.0
    %2013 = vmatmul.mubr.f32.gmra.mxu0 %v1944
    %v2014 = vpop.f32.mrf.mxu0
    %v2015 = vadd.f32 0.0, %v2014
    %v2016 = vpop.f32.mrf.mxu0
    %2017 = vdwg.mxu0
    %2018 = vrot.lane.b32.xlu0 %v277, 108
    %v2019 = vpop.permute.xlu0 %2018
    %2020 = vrot.lane.b32.xlu0 %v277, 76
    %v2021 = vpop.permute.xlu0 %2020
    %v2022 = vsel %vm283, %v2019, 0
    %v2024 = vsel %vm283, %v2021, 0
    %2026 = vmatprep.subr.mxu0 0.0
    %2027 = vmatpush1.xpose.msra.mxu0 0.0
    %2028 = vmatprep.subr.mxu0 0.0
    %2029 = vmatpush1.xpose.msra.mxu0 0.0
    %2030 = vmatprep.subr.mxu0 0.0
    %2031 = vmatpush1.xpose.msra.mxu0 0.0
    %2032 = vmatprep.subr.mxu0 0.0
    %2033 = vmatpush1.xpose.msra.mxu0 0.0
    %2034 = vmatprep.subr.mxu0 0.0
    %2035 = vmatpush1.xpose.msra.mxu0 0.0
    %2036 = vmatprep.subr.mxu0 0.0
    %2037 = vmatpush1.xpose.msra.mxu0 0.0
    %2038 = vmatprep.subr.mxu0 0.0
    %2039 = vmatpush1.xpose.msra.mxu0 0.0
    %2040 = vmatprep.subr.mxu0 0.0
    %2041 = vmatpush1.xpose.msra.mxu0 0.0
    %2042 = vmatprep.subr.mxu0 0.0
    %2043 = vmatpush1.xpose.msra.mxu0 0.0
    %2044 = vmatprep.subr.mxu0 0.0
    %2045 = vmatpush1.xpose.msra.mxu0 0.0
    %2046 = vmatprep.subr.mxu0 0.0
    %2047 = vmatpush1.xpose.msra.mxu0 0.0
    %2048 = vmatprep.subr.mxu0 0.0
    %2049 = vmatpush1.xpose.msra.mxu0 0.0
    %2050 = vmatprep.subr.mxu0 0.0
    %2051 = vmatpush1.xpose.msra.mxu0 0.0
    %2052 = vmatprep.subr.mxu0 0.0
    %2053 = vmatpush1.xpose.msra.mxu0 0.0
    %2054 = vmatprep.subr.mxu0 0.0
    %2055 = vmatpush1.xpose.msra.mxu0 0.0
    %2056 = vmatprep.subr.mxu0 0.0
    %2057 = vmatpush1.xpose.msra.mxu0 %v2024
    %2058 = vmatprep.subr.mxu0 0.0
    %2059 = vmatpush2.xpose.msra.mxu0 0.0
    %2060 = vmatprep.subr.mxu0 0.0
    %2061 = vmatpush2.xpose.msra.mxu0 0.0
    %2062 = vmatprep.subr.mxu0 0.0
    %2063 = vmatpush2.xpose.msra.mxu0 0.0
    %2064 = vmatprep.subr.mxu0 0.0
    %2065 = vmatpush2.xpose.msra.mxu0 0.0
    %2066 = vmatprep.subr.mxu0 0.0
    %2067 = vmatpush2.xpose.msra.mxu0 0.0
    %2068 = vmatprep.subr.mxu0 0.0
    %2069 = vmatpush2.xpose.msra.mxu0 0.0
    %2070 = vmatprep.subr.mxu0 0.0
    %2071 = vmatpush2.xpose.msra.mxu0 0.0
    %2072 = vmatprep.subr.mxu0 0.0
    %2073 = vmatpush2.xpose.msra.mxu0 0.0
    %2074 = vmatprep.subr.mxu0 0.0
    %2075 = vmatpush2.xpose.msra.mxu0 0.0
    %2076 = vmatprep.subr.mxu0 0.0
    %2077 = vmatpush2.xpose.msra.mxu0 0.0
    %2078 = vmatprep.subr.mxu0 0.0
    %2079 = vmatpush2.xpose.msra.mxu0 0.0
    %2080 = vmatprep.subr.mxu0 0.0
    %2081 = vmatpush2.xpose.msra.mxu0 0.0
    %2082 = vmatprep.subr.mxu0 0.0
    %2083 = vmatpush2.xpose.msra.mxu0 0.0
    %2084 = vmatprep.subr.mxu0 0.0
    %2085 = vmatpush2.xpose.msra.mxu0 0.0
    %2086 = vmatprep.subr.mxu0 0.0
    %2087 = vmatpush2.xpose.msra.mxu0 0.0
    %2088 = vmatprep.subr.mxu0 0.0
    %2089 = vmatpush2.xpose.msra.mxu0 0.0
    %2090 = vmatprep.mubr.f32.mxu0 0.0
    %2091 = vmatmul.mubr.f32.gmra.mxu0 %v2022
    %v2092 = vpop.f32.mrf.mxu0
    %v2093 = vadd.f32 0.0, %v2092
    %v2094 = vpop.f32.mrf.mxu0
    %2095 = vdwg.mxu0
    %v2096 = vmul.f32 %v2015, 0.5
    %v2097 = vmul.f32 %v2093, 0.5
    %v2098 = vsel %vm437, %v2096, -inf
    %2099 = vmax.xlane.f32.xlu0 %v2098
    %v2100 = vpop.xlane.xlu0 %2099
    %v2101 = vsel %vm437, %v2097, -inf
    %2102 = vmax.xlane.f32.xlu0 %v2101
    %v2103 = vpop.xlane.xlu0 %2102
    %v2104 = vsub.f32 %v2096, %v2100
    %v2105 = vsub.f32 %v2097, %v2103
    %v2106 = vmul.f32 %v2104, 1.442695
    %v2107 = vpow.pop %v2106
    %v2108 = vmul.f32 %v2105, 1.442695
    %v2109 = vpow.pop %v2108
    %v2110 = vsel %vm437, %v2107, 0.0
    %2111 = vadd.xlane.f32.xlu0 %v2110
    %v2112 = vpop.xlane.xlu0 %2111
    %v2113 = vsel %vm437, %v2109, 0.0
    %2114 = vadd.xlane.f32.xlu0 %v2113
    %v2115 = vpop.xlane.xlu0 %2114
    %v2116 = vrcp.pop %v2112
    %v2117 = vrcp.pop %v2115
    %v2118 = vmul.f32 %v2107, %v2116
    %v2119 = vmul.f32 %v2109, %v2117
    %2120 = vrot.lane.b32.xlu0 %v272, 44
    %v2121 = vpop.permute.xlu0 %2120
    %v2124 = vsel %vm437, %v2118, 0
    %2126 = vmatprep.subr.mxu0 0.0
    %2127 = vmatpush1.msra.mxu0 0.0
    %2128 = vmatprep.subr.mxu0 0.0
    %2129 = vmatpush1.msra.mxu0 0.0
    %2130 = vmatprep.subr.mxu0 0.0
    %2131 = vmatpush1.msra.mxu0 0.0
    %2132 = vmatprep.subr.mxu0 0.0
    %2133 = vmatpush1.msra.mxu0 0.0
    %2134 = vmatprep.subr.mxu0 0.0
    %2135 = vmatpush1.msra.mxu0 0.0
    %2136 = vmatprep.subr.mxu0 0.0
    %2137 = vmatpush1.msra.mxu0 0.0
    %2138 = vmatprep.subr.mxu0 0.0
    %2139 = vmatpush1.msra.mxu0 0.0
    %2140 = vmatprep.subr.mxu0 0.0
    %2141 = vmatpush1.msra.mxu0 0.0
    %2142 = vmatprep.subr.mxu0 0.0
    %2143 = vmatpush1.msra.mxu0 0.0
    %2144 = vmatprep.subr.mxu0 0.0
    %2145 = vmatpush1.msra.mxu0 0.0
    %2146 = vmatprep.subr.mxu0 0.0
    %2147 = vmatpush1.msra.mxu0 0.0
    %2148 = vmatprep.subr.mxu0 0.0
    %2149 = vmatpush1.msra.mxu0 0.0
    %2150 = vmatprep.subr.mxu0 0.0
    %2151 = vmatpush1.msra.mxu0 0.0
    %2152 = vmatprep.subr.mxu0 0.0
    %2153 = vmatpush1.msra.mxu0 0.0
    %2154 = vmatprep.subr.mxu0 0.0
    %2155 = vmatpush1.msra.mxu0 0.0
    %2156 = vmatprep.subr.mxu0 0.0
    %2157 = vmatpush1.msra.mxu0 %v2121
    %2158 = vmatprep.subr.mxu0 0.0
    %2159 = vmatpush2.msra.mxu0 0.0
    %2160 = vmatprep.subr.mxu0 0.0
    %2161 = vmatpush2.msra.mxu0 0.0
    %2162 = vmatprep.subr.mxu0 0.0
    %2163 = vmatpush2.msra.mxu0 0.0
    %2164 = vmatprep.subr.mxu0 0.0
    %2165 = vmatpush2.msra.mxu0 0.0
    %2166 = vmatprep.subr.mxu0 0.0
    %2167 = vmatpush2.msra.mxu0 0.0
    %2168 = vmatprep.subr.mxu0 0.0
    %2169 = vmatpush2.msra.mxu0 0.0
    %2170 = vmatprep.subr.mxu0 0.0
    %2171 = vmatpush2.msra.mxu0 0.0
    %2172 = vmatprep.subr.mxu0 0.0
    %2173 = vmatpush2.msra.mxu0 0.0
    %2174 = vmatprep.subr.mxu0 0.0
    %2175 = vmatpush2.msra.mxu0 0.0
    %2176 = vmatprep.subr.mxu0 0.0
    %2177 = vmatpush2.msra.mxu0 0.0
    %2178 = vmatprep.subr.mxu0 0.0
    %2179 = vmatpush2.msra.mxu0 0.0
    %2180 = vmatprep.subr.mxu0 0.0
    %2181 = vmatpush2.msra.mxu0 0.0
    %2182 = vmatprep.subr.mxu0 0.0
    %2183 = vmatpush2.msra.mxu0 0.0
    %2184 = vmatprep.subr.mxu0 0.0
    %2185 = vmatpush2.msra.mxu0 0.0
    %2186 = vmatprep.subr.mxu0 0.0
    %2187 = vmatpush2.msra.mxu0 0.0
    %2188 = vmatprep.subr.mxu0 0.0
    %2189 = vmatpush2.msra.mxu0 0.0
    %2190 = vmatprep.mubr.f32.mxu0 0.0
    %2191 = vmatmul.mubr.f32.gmra.mxu0 %v2124
    %v2192 = vpop.f32.mrf.mxu0
    %v2193 = vadd.f32 0.0, %v2192
    %v2194 = vpop.f32.mrf.mxu0
    %2195 = vdwg.mxu0
    %2196 = vrot.lane.b32.xlu0 %v277, 44
    %v2197 = vpop.permute.xlu0 %2196
    %v2200 = vsel %vm437, %v2119, 0
    %2202 = vmatprep.subr.mxu0 0.0
    %2203 = vmatpush1.msra.mxu0 0.0
    %2204 = vmatprep.subr.mxu0 0.0
    %2205 = vmatpush1.msra.mxu0 0.0
    %2206 = vmatprep.subr.mxu0 0.0
    %2207 = vmatpush1.msra.mxu0 0.0
    %2208 = vmatprep.subr.mxu0 0.0
    %2209 = vmatpush1.msra.mxu0 0.0
    %2210 = vmatprep.subr.mxu0 0.0
    %2211 = vmatpush1.msra.mxu0 0.0
    %2212 = vmatprep.subr.mxu0 0.0
    %2213 = vmatpush1.msra.mxu0 0.0
    %2214 = vmatprep.subr.mxu0 0.0
    %2215 = vmatpush1.msra.mxu0 0.0
    %2216 = vmatprep.subr.mxu0 0.0
    %2217 = vmatpush1.msra.mxu0 0.0
    %2218 = vmatprep.subr.mxu0 0.0
    %2219 = vmatpush1.msra.mxu0 0.0
    %2220 = vmatprep.subr.mxu0 0.0
    %2221 = vmatpush1.msra.mxu0 0.0
    %2222 = vmatprep.subr.mxu0 0.0
    %2223 = vmatpush1.msra.mxu0 0.0
    %2224 = vmatprep.subr.mxu0 0.0
    %2225 = vmatpush1.msra.mxu0 0.0
    %2226 = vmatprep.subr.mxu0 0.0
    %2227 = vmatpush1.msra.mxu0 0.0
    %2228 = vmatprep.subr.mxu0 0.0
    %2229 = vmatpush1.msra.mxu0 0.0
    %2230 = vmatprep.subr.mxu0 0.0
    %2231 = vmatpush1.msra.mxu0 0.0
    %2232 = vmatprep.subr.mxu0 0.0
    %2233 = vmatpush1.msra.mxu0 %v2197
    %2234 = vmatprep.subr.mxu0 0.0
    %2235 = vmatpush2.msra.mxu0 0.0
    %2236 = vmatprep.subr.mxu0 0.0
    %2237 = vmatpush2.msra.mxu0 0.0
    %2238 = vmatprep.subr.mxu0 0.0
    %2239 = vmatpush2.msra.mxu0 0.0
    %2240 = vmatprep.subr.mxu0 0.0
    %2241 = vmatpush2.msra.mxu0 0.0
    %2242 = vmatprep.subr.mxu0 0.0
    %2243 = vmatpush2.msra.mxu0 0.0
    %2244 = vmatprep.subr.mxu0 0.0
    %2245 = vmatpush2.msra.mxu0 0.0
    %2246 = vmatprep.subr.mxu0 0.0
    %2247 = vmatpush2.msra.mxu0 0.0
    %2248 = vmatprep.subr.mxu0 0.0
    %2249 = vmatpush2.msra.mxu0 0.0
    %2250 = vmatprep.subr.mxu0 0.0
    %2251 = vmatpush2.msra.mxu0 0.0
    %2252 = vmatprep.subr.mxu0 0.0
    %2253 = vmatpush2.msra.mxu0 0.0
    %2254 = vmatprep.subr.mxu0 0.0
    %2255 = vmatpush2.msra.mxu0 0.0
    %2256 = vmatprep.subr.mxu0 0.0
    %2257 = vmatpush2.msra.mxu0 0.0
    %2258 = vmatprep.subr.mxu0 0.0
    %2259 = vmatpush2.msra.mxu0 0.0
    %2260 = vmatprep.subr.mxu0 0.0
    %2261 = vmatpush2.msra.mxu0 0.0
    %2262 = vmatprep.subr.mxu0 0.0
    %2263 = vmatpush2.msra.mxu0 0.0
    %2264 = vmatprep.subr.mxu0 0.0
    %2265 = vmatpush2.msra.mxu0 0.0
    %2266 = vmatprep.mubr.f32.mxu0 0.0
    %2267 = vmatmul.mubr.f32.gmra.mxu0 %v2200
    %v2268 = vpop.f32.mrf.mxu0
    %v2269 = vadd.f32 0.0, %v2268
    %v2270 = vpop.f32.mrf.mxu0
    %2271 = vdwg.mxu0
    %2272 = vrot.lane.b32.xlu0 %v272, 104
    %v2273 = vpop.permute.xlu0 %2272
    %2274 = vrot.lane.b32.xlu0 %v272, 72
    %v2275 = vpop.permute.xlu0 %2274
    %v2276 = vsel %vm283, %v2273, 0
    %v2278 = vsel %vm283, %v2275, 0
    %2280 = vmatprep.subr.mxu0 0.0
    %2281 = vmatpush1.xpose.msra.mxu0 0.0
    %2282 = vmatprep.subr.mxu0 0.0
    %2283 = vmatpush1.xpose.msra.mxu0 0.0
    %2284 = vmatprep.subr.mxu0 0.0
    %2285 = vmatpush1.xpose.msra.mxu0 0.0
    %2286 = vmatprep.subr.mxu0 0.0
    %2287 = vmatpush1.xpose.msra.mxu0 0.0
    %2288 = vmatprep.subr.mxu0 0.0
    %2289 = vmatpush1.xpose.msra.mxu0 0.0
    %2290 = vmatprep.subr.mxu0 0.0
    %2291 = vmatpush1.xpose.msra.mxu0 0.0
    %2292 = vmatprep.subr.mxu0 0.0
    %2293 = vmatpush1.xpose.msra.mxu0 0.0
    %2294 = vmatprep.subr.mxu0 0.0
    %2295 = vmatpush1.xpose.msra.mxu0 0.0
    %2296 = vmatprep.subr.mxu0 0.0
    %2297 = vmatpush1.xpose.msra.mxu0 0.0
    %2298 = vmatprep.subr.mxu0 0.0
    %2299 = vmatpush1.xpose.msra.mxu0 0.0
    %2300 = vmatprep.subr.mxu0 0.0
    %2301 = vmatpush1.xpose.msra.mxu0 0.0
    %2302 = vmatprep.subr.mxu0 0.0
    %2303 = vmatpush1.xpose.msra.mxu0 0.0
    %2304 = vmatprep.subr.mxu0 0.0
    %2305 = vmatpush1.xpose.msra.mxu0 0.0
    %2306 = vmatprep.subr.mxu0 0.0
    %2307 = vmatpush1.xpose.msra.mxu0 0.0
    %2308 = vmatprep.subr.mxu0 0.0
    %2309 = vmatpush1.xpose.msra.mxu0 0.0
    %2310 = vmatprep.subr.mxu0 0.0
    %2311 = vmatpush1.xpose.msra.mxu0 %v2278
    %2312 = vmatprep.subr.mxu0 0.0
    %2313 = vmatpush2.xpose.msra.mxu0 0.0
    %2314 = vmatprep.subr.mxu0 0.0
    %2315 = vmatpush2.xpose.msra.mxu0 0.0
    %2316 = vmatprep.subr.mxu0 0.0
    %2317 = vmatpush2.xpose.msra.mxu0 0.0
    %2318 = vmatprep.subr.mxu0 0.0
    %2319 = vmatpush2.xpose.msra.mxu0 0.0
    %2320 = vmatprep.subr.mxu0 0.0
    %2321 = vmatpush2.xpose.msra.mxu0 0.0
    %2322 = vmatprep.subr.mxu0 0.0
    %2323 = vmatpush2.xpose.msra.mxu0 0.0
    %2324 = vmatprep.subr.mxu0 0.0
    %2325 = vmatpush2.xpose.msra.mxu0 0.0
    %2326 = vmatprep.subr.mxu0 0.0
    %2327 = vmatpush2.xpose.msra.mxu0 0.0
    %2328 = vmatprep.subr.mxu0 0.0
    %2329 = vmatpush2.xpose.msra.mxu0 0.0
    %2330 = vmatprep.subr.mxu0 0.0
    %2331 = vmatpush2.xpose.msra.mxu0 0.0
    %2332 = vmatprep.subr.mxu0 0.0
    %2333 = vmatpush2.xpose.msra.mxu0 0.0
    %2334 = vmatprep.subr.mxu0 0.0
    %2335 = vmatpush2.xpose.msra.mxu0 0.0
    %2336 = vmatprep.subr.mxu0 0.0
    %2337 = vmatpush2.xpose.msra.mxu0 0.0
    %2338 = vmatprep.subr.mxu0 0.0
    %2339 = vmatpush2.xpose.msra.mxu0 0.0
    %2340 = vmatprep.subr.mxu0 0.0
    %2341 = vmatpush2.xpose.msra.mxu0 0.0
    %2342 = vmatprep.subr.mxu0 0.0
    %2343 = vmatpush2.xpose.msra.mxu0 0.0
    %2344 = vmatprep.mubr.f32.mxu0 0.0
    %2345 = vmatmul.mubr.f32.gmra.mxu0 %v2276
    %v2346 = vpop.f32.mrf.mxu0
    %v2347 = vadd.f32 0.0, %v2346
    %v2348 = vpop.f32.mrf.mxu0
    %2349 = vdwg.mxu0
    %2350 = vrot.lane.b32.xlu0 %v277, 104
    %v2351 = vpop.permute.xlu0 %2350
    %2352 = vrot.lane.b32.xlu0 %v277, 72
    %v2353 = vpop.permute.xlu0 %2352
    %v2354 = vsel %vm283, %v2351, 0
    %v2356 = vsel %vm283, %v2353, 0
    %2358 = vmatprep.subr.mxu0 0.0
    %2359 = vmatpush1.xpose.msra.mxu0 0.0
    %2360 = vmatprep.subr.mxu0 0.0
    %2361 = vmatpush1.xpose.msra.mxu0 0.0
    %2362 = vmatprep.subr.mxu0 0.0
    %2363 = vmatpush1.xpose.msra.mxu0 0.0
    %2364 = vmatprep.subr.mxu0 0.0
    %2365 = vmatpush1.xpose.msra.mxu0 0.0
    %2366 = vmatprep.subr.mxu0 0.0
    %2367 = vmatpush1.xpose.msra.mxu0 0.0
    %2368 = vmatprep.subr.mxu0 0.0
    %2369 = vmatpush1.xpose.msra.mxu0 0.0
    %2370 = vmatprep.subr.mxu0 0.0
    %2371 = vmatpush1.xpose.msra.mxu0 0.0
    %2372 = vmatprep.subr.mxu0 0.0
    %2373 = vmatpush1.xpose.msra.mxu0 0.0
    %2374 = vmatprep.subr.mxu0 0.0
    %2375 = vmatpush1.xpose.msra.mxu0 0.0
    %2376 = vmatprep.subr.mxu0 0.0
    %2377 = vmatpush1.xpose.msra.mxu0 0.0
    %2378 = vmatprep.subr.mxu0 0.0
    %2379 = vmatpush1.xpose.msra.mxu0 0.0
    %2380 = vmatprep.subr.mxu0 0.0
    %2381 = vmatpush1.xpose.msra.mxu0 0.0
    %2382 = vmatprep.subr.mxu0 0.0
    %2383 = vmatpush1.xpose.msra.mxu0 0.0
    %2384 = vmatprep.subr.mxu0 0.0
    %2385 = vmatpush1.xpose.msra.mxu0 0.0
    %2386 = vmatprep.subr.mxu0 0.0
    %2387 = vmatpush1.xpose.msra.mxu0 0.0
    %2388 = vmatprep.subr.mxu0 0.0
    %2389 = vmatpush1.xpose.msra.mxu0 %v2356
    %2390 = vmatprep.subr.mxu0 0.0
    %2391 = vmatpush2.xpose.msra.mxu0 0.0
    %2392 = vmatprep.subr.mxu0 0.0
    %2393 = vmatpush2.xpose.msra.mxu0 0.0
    %2394 = vmatprep.subr.mxu0 0.0
    %2395 = vmatpush2.xpose.msra.mxu0 0.0
    %2396 = vmatprep.subr.mxu0 0.0
    %2397 = vmatpush2.xpose.msra.mxu0 0.0
    %2398 = vmatprep.subr.mxu0 0.0
    %2399 = vmatpush2.xpose.msra.mxu0 0.0
    %2400 = vmatprep.subr.mxu0 0.0
    %2401 = vmatpush2.xpose.msra.mxu0 0.0
    %2402 = vmatprep.subr.mxu0 0.0
    %2403 = vmatpush2.xpose.msra.mxu0 0.0
    %2404 = vmatprep.subr.mxu0 0.0
    %2405 = vmatpush2.xpose.msra.mxu0 0.0
    %2406 = vmatprep.subr.mxu0 0.0
    %2407 = vmatpush2.xpose.msra.mxu0 0.0
    %2408 = vmatprep.subr.mxu0 0.0
    %2409 = vmatpush2.xpose.msra.mxu0 0.0
    %2410 = vmatprep.subr.mxu0 0.0
    %2411 = vmatpush2.xpose.msra.mxu0 0.0
    %2412 = vmatprep.subr.mxu0 0.0
    %2413 = vmatpush2.xpose.msra.mxu0 0.0
    %2414 = vmatprep.subr.mxu0 0.0
    %2415 = vmatpush2.xpose.msra.mxu0 0.0
    %2416 = vmatprep.subr.mxu0 0.0
    %2417 = vmatpush2.xpose.msra.mxu0 0.0
    %2418 = vmatprep.subr.mxu0 0.0
    %2419 = vmatpush2.xpose.msra.mxu0 0.0
    %2420 = vmatprep.subr.mxu0 0.0
    %2421 = vmatpush2.xpose.msra.mxu0 0.0
    %2422 = vmatprep.mubr.f32.mxu0 0.0
    %2423 = vmatmul.mubr.f32.gmra.mxu0 %v2354
    %v2424 = vpop.f32.mrf.mxu0
    %v2425 = vadd.f32 0.0, %v2424
    %v2426 = vpop.f32.mrf.mxu0
    %2427 = vdwg.mxu0
    %v2428 = vmul.f32 %v2347, 0.5
    %v2429 = vmul.f32 %v2425, 0.5
    %v2430 = vsel %vm437, %v2428, -inf
    %2431 = vmax.xlane.f32.xlu0 %v2430
    %v2432 = vpop.xlane.xlu0 %2431
    %v2433 = vsel %vm437, %v2429, -inf
    %2434 = vmax.xlane.f32.xlu0 %v2433
    %v2435 = vpop.xlane.xlu0 %2434
    %v2436 = vsub.f32 %v2428, %v2432
    %v2437 = vsub.f32 %v2429, %v2435
    %v2438 = vmul.f32 %v2436, 1.442695
    %v2439 = vpow.pop %v2438
    %v2440 = vmul.f32 %v2437, 1.442695
    %v2441 = vpow.pop %v2440
    %v2442 = vsel %vm437, %v2439, 0.0
    %2443 = vadd.xlane.f32.xlu0 %v2442
    %v2444 = vpop.xlane.xlu0 %2443
    %v2445 = vsel %vm437, %v2441, 0.0
    %2446 = vadd.xlane.f32.xlu0 %v2445
    %v2447 = vpop.xlane.xlu0 %2446
    %v2448 = vrcp.pop %v2444
    %v2449 = vrcp.pop %v2447
    %v2450 = vmul.f32 %v2439, %v2448
    %v2451 = vmul.f32 %v2441, %v2449
    %2452 = vrot.lane.b32.xlu0 %v272, 40
    %v2453 = vpop.permute.xlu0 %2452
    %v2456 = vsel %vm437, %v2450, 0
    %2458 = vmatprep.subr.mxu0 0.0
    %2459 = vmatpush1.msra.mxu0 0.0
    %2460 = vmatprep.subr.mxu0 0.0
    %2461 = vmatpush1.msra.mxu0 0.0
    %2462 = vmatprep.subr.mxu0 0.0
    %2463 = vmatpush1.msra.mxu0 0.0
    %2464 = vmatprep.subr.mxu0 0.0
    %2465 = vmatpush1.msra.mxu0 0.0
    %2466 = vmatprep.subr.mxu0 0.0
    %2467 = vmatpush1.msra.mxu0 0.0
    %2468 = vmatprep.subr.mxu0 0.0
    %2469 = vmatpush1.msra.mxu0 0.0
    %2470 = vmatprep.subr.mxu0 0.0
    %2471 = vmatpush1.msra.mxu0 0.0
    %2472 = vmatprep.subr.mxu0 0.0
    %2473 = vmatpush1.msra.mxu0 0.0
    %2474 = vmatprep.subr.mxu0 0.0
    %2475 = vmatpush1.msra.mxu0 0.0
    %2476 = vmatprep.subr.mxu0 0.0
    %2477 = vmatpush1.msra.mxu0 0.0
    %2478 = vmatprep.subr.mxu0 0.0
    %2479 = vmatpush1.msra.mxu0 0.0
    %2480 = vmatprep.subr.mxu0 0.0
    %2481 = vmatpush1.msra.mxu0 0.0
    %2482 = vmatprep.subr.mxu0 0.0
    %2483 = vmatpush1.msra.mxu0 0.0
    %2484 = vmatprep.subr.mxu0 0.0
    %2485 = vmatpush1.msra.mxu0 0.0
    %2486 = vmatprep.subr.mxu0 0.0
    %2487 = vmatpush1.msra.mxu0 0.0
    %2488 = vmatprep.subr.mxu0 0.0
    %2489 = vmatpush1.msra.mxu0 %v2453
    %2490 = vmatprep.subr.mxu0 0.0
    %2491 = vmatpush2.msra.mxu0 0.0
    %2492 = vmatprep.subr.mxu0 0.0
    %2493 = vmatpush2.msra.mxu0 0.0
    %2494 = vmatprep.subr.mxu0 0.0
    %2495 = vmatpush2.msra.mxu0 0.0
    %2496 = vmatprep.subr.mxu0 0.0
    %2497 = vmatpush2.msra.mxu0 0.0
    %2498 = vmatprep.subr.mxu0 0.0
    %2499 = vmatpush2.msra.mxu0 0.0
    %2500 = vmatprep.subr.mxu0 0.0
    %2501 = vmatpush2.msra.mxu0 0.0
    %2502 = vmatprep.subr.mxu0 0.0
    %2503 = vmatpush2.msra.mxu0 0.0
    %2504 = vmatprep.subr.mxu0 0.0
    %2505 = vmatpush2.msra.mxu0 0.0
    %2506 = vmatprep.subr.mxu0 0.0
    %2507 = vmatpush2.msra.mxu0 0.0
    %2508 = vmatprep.subr.mxu0 0.0
    %2509 = vmatpush2.msra.mxu0 0.0
    %2510 = vmatprep.subr.mxu0 0.0
    %2511 = vmatpush2.msra.mxu0 0.0
    %2512 = vmatprep.subr.mxu0 0.0
    %2513 = vmatpush2.msra.mxu0 0.0
    %2514 = vmatprep.subr.mxu0 0.0
    %2515 = vmatpush2.msra.mxu0 0.0
    %2516 = vmatprep.subr.mxu0 0.0
    %2517 = vmatpush2.msra.mxu0 0.0
    %2518 = vmatprep.subr.mxu0 0.0
    %2519 = vmatpush2.msra.mxu0 0.0
    %2520 = vmatprep.subr.mxu0 0.0
    %2521 = vmatpush2.msra.mxu0 0.0
    %2522 = vmatprep.mubr.f32.mxu0 0.0
    %2523 = vmatmul.mubr.f32.gmra.mxu0 %v2456
    %v2524 = vpop.f32.mrf.mxu0
    %v2525 = vadd.f32 0.0, %v2524
    %v2526 = vpop.f32.mrf.mxu0
    %2527 = vdwg.mxu0
    %2528 = vrot.lane.b32.xlu0 %v277, 40
    %v2529 = vpop.permute.xlu0 %2528
    %v2532 = vsel %vm437, %v2451, 0
    %2534 = vmatprep.subr.mxu0 0.0
    %2535 = vmatpush1.msra.mxu0 0.0
    %2536 = vmatprep.subr.mxu0 0.0
    %2537 = vmatpush1.msra.mxu0 0.0
    %2538 = vmatprep.subr.mxu0 0.0
    %2539 = vmatpush1.msra.mxu0 0.0
    %2540 = vmatprep.subr.mxu0 0.0
    %2541 = vmatpush1.msra.mxu0 0.0
    %2542 = vmatprep.subr.mxu0 0.0
    %2543 = vmatpush1.msra.mxu0 0.0
    %2544 = vmatprep.subr.mxu0 0.0
    %2545 = vmatpush1.msra.mxu0 0.0
    %2546 = vmatprep.subr.mxu0 0.0
    %2547 = vmatpush1.msra.mxu0 0.0
    %2548 = vmatprep.subr.mxu0 0.0
    %2549 = vmatpush1.msra.mxu0 0.0
    %2550 = vmatprep.subr.mxu0 0.0
    %2551 = vmatpush1.msra.mxu0 0.0
    %2552 = vmatprep.subr.mxu0 0.0
    %2553 = vmatpush1.msra.mxu0 0.0
    %2554 = vmatprep.subr.mxu0 0.0
    %2555 = vmatpush1.msra.mxu0 0.0
    %2556 = vmatprep.subr.mxu0 0.0
    %2557 = vmatpush1.msra.mxu0 0.0
    %2558 = vmatprep.subr.mxu0 0.0
    %2559 = vmatpush1.msra.mxu0 0.0
    %2560 = vmatprep.subr.mxu0 0.0
    %2561 = vmatpush1.msra.mxu0 0.0
    %2562 = vmatprep.subr.mxu0 0.0
    %2563 = vmatpush1.msra.mxu0 0.0
    %2564 = vmatprep.subr.mxu0 0.0
    %2565 = vmatpush1.msra.mxu0 %v2529
    %2566 = vmatprep.subr.mxu0 0.0
    %2567 = vmatpush2.msra.mxu0 0.0
    %2568 = vmatprep.subr.mxu0 0.0
    %2569 = vmatpush2.msra.mxu0 0.0
    %2570 = vmatprep.subr.mxu0 0.0
    %2571 = vmatpush2.msra.mxu0 0.0
    %2572 = vmatprep.subr.mxu0 0.0
    %2573 = vmatpush2.msra.mxu0 0.0
    %2574 = vmatprep.subr.mxu0 0.0
    %2575 = vmatpush2.msra.mxu0 0.0
    %2576 = vmatprep.subr.mxu0 0.0
    %2577 = vmatpush2.msra.mxu0 0.0
    %2578 = vmatprep.subr.mxu0 0.0
    %2579 = vmatpush2.msra.mxu0 0.0
    %2580 = vmatprep.subr.mxu0 0.0
    %2581 = vmatpush2.msra.mxu0 0.0
    %2582 = vmatprep.subr.mxu0 0.0
    %2583 = vmatpush2.msra.mxu0 0.0
    %2584 = vmatprep.subr.mxu0 0.0
    %2585 = vmatpush2.msra.mxu0 0.0
    %2586 = vmatprep.subr.mxu0 0.0
    %2587 = vmatpush2.msra.mxu0 0.0
    %2588 = vmatprep.subr.mxu0 0.0
    %2589 = vmatpush2.msra.mxu0 0.0
    %2590 = vmatprep.subr.mxu0 0.0
    %2591 = vmatpush2.msra.mxu0 0.0
    %2592 = vmatprep.subr.mxu0 0.0
    %2593 = vmatpush2.msra.mxu0 0.0
    %2594 = vmatprep.subr.mxu0 0.0
    %2595 = vmatpush2.msra.mxu0 0.0
    %2596 = vmatprep.subr.mxu0 0.0
    %2597 = vmatpush2.msra.mxu0 0.0
    %2598 = vmatprep.mubr.f32.mxu0 0.0
    %2599 = vmatmul.mubr.f32.gmra.mxu0 %v2532
    %v2600 = vpop.f32.mrf.mxu0
    %v2601 = vadd.f32 0.0, %v2600
    %v2602 = vpop.f32.mrf.mxu0
    %2603 = vdwg.mxu0
    %2604 = vrot.lane.b32.xlu0 %v272, 100
    %v2605 = vpop.permute.xlu0 %2604
    %2606 = vrot.lane.b32.xlu0 %v272, 68
    %v2607 = vpop.permute.xlu0 %2606
    %v2608 = vsel %vm283, %v2605, 0
    %v2610 = vsel %vm283, %v2607, 0
    %2612 = vmatprep.subr.mxu0 0.0
    %2613 = vmatpush1.xpose.msra.mxu0 0.0
    %2614 = vmatprep.subr.mxu0 0.0
    %2615 = vmatpush1.xpose.msra.mxu0 0.0
    %2616 = vmatprep.subr.mxu0 0.0
    %2617 = vmatpush1.xpose.msra.mxu0 0.0
    %2618 = vmatprep.subr.mxu0 0.0
    %2619 = vmatpush1.xpose.msra.mxu0 0.0
    %2620 = vmatprep.subr.mxu0 0.0
    %2621 = vmatpush1.xpose.msra.mxu0 0.0
    %2622 = vmatprep.subr.mxu0 0.0
    %2623 = vmatpush1.xpose.msra.mxu0 0.0
    %2624 = vmatprep.subr.mxu0 0.0
    %2625 = vmatpush1.xpose.msra.mxu0 0.0
    %2626 = vmatprep.subr.mxu0 0.0
    %2627 = vmatpush1.xpose.msra.mxu0 0.0
    %2628 = vmatprep.subr.mxu0 0.0
    %2629 = vmatpush1.xpose.msra.mxu0 0.0
    %2630 = vmatprep.subr.mxu0 0.0
    %2631 = vmatpush1.xpose.msra.mxu0 0.0
    %2632 = vmatprep.subr.mxu0 0.0
    %2633 = vmatpush1.xpose.msra.mxu0 0.0
    %2634 = vmatprep.subr.mxu0 0.0
    %2635 = vmatpush1.xpose.msra.mxu0 0.0
    %2636 = vmatprep.subr.mxu0 0.0
    %2637 = vmatpush1.xpose.msra.mxu0 0.0
    %2638 = vmatprep.subr.mxu0 0.0
    %2639 = vmatpush1.xpose.msra.mxu0 0.0
    %2640 = vmatprep.subr.mxu0 0.0
    %2641 = vmatpush1.xpose.msra.mxu0 0.0
    %2642 = vmatprep.subr.mxu0 0.0
    %2643 = vmatpush1.xpose.msra.mxu0 %v2610
    %2644 = vmatprep.subr.mxu0 0.0
    %2645 = vmatpush2.xpose.msra.mxu0 0.0
    %2646 = vmatprep.subr.mxu0 0.0
    %2647 = vmatpush2.xpose.msra.mxu0 0.0
    %2648 = vmatprep.subr.mxu0 0.0
    %2649 = vmatpush2.xpose.msra.mxu0 0.0
    %2650 = vmatprep.subr.mxu0 0.0
    %2651 = vmatpush2.xpose.msra.mxu0 0.0
    %2652 = vmatprep.subr.mxu0 0.0
    %2653 = vmatpush2.xpose.msra.mxu0 0.0
    %2654 = vmatprep.subr.mxu0 0.0
    %2655 = vmatpush2.xpose.msra.mxu0 0.0
    %2656 = vmatprep.subr.mxu0 0.0
    %2657 = vmatpush2.xpose.msra.mxu0 0.0
    %2658 = vmatprep.subr.mxu0 0.0
    %2659 = vmatpush2.xpose.msra.mxu0 0.0
    %2660 = vmatprep.subr.mxu0 0.0
    %2661 = vmatpush2.xpose.msra.mxu0 0.0
    %2662 = vmatprep.subr.mxu0 0.0
    %2663 = vmatpush2.xpose.msra.mxu0 0.0
    %2664 = vmatprep.subr.mxu0 0.0
    %2665 = vmatpush2.xpose.msra.mxu0 0.0
    %2666 = vmatprep.subr.mxu0 0.0
    %2667 = vmatpush2.xpose.msra.mxu0 0.0
    %2668 = vmatprep.subr.mxu0 0.0
    %2669 = vmatpush2.xpose.msra.mxu0 0.0
    %2670 = vmatprep.subr.mxu0 0.0
    %2671 = vmatpush2.xpose.msra.mxu0 0.0
    %2672 = vmatprep.subr.mxu0 0.0
    %2673 = vmatpush2.xpose.msra.mxu0 0.0
    %2674 = vmatprep.subr.mxu0 0.0
    %2675 = vmatpush2.xpose.msra.mxu0 0.0
    %2676 = vmatprep.mubr.f32.mxu0 0.0
    %2677 = vmatmul.mubr.f32.gmra.mxu0 %v2608
    %v2678 = vpop.f32.mrf.mxu0
    %v2679 = vadd.f32 0.0, %v2678
    %v2680 = vpop.f32.mrf.mxu0
    %2681 = vdwg.mxu0
    %2682 = vrot.lane.b32.xlu0 %v277, 100
    %v2683 = vpop.permute.xlu0 %2682
    %2684 = vrot.lane.b32.xlu0 %v277, 68
    %v2685 = vpop.permute.xlu0 %2684
    %v2686 = vsel %vm283, %v2683, 0
    %v2688 = vsel %vm283, %v2685, 0
    %2690 = vmatprep.subr.mxu0 0.0
    %2691 = vmatpush1.xpose.msra.mxu0 0.0
    %2692 = vmatprep.subr.mxu0 0.0
    %2693 = vmatpush1.xpose.msra.mxu0 0.0
    %2694 = vmatprep.subr.mxu0 0.0
    %2695 = vmatpush1.xpose.msra.mxu0 0.0
    %2696 = vmatprep.subr.mxu0 0.0
    %2697 = vmatpush1.xpose.msra.mxu0 0.0
    %2698 = vmatprep.subr.mxu0 0.0
    %2699 = vmatpush1.xpose.msra.mxu0 0.0
    %2700 = vmatprep.subr.mxu0 0.0
    %2701 = vmatpush1.xpose.msra.mxu0 0.0
    %2702 = vmatprep.subr.mxu0 0.0
    %2703 = vmatpush1.xpose.msra.mxu0 0.0
    %2704 = vmatprep.subr.mxu0 0.0
    %2705 = vmatpush1.xpose.msra.mxu0 0.0
    %2706 = vmatprep.subr.mxu0 0.0
    %2707 = vmatpush1.xpose.msra.mxu0 0.0
    %2708 = vmatprep.subr.mxu0 0.0
    %2709 = vmatpush1.xpose.msra.mxu0 0.0
    %2710 = vmatprep.subr.mxu0 0.0
    %2711 = vmatpush1.xpose.msra.mxu0 0.0
    %2712 = vmatprep.subr.mxu0 0.0
    %2713 = vmatpush1.xpose.msra.mxu0 0.0
    %2714 = vmatprep.subr.mxu0 0.0
    %2715 = vmatpush1.xpose.msra.mxu0 0.0
    %2716 = vmatprep.subr.mxu0 0.0
    %2717 = vmatpush1.xpose.msra.mxu0 0.0
    %2718 = vmatprep.subr.mxu0 0.0
    %2719 = vmatpush1.xpose.msra.mxu0 0.0
    %2720 = vmatprep.subr.mxu0 0.0
    %2721 = vmatpush1.xpose.msra.mxu0 %v2688
    %2722 = vmatprep.subr.mxu0 0.0
    %2723 = vmatpush2.xpose.msra.mxu0 0.0
    %2724 = vmatprep.subr.mxu0 0.0
    %2725 = vmatpush2.xpose.msra.mxu0 0.0
    %2726 = vmatprep.subr.mxu0 0.0
    %2727 = vmatpush2.xpose.msra.mxu0 0.0
    %2728 = vmatprep.subr.mxu0 0.0
    %2729 = vmatpush2.xpose.msra.mxu0 0.0
    %2730 = vmatprep.subr.mxu0 0.0
    %2731 = vmatpush2.xpose.msra.mxu0 0.0
    %2732 = vmatprep.subr.mxu0 0.0
    %2733 = vmatpush2.xpose.msra.mxu0 0.0
    %2734 = vmatprep.subr.mxu0 0.0
    %2735 = vmatpush2.xpose.msra.mxu0 0.0
    %2736 = vmatprep.subr.mxu0 0.0
    %2737 = vmatpush2.xpose.msra.mxu0 0.0
    %2738 = vmatprep.subr.mxu0 0.0
    %2739 = vmatpush2.xpose.msra.mxu0 0.0
    %2740 = vmatprep.subr.mxu0 0.0
    %2741 = vmatpush2.xpose.msra.mxu0 0.0
    %2742 = vmatprep.subr.mxu0 0.0
    %2743 = vmatpush2.xpose.msra.mxu0 0.0
    %2744 = vmatprep.subr.mxu0 0.0
    %2745 = vmatpush2.xpose.msra.mxu0 0.0
    %2746 = vmatprep.subr.mxu0 0.0
    %2747 = vmatpush2.xpose.msra.mxu0 0.0
    %2748 = vmatprep.subr.mxu0 0.0
    %2749 = vmatpush2.xpose.msra.mxu0 0.0
    %2750 = vmatprep.subr.mxu0 0.0
    %2751 = vmatpush2.xpose.msra.mxu0 0.0
    %2752 = vmatprep.subr.mxu0 0.0
    %2753 = vmatpush2.xpose.msra.mxu0 0.0
    %2754 = vmatprep.mubr.f32.mxu0 0.0
    %2755 = vmatmul.mubr.f32.gmra.mxu0 %v2686
    %v2756 = vpop.f32.mrf.mxu0
    %v2757 = vadd.f32 0.0, %v2756
    %v2758 = vpop.f32.mrf.mxu0
    %2759 = vdwg.mxu0
    %v2760 = vmul.f32 %v2679, 0.5
    %v2761 = vmul.f32 %v2757, 0.5
    %v2762 = vsel %vm437, %v2760, -inf
    %2763 = vmax.xlane.f32.xlu0 %v2762
    %v2764 = vpop.xlane.xlu0 %2763
    %v2765 = vsel %vm437, %v2761, -inf
    %2766 = vmax.xlane.f32.xlu0 %v2765
    %v2767 = vpop.xlane.xlu0 %2766
    %v2768 = vsub.f32 %v2760, %v2764
    %v2769 = vsub.f32 %v2761, %v2767
    %v2770 = vmul.f32 %v2768, 1.442695
    %v2771 = vpow.pop %v2770
    %v2772 = vmul.f32 %v2769, 1.442695
    %v2773 = vpow.pop %v2772
    %v2774 = vsel %vm437, %v2771, 0.0
    %2775 = vadd.xlane.f32.xlu0 %v2774
    %v2776 = vpop.xlane.xlu0 %2775
    %v2777 = vsel %vm437, %v2773, 0.0
    %2778 = vadd.xlane.f32.xlu0 %v2777
    %v2779 = vpop.xlane.xlu0 %2778
    %v2780 = vrcp.pop %v2776
    %v2781 = vrcp.pop %v2779
    %v2782 = vmul.f32 %v2771, %v2780
    %v2783 = vmul.f32 %v2773, %v2781
    %2784 = vrot.lane.b32.xlu0 %v272, 36
    %v2785 = vpop.permute.xlu0 %2784
    %v2788 = vsel %vm437, %v2782, 0
    %2790 = vmatprep.subr.mxu0 0.0
    %2791 = vmatpush1.msra.mxu0 0.0
    %2792 = vmatprep.subr.mxu0 0.0
    %2793 = vmatpush1.msra.mxu0 0.0
    %2794 = vmatprep.subr.mxu0 0.0
    %2795 = vmatpush1.msra.mxu0 0.0
    %2796 = vmatprep.subr.mxu0 0.0
    %2797 = vmatpush1.msra.mxu0 0.0
    %2798 = vmatprep.subr.mxu0 0.0
    %2799 = vmatpush1.msra.mxu0 0.0
    %2800 = vmatprep.subr.mxu0 0.0
    %2801 = vmatpush1.msra.mxu0 0.0
    %2802 = vmatprep.subr.mxu0 0.0
    %2803 = vmatpush1.msra.mxu0 0.0
    %2804 = vmatprep.subr.mxu0 0.0
    %2805 = vmatpush1.msra.mxu0 0.0
    %2806 = vmatprep.subr.mxu0 0.0
    %2807 = vmatpush1.msra.mxu0 0.0
    %2808 = vmatprep.subr.mxu0 0.0
    %2809 = vmatpush1.msra.mxu0 0.0
    %2810 = vmatprep.subr.mxu0 0.0
    %2811 = vmatpush1.msra.mxu0 0.0
    %2812 = vmatprep.subr.mxu0 0.0
    %2813 = vmatpush1.msra.mxu0 0.0
    %2814 = vmatprep.subr.mxu0 0.0
    %2815 = vmatpush1.msra.mxu0 0.0
    %2816 = vmatprep.subr.mxu0 0.0
    %2817 = vmatpush1.msra.mxu0 0.0
    %2818 = vmatprep.subr.mxu0 0.0
    %2819 = vmatpush1.msra.mxu0 0.0
    %2820 = vmatprep.subr.mxu0 0.0
    %2821 = vmatpush1.msra.mxu0 %v2785
    %2822 = vmatprep.subr.mxu0 0.0
    %2823 = vmatpush2.msra.mxu0 0.0
    %2824 = vmatprep.subr.mxu0 0.0
    %2825 = vmatpush2.msra.mxu0 0.0
    %2826 = vmatprep.subr.mxu0 0.0
    %2827 = vmatpush2.msra.mxu0 0.0
    %2828 = vmatprep.subr.mxu0 0.0
    %2829 = vmatpush2.msra.mxu0 0.0
    %2830 = vmatprep.subr.mxu0 0.0
    %2831 = vmatpush2.msra.mxu0 0.0
    %2832 = vmatprep.subr.mxu0 0.0
    %2833 = vmatpush2.msra.mxu0 0.0
    %2834 = vmatprep.subr.mxu0 0.0
    %2835 = vmatpush2.msra.mxu0 0.0
    %2836 = vmatprep.subr.mxu0 0.0
    %2837 = vmatpush2.msra.mxu0 0.0
    %2838 = vmatprep.subr.mxu0 0.0
    %2839 = vmatpush2.msra.mxu0 0.0
    %2840 = vmatprep.subr.mxu0 0.0
    %2841 = vmatpush2.msra.mxu0 0.0
    %2842 = vmatprep.subr.mxu0 0.0
    %2843 = vmatpush2.msra.mxu0 0.0
    %2844 = vmatprep.subr.mxu0 0.0
    %2845 = vmatpush2.msra.mxu0 0.0
    %2846 = vmatprep.subr.mxu0 0.0
    %2847 = vmatpush2.msra.mxu0 0.0
    %2848 = vmatprep.subr.mxu0 0.0
    %2849 = vmatpush2.msra.mxu0 0.0
    %2850 = vmatprep.subr.mxu0 0.0
    %2851 = vmatpush2.msra.mxu0 0.0
    %2852 = vmatprep.subr.mxu0 0.0
    %2853 = vmatpush2.msra.mxu0 0.0
    %2854 = vmatprep.mubr.f32.mxu0 0.0
    %2855 = vmatmul.mubr.f32.gmra.mxu0 %v2788
    %v2856 = vpop.f32.mrf.mxu0
    %v2857 = vadd.f32 0.0, %v2856
    %v2858 = vpop.f32.mrf.mxu0
    %2859 = vdwg.mxu0
    %2860 = vrot.lane.b32.xlu0 %v277, 36
    %v2861 = vpop.permute.xlu0 %2860
    %v2864 = vsel %vm437, %v2783, 0
    %2866 = vmatprep.subr.mxu0 0.0
    %2867 = vmatpush1.msra.mxu0 0.0
    %2868 = vmatprep.subr.mxu0 0.0
    %2869 = vmatpush1.msra.mxu0 0.0
    %2870 = vmatprep.subr.mxu0 0.0
    %2871 = vmatpush1.msra.mxu0 0.0
    %2872 = vmatprep.subr.mxu0 0.0
    %2873 = vmatpush1.msra.mxu0 0.0
    %2874 = vmatprep.subr.mxu0 0.0
    %2875 = vmatpush1.msra.mxu0 0.0
    %2876 = vmatprep.subr.mxu0 0.0
    %2877 = vmatpush1.msra.mxu0 0.0
    %2878 = vmatprep.subr.mxu0 0.0
    %2879 = vmatpush1.msra.mxu0 0.0
    %2880 = vmatprep.subr.mxu0 0.0
    %2881 = vmatpush1.msra.mxu0 0.0
    %2882 = vmatprep.subr.mxu0 0.0
    %2883 = vmatpush1.msra.mxu0 0.0
    %2884 = vmatprep.subr.mxu0 0.0
    %2885 = vmatpush1.msra.mxu0 0.0
    %2886 = vmatprep.subr.mxu0 0.0
    %2887 = vmatpush1.msra.mxu0 0.0
    %2888 = vmatprep.subr.mxu0 0.0
    %2889 = vmatpush1.msra.mxu0 0.0
    %2890 = vmatprep.subr.mxu0 0.0
    %2891 = vmatpush1.msra.mxu0 0.0
    %2892 = vmatprep.subr.mxu0 0.0
    %2893 = vmatpush1.msra.mxu0 0.0
    %2894 = vmatprep.subr.mxu0 0.0
    %2895 = vmatpush1.msra.mxu0 0.0
    %2896 = vmatprep.subr.mxu0 0.0
    %2897 = vmatpush1.msra.mxu0 %v2861
    %2898 = vmatprep.subr.mxu0 0.0
    %2899 = vmatpush2.msra.mxu0 0.0
    %2900 = vmatprep.subr.mxu0 0.0
    %2901 = vmatpush2.msra.mxu0 0.0
    %2902 = vmatprep.subr.mxu0 0.0
    %2903 = vmatpush2.msra.mxu0 0.0
    %2904 = vmatprep.subr.mxu0 0.0
    %2905 = vmatpush2.msra.mxu0 0.0
    %2906 = vmatprep.subr.mxu0 0.0
    %2907 = vmatpush2.msra.mxu0 0.0
    %2908 = vmatprep.subr.mxu0 0.0
    %2909 = vmatpush2.msra.mxu0 0.0
    %2910 = vmatprep.subr.mxu0 0.0
    %2911 = vmatpush2.msra.mxu0 0.0
    %2912 = vmatprep.subr.mxu0 0.0
    %2913 = vmatpush2.msra.mxu0 0.0
    %2914 = vmatprep.subr.mxu0 0.0
    %2915 = vmatpush2.msra.mxu0 0.0
    %2916 = vmatprep.subr.mxu0 0.0
    %2917 = vmatpush2.msra.mxu0 0.0
    %2918 = vmatprep.subr.mxu0 0.0
    %2919 = vmatpush2.msra.mxu0 0.0
    %2920 = vmatprep.subr.mxu0 0.0
    %2921 = vmatpush2.msra.mxu0 0.0
    %2922 = vmatprep.subr.mxu0 0.0
    %2923 = vmatpush2.msra.mxu0 0.0
    %2924 = vmatprep.subr.mxu0 0.0
    %2925 = vmatpush2.msra.mxu0 0.0
    %2926 = vmatprep.subr.mxu0 0.0
    %2927 = vmatpush2.msra.mxu0 0.0
    %2928 = vmatprep.subr.mxu0 0.0
    %2929 = vmatpush2.msra.mxu0 0.0
    %2930 = vmatprep.mubr.f32.mxu0 0.0
    %2931 = vmatmul.mubr.f32.gmra.mxu0 %v2864
    %v2932 = vpop.f32.mrf.mxu0
    %v2933 = vadd.f32 0.0, %v2932
    %v2934 = vpop.f32.mrf.mxu0
    %2935 = vdwg.mxu0
    %2938 = vrot.lane.b32.xlu0 %v865, 4
    %v2939 = vpop.permute.xlu0 %2938
    %2940 = vrot.lane.b32.xlu0 %v941, 4
    %v2941 = vpop.permute.xlu0 %2940
    %2946 = vrot.lane.b32.xlu0 %v1197, 8
    %v2947 = vpop.permute.xlu0 %2946
    %2948 = vrot.lane.b32.xlu0 %v1273, 8
    %v2949 = vpop.permute.xlu0 %2948
    %2954 = vrot.lane.b32.xlu0 %v1529, 12
    %v2955 = vpop.permute.xlu0 %2954
    %2956 = vrot.lane.b32.xlu0 %v1605, 12
    %v2957 = vpop.permute.xlu0 %2956
    %2962 = vrot.lane.b32.xlu0 %v1861, 16
    %v2963 = vpop.permute.xlu0 %2962
    %2964 = vrot.lane.b32.xlu0 %v1937, 16
    %v2965 = vpop.permute.xlu0 %2964
    %2970 = vrot.lane.b32.xlu0 %v2193, 20
    %v2971 = vpop.permute.xlu0 %2970
    %2972 = vrot.lane.b32.xlu0 %v2269, 20
    %v2973 = vpop.permute.xlu0 %2972
    %2978 = vrot.lane.b32.xlu0 %v2525, 24
    %v2979 = vpop.permute.xlu0 %2978
    %2980 = vrot.lane.b32.xlu0 %v2601, 24
    %v2981 = vpop.permute.xlu0 %2980
    %2986 = vrot.lane.b32.xlu0 %v2857, 28
    %v2987 = vpop.permute.xlu0 %2986
    %2988 = vrot.lane.b32.xlu0 %v2933, 28
    %v2989 = vpop.permute.xlu0 %2988
    %v2992 = vsel %vm283, %v533, %v2939
    %v2993 = vsel %vm283, %v609, %v2941
    %v2994 = vsel %vm437, %v2992, %v2947
    %v2995 = vsel %vm437, %v2993, %v2949
    %vm2996 = vcmask 97280
    %v2997 = vsel %vm2996, %v2994, %v2955
    %v2998 = vsel %vm2996, %v2995, %v2957
    %vm2999 = vcmask 130048
    %v3000 = vsel %vm2999, %v2997, %v2963
    %v3001 = vsel %vm2999, %v2998, %v2965
    %vm3002 = vcmask 162816
    %v3003 = vsel %vm3002, %v3000, %v2971
    %v3004 = vsel %vm3002, %v3001, %v2973
    %vm3005 = vcmask 195584
    %v3006 = vsel %vm3005, %v3003, %v2979
    %v3007 = vsel %vm3005, %v3004, %v2981
    %vm3008 = vcmask 228352
    %v3009 = vsel %vm3008, %v3006, %v2987
    %v3010 = vsel %vm3008, %v3007, %v2989
    %v3011 = vld [vmem:[%s5] sm:$0xff]
    %v3012 = vld [vmem:[%s5 + $0x8] sm:$0xff]
    %v3013 = vld [vmem:[%s5 + $0x10] sm:$0xff]
    %v3014 = vld [vmem:[%s5 + $0x18] sm:$0xff]
    %v3015 = vld [vmem:[%s6] sm:$0x1]
    %v3017 = vlaneseq
    %v3018 = vshrl.u32 %v3017, 7
    %v3019 = vsub.s32 0, %v3018
    %v3020 = vrot.slane %v3015, %v3019
    %v3023 = vsel %vm198, %v3009, 0
    %v3026 = vsel %vm198, %v3010, 0
    %3028 = vmatprep.subr.mxu0 0.0
    %3029 = vmatpush1.msra.mxu0 0.0
    %3030 = vmatprep.subr.mxu0 0.0
    %3031 = vmatpush1.msra.mxu0 0.0
    %3032 = vmatprep.subr.mxu0 0.0
    %3033 = vmatpush1.msra.mxu0 0.0
    %3034 = vmatprep.subr.mxu0 0.0
    %3035 = vmatpush1.msra.mxu0 0.0
    %3036 = vmatprep.subr.mxu0 0.0
    %3037 = vmatpush1.msra.mxu0 0.0
    %3038 = vmatprep.subr.mxu0 0.0
    %3039 = vmatpush1.msra.mxu0 0.0
    %3040 = vmatprep.subr.mxu0 0.0
    %3041 = vmatpush1.msra.mxu0 0.0
    %3042 = vmatprep.subr.mxu0 0.0
    %3043 = vmatpush1.msra.mxu0 0.0
    %3044 = vmatprep.subr.mxu0 0.0
    %3045 = vmatpush1.msra.mxu0 0.0
    %3046 = vmatprep.subr.mxu0 0.0
    %3047 = vmatpush1.msra.mxu0 0.0
    %3048 = vmatprep.subr.mxu0 0.0
    %3049 = vmatpush1.msra.mxu0 0.0
    %3050 = vmatprep.subr.mxu0 0.0
    %3051 = vmatpush1.msra.mxu0 0.0
    %3052 = vmatprep.subr.mxu0 0.0
    %3053 = vmatpush1.msra.mxu0 %v3014
    %3054 = vmatprep.subr.mxu0 0.0
    %3055 = vmatpush1.msra.mxu0 %v3013
    %3056 = vmatprep.subr.mxu0 0.0
    %3057 = vmatpush1.msra.mxu0 %v3012
    %3058 = vmatprep.subr.mxu0 0.0
    %3059 = vmatpush1.msra.mxu0 %v3011
    %3060 = vmatprep.subr.mxu0 0.0
    %3061 = vmatpush2.msra.mxu0 0.0
    %3062 = vmatprep.subr.mxu0 0.0
    %3063 = vmatpush2.msra.mxu0 0.0
    %3064 = vmatprep.subr.mxu0 0.0
    %3065 = vmatpush2.msra.mxu0 0.0
    %3066 = vmatprep.subr.mxu0 0.0
    %3067 = vmatpush2.msra.mxu0 0.0
    %3068 = vmatprep.subr.mxu0 0.0
    %3069 = vmatpush2.msra.mxu0 0.0
    %3070 = vmatprep.subr.mxu0 0.0
    %3071 = vmatpush2.msra.mxu0 0.0
    %3072 = vmatprep.subr.mxu0 0.0
    %3073 = vmatpush2.msra.mxu0 0.0
    %3074 = vmatprep.subr.mxu0 0.0
    %3075 = vmatpush2.msra.mxu0 0.0
    %3076 = vmatprep.subr.mxu0 0.0
    %3077 = vmatpush2.msra.mxu0 0.0
    %3078 = vmatprep.subr.mxu0 0.0
    %3079 = vmatpush2.msra.mxu0 0.0
    %3080 = vmatprep.subr.mxu0 0.0
    %3081 = vmatpush2.msra.mxu0 0.0
    %3082 = vmatprep.subr.mxu0 0.0
    %3083 = vmatpush2.msra.mxu0 0.0
    %3084 = vmatprep.subr.mxu0 0.0
    %3085 = vmatpush2.msra.mxu0 0.0
    %3086 = vmatprep.subr.mxu0 0.0
    %3087 = vmatpush2.msra.mxu0 0.0
    %3088 = vmatprep.subr.mxu0 0.0
    %3089 = vmatpush2.msra.mxu0 0.0
    %3090 = vmatprep.subr.mxu0 0.0
    %3091 = vmatpush2.msra.mxu0 0.0
    %3092 = vmatprep.mubr.f32.mxu0 0.0
    %3093 = vmatmul.mubr.f32.gmra.mxu0 %v3023
    %v3094 = vpop.f32.mrf.mxu0
    %v3095 = vadd.f32 %v3020, %v3094
    %v3096 = vpop.f32.mrf.mxu0
    %3097 = vmatprep.mubr.f32.mxu0 0.0
    %3098 = vmatmul.mubr.f32.gmra.mxu0 %v3026
    %v3099 = vpop.f32.mrf.mxu0
    %v3100 = vadd.f32 %v3020, %v3099
    %v3101 = vpop.f32.mrf.mxu0
    %3102 = vdwg.mxu0
    %v3103 = vadd.f32 %v179, %v3095
    %v3104 = vadd.f32 %v184, %v3100
    %v3105 = vld [vmem:[%s7] sm:$0x1]
    %v3106 = vld [vmem:[%s8] sm:$0x1]
    %v3107 = vsel %vm198, %v3103, 0.0
    %3108 = vadd.xlane.f32.xlu0 %v3107
    %v3109 = vpop.xlane.xlu0 %3108
    %v3110 = vsel %vm198, %v3104, 0.0
    %3111 = vadd.xlane.f32.xlu0 %v3110
    %v3112 = vpop.xlane.xlu0 %3111
    %v3113 = vrcp.pop 32.0
    %v3114 = vmul.f32 %v3109, %v3113
    %v3115 = vmul.f32 %v3112, %v3113
    %v3116 = vsub.f32 %v3103, %v3114
    %v3117 = vsub.f32 %v3104, %v3115
    %v3118 = vmul.f32 %v3116, %v3116
    %v3119 = vmul.f32 %v3117, %v3117
    %v3120 = vsel %vm198, %v3118, 0.0
    %3121 = vadd.xlane.f32.xlu0 %v3120
    %v3122 = vpop.xlane.xlu0 %3121
    %v3123 = vsel %vm198, %v3119, 0.0
    %3124 = vadd.xlane.f32.xlu0 %v3123
    %v3125 = vpop.xlane.xlu0 %3124
    %v3126 = vmul.f32 %v3122, %v3113
    %v3127 = vmul.f32 %v3125, %v3113
    %v3128 = vadd.f32 %v3126, 1e-05
    %v3129 = vadd.f32 %v3127, 1e-05
    %v3130 = vrsqrt.pop %v3128
    %v3131 = vrsqrt.pop %v3129
    %v3132 = vmul.f32 %v3116, %v3130
    %v3133 = vmul.f32 %v3117, %v3131
    %v3135 = vlaneseq
    %v3136 = vshrl.u32 %v3135, 7
    %v3137 = vsub.s32 0, %v3136
    %v3138 = vrot.slane %v3105, %v3137
    %v3140 = vmul.f32 %v3132, %v3138
    %v3141 = vmul.f32 %v3133, %v3138
    %v3143 = vlaneseq
    %v3144 = vshrl.u32 %v3143, 7
    %v3145 = vsub.s32 0, %v3144
    %v3146 = vrot.slane %v3106, %v3145
    %v3148 = vadd.f32 %v3140, %v3146
    %v3149 = vadd.f32 %v3141, %v3146
    %v3150 = vld [vmem:[%s9] sm:$0xff]
    %v3151 = vld [vmem:[%s9 + $0x8] sm:$0xff]
    %v3152 = vld [vmem:[%s9 + $0x10] sm:$0xff]
    %v3153 = vld [vmem:[%s9 + $0x18] sm:$0xff]
    %v3154 = vld [vmem:[%s10] sm:$0x1]
    %v3156 = vlaneseq
    %v3157 = vshrl.u32 %v3156, 7
    %v3158 = vsub.s32 0, %v3157
    %v3159 = vrot.slane %v3154, %v3158
    %v3162 = vsel %vm198, %v3148, 0
    %v3165 = vsel %vm198, %v3149, 0
    %3167 = vmatprep.subr.mxu0 0.0
    %3168 = vmatpush1.msra.mxu0 0.0
    %3169 = vmatprep.subr.mxu0 0.0
    %3170 = vmatpush1.msra.mxu0 0.0
    %3171 = vmatprep.subr.mxu0 0.0
    %3172 = vmatpush1.msra.mxu0 0.0
    %3173 = vmatprep.subr.mxu0 0.0
    %3174 = vmatpush1.msra.mxu0 0.0
    %3175 = vmatprep.subr.mxu0 0.0
    %3176 = vmatpush1.msra.mxu0 0.0
    %3177 = vmatprep.subr.mxu0 0.0
    %3178 = vmatpush1.msra.mxu0 0.0
    %3179 = vmatprep.subr.mxu0 0.0
    %3180 = vmatpush1.msra.mxu0 0.0
    %3181 = vmatprep.subr.mxu0 0.0
    %3182 = vmatpush1.msra.mxu0 0.0
    %3183 = vmatprep.subr.mxu0 0.0
    %3184 = vmatpush1.msra.mxu0 0.0
    %3185 = vmatprep.subr.mxu0 0.0
    %3186 = vmatpush1.msra.mxu0 0.0
    %3187 = vmatprep.subr.mxu0 0.0
    %3188 = vmatpush1.msra.mxu0 0.0
    %3189 = vmatprep.subr.mxu0 0.0
    %3190 = vmatpush1.msra.mxu0 0.0
    %3191 = vmatprep.subr.mxu0 0.0
    %3192 = vmatpush1.msra.mxu0 %v3153
    %3193 = vmatprep.subr.mxu0 0.0
    %3194 = vmatpush1.msra.mxu0 %v3152
    %3195 = vmatprep.subr.mxu0 0.0
    %3196 = vmatpush1.msra.mxu0 %v3151
    %3197 = vmatprep.subr.mxu0 0.0
    %3198 = vmatpush1.msra.mxu0 %v3150
    %3199 = vmatprep.subr.mxu0 0.0
    %3200 = vmatpush2.msra.mxu0 0.0
    %3201 = vmatprep.subr.mxu0 0.0
    %3202 = vmatpush2.msra.mxu0 0.0
    %3203 = vmatprep.subr.mxu0 0.0
    %3204 = vmatpush2.msra.mxu0 0.0
    %3205 = vmatprep.subr.mxu0 0.0
    %3206 = vmatpush2.msra.mxu0 0.0
    %3207 = vmatprep.subr.mxu0 0.0
    %3208 = vmatpush2.msra.mxu0 0.0
    %3209 = vmatprep.subr.mxu0 0.0
    %3210 = vmatpush2.msra.mxu0 0.0
    %3211 = vmatprep.subr.mxu0 0.0
    %3212 = vmatpush2.msra.mxu0 0.0
    %3213 = vmatprep.subr.mxu0 0.0
    %3214 = vmatpush2.msra.mxu0 0.0
    %3215 = vmatprep.subr.mxu0 0.0
    %3216 = vmatpush2.msra.mxu0 0.0
    %3217 = vmatprep.subr.mxu0 0.0
    %3218 = vmatpush2.msra.mxu0 0.0
    %3219 = vmatprep.subr.mxu0 0.0
    %3220 = vmatpush2.msra.mxu0 0.0
    %3221 = vmatprep.subr.mxu0 0.0
    %3222 = vmatpush2.msra.mxu0 0.0
    %3223 = vmatprep.subr.mxu0 0.0
    %3224 = vmatpush2.msra.mxu0 0.0
    %3225 = vmatprep.subr.mxu0 0.0
    %3226 = vmatpush2.msra.mxu0 0.0
    %3227 = vmatprep.subr.mxu0 0.0
    %3228 = vmatpush2.msra.mxu0 0.0
    %3229 = vmatprep.subr.mxu0 0.0
    %3230 = vmatpush2.msra.mxu0 0.0
    %3231 = vmatprep.mubr.f32.mxu0 0.0
    %3232 = vmatmul.mubr.f32.gmra.mxu0 %v3162
    %v3233 = vpop.f32.mrf.mxu0
    %v3234 = vadd.f32 %v3159, %v3233
    %v3235 = vpop.f32.mrf.mxu0
    %3236 = vmatprep.mubr.f32.mxu0 0.0
    %3237 = vmatmul.mubr.f32.gmra.mxu0 %v3165
    %v3238 = vpop.f32.mrf.mxu0
    %v3239 = vadd.f32 %v3159, %v3238
    %v3240 = vpop.f32.mrf.mxu0
    %3241 = vdwg.mxu0
    %v3242 = vmax.f32 %v3234, 0.0
    %v3243 = vmax.f32 %v3239, 0.0
    %v3244 = vld [vmem:[%s11] sm:$0xff]
    %v3245 = vld [vmem:[%s11 + $0x8] sm:$0xff]
    %v3246 = vld [vmem:[%s11 + $0x10] sm:$0xff]
    %v3247 = vld [vmem:[%s11 + $0x18] sm:$0xff]
    %v3248 = vld [vmem:[%s11 + $0x20] sm:$0xff]
    %v3249 = vld [vmem:[%s11 + $0x28] sm:$0xff]
    %v3250 = vld [vmem:[%s11 + $0x30] sm:$0xff]
    %v3251 = vld [vmem:[%s11 + $0x38] sm:$0xff]
    %v3252 = vld [vmem:[%s11 + $0x40] sm:$0xff]
    %v3253 = vld [vmem:[%s11 + $0x48] sm:$0xff]
    %v3254 = vld [vmem:[%s11 + $0x50] sm:$0xff]
    %v3255 = vld [vmem:[%s11 + $0x58] sm:$0xff]
    %v3256 = vld [vmem:[%s11 + $0x60] sm:$0xff]
    %v3257 = vld [vmem:[%s11 + $0x68] sm:$0xff]
    %v3258 = vld [vmem:[%s11 + $0x70] sm:$0xff]
    %v3259 = vld [vmem:[%s11 + $0x78] sm:$0xff]
    %v3260 = vld [vmem:[%s12] sm:$0x1]
    %v3262 = vlaneseq
    %v3263 = vshrl.u32 %v3262, 7
    %v3264 = vsub.s32 0, %v3263
    %v3265 = vrot.slane %v3260, %v3264
    %3267 = vmatprep.subr.mxu0 0.0
    %3268 = vmatpush1.msra.mxu0 %v3259
    %3269 = vmatprep.subr.mxu0 0.0
    %3270 = vmatpush1.msra.mxu0 %v3258
    %3271 = vmatprep.subr.mxu0 0.0
    %3272 = vmatpush1.msra.mxu0 %v3257
    %3273 = vmatprep.subr.mxu0 0.0
    %3274 = vmatpush1.msra.mxu0 %v3256
    %3275 = vmatprep.subr.mxu0 0.0
    %3276 = vmatpush1.msra.mxu0 %v3255
    %3277 = vmatprep.subr.mxu0 0.0
    %3278 = vmatpush1.msra.mxu0 %v3254
    %3279 = vmatprep.subr.mxu0 0.0
    %3280 = vmatpush1.msra.mxu0 %v3253
    %3281 = vmatprep.subr.mxu0 0.0
    %3282 = vmatpush1.msra.mxu0 %v3252
    %3283 = vmatprep.subr.mxu0 0.0
    %3284 = vmatpush1.msra.mxu0 %v3251
    %3285 = vmatprep.subr.mxu0 0.0
    %3286 = vmatpush1.msra.mxu0 %v3250
    %3287 = vmatprep.subr.mxu0 0.0
    %3288 = vmatpush1.msra.mxu0 %v3249
    %3289 = vmatprep.subr.mxu0 0.0
    %3290 = vmatpush1.msra.mxu0 %v3248
    %3291 = vmatprep.subr.mxu0 0.0
    %3292 = vmatpush1.msra.mxu0 %v3247
    %3293 = vmatprep.subr.mxu0 0.0
    %3294 = vmatpush1.msra.mxu0 %v3246
    %3295 = vmatprep.subr.mxu0 0.0
    %3296 = vmatpush1.msra.mxu0 %v3245
    %3297 = vmatprep.subr.mxu0 0.0
    %3298 = vmatpush1.msra.mxu0 %v3244
    %3299 = vmatprep.subr.mxu0 0.0
    %3300 = vmatpush2.msra.mxu0 0.0
    %3301 = vmatprep.subr.mxu0 0.0
    %3302 = vmatpush2.msra.mxu0 0.0
    %3303 = vmatprep.subr.mxu0 0.0
    %3304 = vmatpush2.msra.mxu0 0.0
    %3305 = vmatprep.subr.mxu0 0.0
    %3306 = vmatpush2.msra.mxu0 0.0
    %3307 = vmatprep.subr.mxu0 0.0
    %3308 = vmatpush2.msra.mxu0 0.0
    %3309 = vmatprep.subr.mxu0 0.0
    %3310 = vmatpush2.msra.mxu0 0.0
    %3311 = vmatprep.subr.mxu0 0.0
    %3312 = vmatpush2.msra.mxu0 0.0
    %3313 = vmatprep.subr.mxu0 0.0
    %3314 = vmatpush2.msra.mxu0 0.0
    %3315 = vmatprep.subr.mxu0 0.0
    %3316 = vmatpush2.msra.mxu0 0.0
    %3317 = vmatprep.subr.mxu0 0.0
    %3318 = vmatpush2.msra.mxu0 0.0
    %3319 = vmatprep.subr.mxu0 0.0
    %3320 = vmatpush2.msra.mxu0 0.0
    %3321 = vmatprep.subr.mxu0 0.0
    %3322 = vmatpush2.msra.mxu0 0.0
    %3323 = vmatprep.subr.mxu0 0.0
    %3324 = vmatpush2.msra.mxu0 0.0
    %3325 = vmatprep.subr.mxu0 0.0
    %3326 = vmatpush2.msra.mxu0 0.0
    %3327 = vmatprep.subr.mxu0 0.0
    %3328 = vmatpush2.msra.mxu0 0.0
    %3329 = vmatprep.subr.mxu0 0.0
    %3330 = vmatpush2.msra.mxu0 0.0
    %3331 = vmatprep.mubr.f32.mxu0 0.0
    %3332 = vmatmul.mubr.f32.gmra.mxu0 %v3242
    %v3333 = vpop.f32.mrf.mxu0
    %v3334 = vadd.f32 %v3265, %v3333
    %v3335 = vpop.f32.mrf.mxu0
    %3336 = vmatprep.mubr.f32.mxu0 0.0
    %3337 = vmatmul.mubr.f32.gmra.mxu0 %v3243
    %v3338 = vpop.f32.mrf.mxu0
    %v3339 = vadd.f32 %v3265, %v3338
    %v3340 = vpop.f32.mrf.mxu0
    %3341 = vdwg.mxu0
    %v3342 = vadd.f32 %v3148, %v3334
    %v3343 = vadd.f32 %v3149, %v3339
    %v3344 = vld [vmem:[%s13] sm:$0x1]
    %v3345 = vld [vmem:[%s14] sm:$0x1]
    %v3346 = vsel %vm198, %v3342, 0.0
    %3347 = vadd.xlane.f32.xlu0 %v3346
    %v3348 = vpop.xlane.xlu0 %3347
    %v3349 = vsel %vm198, %v3343, 0.0
    %3350 = vadd.xlane.f32.xlu0 %v3349
    %v3351 = vpop.xlane.xlu0 %3350
    %v3352 = vmul.f32 %v3348, %v3113
    %v3353 = vmul.f32 %v3351, %v3113
    %v3354 = vsub.f32 %v3342, %v3352
    %v3355 = vsub.f32 %v3343, %v3353
    %v3356 = vmul.f32 %v3354, %v3354
    %v3357 = vmul.f32 %v3355, %v3355
    %v3358 = vsel %vm198, %v3356, 0.0
    %3359 = vadd.xlane.f32.xlu0 %v3358
    %v3360 = vpop.xlane.xlu0 %3359
    %v3361 = vsel %vm198, %v3357, 0.0
    %3362 = vadd.xlane.f32.xlu0 %v3361
    %v3363 = vpop.xlane.xlu0 %3362
    %v3364 = vmul.f32 %v3360, %v3113
    %v3365 = vmul.f32 %v3363, %v3113
    %v3366 = vadd.f32 %v3364, 1e-05
    %v3367 = vadd.f32 %v3365, 1e-05
    %v3368 = vrsqrt.pop %v3366
    %v3369 = vrsqrt.pop %v3367
    %v3370 = vmul.f32 %v3354, %v3368
    %v3371 = vmul.f32 %v3355, %v3369
    %v3373 = vlaneseq
    %v3374 = vshrl.u32 %v3373, 7
    %v3375 = vsub.s32 0, %v3374
    %v3376 = vrot.slane %v3344, %v3375
    %v3378 = vmul.f32 %v3370, %v3376
    %v3379 = vmul.f32 %v3371, %v3376
    %v3381 = vlaneseq
    %v3382 = vshrl.u32 %v3381, 7
    %v3383 = vsub.s32 0, %v3382
    %v3384 = vrot.slane %v3345, %v3383
    %v3386 = vadd.f32 %v3378, %v3384
    %v3387 = vadd.f32 %v3379, %v3384
    %s3388 = scalar_lea.vmem %s3, 32
    %v3389 = vld [vmem:[%s3388] sm:$0xff]
    %v3390 = vld [vmem:[%s3388 + $0x8] sm:$0xff]
    %v3391 = vld [vmem:[%s3388 + $0x10] sm:$0xff]
    %v3392 = vld [vmem:[%s3388 + $0x18] sm:$0xff]
    %s3393 = scalar_lea.vmem %s4, 1
    %v3394 = vld [vmem:[%s3393] sm:$0x1]
    %v3396 = vlaneseq
    %v3397 = vshrl.u32 %v3396, 7
    %v3398 = vsub.s32 0, %v3397
    %v3399 = vrot.slane %v3394, %v3398
    %v3402 = vsel %vm198, %v3386, 0
    %v3405 = vsel %vm198, %v3387, 0
    %3407 = vmatprep.subr.mxu0 0.0
    %3408 = vmatpush1.msra.mxu0 0.0
    %3409 = vmatprep.subr.mxu0 0.0
    %3410 = vmatpush1.msra.mxu0 0.0
    %3411 = vmatprep.subr.mxu0 0.0
    %3412 = vmatpush1.msra.mxu0 0.0
    %3413 = vmatprep.subr.mxu0 0.0
    %3414 = vmatpush1.msra.mxu0 0.0
    %3415 = vmatprep.subr.mxu0 0.0
    %3416 = vmatpush1.msra.mxu0 0.0
    %3417 = vmatprep.subr.mxu0 0.0
    %3418 = vmatpush1.msra.mxu0 0.0
    %3419 = vmatprep.subr.mxu0 0.0
    %3420 = vmatpush1.msra.mxu0 0.0
    %3421 = vmatprep.subr.mxu0 0.0
    %3422 = vmatpush1.msra.mxu0 0.0
    %3423 = vmatprep.subr.mxu0 0.0
    %3424 = vmatpush1.msra.mxu0 0.0
    %3425 = vmatprep.subr.mxu0 0.0
    %3426 = vmatpush1.msra.mxu0 0.0
    %3427 = vmatprep.subr.mxu0 0.0
    %3428 = vmatpush1.msra.mxu0 0.0
    %3429 = vmatprep.subr.mxu0 0.0
    %3430 = vmatpush1.msra.mxu0 0.0
    %3431 = vmatprep.subr.mxu0 0.0
    %3432 = vmatpush1.msra.mxu0 %v3392
    %3433 = vmatprep.subr.mxu0 0.0
    %3434 = vmatpush1.msra.mxu0 %v3391
    %3435 = vmatprep.subr.mxu0 0.0
    %3436 = vmatpush1.msra.mxu0 %v3390
    %3437 = vmatprep.subr.mxu0 0.0
    %3438 = vmatpush1.msra.mxu0 %v3389
    %3439 = vmatprep.subr.mxu0 0.0
    %3440 = vmatpush2.msra.mxu0 0.0
    %3441 = vmatprep.subr.mxu0 0.0
    %3442 = vmatpush2.msra.mxu0 0.0
    %3443 = vmatprep.subr.mxu0 0.0
    %3444 = vmatpush2.msra.mxu0 0.0
    %3445 = vmatprep.subr.mxu0 0.0
    %3446 = vmatpush2.msra.mxu0 0.0
    %3447 = vmatprep.subr.mxu0 0.0
    %3448 = vmatpush2.msra.mxu0 0.0
    %3449 = vmatprep.subr.mxu0 0.0
    %3450 = vmatpush2.msra.mxu0 0.0
    %3451 = vmatprep.subr.mxu0 0.0
    %3452 = vmatpush2.msra.mxu0 0.0
    %3453 = vmatprep.subr.mxu0 0.0
    %3454 = vmatpush2.msra.mxu0 0.0
    %3455 = vmatprep.subr.mxu0 0.0
    %3456 = vmatpush2.msra.mxu0 0.0
    %3457 = vmatprep.subr.mxu0 0.0
    %3458 = vmatpush2.msra.mxu0 0.0
    %3459 = vmatprep.subr.mxu0 0.0
    %3460 = vmatpush2.msra.mxu0 0.0
    %3461 = vmatprep.subr.mxu0 0.0
    %3462 = vmatpush2.msra.mxu0 0.0
    %3463 = vmatprep.subr.mxu0 0.0
    %3464 = vmatpush2.msra.mxu0 0.0
    %3465 = vmatprep.subr.mxu0 0.0
    %3466 = vmatpush2.msra.mxu0 0.0
    %3467 = vmatprep.subr.mxu0 0.0
    %3468 = vmatpush2.msra.mxu0 0.0
    %3469 = vmatprep.subr.mxu0 0.0
    %3470 = vmatpush2.msra.mxu0 0.0
    %3471 = vmatprep.mubr.f32.mxu0 0.0
    %3472 = vmatmul.mubr.f32.gmra.mxu0 %v3402
    %v3473 = vpop.f32.mrf.mxu0
    %v3474 = vadd.f32 %v3399, %v3473
    %v3475 = vpop.f32.mrf.mxu0
    %3476 = vmatprep.mubr.f32.mxu0 0.0
    %3477 = vmatmul.mubr.f32.gmra.mxu0 %v3405
    %v3478 = vpop.f32.mrf.mxu0
    %v3479 = vadd.f32 %v3399, %v3478
    %v3480 = vpop.f32.mrf.mxu0
    %3481 = vdwg.mxu0
    %3483 = vrot.lane.b32.xlu0 %v3474, 96
    %v3484 = vpop.permute.xlu0 %3483
    %v3485 = vsel %vm283, %v3474, 0
    %v3487 = vsel %vm283, %v3484, 0
    %3489 = vmatprep.subr.mxu0 0.0
    %3490 = vmatpush1.xpose.msra.mxu0 0.0
    %3491 = vmatprep.subr.mxu0 0.0
    %3492 = vmatpush1.xpose.msra.mxu0 0.0
    %3493 = vmatprep.subr.mxu0 0.0
    %3494 = vmatpush1.xpose.msra.mxu0 0.0
    %3495 = vmatprep.subr.mxu0 0.0
    %3496 = vmatpush1.xpose.msra.mxu0 0.0
    %3497 = vmatprep.subr.mxu0 0.0
    %3498 = vmatpush1.xpose.msra.mxu0 0.0
    %3499 = vmatprep.subr.mxu0 0.0
    %3500 = vmatpush1.xpose.msra.mxu0 0.0
    %3501 = vmatprep.subr.mxu0 0.0
    %3502 = vmatpush1.xpose.msra.mxu0 0.0
    %3503 = vmatprep.subr.mxu0 0.0
    %3504 = vmatpush1.xpose.msra.mxu0 0.0
    %3505 = vmatprep.subr.mxu0 0.0
    %3506 = vmatpush1.xpose.msra.mxu0 0.0
    %3507 = vmatprep.subr.mxu0 0.0
    %3508 = vmatpush1.xpose.msra.mxu0 0.0
    %3509 = vmatprep.subr.mxu0 0.0
    %3510 = vmatpush1.xpose.msra.mxu0 0.0
    %3511 = vmatprep.subr.mxu0 0.0
    %3512 = vmatpush1.xpose.msra.mxu0 0.0
    %3513 = vmatprep.subr.mxu0 0.0
    %3514 = vmatpush1.xpose.msra.mxu0 0.0
    %3515 = vmatprep.subr.mxu0 0.0
    %3516 = vmatpush1.xpose.msra.mxu0 0.0
    %3517 = vmatprep.subr.mxu0 0.0
    %3518 = vmatpush1.xpose.msra.mxu0 0.0
    %3519 = vmatprep.subr.mxu0 0.0
    %3520 = vmatpush1.xpose.msra.mxu0 %v3487
    %3521 = vmatprep.subr.mxu0 0.0
    %3522 = vmatpush2.xpose.msra.mxu0 0.0
    %3523 = vmatprep.subr.mxu0 0.0
    %3524 = vmatpush2.xpose.msra.mxu0 0.0
    %3525 = vmatprep.subr.mxu0 0.0
    %3526 = vmatpush2.xpose.msra.mxu0 0.0
    %3527 = vmatprep.subr.mxu0 0.0
    %3528 = vmatpush2.xpose.msra.mxu0 0.0
    %3529 = vmatprep.subr.mxu0 0.0
    %3530 = vmatpush2.xpose.msra.mxu0 0.0
    %3531 = vmatprep.subr.mxu0 0.0
    %3532 = vmatpush2.xpose.msra.mxu0 0.0
    %3533 = vmatprep.subr.mxu0 0.0
    %3534 = vmatpush2.xpose.msra.mxu0 0.0
    %3535 = vmatprep.subr.mxu0 0.0
    %3536 = vmatpush2.xpose.msra.mxu0 0.0
    %3537 = vmatprep.subr.mxu0 0.0
    %3538 = vmatpush2.xpose.msra.mxu0 0.0
    %3539 = vmatprep.subr.mxu0 0.0
    %3540 = vmatpush2.xpose.msra.mxu0 0.0
    %3541 = vmatprep.subr.mxu0 0.0
    %3542 = vmatpush2.xpose.msra.mxu0 0.0
    %3543 = vmatprep.subr.mxu0 0.0
    %3544 = vmatpush2.xpose.msra.mxu0 0.0
    %3545 = vmatprep.subr.mxu0 0.0
    %3546 = vmatpush2.xpose.msra.mxu0 0.0
    %3547 = vmatprep.subr.mxu0 0.0
    %3548 = vmatpush2.xpose.msra.mxu0 0.0
    %3549 = vmatprep.subr.mxu0 0.0
    %3550 = vmatpush2.xpose.msra.mxu0 0.0
    %3551 = vmatprep.subr.mxu0 0.0
    %3552 = vmatpush2.xpose.msra.mxu0 0.0
    %3553 = vmatprep.mubr.f32.mxu0 0.0
    %3554 = vmatmul.mubr.f32.gmra.mxu0 %v3485
    %v3555 = vpop.f32.mrf.mxu0
    %v3556 = vadd.f32 0.0, %v3555
    %v3557 = vpop.f32.mrf.mxu0
    %3558 = vdwg.mxu0
    %3560 = vrot.lane.b32.xlu0 %v3479, 96
    %v3561 = vpop.permute.xlu0 %3560
    %v3562 = vsel %vm283, %v3479, 0
    %v3564 = vsel %vm283, %v3561, 0
    %3566 = vmatprep.subr.mxu0 0.0
    %3567 = vmatpush1.xpose.msra.mxu0 0.0
    %3568 = vmatprep.subr.mxu0 0.0
    %3569 = vmatpush1.xpose.msra.mxu0 0.0
    %3570 = vmatprep.subr.mxu0 0.0
    %3571 = vmatpush1.xpose.msra.mxu0 0.0
    %3572 = vmatprep.subr.mxu0 0.0
    %3573 = vmatpush1.xpose.msra.mxu0 0.0
    %3574 = vmatprep.subr.mxu0 0.0
    %3575 = vmatpush1.xpose.msra.mxu0 0.0
    %3576 = vmatprep.subr.mxu0 0.0
    %3577 = vmatpush1.xpose.msra.mxu0 0.0
    %3578 = vmatprep.subr.mxu0 0.0
    %3579 = vmatpush1.xpose.msra.mxu0 0.0
    %3580 = vmatprep.subr.mxu0 0.0
    %3581 = vmatpush1.xpose.msra.mxu0 0.0
    %3582 = vmatprep.subr.mxu0 0.0
    %3583 = vmatpush1.xpose.msra.mxu0 0.0
    %3584 = vmatprep.subr.mxu0 0.0
    %3585 = vmatpush1.xpose.msra.mxu0 0.0
    %3586 = vmatprep.subr.mxu0 0.0
    %3587 = vmatpush1.xpose.msra.mxu0 0.0
    %3588 = vmatprep.subr.mxu0 0.0
    %3589 = vmatpush1.xpose.msra.mxu0 0.0
    %3590 = vmatprep.subr.mxu0 0.0
    %3591 = vmatpush1.xpose.msra.mxu0 0.0
    %3592 = vmatprep.subr.mxu0 0.0
    %3593 = vmatpush1.xpose.msra.mxu0 0.0
    %3594 = vmatprep.subr.mxu0 0.0
    %3595 = vmatpush1.xpose.msra.mxu0 0.0
    %3596 = vmatprep.subr.mxu0 0.0
    %3597 = vmatpush1.xpose.msra.mxu0 %v3564
    %3598 = vmatprep.subr.mxu0 0.0
    %3599 = vmatpush2.xpose.msra.mxu0 0.0
    %3600 = vmatprep.subr.mxu0 0.0
    %3601 = vmatpush2.xpose.msra.mxu0 0.0
    %3602 = vmatprep.subr.mxu0 0.0
    %3603 = vmatpush2.xpose.msra.mxu0 0.0
    %3604 = vmatprep.subr.mxu0 0.0
    %3605 = vmatpush2.xpose.msra.mxu0 0.0
    %3606 = vmatprep.subr.mxu0 0.0
    %3607 = vmatpush2.xpose.msra.mxu0 0.0
    %3608 = vmatprep.subr.mxu0 0.0
    %3609 = vmatpush2.xpose.msra.mxu0 0.0
    %3610 = vmatprep.subr.mxu0 0.0
    %3611 = vmatpush2.xpose.msra.mxu0 0.0
    %3612 = vmatprep.subr.mxu0 0.0
    %3613 = vmatpush2.xpose.msra.mxu0 0.0
    %3614 = vmatprep.subr.mxu0 0.0
    %3615 = vmatpush2.xpose.msra.mxu0 0.0
    %3616 = vmatprep.subr.mxu0 0.0
    %3617 = vmatpush2.xpose.msra.mxu0 0.0
    %3618 = vmatprep.subr.mxu0 0.0
    %3619 = vmatpush2.xpose.msra.mxu0 0.0
    %3620 = vmatprep.subr.mxu0 0.0
    %3621 = vmatpush2.xpose.msra.mxu0 0.0
    %3622 = vmatprep.subr.mxu0 0.0
    %3623 = vmatpush2.xpose.msra.mxu0 0.0
    %3624 = vmatprep.subr.mxu0 0.0
    %3625 = vmatpush2.xpose.msra.mxu0 0.0
    %3626 = vmatprep.subr.mxu0 0.0
    %3627 = vmatpush2.xpose.msra.mxu0 0.0
    %3628 = vmatprep.subr.mxu0 0.0
    %3629 = vmatpush2.xpose.msra.mxu0 0.0
    %3630 = vmatprep.mubr.f32.mxu0 0.0
    %3631 = vmatmul.mubr.f32.gmra.mxu0 %v3562
    %v3632 = vpop.f32.mrf.mxu0
    %v3633 = vadd.f32 0.0, %v3632
    %v3634 = vpop.f32.mrf.mxu0
    %3635 = vdwg.mxu0
    %v3636 = vmul.f32 %v3556, 0.5
    %v3637 = vmul.f32 %v3633, 0.5
    %v3638 = vsel %vm437, %v3636, -inf
    %3639 = vmax.xlane.f32.xlu0 %v3638
    %v3640 = vpop.xlane.xlu0 %3639
    %v3641 = vsel %vm437, %v3637, -inf
    %3642 = vmax.xlane.f32.xlu0 %v3641
    %v3643 = vpop.xlane.xlu0 %3642
    %v3644 = vsub.f32 %v3636, %v3640
    %v3645 = vsub.f32 %v3637, %v3643
    %v3646 = vmul.f32 %v3644, 1.442695
    %v3647 = vpow.pop %v3646
    %v3648 = vmul.f32 %v3645, 1.442695
    %v3649 = vpow.pop %v3648
    %v3650 = vsel %vm437, %v3647, 0.0
    %3651 = vadd.xlane.f32.xlu0 %v3650
    %v3652 = vpop.xlane.xlu0 %3651
    %v3653 = vsel %vm437, %v3649, 0.0
    %3654 = vadd.xlane.f32.xlu0 %v3653
    %v3655 = vpop.xlane.xlu0 %3654
    %v3656 = vrcp.pop %v3652
    %v3657 = vrcp.pop %v3655
    %v3658 = vmul.f32 %v3647, %v3656
    %v3659 = vmul.f32 %v3649, %v3657
    %3660 = vrot.lane.b32.xlu0 %v3474, 64
    %v3661 = vpop.permute.xlu0 %3660
    %v3664 = vsel %vm437, %v3658, 0
    %3666 = vmatprep.subr.mxu0 0.0
    %3667 = vmatpush1.msra.mxu0 0.0
    %3668 = vmatprep.subr.mxu0 0.0
    %3669 = vmatpush1.msra.mxu0 0.0
    %3670 = vmatprep.subr.mxu0 0.0
    %3671 = vmatpush1.msra.mxu0 0.0
    %3672 = vmatprep.subr.mxu0 0.0
    %3673 = vmatpush1.msra.mxu0 0.0
    %3674 = vmatprep.subr.mxu0 0.0
    %3675 = vmatpush1.msra.mxu0 0.0
    %3676 = vmatprep.subr.mxu0 0.0
    %3677 = vmatpush1.msra.mxu0 0.0
    %3678 = vmatprep.subr.mxu0 0.0
    %3679 = vmatpush1.msra.mxu0 0.0
    %3680 = vmatprep.subr.mxu0 0.0
    %3681 = vmatpush1.msra.mxu0 0.0
    %3682 = vmatprep.subr.mxu0 0.0
    %3683 = vmatpush1.msra.mxu0 0.0
    %3684 = vmatprep.subr.mxu0 0.0
    %3685 = vmatpush1.msra.mxu0 0.0
    %3686 = vmatprep.subr.mxu0 0.0
    %3687 = vmatpush1.msra.mxu0 0.0
    %3688 = vmatprep.subr.mxu0 0.0
    %3689 = vmatpush1.msra.mxu0 0.0
    %3690 = vmatprep.subr.mxu0 0.0
    %3691 = vmatpush1.msra.mxu0 0.0
    %3692 = vmatprep.subr.mxu0 0.0
    %3693 = vmatpush1.msra.mxu0 0.0
    %3694 = vmatprep.subr.mxu0 0.0
    %3695 = vmatpush1.msra.mxu0 0.0
    %3696 = vmatprep.subr.mxu0 0.0
    %3697 = vmatpush1.msra.mxu0 %v3661
    %3698 = vmatprep.subr.mxu0 0.0
    %3699 = vmatpush2.msra.mxu0 0.0
    %3700 = vmatprep.subr.mxu0 0.0
    %3701 = vmatpush2.msra.mxu0 0.0
    %3702 = vmatprep.subr.mxu0 0.0
    %3703 = vmatpush2.msra.mxu0 0.0
    %3704 = vmatprep.subr.mxu0 0.0
    %3705 = vmatpush2.msra.mxu0 0.0
    %3706 = vmatprep.subr.mxu0 0.0
    %3707 = vmatpush2.msra.mxu0 0.0
    %3708 = vmatprep.subr.mxu0 0.0
    %3709 = vmatpush2.msra.mxu0 0.0
    %3710 = vmatprep.subr.mxu0 0.0
    %3711 = vmatpush2.msra.mxu0 0.0
    %3712 = vmatprep.subr.mxu0 0.0
    %3713 = vmatpush2.msra.mxu0 0.0
    %3714 = vmatprep.subr.mxu0 0.0
    %3715 = vmatpush2.msra.mxu0 0.0
    %3716 = vmatprep.subr.mxu0 0.0
    %3717 = vmatpush2.msra.mxu0 0.0
    %3718 = vmatprep.subr.mxu0 0.0
    %3719 = vmatpush2.msra.mxu0 0.0
    %3720 = vmatprep.subr.mxu0 0.0
    %3721 = vmatpush2.msra.mxu0 0.0
    %3722 = vmatprep.subr.mxu0 0.0
    %3723 = vmatpush2.msra.mxu0 0.0
    %3724 = vmatprep.subr.mxu0 0.0
    %3725 = vmatpush2.msra.mxu0 0.0
    %3726 = vmatprep.subr.mxu0 0.0
    %3727 = vmatpush2.msra.mxu0 0.0
    %3728 = vmatprep.subr.mxu0 0.0
    %3729 = vmatpush2.msra.mxu0 0.0
    %3730 = vmatprep.mubr.f32.mxu0 0.0
    %3731 = vmatmul.mubr.f32.gmra.mxu0 %v3664
    %v3732 = vpop.f32.mrf.mxu0
    %v3733 = vadd.f32 0.0, %v3732
    %v3734 = vpop.f32.mrf.mxu0
    %3735 = vdwg.mxu0
    %3736 = vrot.lane.b32.xlu0 %v3479, 64
    %v3737 = vpop.permute.xlu0 %3736
    %v3740 = vsel %vm437, %v3659, 0
    %3742 = vmatprep.subr.mxu0 0.0
    %3743 = vmatpush1.msra.mxu0 0.0
    %3744 = vmatprep.subr.mxu0 0.0
    %3745 = vmatpush1.msra.mxu0 0.0
    %3746 = vmatprep.subr.mxu0 0.0
    %3747 = vmatpush1.msra.mxu0 0.0
    %3748 = vmatprep.subr.mxu0 0.0
    %3749 = vmatpush1.msra.mxu0 0.0
    %3750 = vmatprep.subr.mxu0 0.0
    %3751 = vmatpush1.msra.mxu0 0.0
    %3752 = vmatprep.subr.mxu0 0.0
    %3753 = vmatpush1.msra.mxu0 0.0
    %3754 = vmatprep.subr.mxu0 0.0
    %3755 = vmatpush1.msra.mxu0 0.0
    %3756 = vmatprep.subr.mxu0 0.0
    %3757 = vmatpush1.msra.mxu0 0.0
    %3758 = vmatprep.subr.mxu0 0.0
    %3759 = vmatpush1.msra.mxu0 0.0
    %3760 = vmatprep.subr.mxu0 0.0
    %3761 = vmatpush1.msra.mxu0 0.0
    %3762 = vmatprep.subr.mxu0 0.0
    %3763 = vmatpush1.msra.mxu0 0.0
    %3764 = vmatprep.subr.mxu0 0.0
    %3765 = vmatpush1.msra.mxu0 0.0
    %3766 = vmatprep.subr.mxu0 0.0
    %3767 = vmatpush1.msra.mxu0 0.0
    %3768 = vmatprep.subr.mxu0 0.0
    %3769 = vmatpush1.msra.mxu0 0.0
    %3770 = vmatprep.subr.mxu0 0.0
    %3771 = vmatpush1.msra.mxu0 0.0
    %3772 = vmatprep.subr.mxu0 0.0
    %3773 = vmatpush1.msra.mxu0 %v3737
    %3774 = vmatprep.subr.mxu0 0.0
    %3775 = vmatpush2.msra.mxu0 0.0
    %3776 = vmatprep.subr.mxu0 0.0
    %3777 = vmatpush2.msra.mxu0 0.0
    %3778 = vmatprep.subr.mxu0 0.0
    %3779 = vmatpush2.msra.mxu0 0.0
    %3780 = vmatprep.subr.mxu0 0.0
    %3781 = vmatpush2.msra.mxu0 0.0
    %3782 = vmatprep.subr.mxu0 0.0
    %3783 = vmatpush2.msra.mxu0 0.0
    %3784 = vmatprep.subr.mxu0 0.0
    %3785 = vmatpush2.msra.mxu0 0.0
    %3786 = vmatprep.subr.mxu0 0.0
    %3787 = vmatpush2.msra.mxu0 0.0
    %3788 = vmatprep.subr.mxu0 0.0
    %3789 = vmatpush2.msra.mxu0 0.0
    %3790 = vmatprep.subr.mxu0 0.0
    %3791 = vmatpush2.msra.mxu0 0.0
    %3792 = vmatprep.subr.mxu0 0.0
    %3793 = vmatpush2.msra.mxu0 0.0
    %3794 = vmatprep.subr.mxu0 0.0
    %3795 = vmatpush2.msra.mxu0 0.0
    %3796 = vmatprep.subr.mxu0 0.0
    %3797 = vmatpush2.msra.mxu0 0.0
    %3798 = vmatprep.subr.mxu0 0.0
    %3799 = vmatpush2.msra.mxu0 0.0
    %3800 = vmatprep.subr.mxu0 0.0
    %3801 = vmatpush2.msra.mxu0 0.0
    %3802 = vmatprep.subr.mxu0 0.0
    %3803 = vmatpush2.msra.mxu0 0.0
    %3804 = vmatprep.subr.mxu0 0.0
    %3805 = vmatpush2.msra.mxu0 0.0
    %3806 = vmatprep.mubr.f32.mxu0 0.0
    %3807 = vmatmul.mubr.f32.gmra.mxu0 %v3740
    %v3808 = vpop.f32.mrf.mxu0
    %v3809 = vadd.f32 0.0, %v3808
    %v3810 = vpop.f32.mrf.mxu0
    %3811 = vdwg.mxu0
    %3812 = vrot.lane.b32.xlu0 %v3474, 124
    %v3813 = vpop.permute.xlu0 %3812
    %3814 = vrot.lane.b32.xlu0 %v3474, 92
    %v3815 = vpop.permute.xlu0 %3814
    %v3816 = vsel %vm283, %v3813, 0
    %v3818 = vsel %vm283, %v3815, 0
    %3820 = vmatprep.subr.mxu0 0.0
    %3821 = vmatpush1.xpose.msra.mxu0 0.0
    %3822 = vmatprep.subr.mxu0 0.0
    %3823 = vmatpush1.xpose.msra.mxu0 0.0
    %3824 = vmatprep.subr.mxu0 0.0
    %3825 = vmatpush1.xpose.msra.mxu0 0.0
    %3826 = vmatprep.subr.mxu0 0.0
    %3827 = vmatpush1.xpose.msra.mxu0 0.0
    %3828 = vmatprep.subr.mxu0 0.0
    %3829 = vmatpush1.xpose.msra.mxu0 0.0
    %3830 = vmatprep.subr.mxu0 0.0
    %3831 = vmatpush1.xpose.msra.mxu0 0.0
    %3832 = vmatprep.subr.mxu0 0.0
    %3833 = vmatpush1.xpose.msra.mxu0 0.0
    %3834 = vmatprep.subr.mxu0 0.0
    %3835 = vmatpush1.xpose.msra.mxu0 0.0
    %3836 = vmatprep.subr.mxu0 0.0
    %3837 = vmatpush1.xpose.msra.mxu0 0.0
    %3838 = vmatprep.subr.mxu0 0.0
    %3839 = vmatpush1.xpose.msra.mxu0 0.0
    %3840 = vmatprep.subr.mxu0 0.0
    %3841 = vmatpush1.xpose.msra.mxu0 0.0
    %3842 = vmatprep.subr.mxu0 0.0
    %3843 = vmatpush1.xpose.msra.mxu0 0.0
    %3844 = vmatprep.subr.mxu0 0.0
    %3845 = vmatpush1.xpose.msra.mxu0 0.0
    %3846 = vmatprep.subr.mxu0 0.0
    %3847 = vmatpush1.xpose.msra.mxu0 0.0
    %3848 = vmatprep.subr.mxu0 0.0
    %3849 = vmatpush1.xpose.msra.mxu0 0.0
    %3850 = vmatprep.subr.mxu0 0.0
    %3851 = vmatpush1.xpose.msra.mxu0 %v3818
    %3852 = vmatprep.subr.mxu0 0.0
    %3853 = vmatpush2.xpose.msra.mxu0 0.0
    %3854 = vmatprep.subr.mxu0 0.0
    %3855 = vmatpush2.xpose.msra.mxu0 0.0
    %3856 = vmatprep.subr.mxu0 0.0
    %3857 = vmatpush2.xpose.msra.mxu0 0.0
    %3858 = vmatprep.subr.mxu0 0.0
    %3859 = vmatpush2.xpose.msra.mxu0 0.0
    %3860 = vmatprep.subr.mxu0 0.0
    %3861 = vmatpush2.xpose.msra.mxu0 0.0
    %3862 = vmatprep.subr.mxu0 0.0
    %3863 = vmatpush2.xpose.msra.mxu0 0.0
    %3864 = vmatprep.subr.mxu0 0.0
    %3865 = vmatpush2.xpose.msra.mxu0 0.0
    %3866 = vmatprep.subr.mxu0 0.0
    %3867 = vmatpush2.xpose.msra.mxu0 0.0
    %3868 = vmatprep.subr.mxu0 0.0
    %3869 = vmatpush2.xpose.msra.mxu0 0.0
    %3870 = vmatprep.subr.mxu0 0.0
    %3871 = vmatpush2.xpose.msra.mxu0 0.0
    %3872 = vmatprep.subr.mxu0 0.0
    %3873 = vmatpush2.xpose.msra.mxu0 0.0
    %3874 = vmatprep.subr.mxu0 0.0
    %3875 = vmatpush2.xpose.msra.mxu0 0.0
    %3876 = vmatprep.subr.mxu0 0.0
    %3877 = vmatpush2.xpose.msra.mxu0 0.0
    %3878 = vmatprep.subr.mxu0 0.0
    %3879 = vmatpush2.xpose.msra.mxu0 0.0
    %3880 = vmatprep.subr.mxu0 0.0
    %3881 = vmatpush2.xpose.msra.mxu0 0.0
    %3882 = vmatprep.subr.mxu0 0.0
    %3883 = vmatpush2.xpose.msra.mxu0 0.0
    %3884 = vmatprep.mubr.f32.mxu0 0.0
    %3885 = vmatmul.mubr.f32.gmra.mxu0 %v3816
    %v3886 = vpop.f32.mrf.mxu0
    %v3887 = vadd.f32 0.0, %v3886
    %v3888 = vpop.f32.mrf.mxu0
    %3889 = vdwg.mxu0
    %3890 = vrot.lane.b32.xlu0 %v3479, 124
    %v3891 = vpop.permute.xlu0 %3890
    %3892 = vrot.lane.b32.xlu0 %v3479, 92
    %v3893 = vpop.permute.xlu0 %3892
    %v3894 = vsel %vm283, %v3891, 0
    %v3896 = vsel %vm283, %v3893, 0
    %3898 = vmatprep.subr.mxu0 0.0
    %3899 = vmatpush1.xpose.msra.mxu0 0.0
    %3900 = vmatprep.subr.mxu0 0.0
    %3901 = vmatpush1.xpose.msra.mxu0 0.0
    %3902 = vmatprep.subr.mxu0 0.0
    %3903 = vmatpush1.xpose.msra.mxu0 0.0
    %3904 = vmatprep.subr.mxu0 0.0
    %3905 = vmatpush1.xpose.msra.mxu0 0.0
    %3906 = vmatprep.subr.mxu0 0.0
    %3907 = vmatpush1.xpose.msra.mxu0 0.0
    %3908 = vmatprep.subr.mxu0 0.0
    %3909 = vmatpush1.xpose.msra.mxu0 0.0
    %3910 = vmatprep.subr.mxu0 0.0
    %3911 = vmatpush1.xpose.msra.mxu0 0.0
    %3912 = vmatprep.subr.mxu0 0.0
    %3913 = vmatpush1.xpose.msra.mxu0 0.0
    %3914 = vmatprep.subr.mxu0 0.0
    %3915 = vmatpush1.xpose.msra.mxu0 0.0
    %3916 = vmatprep.subr.mxu0 0.0
    %3917 = vmatpush1.xpose.msra.mxu0 0.0
    %3918 = vmatprep.subr.mxu0 0.0
    %3919 = vmatpush1.xpose.msra.mxu0 0.0
    %3920 = vmatprep.subr.mxu0 0.0
    %3921 = vmatpush1.xpose.msra.mxu0 0.0
    %3922 = vmatprep.subr.mxu0 0.0
    %3923 = vmatpush1.xpose.msra.mxu0 0.0
    %3924 = vmatprep.subr.mxu0 0.0
    %3925 = vmatpush1.xpose.msra.mxu0 0.0
    %3926 = vmatprep.subr.mxu0 0.0
    %3927 = vmatpush1.xpose.msra.mxu0 0.0
    %3928 = vmatprep.subr.mxu0 0.0
    %3929 = vmatpush1.xpose.msra.mxu0 %v3896
    %3930 = vmatprep.subr.mxu0 0.0
    %3931 = vmatpush2.xpose.msra.mxu0 0.0
    %3932 = vmatprep.subr.mxu0 0.0
    %3933 = vmatpush2.xpose.msra.mxu0 0.0
    %3934 = vmatprep.subr.mxu0 0.0
    %3935 = vmatpush2.xpose.msra.mxu0 0.0
    %3936 = vmatprep.subr.mxu0 0.0
    %3937 = vmatpush2.xpose.msra.mxu0 0.0
    %3938 = vmatprep.subr.mxu0 0.0
    %3939 = vmatpush2.xpose.msra.mxu0 0.0
    %3940 = vmatprep.subr.mxu0 0.0
    %3941 = vmatpush2.xpose.msra.mxu0 0.0
    %3942 = vmatprep.subr.mxu0 0.0
    %3943 = vmatpush2.xpose.msra.mxu0 0.0
    %3944 = vmatprep.subr.mxu0 0.0
    %3945 = vmatpush2.xpose.msra.mxu0 0.0
    %3946 = vmatprep.subr.mxu0 0.0
    %3947 = vmatpush2.xpose.msra.mxu0 0.0
    %3948 = vmatprep.subr.mxu0 0.0
    %3949 = vmatpush2.xpose.msra.mxu0 0.0
    %3950 = vmatprep.subr.mxu0 0.0
    %3951 = vmatpush2.xpose.msra.mxu0 0.0
    %3952 = vmatprep.subr.mxu0 0.0
    %3953 = vmatpush2.xpose.msra.mxu0 0.0
    %3954 = vmatprep.subr.mxu0 0.0
    %3955 = vmatpush2.xpose.msra.mxu0 0.0
    %3956 = vmatprep.subr.mxu0 0.0
    %3957 = vmatpush2.xpose.msra.mxu0 0.0
    %3958 = vmatprep.subr.mxu0 0.0
    %3959 = vmatpush2.xpose.msra.mxu0 0.0
    %3960 = vmatprep.subr.mxu0 0.0
    %3961 = vmatpush2.xpose.msra.mxu0 0.0
    %3962 = vmatprep.mubr.f32.mxu0 0.0
    %3963 = vmatmul.mubr.f32.gmra.mxu0 %v3894
    %v3964 = vpop.f32.mrf.mxu0
    %v3965 = vadd.f32 0.0, %v3964
    %v3966 = vpop.f32.mrf.mxu0
    %3967 = vdwg.mxu0
    %v3968 = vmul.f32 %v3887, 0.5
    %v3969 = vmul.f32 %v3965, 0.5
    %v3970 = vsel %vm437, %v3968, -inf
    %3971 = vmax.xlane.f32.xlu0 %v3970
    %v3972 = vpop.xlane.xlu0 %3971
    %v3973 = vsel %vm437, %v3969, -inf
    %3974 = vmax.xlane.f32.xlu0 %v3973
    %v3975 = vpop.xlane.xlu0 %3974
    %v3976 = vsub.f32 %v3968, %v3972
    %v3977 = vsub.f32 %v3969, %v3975
    %v3978 = vmul.f32 %v3976, 1.442695
    %v3979 = vpow.pop %v3978
    %v3980 = vmul.f32 %v3977, 1.442695
    %v3981 = vpow.pop %v3980
    %v3982 = vsel %vm437, %v3979, 0.0
    %3983 = vadd.xlane.f32.xlu0 %v3982
    %v3984 = vpop.xlane.xlu0 %3983
    %v3985 = vsel %vm437, %v3981, 0.0
    %3986 = vadd.xlane.f32.xlu0 %v3985
    %v3987 = vpop.xlane.xlu0 %3986
    %v3988 = vrcp.pop %v3984
    %v3989 = vrcp.pop %v3987
    %v3990 = vmul.f32 %v3979, %v3988
    %v3991 = vmul.f32 %v3981, %v3989
    %3992 = vrot.lane.b32.xlu0 %v3474, 60
    %v3993 = vpop.permute.xlu0 %3992
    %v3996 = vsel %vm437, %v3990, 0
    %3998 = vmatprep.subr.mxu0 0.0
    %3999 = vmatpush1.msra.mxu0 0.0
    %4000 = vmatprep.subr.mxu0 0.0
    %4001 = vmatpush1.msra.mxu0 0.0
    %4002 = vmatprep.subr.mxu0 0.0
    %4003 = vmatpush1.msra.mxu0 0.0
    %4004 = vmatprep.subr.mxu0 0.0
    %4005 = vmatpush1.msra.mxu0 0.0
    %4006 = vmatprep.subr.mxu0 0.0
    %4007 = vmatpush1.msra.mxu0 0.0
    %4008 = vmatprep.subr.mxu0 0.0
    %4009 = vmatpush1.msra.mxu0 0.0
    %4010 = vmatprep.subr.mxu0 0.0
    %4011 = vmatpush1.msra.mxu0 0.0
    %4012 = vmatprep.subr.mxu0 0.0
    %4013 = vmatpush1.msra.mxu0 0.0
    %4014 = vmatprep.subr.mxu0 0.0
    %4015 = vmatpush1.msra.mxu0 0.0
    %4016 = vmatprep.subr.mxu0 0.0
    %4017 = vmatpush1.msra.mxu0 0.0
    %4018 = vmatprep.subr.mxu0 0.0
    %4019 = vmatpush1.msra.mxu0 0.0
    %4020 = vmatprep.subr.mxu0 0.0
    %4021 = vmatpush1.msra.mxu0 0.0
    %4022 = vmatprep.subr.mxu0 0.0
    %4023 = vmatpush1.msra.mxu0 0.0
    %4024 = vmatprep.subr.mxu0 0.0
    %4025 = vmatpush1.msra.mxu0 0.0
    %4026 = vmatprep.subr.mxu0 0.0
    %4027 = vmatpush1.msra.mxu0 0.0
    %4028 = vmatprep.subr.mxu0 0.0
    %4029 = vmatpush1.msra.mxu0 %v3993
    %4030 = vmatprep.subr.mxu0 0.0
    %4031 = vmatpush2.msra.mxu0 0.0
    %4032 = vmatprep.subr.mxu0 0.0
    %4033 = vmatpush2.msra.mxu0 0.0
    %4034 = vmatprep.subr.mxu0 0.0
    %4035 = vmatpush2.msra.mxu0 0.0
    %4036 = vmatprep.subr.mxu0 0.0
    %4037 = vmatpush2.msra.mxu0 0.0
    %4038 = vmatprep.subr.mxu0 0.0
    %4039 = vmatpush2.msra.mxu0 0.0
    %4040 = vmatprep.subr.mxu0 0.0
    %4041 = vmatpush2.msra.mxu0 0.0
    %4042 = vmatprep.subr.mxu0 0.0
    %4043 = vmatpush2.msra.mxu0 0.0
    %4044 = vmatprep.subr.mxu0 0.0
    %4045 = vmatpush2.msra.mxu0 0.0
    %4046 = vmatprep.subr.mxu0 0.0
    %4047 = vmatpush2.msra.mxu0 0.0
    %4048 = vmatprep.subr.mxu0 0.0
    %4049 = vmatpush2.msra.mxu0 0.0
    %4050 = vmatprep.subr.mxu0 0.0
    %4051 = vmatpush2.msra.mxu0 0.0
    %4052 = vmatprep.subr.mxu0 0.0
    %4053 = vmatpush2.msra.mxu0 0.0
    %4054 = vmatprep.subr.mxu0 0.0
    %4055 = vmatpush2.msra.mxu0 0.0
    %4056 = vmatprep.subr.mxu0 0.0
    %4057 = vmatpush2.msra.mxu0 0.0
    %4058 = vmatprep.subr.mxu0 0.0
    %4059 = vmatpush2.msra.mxu0 0.0
    %4060 = vmatprep.subr.mxu0 0.0
    %4061 = vmatpush2.msra.mxu0 0.0
    %4062 = vmatprep.mubr.f32.mxu0 0.0
    %4063 = vmatmul.mubr.f32.gmra.mxu0 %v3996
    %v4064 = vpop.f32.mrf.mxu0
    %v4065 = vadd.f32 0.0, %v4064
    %v4066 = vpop.f32.mrf.mxu0
    %4067 = vdwg.mxu0
    %4068 = vrot.lane.b32.xlu0 %v3479, 60
    %v4069 = vpop.permute.xlu0 %4068
    %v4072 = vsel %vm437, %v3991, 0
    %4074 = vmatprep.subr.mxu0 0.0
    %4075 = vmatpush1.msra.mxu0 0.0
    %4076 = vmatprep.subr.mxu0 0.0
    %4077 = vmatpush1.msra.mxu0 0.0
    %4078 = vmatprep.subr.mxu0 0.0
    %4079 = vmatpush1.msra.mxu0 0.0
    %4080 = vmatprep.subr.mxu0 0.0
    %4081 = vmatpush1.msra.mxu0 0.0
    %4082 = vmatprep.subr.mxu0 0.0
    %4083 = vmatpush1.msra.mxu0 0.0
    %4084 = vmatprep.subr.mxu0 0.0
    %4085 = vmatpush1.msra.mxu0 0.0
    %4086 = vmatprep.subr.mxu0 0.0
    %4087 = vmatpush1.msra.mxu0 0.0
    %4088 = vmatprep.subr.mxu0 0.0
    %4089 = vmatpush1.msra.mxu0 0.0
    %4090 = vmatprep.subr.mxu0 0.0
    %4091 = vmatpush1.msra.mxu0 0.0
    %4092 = vmatprep.subr.mxu0 0.0
    %4093 = vmatpush1.msra.mxu0 0.0
    %4094 = vmatprep.subr.mxu0 0.0
    %4095 = vmatpush1.msra.mxu0 0.0
    %4096 = vmatprep.subr.mxu0 0.0
    %4097 = vmatpush1.msra.mxu0 0.0
    %4098 = vmatprep.subr.mxu0 0.0
    %4099 = vmatpush1.msra.mxu0 0.0
    %4100 = vmatprep.subr.mxu0 0.0
    %4101 = vmatpush1.msra.mxu0 0.0
    %4102 = vmatprep.subr.mxu0 0.0
    %4103 = vmatpush1.msra.mxu0 0.0
    %4104 = vmatprep.subr.mxu0 0.0
    %4105 = vmatpush1.msra.mxu0 %v4069
    %4106 = vmatprep.subr.mxu0 0.0
    %4107 = vmatpush2.msra.mxu0 0.0
    %4108 = vmatprep.subr.mxu0 0.0
    %4109 = vmatpush2.msra.mxu0 0.0
    %4110 = vmatprep.subr.mxu0 0.0
    %4111 = vmatpush2.msra.mxu0 0.0
    %4112 = vmatprep.subr.mxu0 0.0
    %4113 = vmatpush2.msra.mxu0 0.0
    %4114 = vmatprep.subr.mxu0 0.0
    %4115 = vmatpush2.msra.mxu0 0.0
    %4116 = vmatprep.subr.mxu0 0.0
    %4117 = vmatpush2.msra.mxu0 0.0
    %4118 = vmatprep.subr.mxu0 0.0
    %4119 = vmatpush2.msra.mxu0 0.0
    %4120 = vmatprep.subr.mxu0 0.0
    %4121 = vmatpush2.msra.mxu0 0.0
    %4122 = vmatprep.subr.mxu0 0.0
    %4123 = vmatpush2.msra.mxu0 0.0
    %4124 = vmatprep.subr.mxu0 0.0
    %4125 = vmatpush2.msra.mxu0 0.0
    %4126 = vmatprep.subr.mxu0 0.0
    %4127 = vmatpush2.msra.mxu0 0.0
    %4128 = vmatprep.subr.mxu0 0.0
    %4129 = vmatpush2.msra.mxu0 0.0
    %4130 = vmatprep.subr.mxu0 0.0
    %4131 = vmatpush2.msra.mxu0 0.0
    %4132 = vmatprep.subr.mxu0 0.0
    %4133 = vmatpush2.msra.mxu0 0.0
    %4134 = vmatprep.subr.mxu0 0.0
    %4135 = vmatpush2.msra.mxu0 0.0
    %4136 = vmatprep.subr.mxu0 0.0
    %4137 = vmatpush2.msra.mxu0 0.0
    %4138 = vmatprep.mubr.f32.mxu0 0.0
    %4139 = vmatmul.mubr.f32.gmra.mxu0 %v4072
    %v4140 = vpop.f32.mrf.mxu0
    %v4141 = vadd.f32 0.0, %v4140
    %v4142 = vpop.f32.mrf.mxu0
    %4143 = vdwg.mxu0
    %4144 = vrot.lane.b32.xlu0 %v3474, 120
    %v4145 = vpop.permute.xlu0 %4144
    %4146 = vrot.lane.b32.xlu0 %v3474, 88
    %v4147 = vpop.permute.xlu0 %4146
    %v4148 = vsel %vm283, %v4145, 0
    %v4150 = vsel %vm283, %v4147, 0
    %4152 = vmatprep.subr.mxu0 0.0
    %4153 = vmatpush1.xpose.msra.mxu0 0.0
    %4154 = vmatprep.subr.mxu0 0.0
    %4155 = vmatpush1.xpose.msra.mxu0 0.0
    %4156 = vmatprep.subr.mxu0 0.0
    %4157 = vmatpush1.xpose.msra.mxu0 0.0
    %4158 = vmatprep.subr.mxu0 0.0
    %4159 = vmatpush1.xpose.msra.mxu0 0.0
    %4160 = vmatprep.subr.mxu0 0.0
    %4161 = vmatpush1.xpose.msra.mxu0 0.0
    %4162 = vmatprep.subr.mxu0 0.0
    %4163 = vmatpush1.xpose.msra.mxu0 0.0
    %4164 = vmatprep.subr.mxu0 0.0
    %4165 = vmatpush1.xpose.msra.mxu0 0.0
    %4166 = vmatprep.subr.mxu0 0.0
    %4167 = vmatpush1.xpose.msra.mxu0 0.0
    %4168 = vmatprep.subr.mxu0 0.0
    %4169 = vmatpush1.xpose.msra.mxu0 0.0
    %4170 = vmatprep.subr.mxu0 0.0
    %4171 = vmatpush1.xpose.msra.mxu0 0.0
    %4172 = vmatprep.subr.mxu0 0.0
    %4173 = vmatpush1.xpose.msra.mxu0 0.0
    %4174 = vmatprep.subr.mxu0 0.0
    %4175 = vmatpush1.xpose.msra.mxu0 0.0
    %4176 = vmatprep.subr.mxu0 0.0
    %4177 = vmatpush1.xpose.msra.mxu0 0.0
    %4178 = vmatprep.subr.mxu0 0.0
    %4179 = vmatpush1.xpose.msra.mxu0 0.0
    %4180 = vmatprep.subr.mxu0 0.0
    %4181 = vmatpush1.xpose.msra.mxu0 0.0
    %4182 = vmatprep.subr.mxu0 0.0
    %4183 = vmatpush1.xpose.msra.mxu0 %v4150
    %4184 = vmatprep.subr.mxu0 0.0
    %4185 = vmatpush2.xpose.msra.mxu0 0.0
    %4186 = vmatprep.subr.mxu0 0.0
    %4187 = vmatpush2.xpose.msra.mxu0 0.0
    %4188 = vmatprep.subr.mxu0 0.0
    %4189 = vmatpush2.xpose.msra.mxu0 0.0
    %4190 = vmatprep.subr.mxu0 0.0
    %4191 = vmatpush2.xpose.msra.mxu0 0.0
    %4192 = vmatprep.subr.mxu0 0.0
    %4193 = vmatpush2.xpose.msra.mxu0 0.0
    %4194 = vmatprep.subr.mxu0 0.0
    %4195 = vmatpush2.xpose.msra.mxu0 0.0
    %4196 = vmatprep.subr.mxu0 0.0
    %4197 = vmatpush2.xpose.msra.mxu0 0.0
    %4198 = vmatprep.subr.mxu0 0.0
    %4199 = vmatpush2.xpose.msra.mxu0 0.0
    %4200 = vmatprep.subr.mxu0 0.0
    %4201 = vmatpush2.xpose.msra.mxu0 0.0
    %4202 = vmatprep.subr.mxu0 0.0
    %4203 = vmatpush2.xpose.msra.mxu0 0.0
    %4204 = vmatprep.subr.mxu0 0.0
    %4205 = vmatpush2.xpose.msra.mxu0 0.0
    %4206 = vmatprep.subr.mxu0 0.0
    %4207 = vmatpush2.xpose.msra.mxu0 0.0
    %4208 = vmatprep.subr.mxu0 0.0
    %4209 = vmatpush2.xpose.msra.mxu0 0.0
    %4210 = vmatprep.subr.mxu0 0.0
    %4211 = vmatpush2.xpose.msra.mxu0 0.0
    %4212 = vmatprep.subr.mxu0 0.0
    %4213 = vmatpush2.xpose.msra.mxu0 0.0
    %4214 = vmatprep.subr.mxu0 0.0
    %4215 = vmatpush2.xpose.msra.mxu0 0.0
    %4216 = vmatprep.mubr.f32.mxu0 0.0
    %4217 = vmatmul.mubr.f32.gmra.mxu0 %v4148
    %v4218 = vpop.f32.mrf.mxu0
    %v4219 = vadd.f32 0.0, %v4218
    %v4220 = vpop.f32.mrf.mxu0
    %4221 = vdwg.mxu0
    %4222 = vrot.lane.b32.xlu0 %v3479, 120
    %v4223 = vpop.permute.xlu0 %4222
    %4224 = vrot.lane.b32.xlu0 %v3479, 88
    %v4225 = vpop.permute.xlu0 %4224
    %v4226 = vsel %vm283, %v4223, 0
    %v4228 = vsel %vm283, %v4225, 0
    %4230 = vmatprep.subr.mxu0 0.0
    %4231 = vmatpush1.xpose.msra.mxu0 0.0
    %4232 = vmatprep.subr.mxu0 0.0
    %4233 = vmatpush1.xpose.msra.mxu0 0.0
    %4234 = vmatprep.subr.mxu0 0.0
    %4235 = vmatpush1.xpose.msra.mxu0 0.0
    %4236 = vmatprep.subr.mxu0 0.0
    %4237 = vmatpush1.xpose.msra.mxu0 0.0
    %4238 = vmatprep.subr.mxu0 0.0
    %4239 = vmatpush1.xpose.msra.mxu0 0.0
    %4240 = vmatprep.subr.mxu0 0.0
    %4241 = vmatpush1.xpose.msra.mxu0 0.0
    %4242 = vmatprep.subr.mxu0 0.0
    %4243 = vmatpush1.xpose.msra.mxu0 0.0
    %4244 = vmatprep.subr.mxu0 0.0
    %4245 = vmatpush1.xpose.msra.mxu0 0.0
    %4246 = vmatprep.subr.mxu0 0.0
    %4247 = vmatpush1.xpose.msra.mxu0 0.0
    %4248 = vmatprep.subr.mxu0 0.0
    %4249 = vmatpush1.xpose.msra.mxu0 0.0
    %4250 = vmatprep.subr.mxu0 0.0
    %4251 = vmatpush1.xpose.msra.mxu0 0.0
    %4252 = vmatprep.subr.mxu0 0.0
    %4253 = vmatpush1.xpose.msra.mxu0 0.0
    %4254 = vmatprep.subr.mxu0 0.0
    %4255 = vmatpush1.xpose.msra.mxu0 0.0
    %4256 = vmatprep.subr.mxu0 0.0
    %4257 = vmatpush1.xpose.msra.mxu0 0.0
    %4258 = vmatprep.subr.mxu0 0.0
    %4259 = vmatpush1.xpose.msra.mxu0 0.0
    %4260 = vmatprep.subr.mxu0 0.0
    %4261 = vmatpush1.xpose.msra.mxu0 %v4228
    %4262 = vmatprep.subr.mxu0 0.0
    %4263 = vmatpush2.xpose.msra.mxu0 0.0
    %4264 = vmatprep.subr.mxu0 0.0
    %4265 = vmatpush2.xpose.msra.mxu0 0.0
    %4266 = vmatprep.subr.mxu0 0.0
    %4267 = vmatpush2.xpose.msra.mxu0 0.0
    %4268 = vmatprep.subr.mxu0 0.0
    %4269 = vmatpush2.xpose.msra.mxu0 0.0
    %4270 = vmatprep.subr.mxu0 0.0
    %4271 = vmatpush2.xpose.msra.mxu0 0.0
    %4272 = vmatprep.subr.mxu0 0.0
    %4273 = vmatpush2.xpose.msra.mxu0 0.0
    %4274 = vmatprep.subr.mxu0 0.0
    %4275 = vmatpush2.xpose.msra.mxu0 0.0
    %4276 = vmatprep.subr.mxu0 0.0
    %4277 = vmatpush2.xpose.msra.mxu0 0.0
    %4278 = vmatprep.subr.mxu0 0.0
    %4279 = vmatpush2.xpose.msra.mxu0 0.0
    %4280 = vmatprep.subr.mxu0 0.0
    %4281 = vmatpush2.xpose.msra.mxu0 0.0
    %4282 = vmatprep.subr.mxu0 0.0
    %4283 = vmatpush2.xpose.msra.mxu0 0.0
    %4284 = vmatprep.subr.mxu0 0.0
    %4285 = vmatpush2.xpose.msra.mxu0 0.0
    %4286 = vmatprep.subr.mxu0 0.0
    %4287 = vmatpush2.xpose.msra.mxu0 0.0
    %4288 = vmatprep.subr.mxu0 0.0
    %4289 = vmatpush2.xpose.msra.mxu0 0.0
    %4290 = vmatprep.subr.mxu0 0.0
    %4291 = vmatpush2.xpose.msra.mxu0 0.0
    %4292 = vmatprep.subr.mxu0 0.0
    %4293 = vmatpush2.xpose.msra.mxu0 0.0
    %4294 = vmatprep.mubr.f32.mxu0 0.0
    %4295 = vmatmul.mubr.f32.gmra.mxu0 %v4226
    %v4296 = vpop.f32.mrf.mxu0
    %v4297 = vadd.f32 0.0, %v4296
    %v4298 = vpop.f32.mrf.mxu0
    %4299 = vdwg.mxu0
    %v4300 = vmul.f32 %v4219, 0.5
    %v4301 = vmul.f32 %v4297, 0.5
    %v4302 = vsel %vm437, %v4300, -inf
    %4303 = vmax.xlane.f32.xlu0 %v4302
    %v4304 = vpop.xlane.xlu0 %4303
    %v4305 = vsel %vm437, %v4301, -inf
    %4306 = vmax.xlane.f32.xlu0 %v4305
    %v4307 = vpop.xlane.xlu0 %4306
    %v4308 = vsub.f32 %v4300, %v4304
    %v4309 = vsub.f32 %v4301, %v4307
    %v4310 = vmul.f32 %v4308, 1.442695
    %v4311 = vpow.pop %v4310
    %v4312 = vmul.f32 %v4309, 1.442695
    %v4313 = vpow.pop %v4312
    %v4314 = vsel %vm437, %v4311, 0.0
    %4315 = vadd.xlane.f32.xlu0 %v4314
    %v4316 = vpop.xlane.xlu0 %4315
    %v4317 = vsel %vm437, %v4313, 0.0
    %4318 = vadd.xlane.f32.xlu0 %v4317
    %v4319 = vpop.xlane.xlu0 %4318
    %v4320 = vrcp.pop %v4316
    %v4321 = vrcp.pop %v4319
    %v4322 = vmul.f32 %v4311, %v4320
    %v4323 = vmul.f32 %v4313, %v4321
    %4324 = vrot.lane.b32.xlu0 %v3474, 56
    %v4325 = vpop.permute.xlu0 %4324
    %v4328 = vsel %vm437, %v4322, 0
    %4330 = vmatprep.subr.mxu0 0.0
    %4331 = vmatpush1.msra.mxu0 0.0
    %4332 = vmatprep.subr.mxu0 0.0
    %4333 = vmatpush1.msra.mxu0 0.0
    %4334 = vmatprep.subr.mxu0 0.0
    %4335 = vmatpush1.msra.mxu0 0.0
    %4336 = vmatprep.subr.mxu0 0.0
    %4337 = vmatpush1.msra.mxu0 0.0
    %4338 = vmatprep.subr.mxu0 0.0
    %4339 = vmatpush1.msra.mxu0 0.0
    %4340 = vmatprep.subr.mxu0 0.0
    %4341 = vmatpush1.msra.mxu0 0.0
    %4342 = vmatprep.subr.mxu0 0.0
    %4343 = vmatpush1.msra.mxu0 0.0
    %4344 = vmatprep.subr.mxu0 0.0
    %4345 = vmatpush1.msra.mxu0 0.0
    %4346 = vmatprep.subr.mxu0 0.0
    %4347 = vmatpush1.msra.mxu0 0.0
    %4348 = vmatprep.subr.mxu0 0.0
    %4349 = vmatpush1.msra.mxu0 0.0
    %4350 = vmatprep.subr.mxu0 0.0
    %4351 = vmatpush1.msra.mxu0 0.0
    %4352 = vmatprep.subr.mxu0 0.0
    %4353 = vmatpush1.msra.mxu0 0.0
    %4354 = vmatprep.subr.mxu0 0.0
    %4355 = vmatpush1.msra.mxu0 0.0
    %4356 = vmatprep.subr.mxu0 0.0
    %4357 = vmatpush1.msra.mxu0 0.0
    %4358 = vmatprep.subr.mxu0 0.0
    %4359 = vmatpush1.msra.mxu0 0.0
    %4360 = vmatprep.subr.mxu0 0.0
    %4361 = vmatpush1.msra.mxu0 %v4325
    %4362 = vmatprep.subr.mxu0 0.0
    %4363 = vmatpush2.msra.mxu0 0.0
    %4364 = vmatprep.subr.mxu0 0.0
    %4365 = vmatpush2.msra.mxu0 0.0
    %4366 = vmatprep.subr.mxu0 0.0
    %4367 = vmatpush2.msra.mxu0 0.0
    %4368 = vmatprep.subr.mxu0 0.0
    %4369 = vmatpush2.msra.mxu0 0.0
    %4370 = vmatprep.subr.mxu0 0.0
    %4371 = vmatpush2.msra.mxu0 0.0
    %4372 = vmatprep.subr.mxu0 0.0
    %4373 = vmatpush2.msra.mxu0 0.0
    %4374 = vmatprep.subr.mxu0 0.0
    %4375 = vmatpush2.msra.mxu0 0.0
    %4376 = vmatprep.subr.mxu0 0.0
    %4377 = vmatpush2.msra.mxu0 0.0
    %4378 = vmatprep.subr.mxu0 0.0
    %4379 = vmatpush2.msra.mxu0 0.0
    %4380 = vmatprep.subr.mxu0 0.0
    %4381 = vmatpush2.msra.mxu0 0.0
    %4382 = vmatprep.subr.mxu0 0.0
    %4383 = vmatpush2.msra.mxu0 0.0
    %4384 = vmatprep.subr.mxu0 0.0
    %4385 = vmatpush2.msra.mxu0 0.0
    %4386 = vmatprep.subr.mxu0 0.0
    %4387 = vmatpush2.msra.mxu0 0.0
    %4388 = vmatprep.subr.mxu0 0.0
    %4389 = vmatpush2.msra.mxu0 0.0
    %4390 = vmatprep.subr.mxu0 0.0
    %4391 = vmatpush2.msra.mxu0 0.0
    %4392 = vmatprep.subr.mxu0 0.0
    %4393 = vmatpush2.msra.mxu0 0.0
    %4394 = vmatprep.mubr.f32.mxu0 0.0
    %4395 = vmatmul.mubr.f32.gmra.mxu0 %v4328
    %v4396 = vpop.f32.mrf.mxu0
    %v4397 = vadd.f32 0.0, %v4396
    %v4398 = vpop.f32.mrf.mxu0
    %4399 = vdwg.mxu0
    %4400 = vrot.lane.b32.xlu0 %v3479, 56
    %v4401 = vpop.permute.xlu0 %4400
    %v4404 = vsel %vm437, %v4323, 0
    %4406 = vmatprep.subr.mxu0 0.0
    %4407 = vmatpush1.msra.mxu0 0.0
    %4408 = vmatprep.subr.mxu0 0.0
    %4409 = vmatpush1.msra.mxu0 0.0
    %4410 = vmatprep.subr.mxu0 0.0
    %4411 = vmatpush1.msra.mxu0 0.0
    %4412 = vmatprep.subr.mxu0 0.0
    %4413 = vmatpush1.msra.mxu0 0.0
    %4414 = vmatprep.subr.mxu0 0.0
    %4415 = vmatpush1.msra.mxu0 0.0
    %4416 = vmatprep.subr.mxu0 0.0
    %4417 = vmatpush1.msra.mxu0 0.0
    %4418 = vmatprep.subr.mxu0 0.0
    %4419 = vmatpush1.msra.mxu0 0.0
    %4420 = vmatprep.subr.mxu0 0.0
    %4421 = vmatpush1.msra.mxu0 0.0
    %4422 = vmatprep.subr.mxu0 0.0
    %4423 = vmatpush1.msra.mxu0 0.0
    %4424 = vmatprep.subr.mxu0 0.0
    %4425 = vmatpush1.msra.mxu0 0.0
    %4426 = vmatprep.subr.mxu0 0.0
    %4427 = vmatpush1.msra.mxu0 0.0
    %4428 = vmatprep.subr.mxu0 0.0
    %4429 = vmatpush1.msra.mxu0 0.0
    %4430 = vmatprep.subr.mxu0 0.0
    %4431 = vmatpush1.msra.mxu0 0.0
    %4432 = vmatprep.subr.mxu0 0.0
    %4433 = vmatpush1.msra.mxu0 0.0
    %4434 = vmatprep.subr.mxu0 0.0
    %4435 = vmatpush1.msra.mxu0 0.0
    %4436 = vmatprep.subr.mxu0 0.0
    %4437 = vmatpush1.msra.mxu0 %v4401
    %4438 = vmatprep.subr.mxu0 0.0
    %4439 = vmatpush2.msra.mxu0 0.0
    %4440 = vmatprep.subr.mxu0 0.0
    %4441 = vmatpush2.msra.mxu0 0.0
    %4442 = vmatprep.subr.mxu0 0.0
    %4443 = vmatpush2.msra.mxu0 0.0
    %4444 = vmatprep.subr.mxu0 0.0
    %4445 = vmatpush2.msra.mxu0 0.0
    %4446 = vmatprep.subr.mxu0 0.0
    %4447 = vmatpush2.msra.mxu0 0.0
    %4448 = vmatprep.subr.mxu0 0.0
    %4449 = vmatpush2.msra.mxu0 0.0
    %4450 = vmatprep.subr.mxu0 0.0
    %4451 = vmatpush2.msra.mxu0 0.0
    %4452 = vmatprep.subr.mxu0 0.0
    %4453 = vmatpush2.msra.mxu0 0.0
    %4454 = vmatprep.subr.mxu0 0.0
    %4455 = vmatpush2.msra.mxu0 0.0
    %4456 = vmatprep.subr.mxu0 0.0
    %4457 = vmatpush2.msra.mxu0 0.0
    %4458 = vmatprep.subr.mxu0 0.0
    %4459 = vmatpush2.msra.mxu0 0.0
    %4460 = vmatprep.subr.mxu0 0.0
    %4461 = vmatpush2.msra.mxu0 0.0
    %4462 = vmatprep.subr.mxu0 0.0
    %4463 = vmatpush2.msra.mxu0 0.0
    %4464 = vmatprep.subr.mxu0 0.0
    %4465 = vmatpush2.msra.mxu0 0.0
    %4466 = vmatprep.subr.mxu0 0.0
    %4467 = vmatpush2.msra.mxu0 0.0
    %4468 = vmatprep.subr.mxu0 0.0
    %4469 = vmatpush2.msra.mxu0 0.0
    %4470 = vmatprep.mubr.f32.mxu0 0.0
    %4471 = vmatmul.mubr.f32.gmra.mxu0 %v4404
    %v4472 = vpop.f32.mrf.mxu0
    %v4473 = vadd.f32 0.0, %v4472
    %v4474 = vpop.f32.mrf.mxu0
    %4475 = vdwg.mxu0
    %4476 = vrot.lane.b32.xlu0 %v3474, 116
    %v4477 = vpop.permute.xlu0 %4476
    %4478 = vrot.lane.b32.xlu0 %v3474, 84
    %v4479 = vpop.permute.xlu0 %4478
    %v4480 = vsel %vm283, %v4477, 0
    %v4482 = vsel %vm283, %v4479, 0
    %4484 = vmatprep.subr.mxu0 0.0
    %4485 = vmatpush1.xpose.msra.mxu0 0.0
    %4486 = vmatprep.subr.mxu0 0.0
    %4487 = vmatpush1.xpose.msra.mxu0 0.0
    %4488 = vmatprep.subr.mxu0 0.0
    %4489 = vmatpush1.xpose.msra.mxu0 0.0
    %4490 = vmatprep.subr.mxu0 0.0
    %4491 = vmatpush1.xpose.msra.mxu0 0.0
    %4492 = vmatprep.subr.mxu0 0.0
    %4493 = vmatpush1.xpose.msra.mxu0 0.0
    %4494 = vmatprep.subr.mxu0 0.0
    %4495 = vmatpush1.xpose.msra.mxu0 0.0
    %4496 = vmatprep.subr.mxu0 0.0
    %4497 = vmatpush1.xpose.msra.mxu0 0.0
    %4498 = vmatprep.subr.mxu0 0.0
    %4499 = vmatpush1.xpose.msra.mxu0 0.0
    %4500 = vmatprep.subr.mxu0 0.0
    %4501 = vmatpush1.xpose.msra.mxu0 0.0
    %4502 = vmatprep.subr.mxu0 0.0
    %4503 = vmatpush1.xpose.msra.mxu0 0.0
    %4504 = vmatprep.subr.mxu0 0.0
    %4505 = vmatpush1.xpose.msra.mxu0 0.0
    %4506 = vmatprep.subr.mxu0 0.0
    %4507 = vmatpush1.xpose.msra.mxu0 0.0
    %4508 = vmatprep.subr.mxu0 0.0
    %4509 = vmatpush1.xpose.msra.mxu0 0.0
    %4510 = vmatprep.subr.mxu0 0.0
    %4511 = vmatpush1.xpose.msra.mxu0 0.0
    %4512 = vmatprep.subr.mxu0 0.0
    %4513 = vmatpush1.xpose.msra.mxu0 0.0
    %4514 = vmatprep.subr.mxu0 0.0
    %4515 = vmatpush1.xpose.msra.mxu0 %v4482
    %4516 = vmatprep.subr.mxu0 0.0
    %4517 = vmatpush2.xpose.msra.mxu0 0.0
    %4518 = vmatprep.subr.mxu0 0.0
    %4519 = vmatpush2.xpose.msra.mxu0 0.0
    %4520 = vmatprep.subr.mxu0 0.0
    %4521 = vmatpush2.xpose.msra.mxu0 0.0
    %4522 = vmatprep.subr.mxu0 0.0
    %4523 = vmatpush2.xpose.msra.mxu0 0.0
    %4524 = vmatprep.subr.mxu0 0.0
    %4525 = vmatpush2.xpose.msra.mxu0 0.0
    %4526 = vmatprep.subr.mxu0 0.0
    %4527 = vmatpush2.xpose.msra.mxu0 0.0
    %4528 = vmatprep.subr.mxu0 0.0
    %4529 = vmatpush2.xpose.msra.mxu0 0.0
    %4530 = vmatprep.subr.mxu0 0.0
    %4531 = vmatpush2.xpose.msra.mxu0 0.0
    %4532 = vmatprep.subr.mxu0 0.0
    %4533 = vmatpush2.xpose.msra.mxu0 0.0
    %4534 = vmatprep.subr.mxu0 0.0
    %4535 = vmatpush2.xpose.msra.mxu0 0.0
    %4536 = vmatprep.subr.mxu0 0.0
    %4537 = vmatpush2.xpose.msra.mxu0 0.0
    %4538 = vmatprep.subr.mxu0 0.0
    %4539 = vmatpush2.xpose.msra.mxu0 0.0
    %4540 = vmatprep.subr.mxu0 0.0
    %4541 = vmatpush2.xpose.msra.mxu0 0.0
    %4542 = vmatprep.subr.mxu0 0.0
    %4543 = vmatpush2.xpose.msra.mxu0 0.0
    %4544 = vmatprep.subr.mxu0 0.0
    %4545 = vmatpush2.xpose.msra.mxu0 0.0
    %4546 = vmatprep.subr.mxu0 0.0
    %4547 = vmatpush2.xpose.msra.mxu0 0.0
    %4548 = vmatprep.mubr.f32.mxu0 0.0
    %4549 = vmatmul.mubr.f32.gmra.mxu0 %v4480
    %v4550 = vpop.f32.mrf.mxu0
    %v4551 = vadd.f32 0.0, %v4550
    %v4552 = vpop.f32.mrf.mxu0
    %4553 = vdwg.mxu0
    %4554 = vrot.lane.b32.xlu0 %v3479, 116
    %v4555 = vpop.permute.xlu0 %4554
    %4556 = vrot.lane.b32.xlu0 %v3479, 84
    %v4557 = vpop.permute.xlu0 %4556
    %v4558 = vsel %vm283, %v4555, 0
    %v4560 = vsel %vm283, %v4557, 0
    %4562 = vmatprep.subr.mxu0 0.0
    %4563 = vmatpush1.xpose.msra.mxu0 0.0
    %4564 = vmatprep.subr.mxu0 0.0
    %4565 = vmatpush1.xpose.msra.mxu0 0.0
    %4566 = vmatprep.subr.mxu0 0.0
    %4567 = vmatpush1.xpose.msra.mxu0 0.0
    %4568 = vmatprep.subr.mxu0 0.0
    %4569 = vmatpush1.xpose.msra.mxu0 0.0
    %4570 = vmatprep.subr.mxu0 0.0
    %4571 = vmatpush1.xpose.msra.mxu0 0.0
    %4572 = vmatprep.subr.mxu0 0.0
    %4573 = vmatpush1.xpose.msra.mxu0 0.0
    %4574 = vmatprep.subr.mxu0 0.0
    %4575 = vmatpush1.xpose.msra.mxu0 0.0
    %4576 = vmatprep.subr.mxu0 0.0
    %4577 = vmatpush1.xpose.msra.mxu0 0.0
    %4578 = vmatprep.subr.mxu0 0.0
    %4579 = vmatpush1.xpose.msra.mxu0 0.0
    %4580 = vmatprep.subr.mxu0 0.0
    %4581 = vmatpush1.xpose.msra.mxu0 0.0
    %4582 = vmatprep.subr.mxu0 0.0
    %4583 = vmatpush1.xpose.msra.mxu0 0.0
    %4584 = vmatprep.subr.mxu0 0.0
    %4585 = vmatpush1.xpose.msra.mxu0 0.0
    %4586 = vmatprep.subr.mxu0 0.0
    %4587 = vmatpush1.xpose.msra.mxu0 0.0
    %4588 = vmatprep.subr.mxu0 0.0
    %4589 = vmatpush1.xpose.msra.mxu0 0.0
    %4590 = vmatprep.subr.mxu0 0.0
    %4591 = vmatpush1.xpose.msra.mxu0 0.0
    %4592 = vmatprep.subr.mxu0 0.0
    %4593 = vmatpush1.xpose.msra.mxu0 %v4560
    %4594 = vmatprep.subr.mxu0 0.0
    %4595 = vmatpush2.xpose.msra.mxu0 0.0
    %4596 = vmatprep.subr.mxu0 0.0
    %4597 = vmatpush2.xpose.msra.mxu0 0.0
    %4598 = vmatprep.subr.mxu0 0.0
    %4599 = vmatpush2.xpose.msra.mxu0 0.0
    %4600 = vmatprep.subr.mxu0 0.0
    %4601 = vmatpush2.xpose.msra.mxu0 0.0
    %4602 = vmatprep.subr.mxu0 0.0
    %4603 = vmatpush2.xpose.msra.mxu0 0.0
    %4604 = vmatprep.subr.mxu0 0.0
    %4605 = vmatpush2.xpose.msra.mxu0 0.0
    %4606 = vmatprep.subr.mxu0 0.0
    %4607 = vmatpush2.xpose.msra.mxu0 0.0
    %4608 = vmatprep.subr.mxu0 0.0
    %4609 = vmatpush2.xpose.msra.mxu0 0.0
    %4610 = vmatprep.subr.mxu0 0.0
    %4611 = vmatpush2.xpose.msra.mxu0 0.0
    %4612 = vmatprep.subr.mxu0 0.0
    %4613 = vmatpush2.xpose.msra.mxu0 0.0
    %4614 = vmatprep.subr.mxu0 0.0
    %4615 = vmatpush2.xpose.msra.mxu0 0.0
    %4616 = vmatprep.subr.mxu0 0.0
    %4617 = vmatpush2.xpose.msra.mxu0 0.0
    %4618 = vmatprep.subr.mxu0 0.0
    %4619 = vmatpush2.xpose.msra.mxu0 0.0
    %4620 = vmatprep.subr.mxu0 0.0
    %4621 = vmatpush2.xpose.msra.mxu0 0.0
    %4622 = vmatprep.subr.mxu0 0.0
    %4623 = vmatpush2.xpose.msra.mxu0 0.0
    %4624 = vmatprep.subr.mxu0 0.0
    %4625 = vmatpush2.xpose.msra.mxu0 0.0
    %4626 = vmatprep.mubr.f32.mxu0 0.0
    %4627 = vmatmul.mubr.f32.gmra.mxu0 %v4558
    %v4628 = vpop.f32.mrf.mxu0
    %v4629 = vadd.f32 0.0, %v4628
    %v4630 = vpop.f32.mrf.mxu0
    %4631 = vdwg.mxu0
    %v4632 = vmul.f32 %v4551, 0.5
    %v4633 = vmul.f32 %v4629, 0.5
    %v4634 = vsel %vm437, %v4632, -inf
    %4635 = vmax.xlane.f32.xlu0 %v4634
    %v4636 = vpop.xlane.xlu0 %4635
    %v4637 = vsel %vm437, %v4633, -inf
    %4638 = vmax.xlane.f32.xlu0 %v4637
    %v4639 = vpop.xlane.xlu0 %4638
    %v4640 = vsub.f32 %v4632, %v4636
    %v4641 = vsub.f32 %v4633, %v4639
    %v4642 = vmul.f32 %v4640, 1.442695
    %v4643 = vpow.pop %v4642
    %v4644 = vmul.f32 %v4641, 1.442695
    %v4645 = vpow.pop %v4644
    %v4646 = vsel %vm437, %v4643, 0.0
    %4647 = vadd.xlane.f32.xlu0 %v4646
    %v4648 = vpop.xlane.xlu0 %4647
    %v4649 = vsel %vm437, %v4645, 0.0
    %4650 = vadd.xlane.f32.xlu0 %v4649
    %v4651 = vpop.xlane.xlu0 %4650
    %v4652 = vrcp.pop %v4648
    %v4653 = vrcp.pop %v4651
    %v4654 = vmul.f32 %v4643, %v4652
    %v4655 = vmul.f32 %v4645, %v4653
    %4656 = vrot.lane.b32.xlu0 %v3474, 52
    %v4657 = vpop.permute.xlu0 %4656
    %v4660 = vsel %vm437, %v4654, 0
    %4662 = vmatprep.subr.mxu0 0.0
    %4663 = vmatpush1.msra.mxu0 0.0
    %4664 = vmatprep.subr.mxu0 0.0
    %4665 = vmatpush1.msra.mxu0 0.0
    %4666 = vmatprep.subr.mxu0 0.0
    %4667 = vmatpush1.msra.mxu0 0.0
    %4668 = vmatprep.subr.mxu0 0.0
    %4669 = vmatpush1.msra.mxu0 0.0
    %4670 = vmatprep.subr.mxu0 0.0
    %4671 = vmatpush1.msra.mxu0 0.0
    %4672 = vmatprep.subr.mxu0 0.0
    %4673 = vmatpush1.msra.mxu0 0.0
    %4674 = vmatprep.subr.mxu0 0.0
    %4675 = vmatpush1.msra.mxu0 0.0
    %4676 = vmatprep.subr.mxu0 0.0
    %4677 = vmatpush1.msra.mxu0 0.0
    %4678 = vmatprep.subr.mxu0 0.0
    %4679 = vmatpush1.msra.mxu0 0.0
    %4680 = vmatprep.subr.mxu0 0.0
    %4681 = vmatpush1.msra.mxu0 0.0
    %4682 = vmatprep.subr.mxu0 0.0
    %4683 = vmatpush1.msra.mxu0 0.0
    %4684 = vmatprep.subr.mxu0 0.0
    %4685 = vmatpush1.msra.mxu0 0.0
    %4686 = vmatprep.subr.mxu0 0.0
    %4687 = vmatpush1.msra.mxu0 0.0
    %4688 = vmatprep.subr.mxu0 0.0
    %4689 = vmatpush1.msra.mxu0 0.0
    %4690 = vmatprep.subr.mxu0 0.0
    %4691 = vmatpush1.msra.mxu0 0.0
    %4692 = vmatprep.subr.mxu0 0.0
    %4693 = vmatpush1.msra.mxu0 %v4657
    %4694 = vmatprep.subr.mxu0 0.0
    %4695 = vmatpush2.msra.mxu0 0.0
    %4696 = vmatprep.subr.mxu0 0.0
    %4697 = vmatpush2.msra.mxu0 0.0
    %4698 = vmatprep.subr.mxu0 0.0
    %4699 = vmatpush2.msra.mxu0 0.0
    %4700 = vmatprep.subr.mxu0 0.0
    %4701 = vmatpush2.msra.mxu0 0.0
    %4702 = vmatprep.subr.mxu0 0.0
    %4703 = vmatpush2.msra.mxu0 0.0
    %4704 = vmatprep.subr.mxu0 0.0
    %4705 = vmatpush2.msra.mxu0 0.0
    %4706 = vmatprep.subr.mxu0 0.0
    %4707 = vmatpush2.msra.mxu0 0.0
    %4708 = vmatprep.subr.mxu0 0.0
    %4709 = vmatpush2.msra.mxu0 0.0
    %4710 = vmatprep.subr.mxu0 0.0
    %4711 = vmatpush2.msra.mxu0 0.0
    %4712 = vmatprep.subr.mxu0 0.0
    %4713 = vmatpush2.msra.mxu0 0.0
    %4714 = vmatprep.subr.mxu0 0.0
    %4715 = vmatpush2.msra.mxu0 0.0
    %4716 = vmatprep.subr.mxu0 0.0
    %4717 = vmatpush2.msra.mxu0 0.0
    %4718 = vmatprep.subr.mxu0 0.0
    %4719 = vmatpush2.msra.mxu0 0.0
    %4720 = vmatprep.subr.mxu0 0.0
    %4721 = vmatpush2.msra.mxu0 0.0
    %4722 = vmatprep.subr.mxu0 0.0
    %4723 = vmatpush2.msra.mxu0 0.0
    %4724 = vmatprep.subr.mxu0 0.0
    %4725 = vmatpush2.msra.mxu0 0.0
    %4726 = vmatprep.mubr.f32.mxu0 0.0
    %4727 = vmatmul.mubr.f32.gmra.mxu0 %v4660
    %v4728 = vpop.f32.mrf.mxu0
    %v4729 = vadd.f32 0.0, %v4728
    %v4730 = vpop.f32.mrf.mxu0
    %4731 = vdwg.mxu0
    %4732 = vrot.lane.b32.xlu0 %v3479, 52
    %v4733 = vpop.permute.xlu0 %4732
    %v4736 = vsel %vm437, %v4655, 0
    %4738 = vmatprep.subr.mxu0 0.0
    %4739 = vmatpush1.msra.mxu0 0.0
    %4740 = vmatprep.subr.mxu0 0.0
    %4741 = vmatpush1.msra.mxu0 0.0
    %4742 = vmatprep.subr.mxu0 0.0
    %4743 = vmatpush1.msra.mxu0 0.0
    %4744 = vmatprep.subr.mxu0 0.0
    %4745 = vmatpush1.msra.mxu0 0.0
    %4746 = vmatprep.subr.mxu0 0.0
    %4747 = vmatpush1.msra.mxu0 0.0
    %4748 = vmatprep.subr.mxu0 0.0
    %4749 = vmatpush1.msra.mxu0 0.0
    %4750 = vmatprep.subr.mxu0 0.0
    %4751 = vmatpush1.msra.mxu0 0.0
    %4752 = vmatprep.subr.mxu0 0.0
    %4753 = vmatpush1.msra.mxu0 0.0
    %4754 = vmatprep.subr.mxu0 0.0
    %4755 = vmatpush1.msra.mxu0 0.0
    %4756 = vmatprep.subr.mxu0 0.0
    %4757 = vmatpush1.msra.mxu0 0.0
    %4758 = vmatprep.subr.mxu0 0.0
    %4759 = vmatpush1.msra.mxu0 0.0
    %4760 = vmatprep.subr.mxu0 0.0
    %4761 = vmatpush1.msra.mxu0 0.0
    %4762 = vmatprep.subr.mxu0 0.0
    %4763 = vmatpush1.msra.mxu0 0.0
    %4764 = vmatprep.subr.mxu0 0.0
    %4765 = vmatpush1.msra.mxu0 0.0
    %4766 = vmatprep.subr.mxu0 0.0
    %4767 = vmatpush1.msra.mxu0 0.0
    %4768 = vmatprep.subr.mxu0 0.0
    %4769 = vmatpush1.msra.mxu0 %v4733
    %4770 = vmatprep.subr.mxu0 0.0
    %4771 = vmatpush2.msra.mxu0 0.0
    %4772 = vmatprep.subr.mxu0 0.0
    %4773 = vmatpush2.msra.mxu0 0.0
    %4774 = vmatprep.subr.mxu0 0.0
    %4775 = vmatpush2.msra.mxu0 0.0
    %4776 = vmatprep.subr.mxu0 0.0
    %4777 = vmatpush2.msra.mxu0 0.0
    %4778 = vmatprep.subr.mxu0 0.0
    %4779 = vmatpush2.msra.mxu0 0.0
    %4780 = vmatprep.subr.mxu0 0.0
    %4781 = vmatpush2.msra.mxu0 0.0
    %4782 = vmatprep.subr.mxu0 0.0
    %4783 = vmatpush2.msra.mxu0 0.0
    %4784 = vmatprep.subr.mxu0 0.0
    %4785 = vmatpush2.msra.mxu0 0.0
    %4786 = vmatprep.subr.mxu0 0.0
    %4787 = vmatpush2.msra.mxu0 0.0
    %4788 = vmatprep.subr.mxu0 0.0
    %4789 = vmatpush2.msra.mxu0 0.0
    %4790 = vmatprep.subr.mxu0 0.0
    %4791 = vmatpush2.msra.mxu0 0.0
    %4792 = vmatprep.subr.mxu0 0.0
    %4793 = vmatpush2.msra.mxu0 0.0
    %4794 = vmatprep.subr.mxu0 0.0
    %4795 = vmatpush2.msra.mxu0 0.0
    %4796 = vmatprep.subr.mxu0 0.0
    %4797 = vmatpush2.msra.mxu0 0.0
    %4798 = vmatprep.subr.mxu0 0.0
    %4799 = vmatpush2.msra.mxu0 0.0
    %4800 = vmatprep.subr.mxu0 0.0
    %4801 = vmatpush2.msra.mxu0 0.0
    %4802 = vmatprep.mubr.f32.mxu0 0.0
    %4803 = vmatmul.mubr.f32.gmra.mxu0 %v4736
    %v4804 = vpop.f32.mrf.mxu0
    %v4805 = vadd.f32 0.0, %v4804
    %v4806 = vpop.f32.mrf.mxu0
    %4807 = vdwg.mxu0
    %4808 = vrot.lane.b32.xlu0 %v3474, 112
    %v4809 = vpop.permute.xlu0 %4808
    %4810 = vrot.lane.b32.xlu0 %v3474, 80
    %v4811 = vpop.permute.xlu0 %4810
    %v4812 = vsel %vm283, %v4809, 0
    %v4814 = vsel %vm283, %v4811, 0
    %4816 = vmatprep.subr.mxu0 0.0
    %4817 = vmatpush1.xpose.msra.mxu0 0.0
    %4818 = vmatprep.subr.mxu0 0.0
    %4819 = vmatpush1.xpose.msra.mxu0 0.0
    %4820 = vmatprep.subr.mxu0 0.0
    %4821 = vmatpush1.xpose.msra.mxu0 0.0
    %4822 = vmatprep.subr.mxu0 0.0
    %4823 = vmatpush1.xpose.msra.mxu0 0.0
    %4824 = vmatprep.subr.mxu0 0.0
    %4825 = vmatpush1.xpose.msra.mxu0 0.0
    %4826 = vmatprep.subr.mxu0 0.0
    %4827 = vmatpush1.xpose.msra.mxu0 0.0
    %4828 = vmatprep.subr.mxu0 0.0
    %4829 = vmatpush1.xpose.msra.mxu0 0.0
    %4830 = vmatprep.subr.mxu0 0.0
    %4831 = vmatpush1.xpose.msra.mxu0 0.0
    %4832 = vmatprep.subr.mxu0 0.0
    %4833 = vmatpush1.xpose.msra.mxu0 0.0
    %4834 = vmatprep.subr.mxu0 0.0
    %4835 = vmatpush1.xpose.msra.mxu0 0.0
    %4836 = vmatprep.subr.mxu0 0.0
    %4837 = vmatpush1.xpose.msra.mxu0 0.0
    %4838 = vmatprep.subr.mxu0 0.0
    %4839 = vmatpush1.xpose.msra.mxu0 0.0
    %4840 = vmatprep.subr.mxu0 0.0
    %4841 = vmatpush1.xpose.msra.mxu0 0.0
    %4842 = vmatprep.subr.mxu0 0.0
    %4843 = vmatpush1.xpose.msra.mxu0 0.0
    %4844 = vmatprep.subr.mxu0 0.0
    %4845 = vmatpush1.xpose.msra.mxu0 0.0
    %4846 = vmatprep.subr.mxu0 0.0
    %4847 = vmatpush1.xpose.msra.mxu0 %v4814
    %4848 = vmatprep.subr.mxu0 0.0
    %4849 = vmatpush2.xpose.msra.mxu0 0.0
    %4850 = vmatprep.subr.mxu0 0.0
    %4851 = vmatpush2.xpose.msra.mxu0 0.0
    %4852 = vmatprep.subr.mxu0 0.0
    %4853 = vmatpush2.xpose.msra.mxu0 0.0
    %4854 = vmatprep.subr.mxu0 0.0
    %4855 = vmatpush2.xpose.msra.mxu0 0.0
    %4856 = vmatprep.subr.mxu0 0.0
    %4857 = vmatpush2.xpose.msra.mxu0 0.0
    %4858 = vmatprep.subr.mxu0 0.0
    %4859 = vmatpush2.xpose.msra.mxu0 0.0
    %4860 = vmatprep.subr.mxu0 0.0
    %4861 = vmatpush2.xpose.msra.mxu0 0.0
    %4862 = vmatprep.subr.mxu0 0.0
    %4863 = vmatpush2.xpose.msra.mxu0 0.0
    %4864 = vmatprep.subr.mxu0 0.0
    %4865 = vmatpush2.xpose.msra.mxu0 0.0
    %4866 = vmatprep.subr.mxu0 0.0
    %4867 = vmatpush2.xpose.msra.mxu0 0.0
    %4868 = vmatprep.subr.mxu0 0.0
    %4869 = vmatpush2.xpose.msra.mxu0 0.0
    %4870 = vmatprep.subr.mxu0 0.0
    %4871 = vmatpush2.xpose.msra.mxu0 0.0
    %4872 = vmatprep.subr.mxu0 0.0
    %4873 = vmatpush2.xpose.msra.mxu0 0.0
    %4874 = vmatprep.subr.mxu0 0.0
    %4875 = vmatpush2.xpose.msra.mxu0 0.0
    %4876 = vmatprep.subr.mxu0 0.0
    %4877 = vmatpush2.xpose.msra.mxu0 0.0
    %4878 = vmatprep.subr.mxu0 0.0
    %4879 = vmatpush2.xpose.msra.mxu0 0.0
    %4880 = vmatprep.mubr.f32.mxu0 0.0
    %4881 = vmatmul.mubr.f32.gmra.mxu0 %v4812
    %v4882 = vpop.f32.mrf.mxu0
    %v4883 = vadd.f32 0.0, %v4882
    %v4884 = vpop.f32.mrf.mxu0
    %4885 = vdwg.mxu0
    %4886 = vrot.lane.b32.xlu0 %v3479, 112
    %v4887 = vpop.permute.xlu0 %4886
    %4888 = vrot.lane.b32.xlu0 %v3479, 80
    %v4889 = vpop.permute.xlu0 %4888
    %v4890 = vsel %vm283, %v4887, 0
    %v4892 = vsel %vm283, %v4889, 0
    %4894 = vmatprep.subr.mxu0 0.0
    %4895 = vmatpush1.xpose.msra.mxu0 0.0
    %4896 = vmatprep.subr.mxu0 0.0
    %4897 = vmatpush1.xpose.msra.mxu0 0.0
    %4898 = vmatprep.subr.mxu0 0.0
    %4899 = vmatpush1.xpose.msra.mxu0 0.0
    %4900 = vmatprep.subr.mxu0 0.0
    %4901 = vmatpush1.xpose.msra.mxu0 0.0
    %4902 = vmatprep.subr.mxu0 0.0
    %4903 = vmatpush1.xpose.msra.mxu0 0.0
    %4904 = vmatprep.subr.mxu0 0.0
    %4905 = vmatpush1.xpose.msra.mxu0 0.0
    %4906 = vmatprep.subr.mxu0 0.0
    %4907 = vmatpush1.xpose.msra.mxu0 0.0
    %4908 = vmatprep.subr.mxu0 0.0
    %4909 = vmatpush1.xpose.msra.mxu0 0.0
    %4910 = vmatprep.subr.mxu0 0.0
    %4911 = vmatpush1.xpose.msra.mxu0 0.0
    %4912 = vmatprep.subr.mxu0 0.0
    %4913 = vmatpush1.xpose.msra.mxu0 0.0
    %4914 = vmatprep.subr.mxu0 0.0
    %4915 = vmatpush1.xpose.msra.mxu0 0.0
    %4916 = vmatprep.subr.mxu0 0.0
    %4917 = vmatpush1.xpose.msra.mxu0 0.0
    %4918 = vmatprep.subr.mxu0 0.0
    %4919 = vmatpush1.xpose.msra.mxu0 0.0
    %4920 = vmatprep.subr.mxu0 0.0
    %4921 = vmatpush1.xpose.msra.mxu0 0.0
    %4922 = vmatprep.subr.mxu0 0.0
    %4923 = vmatpush1.xpose.msra.mxu0 0.0
    %4924 = vmatprep.subr.mxu0 0.0
    %4925 = vmatpush1.xpose.msra.mxu0 %v4892
    %4926 = vmatprep.subr.mxu0 0.0
    %4927 = vmatpush2.xpose.msra.mxu0 0.0
    %4928 = vmatprep.subr.mxu0 0.0
    %4929 = vmatpush2.xpose.msra.mxu0 0.0
    %4930 = vmatprep.subr.mxu0 0.0
    %4931 = vmatpush2.xpose.msra.mxu0 0.0
    %4932 = vmatprep.subr.mxu0 0.0
    %4933 = vmatpush2.xpose.msra.mxu0 0.0
    %4934 = vmatprep.subr.mxu0 0.0
    %4935 = vmatpush2.xpose.msra.mxu0 0.0
    %4936 = vmatprep.subr.mxu0 0.0
    %4937 = vmatpush2.xpose.msra.mxu0 0.0
    %4938 = vmatprep.subr.mxu0 0.0
    %4939 = vmatpush2.xpose.msra.mxu0 0.0
    %4940 = vmatprep.subr.mxu0 0.0
    %4941 = vmatpush2.xpose.msra.mxu0 0.0
    %4942 = vmatprep.subr.mxu0 0.0
    %4943 = vmatpush2.xpose.msra.mxu0 0.0
    %4944 = vmatprep.subr.mxu0 0.0
    %4945 = vmatpush2.xpose.msra.mxu0 0.0
    %4946 = vmatprep.subr.mxu0 0.0
    %4947 = vmatpush2.xpose.msra.mxu0 0.0
    %4948 = vmatprep.subr.mxu0 0.0
    %4949 = vmatpush2.xpose.msra.mxu0 0.0
    %4950 = vmatprep.subr.mxu0 0.0
    %4951 = vmatpush2.xpose.msra.mxu0 0.0
    %4952 = vmatprep.subr.mxu0 0.0
    %4953 = vmatpush2.xpose.msra.mxu0 0.0
    %4954 = vmatprep.subr.mxu0 0.0
    %4955 = vmatpush2.xpose.msra.mxu0 0.0
    %4956 = vmatprep.subr.mxu0 0.0
    %4957 = vmatpush2.xpose.msra.mxu0 0.0
    %4958 = vmatprep.mubr.f32.mxu0 0.0
    %4959 = vmatmul.mubr.f32.gmra.mxu0 %v4890
    %v4960 = vpop.f32.mrf.mxu0
    %v4961 = vadd.f32 0.0, %v4960
    %v4962 = vpop.f32.mrf.mxu0
    %4963 = vdwg.mxu0
    %v4964 = vmul.f32 %v4883, 0.5
    %v4965 = vmul.f32 %v4961, 0.5
    %v4966 = vsel %vm437, %v4964, -inf
    %4967 = vmax.xlane.f32.xlu0 %v4966
    %v4968 = vpop.xlane.xlu0 %4967
    %v4969 = vsel %vm437, %v4965, -inf
    %4970 = vmax.xlane.f32.xlu0 %v4969
    %v4971 = vpop.xlane.xlu0 %4970
    %v4972 = vsub.f32 %v4964, %v4968
    %v4973 = vsub.f32 %v4965, %v4971
    %v4974 = vmul.f32 %v4972, 1.442695
    %v4975 = vpow.pop %v4974
    %v4976 = vmul.f32 %v4973, 1.442695
    %v4977 = vpow.pop %v4976
    %v4978 = vsel %vm437, %v4975, 0.0
    %4979 = vadd.xlane.f32.xlu0 %v4978
    %v4980 = vpop.xlane.xlu0 %4979
    %v4981 = vsel %vm437, %v4977, 0.0
    %4982 = vadd.xlane.f32.xlu0 %v4981
    %v4983 = vpop.xlane.xlu0 %4982
    %v4984 = vrcp.pop %v4980
    %v4985 = vrcp.pop %v4983
    %v4986 = vmul.f32 %v4975, %v4984
    %v4987 = vmul.f32 %v4977, %v4985
    %4988 = vrot.lane.b32.xlu0 %v3474, 48
    %v4989 = vpop.permute.xlu0 %4988
    %v4992 = vsel %vm437, %v4986, 0
    %4994 = vmatprep.subr.mxu0 0.0
    %4995 = vmatpush1.msra.mxu0 0.0
    %4996 = vmatprep.subr.mxu0 0.0
    %4997 = vmatpush1.msra.mxu0 0.0
    %4998 = vmatprep.subr.mxu0 0.0
    %4999 = vmatpush1.msra.mxu0 0.0
    %5000 = vmatprep.subr.mxu0 0.0
    %5001 = vmatpush1.msra.mxu0 0.0
    %5002 = vmatprep.subr.mxu0 0.0
    %5003 = vmatpush1.msra.mxu0 0.0
    %5004 = vmatprep.subr.mxu0 0.0
    %5005 = vmatpush1.msra.mxu0 0.0
    %5006 = vmatprep.subr.mxu0 0.0
    %5007 = vmatpush1.msra.mxu0 0.0
    %5008 = vmatprep.subr.mxu0 0.0
    %5009 = vmatpush1.msra.mxu0 0.0
    %5010 = vmatprep.subr.mxu0 0.0
    %5011 = vmatpush1.msra.mxu0 0.0
    %5012 = vmatprep.subr.mxu0 0.0
    %5013 = vmatpush1.msra.mxu0 0.0
    %5014 = vmatprep.subr.mxu0 0.0
    %5015 = vmatpush1.msra.mxu0 0.0
    %5016 = vmatprep.subr.mxu0 0.0
    %5017 = vmatpush1.msra.mxu0 0.0
    %5018 = vmatprep.subr.mxu0 0.0
    %5019 = vmatpush1.msra.mxu0 0.0
    %5020 = vmatprep.subr.mxu0 0.0
    %5021 = vmatpush1.msra.mxu0 0.0
    %5022 = vmatprep.subr.mxu0 0.0
    %5023 = vmatpush1.msra.mxu0 0.0
    %5024 = vmatprep.subr.mxu0 0.0
    %5025 = vmatpush1.msra.mxu0 %v4989
    %5026 = vmatprep.subr.mxu0 0.0
    %5027 = vmatpush2.msra.mxu0 0.0
    %5028 = vmatprep.subr.mxu0 0.0
    %5029 = vmatpush2.msra.mxu0 0.0
    %5030 = vmatprep.subr.mxu0 0.0
    %5031 = vmatpush2.msra.mxu0 0.0
    %5032 = vmatprep.subr.mxu0 0.0
    %5033 = vmatpush2.msra.mxu0 0.0
    %5034 = vmatprep.subr.mxu0 0.0
    %5035 = vmatpush2.msra.mxu0 0.0
    %5036 = vmatprep.subr.mxu0 0.0
    %5037 = vmatpush2.msra.mxu0 0.0
    %5038 = vmatprep.subr.mxu0 0.0
    %5039 = vmatpush2.msra.mxu0 0.0
    %5040 = vmatprep.subr.mxu0 0.0
    %5041 = vmatpush2.msra.mxu0 0.0
    %5042 = vmatprep.subr.mxu0 0.0
    %5043 = vmatpush2.msra.mxu0 0.0
    %5044 = vmatprep.subr.mxu0 0.0
    %5045 = vmatpush2.msra.mxu0 0.0
    %5046 = vmatprep.subr.mxu0 0.0
    %5047 = vmatpush2.msra.mxu0 0.0
    %5048 = vmatprep.subr.mxu0 0.0
    %5049 = vmatpush2.msra.mxu0 0.0
    %5050 = vmatprep.subr.mxu0 0.0
    %5051 = vmatpush2.msra.mxu0 0.0
    %5052 = vmatprep.subr.mxu0 0.0
    %5053 = vmatpush2.msra.mxu0 0.0
    %5054 = vmatprep.subr.mxu0 0.0
    %5055 = vmatpush2.msra.mxu0 0.0
    %5056 = vmatprep.subr.mxu0 0.0
    %5057 = vmatpush2.msra.mxu0 0.0
    %5058 = vmatprep.mubr.f32.mxu0 0.0
    %5059 = vmatmul.mubr.f32.gmra.mxu0 %v4992
    %v5060 = vpop.f32.mrf.mxu0
    %v5061 = vadd.f32 0.0, %v5060
    %v5062 = vpop.f32.mrf.mxu0
    %5063 = vdwg.mxu0
    %5064 = vrot.lane.b32.xlu0 %v3479, 48
    %v5065 = vpop.permute.xlu0 %5064
    %v5068 = vsel %vm437, %v4987, 0
    %5070 = vmatprep.subr.mxu0 0.0
    %5071 = vmatpush1.msra.mxu0 0.0
    %5072 = vmatprep.subr.mxu0 0.0
    %5073 = vmatpush1.msra.mxu0 0.0
    %5074 = vmatprep.subr.mxu0 0.0
    %5075 = vmatpush1.msra.mxu0 0.0
    %5076 = vmatprep.subr.mxu0 0.0
    %5077 = vmatpush1.msra.mxu0 0.0
    %5078 = vmatprep.subr.mxu0 0.0
    %5079 = vmatpush1.msra.mxu0 0.0
    %5080 = vmatprep.subr.mxu0 0.0
    %5081 = vmatpush1.msra.mxu0 0.0
    %5082 = vmatprep.subr.mxu0 0.0
    %5083 = vmatpush1.msra.mxu0 0.0
    %5084 = vmatprep.subr.mxu0 0.0
    %5085 = vmatpush1.msra.mxu0 0.0
    %5086 = vmatprep.subr.mxu0 0.0
    %5087 = vmatpush1.msra.mxu0 0.0
    %5088 = vmatprep.subr.mxu0 0.0
    %5089 = vmatpush1.msra.mxu0 0.0
    %5090 = vmatprep.subr.mxu0 0.0
    %5091 = vmatpush1.msra.mxu0 0.0
    %5092 = vmatprep.subr.mxu0 0.0
    %5093 = vmatpush1.msra.mxu0 0.0
    %5094 = vmatprep.subr.mxu0 0.0
    %5095 = vmatpush1.msra.mxu0 0.0
    %5096 = vmatprep.subr.mxu0 0.0
    %5097 = vmatpush1.msra.mxu0 0.0
    %5098 = vmatprep.subr.mxu0 0.0
    %5099 = vmatpush1.msra.mxu0 0.0
    %5100 = vmatprep.subr.mxu0 0.0
    %5101 = vmatpush1.msra.mxu0 %v5065
    %5102 = vmatprep.subr.mxu0 0.0
    %5103 = vmatpush2.msra.mxu0 0.0
    %5104 = vmatprep.subr.mxu0 0.0
    %5105 = vmatpush2.msra.mxu0 0.0
    %5106 = vmatprep.subr.mxu0 0.0
    %5107 = vmatpush2.msra.mxu0 0.0
    %5108 = vmatprep.subr.mxu0 0.0
    %5109 = vmatpush2.msra.mxu0 0.0
    %5110 = vmatprep.subr.mxu0 0.0
    %5111 = vmatpush2.msra.mxu0 0.0
    %5112 = vmatprep.subr.mxu0 0.0
    %5113 = vmatpush2.msra.mxu0 0.0
    %5114 = vmatprep.subr.mxu0 0.0
    %5115 = vmatpush2.msra.mxu0 0.0
    %5116 = vmatprep.subr.mxu0 0.0
    %5117 = vmatpush2.msra.mxu0 0.0
    %5118 = vmatprep.subr.mxu0 0.0
    %5119 = vmatpush2.msra.mxu0 0.0
    %5120 = vmatprep.subr.mxu0 0.0
    %5121 = vmatpush2.msra.mxu0 0.0
    %5122 = vmatprep.subr.mxu0 0.0
    %5123 = vmatpush2.msra.mxu0 0.0
    %5124 = vmatprep.subr.mxu0 0.0
    %5125 = vmatpush2.msra.mxu0 0.0
    %5126 = vmatprep.subr.mxu0 0.0
    %5127 = vmatpush2.msra.mxu0 0.0
    %5128 = vmatprep.subr.mxu0 0.0
    %5129 = vmatpush2.msra.mxu0 0.0
    %5130 = vmatprep.subr.mxu0 0.0
    %5131 = vmatpush2.msra.mxu0 0.0
    %5132 = vmatprep.subr.mxu0 0.0
    %5133 = vmatpush2.msra.mxu0 0.0
    %5134 = vmatprep.mubr.f32.mxu0 0.0
    %5135 = vmatmul.mubr.f32.gmra.mxu0 %v5068
    %v5136 = vpop.f32.mrf.mxu0
    %v5137 = vadd.f32 0.0, %v5136
    %v5138 = vpop.f32.mrf.mxu0
    %5139 = vdwg.mxu0
    %5140 = vrot.lane.b32.xlu0 %v3474, 108
    %v5141 = vpop.permute.xlu0 %5140
    %5142 = vrot.lane.b32.xlu0 %v3474, 76
    %v5143 = vpop.permute.xlu0 %5142
    %v5144 = vsel %vm283, %v5141, 0
    %v5146 = vsel %vm283, %v5143, 0
    %5148 = vmatprep.subr.mxu0 0.0
    %5149 = vmatpush1.xpose.msra.mxu0 0.0
    %5150 = vmatprep.subr.mxu0 0.0
    %5151 = vmatpush1.xpose.msra.mxu0 0.0
    %5152 = vmatprep.subr.mxu0 0.0
    %5153 = vmatpush1.xpose.msra.mxu0 0.0
    %5154 = vmatprep.subr.mxu0 0.0
    %5155 = vmatpush1.xpose.msra.mxu0 0.0
    %5156 = vmatprep.subr.mxu0 0.0
    %5157 = vmatpush1.xpose.msra.mxu0 0.0
    %5158 = vmatprep.subr.mxu0 0.0
    %5159 = vmatpush1.xpose.msra.mxu0 0.0
    %5160 = vmatprep.subr.mxu0 0.0
    %5161 = vmatpush1.xpose.msra.mxu0 0.0
    %5162 = vmatprep.subr.mxu0 0.0
    %5163 = vmatpush1.xpose.msra.mxu0 0.0
    %5164 = vmatprep.subr.mxu0 0.0
    %5165 = vmatpush1.xpose.msra.mxu0 0.0
    %5166 = vmatprep.subr.mxu0 0.0
    %5167 = vmatpush1.xpose.msra.mxu0 0.0
    %5168 = vmatprep.subr.mxu0 0.0
    %5169 = vmatpush1.xpose.msra.mxu0 0.0
    %5170 = vmatprep.subr.mxu0 0.0
    %5171 = vmatpush1.xpose.msra.mxu0 0.0
    %5172 = vmatprep.subr.mxu0 0.0
    %5173 = vmatpush1.xpose.msra.mxu0 0.0
    %5174 = vmatprep.subr.mxu0 0.0
    %5175 = vmatpush1.xpose.msra.mxu0 0.0
    %5176 = vmatprep.subr.mxu0 0.0
    %5177 = vmatpush1.xpose.msra.mxu0 0.0
    %5178 = vmatprep.subr.mxu0 0.0
    %5179 = vmatpush1.xpose.msra.mxu0 %v5146
    %5180 = vmatprep.subr.mxu0 0.0
    %5181 = vmatpush2.xpose.msra.mxu0 0.0
    %5182 = vmatprep.subr.mxu0 0.0
    %5183 = vmatpush2.xpose.msra.mxu0 0.0
    %5184 = vmatprep.subr.mxu0 0.0
    %5185 = vmatpush2.xpose.msra.mxu0 0.0
    %5186 = vmatprep.subr.mxu0 0.0
    %5187 = vmatpush2.xpose.msra.mxu0 0.0
    %5188 = vmatprep.subr.mxu0 0.0
    %5189 = vmatpush2.xpose.msra.mxu0 0.0
    %5190 = vmatprep.subr.mxu0 0.0
    %5191 = vmatpush2.xpose.msra.mxu0 0.0
    %5192 = vmatprep.subr.mxu0 0.0
    %5193 = vmatpush2.xpose.msra.mxu0 0.0
    %5194 = vmatprep.subr.mxu0 0.0
    %5195 = vmatpush2.xpose.msra.mxu0 0.0
    %5196 = vmatprep.subr.mxu0 0.0
    %5197 = vmatpush2.xpose.msra.mxu0 0.0
    %5198 = vmatprep.subr.mxu0 0.0
    %5199 = vmatpush2.xpose.msra.mxu0 0.0
    %5200 = vmatprep.subr.mxu0 0.0
    %5201 = vmatpush2.xpose.msra.mxu0 0.0
    %5202 = vmatprep.subr.mxu0 0.0
    %5203 = vmatpush2.xpose.msra.mxu0 0.0
    %5204 = vmatprep.subr.mxu0 0.0
    %5205 = vmatpush2.xpose.msra.mxu0 0.0
    %5206 = vmatprep.subr.mxu0 0.0
    %5207 = vmatpush2.xpose.msra.mxu0 0.0
    %5208 = vmatprep.subr.mxu0 0.0
    %5209 = vmatpush2.xpose.msra.mxu0 0.0
    %5210 = vmatprep.subr.mxu0 0.0
    %5211 = vmatpush2.xpose.msra.mxu0 0.0
    %5212 = vmatprep.mubr.f32.mxu0 0.0
    %5213 = vmatmul.mubr.f32.gmra.mxu0 %v5144
    %v5214 = vpop.f32.mrf.mxu0
    %v5215 = vadd.f32 0.0, %v5214
    %v5216 = vpop.f32.mrf.mxu0
    %5217 = vdwg.mxu0
    %5218 = vrot.lane.b32.xlu0 %v3479, 108
    %v5219 = vpop.permute.xlu0 %5218
    %5220 = vrot.lane.b32.xlu0 %v3479, 76
    %v5221 = vpop.permute.xlu0 %5220
    %v5222 = vsel %vm283, %v5219, 0
    %v5224 = vsel %vm283, %v5221, 0
    %5226 = vmatprep.subr.mxu0 0.0
    %5227 = vmatpush1.xpose.msra.mxu0 0.0
    %5228 = vmatprep.subr.mxu0 0.0
    %5229 = vmatpush1.xpose.msra.mxu0 0.0
    %5230 = vmatprep.subr.mxu0 0.0
    %5231 = vmatpush1.xpose.msra.mxu0 0.0
    %5232 = vmatprep.subr.mxu0 0.0
    %5233 = vmatpush1.xpose.msra.mxu0 0.0
    %5234 = vmatprep.subr.mxu0 0.0
    %5235 = vmatpush1.xpose.msra.mxu0 0.0
    %5236 = vmatprep.subr.mxu0 0.0
    %5237 = vmatpush1.xpose.msra.mxu0 0.0
    %5238 = vmatprep.subr.mxu0 0.0
    %5239 = vmatpush1.xpose.msra.mxu0 0.0
    %5240 = vmatprep.subr.mxu0 0.0
    %5241 = vmatpush1.xpose.msra.mxu0 0.0
    %5242 = vmatprep.subr.mxu0 0.0
    %5243 = vmatpush1.xpose.msra.mxu0 0.0
    %5244 = vmatprep.subr.mxu0 0.0
    %5245 = vmatpush1.xpose.msra.mxu0 0.0
    %5246 = vmatprep.subr.mxu0 0.0
    %5247 = vmatpush1.xpose.msra.mxu0 0.0
    %5248 = vmatprep.subr.mxu0 0.0
    %5249 = vmatpush1.xpose.msra.mxu0 0.0
    %5250 = vmatprep.subr.mxu0 0.0
    %5251 = vmatpush1.xpose.msra.mxu0 0.0
    %5252 = vmatprep.subr.mxu0 0.0
    %5253 = vmatpush1.xpose.msra.mxu0 0.0
    %5254 = vmatprep.subr.mxu0 0.0
    %5255 = vmatpush1.xpose.msra.mxu0 0.0
    %5256 = vmatprep.subr.mxu0 0.0
    %5257 = vmatpush1.xpose.msra.mxu0 %v5224
    %5258 = vmatprep.subr.mxu0 0.0
    %5259 = vmatpush2.xpose.msra.mxu0 0.0
    %5260 = vmatprep.subr.mxu0 0.0
    %5261 = vmatpush2.xpose.msra.mxu0 0.0
    %5262 = vmatprep.subr.mxu0 0.0
    %5263 = vmatpush2.xpose.msra.mxu0 0.0
    %5264 = vmatprep.subr.mxu0 0.0
    %5265 = vmatpush2.xpose.msra.mxu0 0.0
    %5266 = vmatprep.subr.mxu0 0.0
    %5267 = vmatpush2.xpose.msra.mxu0 0.0
    %5268 = vmatprep.subr.mxu0 0.0
    %5269 = vmatpush2.xpose.msra.mxu0 0.0
    %5270 = vmatprep.subr.mxu0 0.0
    %5271 = vmatpush2.xpose.msra.mxu0 0.0
    %5272 = vmatprep.subr.mxu0 0.0
    %5273 = vmatpush2.xpose.msra.mxu0 0.0
    %5274 = vmatprep.subr.mxu0 0.0
    %5275 = vmatpush2.xpose.msra.mxu0 0.0
    %5276 = vmatprep.subr.mxu0 0.0
    %5277 = vmatpush2.xpose.msra.mxu0 0.0
    %5278 = vmatprep.subr.mxu0 0.0
    %5279 = vmatpush2.xpose.msra.mxu0 0.0
    %5280 = vmatprep.subr.mxu0 0.0
    %5281 = vmatpush2.xpose.msra.mxu0 0.0
    %5282 = vmatprep.subr.mxu0 0.0
    %5283 = vmatpush2.xpose.msra.mxu0 0.0
    %5284 = vmatprep.subr.mxu0 0.0
    %5285 = vmatpush2.xpose.msra.mxu0 0.0
    %5286 = vmatprep.subr.mxu0 0.0
    %5287 = vmatpush2.xpose.msra.mxu0 0.0
    %5288 = vmatprep.subr.mxu0 0.0
    %5289 = vmatpush2.xpose.msra.mxu0 0.0
    %5290 = vmatprep.mubr.f32.mxu0 0.0
    %5291 = vmatmul.mubr.f32.gmra.mxu0 %v5222
    %v5292 = vpop.f32.mrf.mxu0
    %v5293 = vadd.f32 0.0, %v5292
    %v5294 = vpop.f32.mrf.mxu0
    %5295 = vdwg.mxu0
    %v5296 = vmul.f32 %v5215, 0.5
    %v5297 = vmul.f32 %v5293, 0.5
    %v5298 = vsel %vm437, %v5296, -inf
    %5299 = vmax.xlane.f32.xlu0 %v5298
    %v5300 = vpop.xlane.xlu0 %5299
    %v5301 = vsel %vm437, %v5297, -inf
    %5302 = vmax.xlane.f32.xlu0 %v5301
    %v5303 = vpop.xlane.xlu0 %5302
    %v5304 = vsub.f32 %v5296, %v5300
    %v5305 = vsub.f32 %v5297, %v5303
    %v5306 = vmul.f32 %v5304, 1.442695
    %v5307 = vpow.pop %v5306
    %v5308 = vmul.f32 %v5305, 1.442695
    %v5309 = vpow.pop %v5308
    %v5310 = vsel %vm437, %v5307, 0.0
    %5311 = vadd.xlane.f32.xlu0 %v5310
    %v5312 = vpop.xlane.xlu0 %5311
    %v5313 = vsel %vm437, %v5309, 0.0
    %5314 = vadd.xlane.f32.xlu0 %v5313
    %v5315 = vpop.xlane.xlu0 %5314
    %v5316 = vrcp.pop %v5312
    %v5317 = vrcp.pop %v5315
    %v5318 = vmul.f32 %v5307, %v5316
    %v5319 = vmul.f32 %v5309, %v5317
    %5320 = vrot.lane.b32.xlu0 %v3474, 44
    %v5321 = vpop.permute.xlu0 %5320
    %v5324 = vsel %vm437, %v5318, 0
    %5326 = vmatprep.subr.mxu0 0.0
    %5327 = vmatpush1.msra.mxu0 0.0
    %5328 = vmatprep.subr.mxu0 0.0
    %5329 = vmatpush1.msra.mxu0 0.0
    %5330 = vmatprep.subr.mxu0 0.0
    %5331 = vmatpush1.msra.mxu0 0.0
    %5332 = vmatprep.subr.mxu0 0.0
    %5333 = vmatpush1.msra.mxu0 0.0
    %5334 = vmatprep.subr.mxu0 0.0
    %5335 = vmatpush1.msra.mxu0 0.0
    %5336 = vmatprep.subr.mxu0 0.0
    %5337 = vmatpush1.msra.mxu0 0.0
    %5338 = vmatprep.subr.mxu0 0.0
    %5339 = vmatpush1.msra.mxu0 0.0
    %5340 = vmatprep.subr.mxu0 0.0
    %5341 = vmatpush1.msra.mxu0 0.0
    %5342 = vmatprep.subr.mxu0 0.0
    %5343 = vmatpush1.msra.mxu0 0.0
    %5344 = vmatprep.subr.mxu0 0.0
    %5345 = vmatpush1.msra.mxu0 0.0
    %5346 = vmatprep.subr.mxu0 0.0
    %5347 = vmatpush1.msra.mxu0 0.0
    %5348 = vmatprep.subr.mxu0 0.0
    %5349 = vmatpush1.msra.mxu0 0.0
    %5350 = vmatprep.subr.mxu0 0.0
    %5351 = vmatpush1.msra.mxu0 0.0
    %5352 = vmatprep.subr.mxu0 0.0
    %5353 = vmatpush1.msra.mxu0 0.0
    %5354 = vmatprep.subr.mxu0 0.0
    %5355 = vmatpush1.msra.mxu0 0.0
    %5356 = vmatprep.subr.mxu0 0.0
    %5357 = vmatpush1.msra.mxu0 %v5321
    %5358 = vmatprep.subr.mxu0 0.0
    %5359 = vmatpush2.msra.mxu0 0.0
    %5360 = vmatprep.subr.mxu0 0.0
    %5361 = vmatpush2.msra.mxu0 0.0
    %5362 = vmatprep.subr.mxu0 0.0
    %5363 = vmatpush2.msra.mxu0 0.0
    %5364 = vmatprep.subr.mxu0 0.0
    %5365 = vmatpush2.msra.mxu0 0.0
    %5366 = vmatprep.subr.mxu0 0.0
    %5367 = vmatpush2.msra.mxu0 0.0
    %5368 = vmatprep.subr.mxu0 0.0
    %5369 = vmatpush2.msra.mxu0 0.0
    %5370 = vmatprep.subr.mxu0 0.0
    %5371 = vmatpush2.msra.mxu0 0.0
    %5372 = vmatprep.subr.mxu0 0.0
    %5373 = vmatpush2.msra.mxu0 0.0
    %5374 = vmatprep.subr.mxu0 0.0
    %5375 = vmatpush2.msra.mxu0 0.0
    %5376 = vmatprep.subr.mxu0 0.0
    %5377 = vmatpush2.msra.mxu0 0.0
    %5378 = vmatprep.subr.mxu0 0.0
    %5379 = vmatpush2.msra.mxu0 0.0
    %5380 = vmatprep.subr.mxu0 0.0
    %5381 = vmatpush2.msra.mxu0 0.0
    %5382 = vmatprep.subr.mxu0 0.0
    %5383 = vmatpush2.msra.mxu0 0.0
    %5384 = vmatprep.subr.mxu0 0.0
    %5385 = vmatpush2.msra.mxu0 0.0
    %5386 = vmatprep.subr.mxu0 0.0
    %5387 = vmatpush2.msra.mxu0 0.0
    %5388 = vmatprep.subr.mxu0 0.0
    %5389 = vmatpush2.msra.mxu0 0.0
    %5390 = vmatprep.mubr.f32.mxu0 0.0
    %5391 = vmatmul.mubr.f32.gmra.mxu0 %v5324
    %v5392 = vpop.f32.mrf.mxu0
    %v5393 = vadd.f32 0.0, %v5392
    %v5394 = vpop.f32.mrf.mxu0
    %5395 = vdwg.mxu0
    %5396 = vrot.lane.b32.xlu0 %v3479, 44
    %v5397 = vpop.permute.xlu0 %5396
    %v5400 = vsel %vm437, %v5319, 0
    %5402 = vmatprep.subr.mxu0 0.0
    %5403 = vmatpush1.msra.mxu0 0.0
    %5404 = vmatprep.subr.mxu0 0.0
    %5405 = vmatpush1.msra.mxu0 0.0
    %5406 = vmatprep.subr.mxu0 0.0
    %5407 = vmatpush1.msra.mxu0 0.0
    %5408 = vmatprep.subr.mxu0 0.0
    %5409 = vmatpush1.msra.mxu0 0.0
    %5410 = vmatprep.subr.mxu0 0.0
    %5411 = vmatpush1.msra.mxu0 0.0
    %5412 = vmatprep.subr.mxu0 0.0
    %5413 = vmatpush1.msra.mxu0 0.0
    %5414 = vmatprep.subr.mxu0 0.0
    %5415 = vmatpush1.msra.mxu0 0.0
    %5416 = vmatprep.subr.mxu0 0.0
    %5417 = vmatpush1.msra.mxu0 0.0
    %5418 = vmatprep.subr.mxu0 0.0
    %5419 = vmatpush1.msra.mxu0 0.0
    %5420 = vmatprep.subr.mxu0 0.0
    %5421 = vmatpush1.msra.mxu0 0.0
    %5422 = vmatprep.subr.mxu0 0.0
    %5423 = vmatpush1.msra.mxu0 0.0
    %5424 = vmatprep.subr.mxu0 0.0
    %5425 = vmatpush1.msra.mxu0 0.0
    %5426 = vmatprep.subr.mxu0 0.0
    %5427 = vmatpush1.msra.mxu0 0.0
    %5428 = vmatprep.subr.mxu0 0.0
    %5429 = vmatpush1.msra.mxu0 0.0
    %5430 = vmatprep.subr.mxu0 0.0
    %5431 = vmatpush1.msra.mxu0 0.0
    %5432 = vmatprep.subr.mxu0 0.0
    %5433 = vmatpush1.msra.mxu0 %v5397
    %5434 = vmatprep.subr.mxu0 0.0
    %5435 = vmatpush2.msra.mxu0 0.0
    %5436 = vmatprep.subr.mxu0 0.0
    %5437 = vmatpush2.msra.mxu0 0.0
    %5438 = vmatprep.subr.mxu0 0.0
    %5439 = vmatpush2.msra.mxu0 0.0
    %5440 = vmatprep.subr.mxu0 0.0
    %5441 = vmatpush2.msra.mxu0 0.0
    %5442 = vmatprep.subr.mxu0 0.0
    %5443 = vmatpush2.msra.mxu0 0.0
    %5444 = vmatprep.subr.mxu0 0.0
    %5445 = vmatpush2.msra.mxu0 0.0
    %5446 = vmatprep.subr.mxu0 0.0
    %5447 = vmatpush2.msra.mxu0 0.0
    %5448 = vmatprep.subr.mxu0 0.0
    %5449 = vmatpush2.msra.mxu0 0.0
    %5450 = vmatprep.subr.mxu0 0.0
    %5451 = vmatpush2.msra.mxu0 0.0
    %5452 = vmatprep.subr.mxu0 0.0
    %5453 = vmatpush2.msra.mxu0 0.0
    %5454 = vmatprep.subr.mxu0 0.0
    %5455 = vmatpush2.msra.mxu0 0.0
    %5456 = vmatprep.subr.mxu0 0.0
    %5457 = vmatpush2.msra.mxu0 0.0
    %5458 = vmatprep.subr.mxu0 0.0
    %5459 = vmatpush2.msra.mxu0 0.0
    %5460 = vmatprep.subr.mxu0 0.0
    %5461 = vmatpush2.msra.mxu0 0.0
    %5462 = vmatprep.subr.mxu0 0.0
    %5463 = vmatpush2.msra.mxu0 0.0
    %5464 = vmatprep.subr.mxu0 0.0
    %5465 = vmatpush2.msra.mxu0 0.0
    %5466 = vmatprep.mubr.f32.mxu0 0.0
    %5467 = vmatmul.mubr.f32.gmra.mxu0 %v5400
    %v5468 = vpop.f32.mrf.mxu0
    %v5469 = vadd.f32 0.0, %v5468
    %v5470 = vpop.f32.mrf.mxu0
    %5471 = vdwg.mxu0
    %5472 = vrot.lane.b32.xlu0 %v3474, 104
    %v5473 = vpop.permute.xlu0 %5472
    %5474 = vrot.lane.b32.xlu0 %v3474, 72
    %v5475 = vpop.permute.xlu0 %5474
    %v5476 = vsel %vm283, %v5473, 0
    %v5478 = vsel %vm283, %v5475, 0
    %5480 = vmatprep.subr.mxu0 0.0
    %5481 = vmatpush1.xpose.msra.mxu0 0.0
    %5482 = vmatprep.subr.mxu0 0.0
    %5483 = vmatpush1.xpose.msra.mxu0 0.0
    %5484 = vmatprep.subr.mxu0 0.0
    %5485 = vmatpush1.xpose.msra.mxu0 0.0
    %5486 = vmatprep.subr.mxu0 0.0
    %5487 = vmatpush1.xpose.msra.mxu0 0.0
    %5488 = vmatprep.subr.mxu0 0.0
    %5489 = vmatpush1.xpose.msra.mxu0 0.0
    %5490 = vmatprep.subr.mxu0 0.0
    %5491 = vmatpush1.xpose.msra.mxu0 0.0
    %5492 = vmatprep.subr.mxu0 0.0
    %5493 = vmatpush1.xpose.msra.mxu0 0.0
    %5494 = vmatprep.subr.mxu0 0.0
    %5495 = vmatpush1.xpose.msra.mxu0 0.0
    %5496 = vmatprep.subr.mxu0 0.0
    %5497 = vmatpush1.xpose.msra.mxu0 0.0
    %5498 = vmatprep.subr.mxu0 0.0
    %5499 = vmatpush1.xpose.msra.mxu0 0.0
    %5500 = vmatprep.subr.mxu0 0.0
    %5501 = vmatpush1.xpose.msra.mxu0 0.0
    %5502 = vmatprep.subr.mxu0 0.0
    %5503 = vmatpush1.xpose.msra.mxu0 0.0
    %5504 = vmatprep.subr.mxu0 0.0
    %5505 = vmatpush1.xpose.msra.mxu0 0.0
    %5506 = vmatprep.subr.mxu0 0.0
    %5507 = vmatpush1.xpose.msra.mxu0 0.0
    %5508 = vmatprep.subr.mxu0 0.0
    %5509 = vmatpush1.xpose.msra.mxu0 0.0
    %5510 = vmatprep.subr.mxu0 0.0
    %5511 = vmatpush1.xpose.msra.mxu0 %v5478
    %5512 = vmatprep.subr.mxu0 0.0
    %5513 = vmatpush2.xpose.msra.mxu0 0.0
    %5514 = vmatprep.subr.mxu0 0.0
    %5515 = vmatpush2.xpose.msra.mxu0 0.0
    %5516 = vmatprep.subr.mxu0 0.0
    %5517 = vmatpush2.xpose.msra.mxu0 0.0
    %5518 = vmatprep.subr.mxu0 0.0
    %5519 = vmatpush2.xpose.msra.mxu0 0.0
    %5520 = vmatprep.subr.mxu0 0.0
    %5521 = vmatpush2.xpose.msra.mxu0 0.0
    %5522 = vmatprep.subr.mxu0 0.0
    %5523 = vmatpush2.xpose.msra.mxu0 0.0
    %5524 = vmatprep.subr.mxu0 0.0
    %5525 = vmatpush2.xpose.msra.mxu0 0.0
    %5526 = vmatprep.subr.mxu0 0.0
    %5527 = vmatpush2.xpose.msra.mxu0 0.0
    %5528 = vmatprep.subr.mxu0 0.0
    %5529 = vmatpush2.xpose.msra.mxu0 0.0
    %5530 = vmatprep.subr.mxu0 0.0
    %5531 = vmatpush2.xpose.msra.mxu0 0.0
    %5532 = vmatprep.subr.mxu0 0.0
    %5533 = vmatpush2.xpose.msra.mxu0 0.0
    %5534 = vmatprep.subr.mxu0 0.0
    %5535 = vmatpush2.xpose.msra.mxu0 0.0
    %5536 = vmatprep.subr.mxu0 0.0
    %5537 = vmatpush2.xpose.msra.mxu0 0.0
    %5538 = vmatprep.subr.mxu0 0.0
    %5539 = vmatpush2.xpose.msra.mxu0 0.0
    %5540 = vmatprep.subr.mxu0 0.0
    %5541 = vmatpush2.xpose.msra.mxu0 0.0
    %5542 = vmatprep.subr.mxu0 0.0
    %5543 = vmatpush2.xpose.msra.mxu0 0.0
    %5544 = vmatprep.mubr.f32.mxu0 0.0
    %5545 = vmatmul.mubr.f32.gmra.mxu0 %v5476
    %v5546 = vpop.f32.mrf.mxu0
    %v5547 = vadd.f32 0.0, %v5546
    %v5548 = vpop.f32.mrf.mxu0
    %5549 = vdwg.mxu0
    %5550 = vrot.lane.b32.xlu0 %v3479, 104
    %v5551 = vpop.permute.xlu0 %5550
    %5552 = vrot.lane.b32.xlu0 %v3479, 72
    %v5553 = vpop.permute.xlu0 %5552
    %v5554 = vsel %vm283, %v5551, 0
    %v5556 = vsel %vm283, %v5553, 0
    %5558 = vmatprep.subr.mxu0 0.0
    %5559 = vmatpush1.xpose.msra.mxu0 0.0
    %5560 = vmatprep.subr.mxu0 0.0
    %5561 = vmatpush1.xpose.msra.mxu0 0.0
    %5562 = vmatprep.subr.mxu0 0.0
    %5563 = vmatpush1.xpose.msra.mxu0 0.0
    %5564 = vmatprep.subr.mxu0 0.0
    %5565 = vmatpush1.xpose.msra.mxu0 0.0
    %5566 = vmatprep.subr.mxu0 0.0
    %5567 = vmatpush1.xpose.msra.mxu0 0.0
    %5568 = vmatprep.subr.mxu0 0.0
    %5569 = vmatpush1.xpose.msra.mxu0 0.0
    %5570 = vmatprep.subr.mxu0 0.0
    %5571 = vmatpush1.xpose.msra.mxu0 0.0
    %5572 = vmatprep.subr.mxu0 0.0
    %5573 = vmatpush1.xpose.msra.mxu0 0.0
    %5574 = vmatprep.subr.mxu0 0.0
    %5575 = vmatpush1.xpose.msra.mxu0 0.0
    %5576 = vmatprep.subr.mxu0 0.0
    %5577 = vmatpush1.xpose.msra.mxu0 0.0
    %5578 = vmatprep.subr.mxu0 0.0
    %5579 = vmatpush1.xpose.msra.mxu0 0.0
    %5580 = vmatprep.subr.mxu0 0.0
    %5581 = vmatpush1.xpose.msra.mxu0 0.0
    %5582 = vmatprep.subr.mxu0 0.0
    %5583 = vmatpush1.xpose.msra.mxu0 0.0
    %5584 = vmatprep.subr.mxu0 0.0
    %5585 = vmatpush1.xpose.msra.mxu0 0.0
    %5586 = vmatprep.subr.mxu0 0.0
    %5587 = vmatpush1.xpose.msra.mxu0 0.0
    %5588 = vmatprep.subr.mxu0 0.0
    %5589 = vmatpush1.xpose.msra.mxu0 %v5556
    %5590 = vmatprep.subr.mxu0 0.0
    %5591 = vmatpush2.xpose.msra.mxu0 0.0
    %5592 = vmatprep.subr.mxu0 0.0
    %5593 = vmatpush2.xpose.msra.mxu0 0.0
    %5594 = vmatprep.subr.mxu0 0.0
    %5595 = vmatpush2.xpose.msra.mxu0 0.0
    %5596 = vmatprep.subr.mxu0 0.0
    %5597 = vmatpush2.xpose.msra.mxu0 0.0
    %5598 = vmatprep.subr.mxu0 0.0
    %5599 = vmatpush2.xpose.msra.mxu0 0.0
    %5600 = vmatprep.subr.mxu0 0.0
    %5601 = vmatpush2.xpose.msra.mxu0 0.0
    %5602 = vmatprep.subr.mxu0 0.0
    %5603 = vmatpush2.xpose.msra.mxu0 0.0
    %5604 = vmatprep.subr.mxu0 0.0
    %5605 = vmatpush2.xpose.msra.mxu0 0.0
    %5606 = vmatprep.subr.mxu0 0.0
    %5607 = vmatpush2.xpose.msra.mxu0 0.0
    %5608 = vmatprep.subr.mxu0 0.0
    %5609 = vmatpush2.xpose.msra.mxu0 0.0
    %5610 = vmatprep.subr.mxu0 0.0
    %5611 = vmatpush2.xpose.msra.mxu0 0.0
    %5612 = vmatprep.subr.mxu0 0.0
    %5613 = vmatpush2.xpose.msra.mxu0 0.0
    %5614 = vmatprep.subr.mxu0 0.0
    %5615 = vmatpush2.xpose.msra.mxu0 0.0
    %5616 = vmatprep.subr.mxu0 0.0
    %5617 = vmatpush2.xpose.msra.mxu0 0.0
    %5618 = vmatprep.subr.mxu0 0.0
    %5619 = vmatpush2.xpose.msra.mxu0 0.0
    %5620 = vmatprep.subr.mxu0 0.0
    %5621 = vmatpush2.xpose.msra.mxu0 0.0
    %5622 = vmatprep.mubr.f32.mxu0 0.0
    %5623 = vmatmul.mubr.f32.gmra.mxu0 %v5554
    %v5624 = vpop.f32.mrf.mxu0
    %v5625 = vadd.f32 0.0, %v5624
    %v5626 = vpop.f32.mrf.mxu0
    %5627 = vdwg.mxu0
    %v5628 = vmul.f32 %v5547, 0.5
    %v5629 = vmul.f32 %v5625, 0.5
    %v5630 = vsel %vm437, %v5628, -inf
    %5631 = vmax.xlane.f32.xlu0 %v5630
    %v5632 = vpop.xlane.xlu0 %5631
    %v5633 = vsel %vm437, %v5629, -inf
    %5634 = vmax.xlane.f32.xlu0 %v5633
    %v5635 = vpop.xlane.xlu0 %5634
    %v5636 = vsub.f32 %v5628, %v5632
    %v5637 = vsub.f32 %v5629, %v5635
    %v5638 = vmul.f32 %v5636, 1.442695
    %v5639 = vpow.pop %v5638
    %v5640 = vmul.f32 %v5637, 1.442695
    %v5641 = vpow.pop %v5640
    %v5642 = vsel %vm437, %v5639, 0.0
    %5643 = vadd.xlane.f32.xlu0 %v5642
    %v5644 = vpop.xlane.xlu0 %5643
    %v5645 = vsel %vm437, %v5641, 0.0
    %5646 = vadd.xlane.f32.xlu0 %v5645
    %v5647 = vpop.xlane.xlu0 %5646
    %v5648 = vrcp.pop %v5644
    %v5649 = vrcp.pop %v5647
    %v5650 = vmul.f32 %v5639, %v5648
    %v5651 = vmul.f32 %v5641, %v5649
    %5652 = vrot.lane.b32.xlu0 %v3474, 40
    %v5653 = vpop.permute.xlu0 %5652
    %v5656 = vsel %vm437, %v5650, 0
    %5658 = vmatprep.subr.mxu0 0.0
    %5659 = vmatpush1.msra.mxu0 0.0
    %5660 = vmatprep.subr.mxu0 0.0
    %5661 = vmatpush1.msra.mxu0 0.0
    %5662 = vmatprep.subr.mxu0 0.0
    %5663 = vmatpush1.msra.mxu0 0.0
    %5664 = vmatprep.subr.mxu0 0.0
    %5665 = vmatpush1.msra.mxu0 0.0
    %5666 = vmatprep.subr.mxu0 0.0
    %5667 = vmatpush1.msra.mxu0 0.0
    %5668 = vmatprep.subr.mxu0 0.0
    %5669 = vmatpush1.msra.mxu0 0.0
    %5670 = vmatprep.subr.mxu0 0.0
    %5671 = vmatpush1.msra.mxu0 0.0
    %5672 = vmatprep.subr.mxu0 0.0
    %5673 = vmatpush1.msra.mxu0 0.0
    %5674 = vmatprep.subr.mxu0 0.0
    %5675 = vmatpush1.msra.mxu0 0.0
    %5676 = vmatprep.subr.mxu0 0.0
    %5677 = vmatpush1.msra.mxu0 0.0
    %5678 = vmatprep.subr.mxu0 0.0
    %5679 = vmatpush1.msra.mxu0 0.0
    %5680 = vmatprep.subr.mxu0 0.0
    %5681 = vmatpush1.msra.mxu0 0.0
    %5682 = vmatprep.subr.mxu0 0.0
    %5683 = vmatpush1.msra.mxu0 0.0
    %5684 = vmatprep.subr.mxu0 0.0
    %5685 = vmatpush1.msra.mxu0 0.0
    %5686 = vmatprep.subr.mxu0 0.0
    %5687 = vmatpush1.msra.mxu0 0.0
    %5688 = vmatprep.subr.mxu0 0.0
    %5689 = vmatpush1.msra.mxu0 %v5653
    %5690 = vmatprep.subr.mxu0 0.0
    %5691 = vmatpush2.msra.mxu0 0.0
    %5692 = vmatprep.subr.mxu0 0.0
    %5693 = vmatpush2.msra.mxu0 0.0
    %5694 = vmatprep.subr.mxu0 0.0
    %5695 = vmatpush2.msra.mxu0 0.0
    %5696 = vmatprep.subr.mxu0 0.0
    %5697 = vmatpush2.msra.mxu0 0.0
    %5698 = vmatprep.subr.mxu0 0.0
    %5699 = vmatpush2.msra.mxu0 0.0
    %5700 = vmatprep.subr.mxu0 0.0
    %5701 = vmatpush2.msra.mxu0 0.0
    %5702 = vmatprep.subr.mxu0 0.0
    %5703 = vmatpush2.msra.mxu0 0.0
    %5704 = vmatprep.subr.mxu0 0.0
    %5705 = vmatpush2.msra.mxu0 0.0
    %5706 = vmatprep.subr.mxu0 0.0
    %5707 = vmatpush2.msra.mxu0 0.0
    %5708 = vmatprep.subr.mxu0 0.0
    %5709 = vmatpush2.msra.mxu0 0.0
    %5710 = vmatprep.subr.mxu0 0.0
    %5711 = vmatpush2.msra.mxu0 0.0
    %5712 = vmatprep.subr.mxu0 0.0
    %5713 = vmatpush2.msra.mxu0 0.0
    %5714 = vmatprep.subr.mxu0 0.0
    %5715 = vmatpush2.msra.mxu0 0.0
    %5716 = vmatprep.subr.mxu0 0.0
    %5717 = vmatpush2.msra.mxu0 0.0
    %5718 = vmatprep.subr.mxu0 0.0
    %5719 = vmatpush2.msra.mxu0 0.0
    %5720 = vmatprep.subr.mxu0 0.0
    %5721 = vmatpush2.msra.mxu0 0.0
    %5722 = vmatprep.mubr.f32.mxu0 0.0
    %5723 = vmatmul.mubr.f32.gmra.mxu0 %v5656
    %v5724 = vpop.f32.mrf.mxu0
    %v5725 = vadd.f32 0.0, %v5724
    %v5726 = vpop.f32.mrf.mxu0
    %5727 = vdwg.mxu0
    %5728 = vrot.lane.b32.xlu0 %v3479, 40
    %v5729 = vpop.permute.xlu0 %5728
    %v5732 = vsel %vm437, %v5651, 0
    %5734 = vmatprep.subr.mxu0 0.0
    %5735 = vmatpush1.msra.mxu0 0.0
    %5736 = vmatprep.subr.mxu0 0.0
    %5737 = vmatpush1.msra.mxu0 0.0
    %5738 = vmatprep.subr.mxu0 0.0
    %5739 = vmatpush1.msra.mxu0 0.0
    %5740 = vmatprep.subr.mxu0 0.0
    %5741 = vmatpush1.msra.mxu0 0.0
    %5742 = vmatprep.subr.mxu0 0.0
    %5743 = vmatpush1.msra.mxu0 0.0
    %5744 = vmatprep.subr.mxu0 0.0
    %5745 = vmatpush1.msra.mxu0 0.0
    %5746 = vmatprep.subr.mxu0 0.0
    %5747 = vmatpush1.msra.mxu0 0.0
    %5748 = vmatprep.subr.mxu0 0.0
    %5749 = vmatpush1.msra.mxu0 0.0
    %5750 = vmatprep.subr.mxu0 0.0
    %5751 = vmatpush1.msra.mxu0 0.0
    %5752 = vmatprep.subr.mxu0 0.0
    %5753 = vmatpush1.msra.mxu0 0.0
    %5754 = vmatprep.subr.mxu0 0.0
    %5755 = vmatpush1.msra.mxu0 0.0
    %5756 = vmatprep.subr.mxu0 0.0
    %5757 = vmatpush1.msra.mxu0 0.0
    %5758 = vmatprep.subr.mxu0 0.0
    %5759 = vmatpush1.msra.mxu0 0.0
    %5760 = vmatprep.subr.mxu0 0.0
    %5761 = vmatpush1.msra.mxu0 0.0
    %5762 = vmatprep.subr.mxu0 0.0
    %5763 = vmatpush1.msra.mxu0 0.0
    %5764 = vmatprep.subr.mxu0 0.0
    %5765 = vmatpush1.msra.mxu0 %v5729
    %5766 = vmatprep.subr.mxu0 0.0
    %5767 = vmatpush2.msra.mxu0 0.0
    %5768 = vmatprep.subr.mxu0 0.0
    %5769 = vmatpush2.msra.mxu0 0.0
    %5770 = vmatprep.subr.mxu0 0.0
    %5771 = vmatpush2.msra.mxu0 0.0
    %5772 = vmatprep.subr.mxu0 0.0
    %5773 = vmatpush2.msra.mxu0 0.0
    %5774 = vmatprep.subr.mxu0 0.0
    %5775 = vmatpush2.msra.mxu0 0.0
    %5776 = vmatprep.subr.mxu0 0.0
    %5777 = vmatpush2.msra.mxu0 0.0
    %5778 = vmatprep.subr.mxu0 0.0
    %5779 = vmatpush2.msra.mxu0 0.0
    %5780 = vmatprep.subr.mxu0 0.0
    %5781 = vmatpush2.msra.mxu0 0.0
    %5782 = vmatprep.subr.mxu0 0.0
    %5783 = vmatpush2.msra.mxu0 0.0
    %5784 = vmatprep.subr.mxu0 0.0
    %5785 = vmatpush2.msra.mxu0 0.0
    %5786 = vmatprep.subr.mxu0 0.0
    %5787 = vmatpush2.msra.mxu0 0.0
    %5788 = vmatprep.subr.mxu0 0.0
    %5789 = vmatpush2.msra.mxu0 0.0
    %5790 = vmatprep.subr.mxu0 0.0
    %5791 = vmatpush2.msra.mxu0 0.0
    %5792 = vmatprep.subr.mxu0 0.0
    %5793 = vmatpush2.msra.mxu0 0.0
    %5794 = vmatprep.subr.mxu0 0.0
    %5795 = vmatpush2.msra.mxu0 0.0
    %5796 = vmatprep.subr.mxu0 0.0
    %5797 = vmatpush2.msra.mxu0 0.0
    %5798 = vmatprep.mubr.f32.mxu0 0.0
    %5799 = vmatmul.mubr.f32.gmra.mxu0 %v5732
    %v5800 = vpop.f32.mrf.mxu0
    %v5801 = vadd.f32 0.0, %v5800
    %v5802 = vpop.f32.mrf.mxu0
    %5803 = vdwg.mxu0
    %5804 = vrot.lane.b32.xlu0 %v3474, 100
    %v5805 = vpop.permute.xlu0 %5804
    %5806 = vrot.lane.b32.xlu0 %v3474, 68
    %v5807 = vpop.permute.xlu0 %5806
    %v5808 = vsel %vm283, %v5805, 0
    %v5810 = vsel %vm283, %v5807, 0
    %5812 = vmatprep.subr.mxu0 0.0
    %5813 = vmatpush1.xpose.msra.mxu0 0.0
    %5814 = vmatprep.subr.mxu0 0.0
    %5815 = vmatpush1.xpose.msra.mxu0 0.0
    %5816 = vmatprep.subr.mxu0 0.0
    %5817 = vmatpush1.xpose.msra.mxu0 0.0
    %5818 = vmatprep.subr.mxu0 0.0
    %5819 = vmatpush1.xpose.msra.mxu0 0.0
    %5820 = vmatprep.subr.mxu0 0.0
    %5821 = vmatpush1.xpose.msra.mxu0 0.0
    %5822 = vmatprep.subr.mxu0 0.0
    %5823 = vmatpush1.xpose.msra.mxu0 0.0
    %5824 = vmatprep.subr.mxu0 0.0
    %5825 = vmatpush1.xpose.msra.mxu0 0.0
    %5826 = vmatprep.subr.mxu0 0.0
    %5827 = vmatpush1.xpose.msra.mxu0 0.0
    %5828 = vmatprep.subr.mxu0 0.0
    %5829 = vmatpush1.xpose.msra.mxu0 0.0
    %5830 = vmatprep.subr.mxu0 0.0
    %5831 = vmatpush1.xpose.msra.mxu0 0.0
    %5832 = vmatprep.subr.mxu0 0.0
    %5833 = vmatpush1.xpose.msra.mxu0 0.0
    %5834 = vmatprep.subr.mxu0 0.0
    %5835 = vmatpush1.xpose.msra.mxu0 0.0
    %5836 = vmatprep.subr.mxu0 0.0
    %5837 = vmatpush1.xpose.msra.mxu0 0.0
    %5838 = vmatprep.subr.mxu0 0.0
    %5839 = vmatpush1.xpose.msra.mxu0 0.0
    %5840 = vmatprep.subr.mxu0 0.0
    %5841 = vmatpush1.xpose.msra.mxu0 0.0
    %5842 = vmatprep.subr.mxu0 0.0
    %5843 = vmatpush1.xpose.msra.mxu0 %v5810
    %5844 = vmatprep.subr.mxu0 0.0
    %5845 = vmatpush2.xpose.msra.mxu0 0.0
    %5846 = vmatprep.subr.mxu0 0.0
    %5847 = vmatpush2.xpose.msra.mxu0 0.0
    %5848 = vmatprep.subr.mxu0 0.0
    %5849 = vmatpush2.xpose.msra.mxu0 0.0
    %5850 = vmatprep.subr.mxu0 0.0
    %5851 = vmatpush2.xpose.msra.mxu0 0.0
    %5852 = vmatprep.subr.mxu0 0.0
    %5853 = vmatpush2.xpose.msra.mxu0 0.0
    %5854 = vmatprep.subr.mxu0 0.0
    %5855 = vmatpush2.xpose.msra.mxu0 0.0
    %5856 = vmatprep.subr.mxu0 0.0
    %5857 = vmatpush2.xpose.msra.mxu0 0.0
    %5858 = vmatprep.subr.mxu0 0.0
    %5859 = vmatpush2.xpose.msra.mxu0 0.0
    %5860 = vmatprep.subr.mxu0 0.0
    %5861 = vmatpush2.xpose.msra.mxu0 0.0
    %5862 = vmatprep.subr.mxu0 0.0
    %5863 = vmatpush2.xpose.msra.mxu0 0.0
    %5864 = vmatprep.subr.mxu0 0.0
    %5865 = vmatpush2.xpose.msra.mxu0 0.0
    %5866 = vmatprep.subr.mxu0 0.0
    %5867 = vmatpush2.xpose.msra.mxu0 0.0
    %5868 = vmatprep.subr.mxu0 0.0
    %5869 = vmatpush2.xpose.msra.mxu0 0.0
    %5870 = vmatprep.subr.mxu0 0.0
    %5871 = vmatpush2.xpose.msra.mxu0 0.0
    %5872 = vmatprep.subr.mxu0 0.0
    %5873 = vmatpush2.xpose.msra.mxu0 0.0
    %5874 = vmatprep.subr.mxu0 0.0
    %5875 = vmatpush2.xpose.msra.mxu0 0.0
    %5876 = vmatprep.mubr.f32.mxu0 0.0
    %5877 = vmatmul.mubr.f32.gmra.mxu0 %v5808
    %v5878 = vpop.f32.mrf.mxu0
    %v5879 = vadd.f32 0.0, %v5878
    %v5880 = vpop.f32.mrf.mxu0
    %5881 = vdwg.mxu0
    %5882 = vrot.lane.b32.xlu0 %v3479, 100
    %v5883 = vpop.permute.xlu0 %5882
    %5884 = vrot.lane.b32.xlu0 %v3479, 68
    %v5885 = vpop.permute.xlu0 %5884
    %v5886 = vsel %vm283, %v5883, 0
    %v5888 = vsel %vm283, %v5885, 0
    %5890 = vmatprep.subr.mxu0 0.0
    %5891 = vmatpush1.xpose.msra.mxu0 0.0
    %5892 = vmatprep.subr.mxu0 0.0
    %5893 = vmatpush1.xpose.msra.mxu0 0.0
    %5894 = vmatprep.subr.mxu0 0.0
    %5895 = vmatpush1.xpose.msra.mxu0 0.0
    %5896 = vmatprep.subr.mxu0 0.0
    %5897 = vmatpush1.xpose.msra.mxu0 0.0
    %5898 = vmatprep.subr.mxu0 0.0
    %5899 = vmatpush1.xpose.msra.mxu0 0.0
    %5900 = vmatprep.subr.mxu0 0.0
    %5901 = vmatpush1.xpose.msra.mxu0 0.0
    %5902 = vmatprep.subr.mxu0 0.0
    %5903 = vmatpush1.xpose.msra.mxu0 0.0
    %5904 = vmatprep.subr.mxu0 0.0
    %5905 = vmatpush1.xpose.msra.mxu0 0.0
    %5906 = vmatprep.subr.mxu0 0.0
    %5907 = vmatpush1.xpose.msra.mxu0 0.0
    %5908 = vmatprep.subr.mxu0 0.0
    %5909 = vmatpush1.xpose.msra.mxu0 0.0
    %5910 = vmatprep.subr.mxu0 0.0
    %5911 = vmatpush1.xpose.msra.mxu0 0.0
    %5912 = vmatprep.subr.mxu0 0.0
    %5913 = vmatpush1.xpose.msra.mxu0 0.0
    %5914 = vmatprep.subr.mxu0 0.0
    %5915 = vmatpush1.xpose.msra.mxu0 0.0
    %5916 = vmatprep.subr.mxu0 0.0
    %5917 = vmatpush1.xpose.msra.mxu0 0.0
    %5918 = vmatprep.subr.mxu0 0.0
    %5919 = vmatpush1.xpose.msra.mxu0 0.0
    %5920 = vmatprep.subr.mxu0 0.0
    %5921 = vmatpush1.xpose.msra.mxu0 %v5888
    %5922 = vmatprep.subr.mxu0 0.0
    %5923 = vmatpush2.xpose.msra.mxu0 0.0
    %5924 = vmatprep.subr.mxu0 0.0
    %5925 = vmatpush2.xpose.msra.mxu0 0.0
    %5926 = vmatprep.subr.mxu0 0.0
    %5927 = vmatpush2.xpose.msra.mxu0 0.0
    %5928 = vmatprep.subr.mxu0 0.0
    %5929 = vmatpush2.xpose.msra.mxu0 0.0
    %5930 = vmatprep.subr.mxu0 0.0
    %5931 = vmatpush2.xpose.msra.mxu0 0.0
    %5932 = vmatprep.subr.mxu0 0.0
    %5933 = vmatpush2.xpose.msra.mxu0 0.0
    %5934 = vmatprep.subr.mxu0 0.0
    %5935 = vmatpush2.xpose.msra.mxu0 0.0
    %5936 = vmatprep.subr.mxu0 0.0
    %5937 = vmatpush2.xpose.msra.mxu0 0.0
    %5938 = vmatprep.subr.mxu0 0.0
    %5939 = vmatpush2.xpose.msra.mxu0 0.0
    %5940 = vmatprep.subr.mxu0 0.0
    %5941 = vmatpush2.xpose.msra.mxu0 0.0
    %5942 = vmatprep.subr.mxu0 0.0
    %5943 = vmatpush2.xpose.msra.mxu0 0.0
    %5944 = vmatprep.subr.mxu0 0.0
    %5945 = vmatpush2.xpose.msra.mxu0 0.0
    %5946 = vmatprep.subr.mxu0 0.0
    %5947 = vmatpush2.xpose.msra.mxu0 0.0
    %5948 = vmatprep.subr.mxu0 0.0
    %5949 = vmatpush2.xpose.msra.mxu0 0.0
    %5950 = vmatprep.subr.mxu0 0.0
    %5951 = vmatpush2.xpose.msra.mxu0 0.0
    %5952 = vmatprep.subr.mxu0 0.0
    %5953 = vmatpush2.xpose.msra.mxu0 0.0
    %5954 = vmatprep.mubr.f32.mxu0 0.0
    %5955 = vmatmul.mubr.f32.gmra.mxu0 %v5886
    %v5956 = vpop.f32.mrf.mxu0
    %v5957 = vadd.f32 0.0, %v5956
    %v5958 = vpop.f32.mrf.mxu0
    %5959 = vdwg.mxu0
    %v5960 = vmul.f32 %v5879, 0.5
    %v5961 = vmul.f32 %v5957, 0.5
    %v5962 = vsel %vm437, %v5960, -inf
    %5963 = vmax.xlane.f32.xlu0 %v5962
    %v5964 = vpop.xlane.xlu0 %5963
    %v5965 = vsel %vm437, %v5961, -inf
    %5966 = vmax.xlane.f32.xlu0 %v5965
    %v5967 = vpop.xlane.xlu0 %5966
    %v5968 = vsub.f32 %v5960, %v5964
    %v5969 = vsub.f32 %v5961, %v5967
    %v5970 = vmul.f32 %v5968, 1.442695
    %v5971 = vpow.pop %v5970
    %v5972 = vmul.f32 %v5969, 1.442695
    %v5973 = vpow.pop %v5972
    %v5974 = vsel %vm437, %v5971, 0.0
    %5975 = vadd.xlane.f32.xlu0 %v5974
    %v5976 = vpop.xlane.xlu0 %5975
    %v5977 = vsel %vm437, %v5973, 0.0
    %5978 = vadd.xlane.f32.xlu0 %v5977
    %v5979 = vpop.xlane.xlu0 %5978
    %v5980 = vrcp.pop %v5976
    %v5981 = vrcp.pop %v5979
    %v5982 = vmul.f32 %v5971, %v5980
    %v5983 = vmul.f32 %v5973, %v5981
    %5984 = vrot.lane.b32.xlu0 %v3474, 36
    %v5985 = vpop.permute.xlu0 %5984
    %v5988 = vsel %vm437, %v5982, 0
    %5990 = vmatprep.subr.mxu0 0.0
    %5991 = vmatpush1.msra.mxu0 0.0
    %5992 = vmatprep.subr.mxu0 0.0
    %5993 = vmatpush1.msra.mxu0 0.0
    %5994 = vmatprep.subr.mxu0 0.0
    %5995 = vmatpush1.msra.mxu0 0.0
    %5996 = vmatprep.subr.mxu0 0.0
    %5997 = vmatpush1.msra.mxu0 0.0
    %5998 = vmatprep.subr.mxu0 0.0
    %5999 = vmatpush1.msra.mxu0 0.0
    %6000 = vmatprep.subr.mxu0 0.0
    %6001 = vmatpush1.msra.mxu0 0.0
    %6002 = vmatprep.subr.mxu0 0.0
    %6003 = vmatpush1.msra.mxu0 0.0
    %6004 = vmatprep.subr.mxu0 0.0
    %6005 = vmatpush1.msra.mxu0 0.0
    %6006 = vmatprep.subr.mxu0 0.0
    %6007 = vmatpush1.msra.mxu0 0.0
    %6008 = vmatprep.subr.mxu0 0.0
    %6009 = vmatpush1.msra.mxu0 0.0
    %6010 = vmatprep.subr.mxu0 0.0
    %6011 = vmatpush1.msra.mxu0 0.0
    %6012 = vmatprep.subr.mxu0 0.0
    %6013 = vmatpush1.msra.mxu0 0.0
    %6014 = vmatprep.subr.mxu0 0.0
    %6015 = vmatpush1.msra.mxu0 0.0
    %6016 = vmatprep.subr.mxu0 0.0
    %6017 = vmatpush1.msra.mxu0 0.0
    %6018 = vmatprep.subr.mxu0 0.0
    %6019 = vmatpush1.msra.mxu0 0.0
    %6020 = vmatprep.subr.mxu0 0.0
    %6021 = vmatpush1.msra.mxu0 %v5985
    %6022 = vmatprep.subr.mxu0 0.0
    %6023 = vmatpush2.msra.mxu0 0.0
    %6024 = vmatprep.subr.mxu0 0.0
    %6025 = vmatpush2.msra.mxu0 0.0
    %6026 = vmatprep.subr.mxu0 0.0
    %6027 = vmatpush2.msra.mxu0 0.0
    %6028 = vmatprep.subr.mxu0 0.0
    %6029 = vmatpush2.msra.mxu0 0.0
    %6030 = vmatprep.subr.mxu0 0.0
    %6031 = vmatpush2.msra.mxu0 0.0
    %6032 = vmatprep.subr.mxu0 0.0
    %6033 = vmatpush2.msra.mxu0 0.0
    %6034 = vmatprep.subr.mxu0 0.0
    %6035 = vmatpush2.msra.mxu0 0.0
    %6036 = vmatprep.subr.mxu0 0.0
    %6037 = vmatpush2.msra.mxu0 0.0
    %6038 = vmatprep.subr.mxu0 0.0
    %6039 = vmatpush2.msra.mxu0 0.0
    %6040 = vmatprep.subr.mxu0 0.0
    %6041 = vmatpush2.msra.mxu0 0.0
    %6042 = vmatprep.subr.mxu0 0.0
    %6043 = vmatpush2.msra.mxu0 0.0
    %6044 = vmatprep.subr.mxu0 0.0
    %6045 = vmatpush2.msra.mxu0 0.0
    %6046 = vmatprep.subr.mxu0 0.0
    %6047 = vmatpush2.msra.mxu0 0.0
    %6048 = vmatprep.subr.mxu0 0.0
    %6049 = vmatpush2.msra.mxu0 0.0
    %6050 = vmatprep.subr.mxu0 0.0
    %6051 = vmatpush2.msra.mxu0 0.0
    %6052 = vmatprep.subr.mxu0 0.0
    %6053 = vmatpush2.msra.mxu0 0.0
    %6054 = vmatprep.mubr.f32.mxu0 0.0
    %6055 = vmatmul.mubr.f32.gmra.mxu0 %v5988
    %v6056 = vpop.f32.mrf.mxu0
    %v6057 = vadd.f32 0.0, %v6056
    %v6058 = vpop.f32.mrf.mxu0
    %6059 = vdwg.mxu0
    %6060 = vrot.lane.b32.xlu0 %v3479, 36
    %v6061 = vpop.permute.xlu0 %6060
    %v6064 = vsel %vm437, %v5983, 0
    %6066 = vmatprep.subr.mxu0 0.0
    %6067 = vmatpush1.msra.mxu0 0.0
    %6068 = vmatprep.subr.mxu0 0.0
    %6069 = vmatpush1.msra.mxu0 0.0
    %6070 = vmatprep.subr.mxu0 0.0
    %6071 = vmatpush1.msra.mxu0 0.0
    %6072 = vmatprep.subr.mxu0 0.0
    %6073 = vmatpush1.msra.mxu0 0.0
    %6074 = vmatprep.subr.mxu0 0.0
    %6075 = vmatpush1.msra.mxu0 0.0
    %6076 = vmatprep.subr.mxu0 0.0
    %6077 = vmatpush1.msra.mxu0 0.0
    %6078 = vmatprep.subr.mxu0 0.0
    %6079 = vmatpush1.msra.mxu0 0.0
    %6080 = vmatprep.subr.mxu0 0.0
    %6081 = vmatpush1.msra.mxu0 0.0
    %6082 = vmatprep.subr.mxu0 0.0
    %6083 = vmatpush1.msra.mxu0 0.0
    %6084 = vmatprep.subr.mxu0 0.0
    %6085 = vmatpush1.msra.mxu0 0.0
    %6086 = vmatprep.subr.mxu0 0.0
    %6087 = vmatpush1.msra.mxu0 0.0
    %6088 = vmatprep.subr.mxu0 0.0
    %6089 = vmatpush1.msra.mxu0 0.0
    %6090 = vmatprep.subr.mxu0 0.0
    %6091 = vmatpush1.msra.mxu0 0.0
    %6092 = vmatprep.subr.mxu0 0.0
    %6093 = vmatpush1.msra.mxu0 0.0
    %6094 = vmatprep.subr.mxu0 0.0
    %6095 = vmatpush1.msra.mxu0 0.0
    %6096 = vmatprep.subr.mxu0 0.0
    %6097 = vmatpush1.msra.mxu0 %v6061
    %6098 = vmatprep.subr.mxu0 0.0
    %6099 = vmatpush2.msra.mxu0 0.0
    %6100 = vmatprep.subr.mxu0 0.0
    %6101 = vmatpush2.msra.mxu0 0.0
    %6102 = vmatprep.subr.mxu0 0.0
    %6103 = vmatpush2.msra.mxu0 0.0
    %6104 = vmatprep.subr.mxu0 0.0
    %6105 = vmatpush2.msra.mxu0 0.0
    %6106 = vmatprep.subr.mxu0 0.0
    %6107 = vmatpush2.msra.mxu0 0.0
    %6108 = vmatprep.subr.mxu0 0.0
    %6109 = vmatpush2.msra.mxu0 0.0
    %6110 = vmatprep.subr.mxu0 0.0
    %6111 = vmatpush2.msra.mxu0 0.0
    %6112 = vmatprep.subr.mxu0 0.0
    %6113 = vmatpush2.msra.mxu0 0.0
    %6114 = vmatprep.subr.mxu0 0.0
    %6115 = vmatpush2.msra.mxu0 0.0
    %6116 = vmatprep.subr.mxu0 0.0
    %6117 = vmatpush2.msra.mxu0 0.0
    %6118 = vmatprep.subr.mxu0 0.0
    %6119 = vmatpush2.msra.mxu0 0.0
    %6120 = vmatprep.subr.mxu0 0.0
    %6121 = vmatpush2.msra.mxu0 0.0
    %6122 = vmatprep.subr.mxu0 0.0
    %6123 = vmatpush2.msra.mxu0 0.0
    %6124 = vmatprep.subr.mxu0 0.0
    %6125 = vmatpush2.msra.mxu0 0.0
    %6126 = vmatprep.subr.mxu0 0.0
    %6127 = vmatpush2.msra.mxu0 0.0
    %6128 = vmatprep.subr.mxu0 0.0
    %6129 = vmatpush2.msra.mxu0 0.0
    %6130 = vmatprep.mubr.f32.mxu0 0.0
    %6131 = vmatmul.mubr.f32.gmra.mxu0 %v6064
    %v6132 = vpop.f32.mrf.mxu0
    %v6133 = vadd.f32 0.0, %v6132
    %v6134 = vpop.f32.mrf.mxu0
    %6135 = vdwg.mxu0
    %6138 = vrot.lane.b32.xlu0 %v4065, 4
    %v6139 = vpop.permute.xlu0 %6138
    %6140 = vrot.lane.b32.xlu0 %v4141, 4
    %v6141 = vpop.permute.xlu0 %6140
    %6146 = vrot.lane.b32.xlu0 %v4397, 8
    %v6147 = vpop.permute.xlu0 %6146
    %6148 = vrot.lane.b32.xlu0 %v4473, 8
    %v6149 = vpop.permute.xlu0 %6148
    %6154 = vrot.lane.b32.xlu0 %v4729, 12
    %v6155 = vpop.permute.xlu0 %6154
    %6156 = vrot.lane.b32.xlu0 %v4805, 12
    %v6157 = vpop.permute.xlu0 %6156
    %6162 = vrot.lane.b32.xlu0 %v5061, 16
    %v6163 = vpop.permute.xlu0 %6162
    %6164 = vrot.lane.b32.xlu0 %v5137, 16
    %v6165 = vpop.permute.xlu0 %6164
    %6170 = vrot.lane.b32.xlu0 %v5393, 20
    %v6171 = vpop.permute.xlu0 %6170
    %6172 = vrot.lane.b32.xlu0 %v5469, 20
    %v6173 = vpop.permute.xlu0 %6172
    %6178 = vrot.lane.b32.xlu0 %v5725, 24
    %v6179 = vpop.permute.xlu0 %6178
    %6180 = vrot.lane.b32.xlu0 %v5801, 24
    %v6181 = vpop.permute.xlu0 %6180
    %6186 = vrot.lane.b32.xlu0 %v6057, 28
    %v6187 = vpop.permute.xlu0 %6186
    %6188 = vrot.lane.b32.xlu0 %v6133, 28
    %v6189 = vpop.permute.xlu0 %6188
    %v6192 = vsel %vm283, %v3733, %v6139
    %v6193 = vsel %vm283, %v3809, %v6141
    %v6194 = vsel %vm437, %v6192, %v6147
    %v6195 = vsel %vm437, %v6193, %v6149
    %v6196 = vsel %vm2996, %v6194, %v6155
    %v6197 = vsel %vm2996, %v6195, %v6157
    %v6198 = vsel %vm2999, %v6196, %v6163
    %v6199 = vsel %vm2999, %v6197, %v6165
    %v6200 = vsel %vm3002, %v6198, %v6171
    %v6201 = vsel %vm3002, %v6199, %v6173
    %v6202 = vsel %vm3005, %v6200, %v6179
    %v6203 = vsel %vm3005, %v6201, %v6181
    %v6204 = vsel %vm3008, %v6202, %v6187
    %v6205 = vsel %vm3008, %v6203, %v6189
    %s6206 = scalar_lea.vmem %s5, 32
    %v6207 = vld [vmem:[%s6206] sm:$0xff]
    %v6208 = vld [vmem:[%s6206 + $0x8] sm:$0xff]
    %v6209 = vld [vmem:[%s6206 + $0x10] sm:$0xff]
    %v6210 = vld [vmem:[%s6206 + $0x18] sm:$0xff]
    %s6211 = scalar_lea.vmem %s6, 1
    %v6212 = vld [vmem:[%s6211] sm:$0x1]
    %v6214 = vlaneseq
    %v6215 = vshrl.u32 %v6214, 7
    %v6216 = vsub.s32 0, %v6215
    %v6217 = vrot.slane %v6212, %v6216
    %v6220 = vsel %vm198, %v6204, 0
    %v6223 = vsel %vm198, %v6205, 0
    %6225 = vmatprep.subr.mxu0 0.0
    %6226 = vmatpush1.msra.mxu0 0.0
    %6227 = vmatprep.subr.mxu0 0.0
    %6228 = vmatpush1.msra.mxu0 0.0
    %6229 = vmatprep.subr.mxu0 0.0
    %6230 = vmatpush1.msra.mxu0 0.0
    %6231 = vmatprep.subr.mxu0 0.0
    %6232 = vmatpush1.msra.mxu0 0.0
    %6233 = vmatprep.subr.mxu0 0.0
    %6234 = vmatpush1.msra.mxu0 0.0
    %6235 = vmatprep.subr.mxu0 0.0
    %6236 = vmatpush1.msra.mxu0 0.0
    %6237 = vmatprep.subr.mxu0 0.0
    %6238 = vmatpush1.msra.mxu0 0.0
    %6239 = vmatprep.subr.mxu0 0.0
    %6240 = vmatpush1.msra.mxu0 0.0
    %6241 = vmatprep.subr.mxu0 0.0
    %6242 = vmatpush1.msra.mxu0 0.0
    %6243 = vmatprep.subr.mxu0 0.0
    %6244 = vmatpush1.msra.mxu0 0.0
    %6245 = vmatprep.subr.mxu0 0.0
    %6246 = vmatpush1.msra.mxu0 0.0
    %6247 = vmatprep.subr.mxu0 0.0
    %6248 = vmatpush1.msra.mxu0 0.0
    %6249 = vmatprep.subr.mxu0 0.0
    %6250 = vmatpush1.msra.mxu0 %v6210
    %6251 = vmatprep.subr.mxu0 0.0
    %6252 = vmatpush1.msra.mxu0 %v6209
    %6253 = vmatprep.subr.mxu0 0.0
    %6254 = vmatpush1.msra.mxu0 %v6208
    %6255 = vmatprep.subr.mxu0 0.0
    %6256 = vmatpush1.msra.mxu0 %v6207
    %6257 = vmatprep.subr.mxu0 0.0
    %6258 = vmatpush2.msra.mxu0 0.0
    %6259 = vmatprep.subr.mxu0 0.0
    %6260 = vmatpush2.msra.mxu0 0.0
    %6261 = vmatprep.subr.mxu0 0.0
    %6262 = vmatpush2.msra.mxu0 0.0
    %6263 = vmatprep.subr.mxu0 0.0
    %6264 = vmatpush2.msra.mxu0 0.0
    %6265 = vmatprep.subr.mxu0 0.0
    %6266 = vmatpush2.msra.mxu0 0.0
    %6267 = vmatprep.subr.mxu0 0.0
    %6268 = vmatpush2.msra.mxu0 0.0
    %6269 = vmatprep.subr.mxu0 0.0
    %6270 = vmatpush2.msra.mxu0 0.0
    %6271 = vmatprep.subr.mxu0 0.0
    %6272 = vmatpush2.msra.mxu0 0.0
    %6273 = vmatprep.subr.mxu0 0.0
    %6274 = vmatpush2.msra.mxu0 0.0
    %6275 = vmatprep.subr.mxu0 0.0
    %6276 = vmatpush2.msra.mxu0 0.0
    %6277 = vmatprep.subr.mxu0 0.0
    %6278 = vmatpush2.msra.mxu0 0.0
    %6279 = vmatprep.subr.mxu0 0.0
    %6280 = vmatpush2.msra.mxu0 0.0
    %6281 = vmatprep.subr.mxu0 0.0
    %6282 = vmatpush2.msra.mxu0 0.0
    %6283 = vmatprep.subr.mxu0 0.0
    %6284 = vmatpush2.msra.mxu0 0.0
    %6285 = vmatprep.subr.mxu0 0.0
    %6286 = vmatpush2.msra.mxu0 0.0
    %6287 = vmatprep.subr.mxu0 0.0
    %6288 = vmatpush2.msra.mxu0 0.0
    %6289 = vmatprep.mubr.f32.mxu0 0.0
    %6290 = vmatmul.mubr.f32.gmra.mxu0 %v6220
    %v6291 = vpop.f32.mrf.mxu0
    %v6292 = vadd.f32 %v6217, %v6291
    %v6293 = vpop.f32.mrf.mxu0
    %6294 = vmatprep.mubr.f32.mxu0 0.0
    %6295 = vmatmul.mubr.f32.gmra.mxu0 %v6223
    %v6296 = vpop.f32.mrf.mxu0
    %v6297 = vadd.f32 %v6217, %v6296
    %v6298 = vpop.f32.mrf.mxu0
    %6299 = vdwg.mxu0
    %v6300 = vadd.f32 %v3386, %v6292
    %v6301 = vadd.f32 %v3387, %v6297
    %s6302 = scalar_lea.vmem %s7, 1
    %v6303 = vld [vmem:[%s6302] sm:$0x1]
    %s6304 = scalar_lea.vmem %s8, 1
    %v6305 = vld [vmem:[%s6304] sm:$0x1]
    %v6306 = vsel %vm198, %v6300, 0.0
    %6307 = vadd.xlane.f32.xlu0 %v6306
    %v6308 = vpop.xlane.xlu0 %6307
    %v6309 = vsel %vm198, %v6301, 0.0
    %6310 = vadd.xlane.f32.xlu0 %v6309
    %v6311 = vpop.xlane.xlu0 %6310
    %v6312 = vmul.f32 %v6308, %v3113
    %v6313 = vmul.f32 %v6311, %v3113
    %v6314 = vsub.f32 %v6300, %v6312
    %v6315 = vsub.f32 %v6301, %v6313
    %v6316 = vmul.f32 %v6314, %v6314
    %v6317 = vmul.f32 %v6315, %v6315
    %v6318 = vsel %vm198, %v6316, 0.0
    %6319 = vadd.xlane.f32.xlu0 %v6318
    %v6320 = vpop.xlane.xlu0 %6319
    %v6321 = vsel %vm198, %v6317, 0.0
    %6322 = vadd.xlane.f32.xlu0 %v6321
    %v6323 = vpop.xlane.xlu0 %6322
    %v6324 = vmul.f32 %v6320, %v3113
    %v6325 = vmul.f32 %v6323, %v3113
    %v6326 = vadd.f32 %v6324, 1e-05
    %v6327 = vadd.f32 %v6325, 1e-05
    %v6328 = vrsqrt.pop %v6326
    %v6329 = vrsqrt.pop %v6327
    %v6330 = vmul.f32 %v6314, %v6328
    %v6331 = vmul.f32 %v6315, %v6329
    %v6333 = vlaneseq
    %v6334 = vshrl.u32 %v6333, 7
    %v6335 = vsub.s32 0, %v6334
    %v6336 = vrot.slane %v6303, %v6335
    %v6338 = vmul.f32 %v6330, %v6336
    %v6339 = vmul.f32 %v6331, %v6336
    %v6341 = vlaneseq
    %v6342 = vshrl.u32 %v6341, 7
    %v6343 = vsub.s32 0, %v6342
    %v6344 = vrot.slane %v6305, %v6343
    %v6346 = vadd.f32 %v6338, %v6344
    %v6347 = vadd.f32 %v6339, %v6344
    %s6348 = scalar_lea.vmem %s9, 32
    %v6349 = vld [vmem:[%s6348] sm:$0xff]
    %v6350 = vld [vmem:[%s6348 + $0x8] sm:$0xff]
    %v6351 = vld [vmem:[%s6348 + $0x10] sm:$0xff]
    %v6352 = vld [vmem:[%s6348 + $0x18] sm:$0xff]
    %s6353 = scalar_lea.vmem %s10, 1
    %v6354 = vld [vmem:[%s6353] sm:$0x1]
    %v6356 = vlaneseq
    %v6357 = vshrl.u32 %v6356, 7
    %v6358 = vsub.s32 0, %v6357
    %v6359 = vrot.slane %v6354, %v6358
    %v6362 = vsel %vm198, %v6346, 0
    %v6365 = vsel %vm198, %v6347, 0
    %6367 = vmatprep.subr.mxu0 0.0
    %6368 = vmatpush1.msra.mxu0 0.0
    %6369 = vmatprep.subr.mxu0 0.0
    %6370 = vmatpush1.msra.mxu0 0.0
    %6371 = vmatprep.subr.mxu0 0.0
    %6372 = vmatpush1.msra.mxu0 0.0
    %6373 = vmatprep.subr.mxu0 0.0
    %6374 = vmatpush1.msra.mxu0 0.0
    %6375 = vmatprep.subr.mxu0 0.0
    %6376 = vmatpush1.msra.mxu0 0.0
    %6377 = vmatprep.subr.mxu0 0.0
    %6378 = vmatpush1.msra.mxu0 0.0
    %6379 = vmatprep.subr.mxu0 0.0
    %6380 = vmatpush1.msra.mxu0 0.0
    %6381 = vmatprep.subr.mxu0 0.0
    %6382 = vmatpush1.msra.mxu0 0.0
    %6383 = vmatprep.subr.mxu0 0.0
    %6384 = vmatpush1.msra.mxu0 0.0
    %6385 = vmatprep.subr.mxu0 0.0
    %6386 = vmatpush1.msra.mxu0 0.0
    %6387 = vmatprep.subr.mxu0 0.0
    %6388 = vmatpush1.msra.mxu0 0.0
    %6389 = vmatprep.subr.mxu0 0.0
    %6390 = vmatpush1.msra.mxu0 0.0
    %6391 = vmatprep.subr.mxu0 0.0
    %6392 = vmatpush1.msra.mxu0 %v6352
    %6393 = vmatprep.subr.mxu0 0.0
    %6394 = vmatpush1.msra.mxu0 %v6351
    %6395 = vmatprep.subr.mxu0 0.0
    %6396 = vmatpush1.msra.mxu0 %v6350
    %6397 = vmatprep.subr.mxu0 0.0
    %6398 = vmatpush1.msra.mxu0 %v6349
    %6399 = vmatprep.subr.mxu0 0.0
    %6400 = vmatpush2.msra.mxu0 0.0
    %6401 = vmatprep.subr.mxu0 0.0
    %6402 = vmatpush2.msra.mxu0 0.0
    %6403 = vmatprep.subr.mxu0 0.0
    %6404 = vmatpush2.msra.mxu0 0.0
    %6405 = vmatprep.subr.mxu0 0.0
    %6406 = vmatpush2.msra.mxu0 0.0
    %6407 = vmatprep.subr.mxu0 0.0
    %6408 = vmatpush2.msra.mxu0 0.0
    %6409 = vmatprep.subr.mxu0 0.0
    %6410 = vmatpush2.msra.mxu0 0.0
    %6411 = vmatprep.subr.mxu0 0.0
    %6412 = vmatpush2.msra.mxu0 0.0
    %6413 = vmatprep.subr.mxu0 0.0
    %6414 = vmatpush2.msra.mxu0 0.0
    %6415 = vmatprep.subr.mxu0 0.0
    %6416 = vmatpush2.msra.mxu0 0.0
    %6417 = vmatprep.subr.mxu0 0.0
    %6418 = vmatpush2.msra.mxu0 0.0
    %6419 = vmatprep.subr.mxu0 0.0
    %6420 = vmatpush2.msra.mxu0 0.0
    %6421 = vmatprep.subr.mxu0 0.0
    %6422 = vmatpush2.msra.mxu0 0.0
    %6423 = vmatprep.subr.mxu0 0.0
    %6424 = vmatpush2.msra.mxu0 0.0
    %6425 = vmatprep.subr.mxu0 0.0
    %6426 = vmatpush2.msra.mxu0 0.0
    %6427 = vmatprep.subr.mxu0 0.0
    %6428 = vmatpush2.msra.mxu0 0.0
    %6429 = vmatprep.subr.mxu0 0.0
    %6430 = vmatpush2.msra.mxu0 0.0
    %6431 = vmatprep.mubr.f32.mxu0 0.0
    %6432 = vmatmul.mubr.f32.gmra.mxu0 %v6362
    %v6433 = vpop.f32.mrf.mxu0
    %v6434 = vadd.f32 %v6359, %v6433
    %v6435 = vpop.f32.mrf.mxu0
    %6436 = vmatprep.mubr.f32.mxu0 0.0
    %6437 = vmatmul.mubr.f32.gmra.mxu0 %v6365
    %v6438 = vpop.f32.mrf.mxu0
    %v6439 = vadd.f32 %v6359, %v6438
    %v6440 = vpop.f32.mrf.mxu0
    %6441 = vdwg.mxu0
    %v6442 = vmax.f32 %v6434, 0.0
    %v6443 = vmax.f32 %v6439, 0.0
    %s6444 = scalar_lea.vmem %s11, 128
    %v6445 = vld [vmem:[%s6444] sm:$0xff]
    %v6446 = vld [vmem:[%s6444 + $0x8] sm:$0xff]
    %v6447 = vld [vmem:[%s6444 + $0x10] sm:$0xff]
    %v6448 = vld [vmem:[%s6444 + $0x18] sm:$0xff]
    %v6449 = vld [vmem:[%s6444 + $0x20] sm:$0xff]
    %v6450 = vld [vmem:[%s6444 + $0x28] sm:$0xff]
    %v6451 = vld [vmem:[%s6444 + $0x30] sm:$0xff]
    %v6452 = vld [vmem:[%s6444 + $0x38] sm:$0xff]
    %v6453 = vld [vmem:[%s6444 + $0x40] sm:$0xff]
    %v6454 = vld [vmem:[%s6444 + $0x48] sm:$0xff]
    %v6455 = vld [vmem:[%s6444 + $0x50] sm:$0xff]
    %v6456 = vld [vmem:[%s6444 + $0x58] sm:$0xff]
    %v6457 = vld [vmem:[%s6444 + $0x60] sm:$0xff]
    %v6458 = vld [vmem:[%s6444 + $0x68] sm:$0xff]
    %v6459 = vld [vmem:[%s6444 + $0x70] sm:$0xff]
    %v6460 = vld [vmem:[%s6444 + $0x78] sm:$0xff]
    %s6461 = scalar_lea.vmem %s12, 1
    %v6462 = vld [vmem:[%s6461] sm:$0x1]
    %v6464 = vlaneseq
    %v6465 = vshrl.u32 %v6464, 7
    %v6466 = vsub.s32 0, %v6465
    %v6467 = vrot.slane %v6462, %v6466
    %6469 = vmatprep.subr.mxu0 0.0
    %6470 = vmatpush1.msra.mxu0 %v6460
    %6471 = vmatprep.subr.mxu0 0.0
    %6472 = vmatpush1.msra.mxu0 %v6459
    %6473 = vmatprep.subr.mxu0 0.0
    %6474 = vmatpush1.msra.mxu0 %v6458
    %6475 = vmatprep.subr.mxu0 0.0
    %6476 = vmatpush1.msra.mxu0 %v6457
    %6477 = vmatprep.subr.mxu0 0.0
    %6478 = vmatpush1.msra.mxu0 %v6456
    %6479 = vmatprep.subr.mxu0 0.0
    %6480 = vmatpush1.msra.mxu0 %v6455
    %6481 = vmatprep.subr.mxu0 0.0
    %6482 = vmatpush1.msra.mxu0 %v6454
    %6483 = vmatprep.subr.mxu0 0.0
    %6484 = vmatpush1.msra.mxu0 %v6453
    %6485 = vmatprep.subr.mxu0 0.0
    %6486 = vmatpush1.msra.mxu0 %v6452
    %6487 = vmatprep.subr.mxu0 0.0
    %6488 = vmatpush1.msra.mxu0 %v6451
    %6489 = vmatprep.subr.mxu0 0.0
    %6490 = vmatpush1.msra.mxu0 %v6450
    %6491 = vmatprep.subr.mxu0 0.0
    %6492 = vmatpush1.msra.mxu0 %v6449
    %6493 = vmatprep.subr.mxu0 0.0
    %6494 = vmatpush1.msra.mxu0 %v6448
    %6495 = vmatprep.subr.mxu0 0.0
    %6496 = vmatpush1.msra.mxu0 %v6447
    %6497 = vmatprep.subr.mxu0 0.0
    %6498 = vmatpush1.msra.mxu0 %v6446
    %6499 = vmatprep.subr.mxu0 0.0
    %6500 = vmatpush1.msra.mxu0 %v6445
    %6501 = vmatprep.subr.mxu0 0.0
    %6502 = vmatpush2.msra.mxu0 0.0
    %6503 = vmatprep.subr.mxu0 0.0
    %6504 = vmatpush2.msra.mxu0 0.0
    %6505 = vmatprep.subr.mxu0 0.0
    %6506 = vmatpush2.msra.mxu0 0.0
    %6507 = vmatprep.subr.mxu0 0.0
    %6508 = vmatpush2.msra.mxu0 0.0
    %6509 = vmatprep.subr.mxu0 0.0
    %6510 = vmatpush2.msra.mxu0 0.0
    %6511 = vmatprep.subr.mxu0 0.0
    %6512 = vmatpush2.msra.mxu0 0.0
    %6513 = vmatprep.subr.mxu0 0.0
    %6514 = vmatpush2.msra.mxu0 0.0
    %6515 = vmatprep.subr.mxu0 0.0
    %6516 = vmatpush2.msra.mxu0 0.0
    %6517 = vmatprep.subr.mxu0 0.0
    %6518 = vmatpush2.msra.mxu0 0.0
    %6519 = vmatprep.subr.mxu0 0.0
    %6520 = vmatpush2.msra.mxu0 0.0
    %6521 = vmatprep.subr.mxu0 0.0
    %6522 = vmatpush2.msra.mxu0 0.0
    %6523 = vmatprep.subr.mxu0 0.0
    %6524 = vmatpush2.msra.mxu0 0.0
    %6525 = vmatprep.subr.mxu0 0.0
    %6526 = vmatpush2.msra.mxu0 0.0
    %6527 = vmatprep.subr.mxu0 0.0
    %6528 = vmatpush2.msra.mxu0 0.0
    %6529 = vmatprep.subr.mxu0 0.0
    %6530 = vmatpush2.msra.mxu0 0.0
    %6531 = vmatprep.subr.mxu0 0.0
    %6532 = vmatpush2.msra.mxu0 0.0
    %6533 = vmatprep.mubr.f32.mxu0 0.0
    %6534 = vmatmul.mubr.f32.gmra.mxu0 %v6442
    %v6535 = vpop.f32.mrf.mxu0
    %v6536 = vadd.f32 %v6467, %v6535
    %v6537 = vpop.f32.mrf.mxu0
    %6538 = vmatprep.mubr.f32.mxu0 0.0
    %6539 = vmatmul.mubr.f32.gmra.mxu0 %v6443
    %v6540 = vpop.f32.mrf.mxu0
    %v6541 = vadd.f32 %v6467, %v6540
    %v6542 = vpop.f32.mrf.mxu0
    %6543 = vdwg.mxu0
    %v6544 = vadd.f32 %v6346, %v6536
    %v6545 = vadd.f32 %v6347, %v6541
    %s6546 = scalar_lea.vmem %s13, 1
    %v6547 = vld [vmem:[%s6546] sm:$0x1]
    %s6548 = scalar_lea.vmem %s14, 1
    %v6549 = vld [vmem:[%s6548] sm:$0x1]
    %v6550 = vsel %vm198, %v6544, 0.0
    %6551 = vadd.xlane.f32.xlu0 %v6550
    %v6552 = vpop.xlane.xlu0 %6551
    %v6553 = vsel %vm198, %v6545, 0.0
    %6554 = vadd.xlane.f32.xlu0 %v6553
    %v6555 = vpop.xlane.xlu0 %6554
    %v6556 = vmul.f32 %v6552, %v3113
    %v6557 = vmul.f32 %v6555, %v3113
    %v6558 = vsub.f32 %v6544, %v6556
    %v6559 = vsub.f32 %v6545, %v6557
    %v6560 = vmul.f32 %v6558, %v6558
    %v6561 = vmul.f32 %v6559, %v6559
    %v6562 = vsel %vm198, %v6560, 0.0
    %6563 = vadd.xlane.f32.xlu0 %v6562
    %v6564 = vpop.xlane.xlu0 %6563
    %v6565 = vsel %vm198, %v6561, 0.0
    %6566 = vadd.xlane.f32.xlu0 %v6565
    %v6567 = vpop.xlane.xlu0 %6566
    %v6568 = vmul.f32 %v6564, %v3113
    %v6569 = vmul.f32 %v6567, %v3113
    %v6570 = vadd.f32 %v6568, 1e-05
    %v6571 = vadd.f32 %v6569, 1e-05
    %v6572 = vrsqrt.pop %v6570
    %v6573 = vrsqrt.pop %v6571
    %v6574 = vmul.f32 %v6558, %v6572
    %v6575 = vmul.f32 %v6559, %v6573
    %v6577 = vlaneseq
    %v6578 = vshrl.u32 %v6577, 7
    %v6579 = vsub.s32 0, %v6578
    %v6580 = vrot.slane %v6547, %v6579
    %v6582 = vmul.f32 %v6574, %v6580
    %v6583 = vmul.f32 %v6575, %v6580
    %v6585 = vlaneseq
    %v6586 = vshrl.u32 %v6585, 7
    %v6587 = vsub.s32 0, %v6586
    %v6588 = vrot.slane %v6549, %v6587
    %v6590 = vadd.f32 %v6582, %v6588
    %v6591 = vadd.f32 %v6583, %v6588
    %v6592 = vld [vmem:[%s2] sm:$0x3]
    %v6593 = vld [vmem:[%s15] sm:$0x1]
    %v6594 = vld [vmem:[%s16] sm:$0x1]
    %vm6595 = vcmask 25600
    %v6596 = vsel %vm6595, %v6592, 0.0
    %6597 = vadd.xlane.f32.xlu0 %v6596
    %v6598 = vpop.xlane.xlu0 %6597
    %v6599 = vrcp.pop 4.0
    %v6600 = vmul.f32 %v6598, %v6599
    %v6601 = vsub.f32 %v6592, %v6600
    %v6602 = vmul.f32 %v6601, %v6601
    %v6603 = vsel %vm6595, %v6602, 0.0
    %6604 = vadd.xlane.f32.xlu0 %v6603
    %v6605 = vpop.xlane.xlu0 %6604
    %v6606 = vmul.f32 %v6605, %v6599
    %v6607 = vadd.f32 %v6606, 1e-05
    %v6608 = vrsqrt.pop %v6607
    %v6609 = vmul.f32 %v6601, %v6608
    %v6611 = vlaneseq
    %v6612 = vshrl.u32 %v6611, 7
    %v6613 = vsub.s32 0, %v6612
    %v6614 = vrot.slane %v6593, %v6613
    %v6616 = vmul.f32 %v6609, %v6614
    %v6618 = vlaneseq
    %v6619 = vshrl.u32 %v6618, 7
    %v6620 = vsub.s32 0, %v6619
    %v6621 = vrot.slane %v6594, %v6620
    %v6623 = vadd.f32 %v6616, %v6621
    %v6624 = vld [vmem:[%s18] sm:$0xf]
    %v6625 = vld [vmem:[%s17] sm:$0xff]
    %v6626 = vld [vmem:[%s17 + $0x8] sm:$0xff]
    %v6627 = vld [vmem:[%s17 + $0x10] sm:$0xff]
    %v6628 = vld [vmem:[%s17 + $0x18] sm:$0xff]
    %v6631 = vrot.slane %v6591, 7
    %vm6632 = vcmask 1041409
    %v6633 = vsel %vm6632, %v6631, %v6590
    %v6634 = vsel %vm198, %v6633, 0
    %6636 = vmatprep.subr.mxu0 0.0
    %6637 = vmatpush1.msra.mxu0 0.0
    %6638 = vmatprep.subr.mxu0 0.0
    %6639 = vmatpush1.msra.mxu0 0.0
    %6640 = vmatprep.subr.mxu0 0.0
    %6641 = vmatpush1.msra.mxu0 0.0
    %6642 = vmatprep.subr.mxu0 0.0
    %6643 = vmatpush1.msra.mxu0 0.0
    %6644 = vmatprep.subr.mxu0 0.0
    %6645 = vmatpush1.msra.mxu0 0.0
    %6646 = vmatprep.subr.mxu0 0.0
    %6647 = vmatpush1.msra.mxu0 0.0
    %6648 = vmatprep.subr.mxu0 0.0
    %6649 = vmatpush1.msra.mxu0 0.0
    %6650 = vmatprep.subr.mxu0 0.0
    %6651 = vmatpush1.msra.mxu0 0.0
    %6652 = vmatprep.subr.mxu0 0.0
    %6653 = vmatpush1.msra.mxu0 0.0
    %6654 = vmatprep.subr.mxu0 0.0
    %6655 = vmatpush1.msra.mxu0 0.0
    %6656 = vmatprep.subr.mxu0 0.0
    %6657 = vmatpush1.msra.mxu0 0.0
    %6658 = vmatprep.subr.mxu0 0.0
    %6659 = vmatpush1.msra.mxu0 0.0
    %6660 = vmatprep.subr.mxu0 0.0
    %6661 = vmatpush1.msra.mxu0 %v6628
    %6662 = vmatprep.subr.mxu0 0.0
    %6663 = vmatpush1.msra.mxu0 %v6627
    %6664 = vmatprep.subr.mxu0 0.0
    %6665 = vmatpush1.msra.mxu0 %v6626
    %6666 = vmatprep.subr.mxu0 0.0
    %6667 = vmatpush1.msra.mxu0 %v6625
    %6668 = vmatprep.subr.mxu0 0.0
    %6669 = vmatpush2.msra.mxu0 0.0
    %6670 = vmatprep.subr.mxu0 0.0
    %6671 = vmatpush2.msra.mxu0 0.0
    %6672 = vmatprep.subr.mxu0 0.0
    %6673 = vmatpush2.msra.mxu0 0.0
    %6674 = vmatprep.subr.mxu0 0.0
    %6675 = vmatpush2.msra.mxu0 0.0
    %6676 = vmatprep.subr.mxu0 0.0
    %6677 = vmatpush2.msra.mxu0 0.0
    %6678 = vmatprep.subr.mxu0 0.0
    %6679 = vmatpush2.msra.mxu0 0.0
    %6680 = vmatprep.subr.mxu0 0.0
    %6681 = vmatpush2.msra.mxu0 0.0
    %6682 = vmatprep.subr.mxu0 0.0
    %6683 = vmatpush2.msra.mxu0 0.0
    %6684 = vmatprep.subr.mxu0 0.0
    %6685 = vmatpush2.msra.mxu0 0.0
    %6686 = vmatprep.subr.mxu0 0.0
    %6687 = vmatpush2.msra.mxu0 0.0
    %6688 = vmatprep.subr.mxu0 0.0
    %6689 = vmatpush2.msra.mxu0 0.0
    %6690 = vmatprep.subr.mxu0 0.0
    %6691 = vmatpush2.msra.mxu0 0.0
    %6692 = vmatprep.subr.mxu0 0.0
    %6693 = vmatpush2.msra.mxu0 0.0
    %6694 = vmatprep.subr.mxu0 0.0
    %6695 = vmatpush2.msra.mxu0 0.0
    %6696 = vmatprep.subr.mxu0 0.0
    %6697 = vmatpush2.msra.mxu0 0.0
    %6698 = vmatprep.subr.mxu0 0.0
    %6699 = vmatpush2.msra.mxu0 0.0
    %6700 = vmatprep.mubr.f32.mxu0 0.0
    %6701 = vmatmul.mubr.f32.gmra.mxu0 %v6634
    %v6702 = vpop.f32.mrf.mxu0
    %v6703 = vadd.f32 0.0, %v6702
    %v6704 = vpop.f32.mrf.mxu0
    %6705 = vdwg.mxu0
    %v6707 = vsel %vm283, %v6623, 0
    %v6710 = vsel %vm108, %v6624, 0
    %6712 = vmatprep.subr.mxu0 0.0
    %6713 = vmatpush1.msra.mxu0 0.0
    %6714 = vmatprep.subr.mxu0 0.0
    %6715 = vmatpush1.msra.mxu0 0.0
    %6716 = vmatprep.subr.mxu0 0.0
    %6717 = vmatpush1.msra.mxu0 0.0
    %6718 = vmatprep.subr.mxu0 0.0
    %6719 = vmatpush1.msra.mxu0 0.0
    %6720 = vmatprep.subr.mxu0 0.0
    %6721 = vmatpush1.msra.mxu0 0.0
    %6722 = vmatprep.subr.mxu0 0.0
    %6723 = vmatpush1.msra.mxu0 0.0
    %6724 = vmatprep.subr.mxu0 0.0
    %6725 = vmatpush1.msra.mxu0 0.0
    %6726 = vmatprep.subr.mxu0 0.0
    %6727 = vmatpush1.msra.mxu0 0.0
    %6728 = vmatprep.subr.mxu0 0.0
    %6729 = vmatpush1.msra.mxu0 0.0
    %6730 = vmatprep.subr.mxu0 0.0
    %6731 = vmatpush1.msra.mxu0 0.0
    %6732 = vmatprep.subr.mxu0 0.0
    %6733 = vmatpush1.msra.mxu0 0.0
    %6734 = vmatprep.subr.mxu0 0.0
    %6735 = vmatpush1.msra.mxu0 0.0
    %6736 = vmatprep.subr.mxu0 0.0
    %6737 = vmatpush1.msra.mxu0 0.0
    %6738 = vmatprep.subr.mxu0 0.0
    %6739 = vmatpush1.msra.mxu0 0.0
    %6740 = vmatprep.subr.mxu0 0.0
    %6741 = vmatpush1.msra.mxu0 0.0
    %6742 = vmatprep.subr.mxu0 0.0
    %6743 = vmatpush1.msra.mxu0 %v6710
    %6744 = vmatprep.subr.mxu0 0.0
    %6745 = vmatpush2.msra.mxu0 0.0
    %6746 = vmatprep.subr.mxu0 0.0
    %6747 = vmatpush2.msra.mxu0 0.0
    %6748 = vmatprep.subr.mxu0 0.0
    %6749 = vmatpush2.msra.mxu0 0.0
    %6750 = vmatprep.subr.mxu0 0.0
    %6751 = vmatpush2.msra.mxu0 0.0
    %6752 = vmatprep.subr.mxu0 0.0
    %6753 = vmatpush2.msra.mxu0 0.0
    %6754 = vmatprep.subr.mxu0 0.0
    %6755 = vmatpush2.msra.mxu0 0.0
    %6756 = vmatprep.subr.mxu0 0.0
    %6757 = vmatpush2.msra.mxu0 0.0
    %6758 = vmatprep.subr.mxu0 0.0
    %6759 = vmatpush2.msra.mxu0 0.0
    %6760 = vmatprep.subr.mxu0 0.0
    %6761 = vmatpush2.msra.mxu0 0.0
    %6762 = vmatprep.subr.mxu0 0.0
    %6763 = vmatpush2.msra.mxu0 0.0
    %6764 = vmatprep.subr.mxu0 0.0
    %6765 = vmatpush2.msra.mxu0 0.0
    %6766 = vmatprep.subr.mxu0 0.0
    %6767 = vmatpush2.msra.mxu0 0.0
    %6768 = vmatprep.subr.mxu0 0.0
    %6769 = vmatpush2.msra.mxu0 0.0
    %6770 = vmatprep.subr.mxu0 0.0
    %6771 = vmatpush2.msra.mxu0 0.0
    %6772 = vmatprep.subr.mxu0 0.0
    %6773 = vmatpush2.msra.mxu0 0.0
    %6774 = vmatprep.subr.mxu0 0.0
    %6775 = vmatpush2.msra.mxu0 0.0
    %6776 = vmatprep.mubr.f32.mxu0 0.0
    %6777 = vmatmul.mubr.f32.gmra.mxu0 %v6707
    %v6778 = vpop.f32.mrf.mxu0
    %v6779 = vadd.f32 %v6703, %v6778
    %v6780 = vpop.f32.mrf.mxu0
    %6781 = vdwg.mxu0
    %s6782 = scalar_lea.vmem %s17, 32
    %v6783 = vld [vmem:[%s6782] sm:$0xff]
    %v6784 = vld [vmem:[%s6782 + $0x8] sm:$0xff]
    %v6785 = vld [vmem:[%s6782 + $0x10] sm:$0xff]
    %v6786 = vld [vmem:[%s6782 + $0x18] sm:$0xff]
    %v6787 = vrot.slane %v6590, 1
    %v6788 = vsel %vm6632, %v6591, %v6787
    %v6789 = vsel %vm198, %v6788, 0
    %6791 = vmatprep.subr.mxu0 0.0
    %6792 = vmatpush1.msra.mxu0 0.0
    %6793 = vmatprep.subr.mxu0 0.0
    %6794 = vmatpush1.msra.mxu0 0.0
    %6795 = vmatprep.subr.mxu0 0.0
    %6796 = vmatpush1.msra.mxu0 0.0
    %6797 = vmatprep.subr.mxu0 0.0
    %6798 = vmatpush1.msra.mxu0 0.0
    %6799 = vmatprep.subr.mxu0 0.0
    %6800 = vmatpush1.msra.mxu0 0.0
    %6801 = vmatprep.subr.mxu0 0.0
    %6802 = vmatpush1.msra.mxu0 0.0
    %6803 = vmatprep.subr.mxu0 0.0
    %6804 = vmatpush1.msra.mxu0 0.0
    %6805 = vmatprep.subr.mxu0 0.0
    %6806 = vmatpush1.msra.mxu0 0.0
    %6807 = vmatprep.subr.mxu0 0.0
    %6808 = vmatpush1.msra.mxu0 0.0
    %6809 = vmatprep.subr.mxu0 0.0
    %6810 = vmatpush1.msra.mxu0 0.0
    %6811 = vmatprep.subr.mxu0 0.0
    %6812 = vmatpush1.msra.mxu0 0.0
    %6813 = vmatprep.subr.mxu0 0.0
    %6814 = vmatpush1.msra.mxu0 0.0
    %6815 = vmatprep.subr.mxu0 0.0
    %6816 = vmatpush1.msra.mxu0 %v6786
    %6817 = vmatprep.subr.mxu0 0.0
    %6818 = vmatpush1.msra.mxu0 %v6785
    %6819 = vmatprep.subr.mxu0 0.0
    %6820 = vmatpush1.msra.mxu0 %v6784
    %6821 = vmatprep.subr.mxu0 0.0
    %6822 = vmatpush1.msra.mxu0 %v6783
    %6823 = vmatprep.subr.mxu0 0.0
    %6824 = vmatpush2.msra.mxu0 0.0
    %6825 = vmatprep.subr.mxu0 0.0
    %6826 = vmatpush2.msra.mxu0 0.0
    %6827 = vmatprep.subr.mxu0 0.0
    %6828 = vmatpush2.msra.mxu0 0.0
    %6829 = vmatprep.subr.mxu0 0.0
    %6830 = vmatpush2.msra.mxu0 0.0
    %6831 = vmatprep.subr.mxu0 0.0
    %6832 = vmatpush2.msra.mxu0 0.0
    %6833 = vmatprep.subr.mxu0 0.0
    %6834 = vmatpush2.msra.mxu0 0.0
    %6835 = vmatprep.subr.mxu0 0.0
    %6836 = vmatpush2.msra.mxu0 0.0
    %6837 = vmatprep.subr.mxu0 0.0
    %6838 = vmatpush2.msra.mxu0 0.0
    %6839 = vmatprep.subr.mxu0 0.0
    %6840 = vmatpush2.msra.mxu0 0.0
    %6841 = vmatprep.subr.mxu0 0.0
    %6842 = vmatpush2.msra.mxu0 0.0
    %6843 = vmatprep.subr.mxu0 0.0
    %6844 = vmatpush2.msra.mxu0 0.0
    %6845 = vmatprep.subr.mxu0 0.0
    %6846 = vmatpush2.msra.mxu0 0.0
    %6847 = vmatprep.subr.mxu0 0.0
    %6848 = vmatpush2.msra.mxu0 0.0
    %6849 = vmatprep.subr.mxu0 0.0
    %6850 = vmatpush2.msra.mxu0 0.0
    %6851 = vmatprep.subr.mxu0 0.0
    %6852 = vmatpush2.msra.mxu0 0.0
    %6853 = vmatprep.subr.mxu0 0.0
    %6854 = vmatpush2.msra.mxu0 0.0
    %6855 = vmatprep.mubr.f32.mxu0 0.0
    %6856 = vmatmul.mubr.f32.gmra.mxu0 %v6789
    %v6857 = vpop.f32.mrf.mxu0
    %v6858 = vadd.f32 0.0, %v6857
    %v6859 = vpop.f32.mrf.mxu0
    %6860 = vdwg.mxu0
    %v6861 = vadd.f32 %v6779, %v6858
    %s6862 = scalar_lea.vmem %s17, 64
    %v6863 = vld [vmem:[%s6862] sm:$0xff]
    %v6864 = vld [vmem:[%s6862 + $0x8] sm:$0xff]
    %v6865 = vld [vmem:[%s6862 + $0x10] sm:$0xff]
    %v6866 = vld [vmem:[%s6862 + $0x18] sm:$0xff]
    %v6867 = vrot.slane %v6590, 2
    %v6868 = vrot.slane %v6591, 1
    %v6869 = vsel %vm6632, %v6868, %v6867
    %v6870 = vsel %vm198, %v6869, 0
    %6872 = vmatprep.subr.mxu0 0.0
    %6873 = vmatpush1.msra.mxu0 0.0
    %6874 = vmatprep.subr.mxu0 0.0
    %6875 = vmatpush1.msra.mxu0 0.0
    %6876 = vmatprep.subr.mxu0 0.0
    %6877 = vmatpush1.msra.mxu0 0.0
    %6878 = vmatprep.subr.mxu0 0.0
    %6879 = vmatpush1.msra.mxu0 0.0
    %6880 = vmatprep.subr.mxu0 0.0
    %6881 = vmatpush1.msra.mxu0 0.0
    %6882 = vmatprep.subr.mxu0 0.0
    %6883 = vmatpush1.msra.mxu0 0.0
    %6884 = vmatprep.subr.mxu0 0.0
    %6885 = vmatpush1.msra.mxu0 0.0
    %6886 = vmatprep.subr.mxu0 0.0
    %6887 = vmatpush1.msra.mxu0 0.0
    %6888 = vmatprep.subr.mxu0 0.0
    %6889 = vmatpush1.msra.mxu0 0.0
    %6890 = vmatprep.subr.mxu0 0.0
    %6891 = vmatpush1.msra.mxu0 0.0
    %6892 = vmatprep.subr.mxu0 0.0
    %6893 = vmatpush1.msra.mxu0 0.0
    %6894 = vmatprep.subr.mxu0 0.0
    %6895 = vmatpush1.msra.mxu0 0.0
    %6896 = vmatprep.subr.mxu0 0.0
    %6897 = vmatpush1.msra.mxu0 %v6866
    %6898 = vmatprep.subr.mxu0 0.0
    %6899 = vmatpush1.msra.mxu0 %v6865
    %6900 = vmatprep.subr.mxu0 0.0
    %6901 = vmatpush1.msra.mxu0 %v6864
    %6902 = vmatprep.subr.mxu0 0.0
    %6903 = vmatpush1.msra.mxu0 %v6863
    %6904 = vmatprep.subr.mxu0 0.0
    %6905 = vmatpush2.msra.mxu0 0.0
    %6906 = vmatprep.subr.mxu0 0.0
    %6907 = vmatpush2.msra.mxu0 0.0
    %6908 = vmatprep.subr.mxu0 0.0
    %6909 = vmatpush2.msra.mxu0 0.0
    %6910 = vmatprep.subr.mxu0 0.0
    %6911 = vmatpush2.msra.mxu0 0.0
    %6912 = vmatprep.subr.mxu0 0.0
    %6913 = vmatpush2.msra.mxu0 0.0
    %6914 = vmatprep.subr.mxu0 0.0
    %6915 = vmatpush2.msra.mxu0 0.0
    %6916 = vmatprep.subr.mxu0 0.0
    %6917 = vmatpush2.msra.mxu0 0.0
    %6918 = vmatprep.subr.mxu0 0.0
    %6919 = vmatpush2.msra.mxu0 0.0
    %6920 = vmatprep.subr.mxu0 0.0
    %6921 = vmatpush2.msra.mxu0 0.0
    %6922 = vmatprep.subr.mxu0 0.0
    %6923 = vmatpush2.msra.mxu0 0.0
    %6924 = vmatprep.subr.mxu0 0.0
    %6925 = vmatpush2.msra.mxu0 0.0
    %6926 = vmatprep.subr.mxu0 0.0
    %6927 = vmatpush2.msra.mxu0 0.0
    %6928 = vmatprep.subr.mxu0 0.0
    %6929 = vmatpush2.msra.mxu0 0.0
    %6930 = vmatprep.subr.mxu0 0.0
    %6931 = vmatpush2.msra.mxu0 0.0
    %6932 = vmatprep.subr.mxu0 0.0
    %6933 = vmatpush2.msra.mxu0 0.0
    %6934 = vmatprep.subr.mxu0 0.0
    %6935 = vmatpush2.msra.mxu0 0.0
    %6936 = vmatprep.mubr.f32.mxu0 0.0
    %6937 = vmatmul.mubr.f32.gmra.mxu0 %v6870
    %v6938 = vpop.f32.mrf.mxu0
    %v6939 = vadd.f32 0.0, %v6938
    %v6940 = vpop.f32.mrf.mxu0
    %6941 = vdwg.mxu0
    %v6942 = vadd.f32 %v6861, %v6939
    %s6943 = scalar_lea.vmem %s17, 96
    %v6944 = vld [vmem:[%s6943] sm:$0xff]
    %v6945 = vld [vmem:[%s6943 + $0x8] sm:$0xff]
    %v6946 = vld [vmem:[%s6943 + $0x10] sm:$0xff]
    %v6947 = vld [vmem:[%s6943 + $0x18] sm:$0xff]
    %v6948 = vrot.slane %v6590, 3
    %v6949 = vrot.slane %v6591, 2
    %v6950 = vsel %vm6632, %v6949, %v6948
    %v6951 = vsel %vm198, %v6950, 0
    %6953 = vmatprep.subr.mxu0 0.0
    %6954 = vmatpush1.msra.mxu0 0.0
    %6955 = vmatprep.subr.mxu0 0.0
    %6956 = vmatpush1.msra.mxu0 0.0
    %6957 = vmatprep.subr.mxu0 0.0
    %6958 = vmatpush1.msra.mxu0 0.0
    %6959 = vmatprep.subr.mxu0 0.0
    %6960 = vmatpush1.msra.mxu0 0.0
    %6961 = vmatprep.subr.mxu0 0.0
    %6962 = vmatpush1.msra.mxu0 0.0
    %6963 = vmatprep.subr.mxu0 0.0
    %6964 = vmatpush1.msra.mxu0 0.0
    %6965 = vmatprep.subr.mxu0 0.0
    %6966 = vmatpush1.msra.mxu0 0.0
    %6967 = vmatprep.subr.mxu0 0.0
    %6968 = vmatpush1.msra.mxu0 0.0
    %6969 = vmatprep.subr.mxu0 0.0
    %6970 = vmatpush1.msra.mxu0 0.0
    %6971 = vmatprep.subr.mxu0 0.0
    %6972 = vmatpush1.msra.mxu0 0.0
    %6973 = vmatprep.subr.mxu0 0.0
    %6974 = vmatpush1.msra.mxu0 0.0
    %6975 = vmatprep.subr.mxu0 0.0
    %6976 = vmatpush1.msra.mxu0 0.0
    %6977 = vmatprep.subr.mxu0 0.0
    %6978 = vmatpush1.msra.mxu0 %v6947
    %6979 = vmatprep.subr.mxu0 0.0
    %6980 = vmatpush1.msra.mxu0 %v6946
    %6981 = vmatprep.subr.mxu0 0.0
    %6982 = vmatpush1.msra.mxu0 %v6945
    %6983 = vmatprep.subr.mxu0 0.0
    %6984 = vmatpush1.msra.mxu0 %v6944
    %6985 = vmatprep.subr.mxu0 0.0
    %6986 = vmatpush2.msra.mxu0 0.0
    %6987 = vmatprep.subr.mxu0 0.0
    %6988 = vmatpush2.msra.mxu0 0.0
    %6989 = vmatprep.subr.mxu0 0.0
    %6990 = vmatpush2.msra.mxu0 0.0
    %6991 = vmatprep.subr.mxu0 0.0
    %6992 = vmatpush2.msra.mxu0 0.0
    %6993 = vmatprep.subr.mxu0 0.0
    %6994 = vmatpush2.msra.mxu0 0.0
    %6995 = vmatprep.subr.mxu0 0.0
    %6996 = vmatpush2.msra.mxu0 0.0
    %6997 = vmatprep.subr.mxu0 0.0
    %6998 = vmatpush2.msra.mxu0 0.0
    %6999 = vmatprep.subr.mxu0 0.0
    %7000 = vmatpush2.msra.mxu0 0.0
    %7001 = vmatprep.subr.mxu0 0.0
    %7002 = vmatpush2.msra.mxu0 0.0
    %7003 = vmatprep.subr.mxu0 0.0
    %7004 = vmatpush2.msra.mxu0 0.0
    %7005 = vmatprep.subr.mxu0 0.0
    %7006 = vmatpush2.msra.mxu0 0.0
    %7007 = vmatprep.subr.mxu0 0.0
    %7008 = vmatpush2.msra.mxu0 0.0
    %7009 = vmatprep.subr.mxu0 0.0
    %7010 = vmatpush2.msra.mxu0 0.0
    %7011 = vmatprep.subr.mxu0 0.0
    %7012 = vmatpush2.msra.mxu0 0.0
    %7013 = vmatprep.subr.mxu0 0.0
    %7014 = vmatpush2.msra.mxu0 0.0
    %7015 = vmatprep.subr.mxu0 0.0
    %7016 = vmatpush2.msra.mxu0 0.0
    %7017 = vmatprep.mubr.f32.mxu0 0.0
    %7018 = vmatmul.mubr.f32.gmra.mxu0 %v6951
    %v7019 = vpop.f32.mrf.mxu0
    %v7020 = vadd.f32 0.0, %v7019
    %v7021 = vpop.f32.mrf.mxu0
    %7022 = vdwg.mxu0
    %v7023 = vadd.f32 %v6942, %v7020
    %s7024 = scalar_lea.vmem %s17, 128
    %v7025 = vld [vmem:[%s7024] sm:$0xff]
    %v7026 = vld [vmem:[%s7024 + $0x8] sm:$0xff]
    %v7027 = vld [vmem:[%s7024 + $0x10] sm:$0xff]
    %v7028 = vld [vmem:[%s7024 + $0x18] sm:$0xff]
    %v7029 = vrot.slane %v6590, 4
    %v7030 = vrot.slane %v6591, 3
    %v7031 = vsel %vm6632, %v7030, %v7029
    %v7032 = vsel %vm198, %v7031, 0
    %7034 = vmatprep.subr.mxu0 0.0
    %7035 = vmatpush1.msra.mxu0 0.0
    %7036 = vmatprep.subr.mxu0 0.0
    %7037 = vmatpush1.msra.mxu0 0.0
    %7038 = vmatprep.subr.mxu0 0.0
    %7039 = vmatpush1.msra.mxu0 0.0
    %7040 = vmatprep.subr.mxu0 0.0
    %7041 = vmatpush1.msra.mxu0 0.0
    %7042 = vmatprep.subr.mxu0 0.0
    %7043 = vmatpush1.msra.mxu0 0.0
    %7044 = vmatprep.subr.mxu0 0.0
    %7045 = vmatpush1.msra.mxu0 0.0
    %7046 = vmatprep.subr.mxu0 0.0
    %7047 = vmatpush1.msra.mxu0 0.0
    %7048 = vmatprep.subr.mxu0 0.0
    %7049 = vmatpush1.msra.mxu0 0.0
    %7050 = vmatprep.subr.mxu0 0.0
    %7051 = vmatpush1.msra.mxu0 0.0
    %7052 = vmatprep.subr.mxu0 0.0
    %7053 = vmatpush1.msra.mxu0 0.0
    %7054 = vmatprep.subr.mxu0 0.0
    %7055 = vmatpush1.msra.mxu0 0.0
    %7056 = vmatprep.subr.mxu0 0.0
    %7057 = vmatpush1.msra.mxu0 0.0
    %7058 = vmatprep.subr.mxu0 0.0
    %7059 = vmatpush1.msra.mxu0 %v7028
    %7060 = vmatprep.subr.mxu0 0.0
    %7061 = vmatpush1.msra.mxu0 %v7027
    %7062 = vmatprep.subr.mxu0 0.0
    %7063 = vmatpush1.msra.mxu0 %v7026
    %7064 = vmatprep.subr.mxu0 0.0
    %7065 = vmatpush1.msra.mxu0 %v7025
    %7066 = vmatprep.subr.mxu0 0.0
    %7067 = vmatpush2.msra.mxu0 0.0
    %7068 = vmatprep.subr.mxu0 0.0
    %7069 = vmatpush2.msra.mxu0 0.0
    %7070 = vmatprep.subr.mxu0 0.0
    %7071 = vmatpush2.msra.mxu0 0.0
    %7072 = vmatprep.subr.mxu0 0.0
    %7073 = vmatpush2.msra.mxu0 0.0
    %7074 = vmatprep.subr.mxu0 0.0
    %7075 = vmatpush2.msra.mxu0 0.0
    %7076 = vmatprep.subr.mxu0 0.0
    %7077 = vmatpush2.msra.mxu0 0.0
    %7078 = vmatprep.subr.mxu0 0.0
    %7079 = vmatpush2.msra.mxu0 0.0
    %7080 = vmatprep.subr.mxu0 0.0
    %7081 = vmatpush2.msra.mxu0 0.0
    %7082 = vmatprep.subr.mxu0 0.0
    %7083 = vmatpush2.msra.mxu0 0.0
    %7084 = vmatprep.subr.mxu0 0.0
    %7085 = vmatpush2.msra.mxu0 0.0
    %7086 = vmatprep.subr.mxu0 0.0
    %7087 = vmatpush2.msra.mxu0 0.0
    %7088 = vmatprep.subr.mxu0 0.0
    %7089 = vmatpush2.msra.mxu0 0.0
    %7090 = vmatprep.subr.mxu0 0.0
    %7091 = vmatpush2.msra.mxu0 0.0
    %7092 = vmatprep.subr.mxu0 0.0
    %7093 = vmatpush2.msra.mxu0 0.0
    %7094 = vmatprep.subr.mxu0 0.0
    %7095 = vmatpush2.msra.mxu0 0.0
    %7096 = vmatprep.subr.mxu0 0.0
    %7097 = vmatpush2.msra.mxu0 0.0
    %7098 = vmatprep.mubr.f32.mxu0 0.0
    %7099 = vmatmul.mubr.f32.gmra.mxu0 %v7032
    %v7100 = vpop.f32.mrf.mxu0
    %v7101 = vadd.f32 0.0, %v7100
    %v7102 = vpop.f32.mrf.mxu0
    %7103 = vdwg.mxu0
    %v7104 = vadd.f32 %v7023, %v7101
    %s7105 = scalar_lea.vmem %s17, 160
    %v7106 = vld [vmem:[%s7105] sm:$0xff]
    %v7107 = vld [vmem:[%s7105 + $0x8] sm:$0xff]
    %v7108 = vld [vmem:[%s7105 + $0x10] sm:$0xff]
    %v7109 = vld [vmem:[%s7105 + $0x18] sm:$0xff]
    %v7110 = vrot.slane %v6590, 5
    %v7111 = vrot.slane %v6591, 4
    %v7112 = vsel %vm6632, %v7111, %v7110
    %v7113 = vsel %vm198, %v7112, 0
    %7115 = vmatprep.subr.mxu0 0.0
    %7116 = vmatpush1.msra.mxu0 0.0
    %7117 = vmatprep.subr.mxu0 0.0
    %7118 = vmatpush1.msra.mxu0 0.0
    %7119 = vmatprep.subr.mxu0 0.0
    %7120 = vmatpush1.msra.mxu0 0.0
    %7121 = vmatprep.subr.mxu0 0.0
    %7122 = vmatpush1.msra.mxu0 0.0
    %7123 = vmatprep.subr.mxu0 0.0
    %7124 = vmatpush1.msra.mxu0 0.0
    %7125 = vmatprep.subr.mxu0 0.0
    %7126 = vmatpush1.msra.mxu0 0.0
    %7127 = vmatprep.subr.mxu0 0.0
    %7128 = vmatpush1.msra.mxu0 0.0
    %7129 = vmatprep.subr.mxu0 0.0
    %7130 = vmatpush1.msra.mxu0 0.0
    %7131 = vmatprep.subr.mxu0 0.0
    %7132 = vmatpush1.msra.mxu0 0.0
    %7133 = vmatprep.subr.mxu0 0.0
    %7134 = vmatpush1.msra.mxu0 0.0
    %7135 = vmatprep.subr.mxu0 0.0
    %7136 = vmatpush1.msra.mxu0 0.0
    %7137 = vmatprep.subr.mxu0 0.0
    %7138 = vmatpush1.msra.mxu0 0.0
    %7139 = vmatprep.subr.mxu0 0.0
    %7140 = vmatpush1.msra.mxu0 %v7109
    %7141 = vmatprep.subr.mxu0 0.0
    %7142 = vmatpush1.msra.mxu0 %v7108
    %7143 = vmatprep.subr.mxu0 0.0
    %7144 = vmatpush1.msra.mxu0 %v7107
    %7145 = vmatprep.subr.mxu0 0.0
    %7146 = vmatpush1.msra.mxu0 %v7106
    %7147 = vmatprep.subr.mxu0 0.0
    %7148 = vmatpush2.msra.mxu0 0.0
    %7149 = vmatprep.subr.mxu0 0.0
    %7150 = vmatpush2.msra.mxu0 0.0
    %7151 = vmatprep.subr.mxu0 0.0
    %7152 = vmatpush2.msra.mxu0 0.0
    %7153 = vmatprep.subr.mxu0 0.0
    %7154 = vmatpush2.msra.mxu0 0.0
    %7155 = vmatprep.subr.mxu0 0.0
    %7156 = vmatpush2.msra.mxu0 0.0
    %7157 = vmatprep.subr.mxu0 0.0
    %7158 = vmatpush2.msra.mxu0 0.0
    %7159 = vmatprep.subr.mxu0 0.0
    %7160 = vmatpush2.msra.mxu0 0.0
    %7161 = vmatprep.subr.mxu0 0.0
    %7162 = vmatpush2.msra.mxu0 0.0
    %7163 = vmatprep.subr.mxu0 0.0
    %7164 = vmatpush2.msra.mxu0 0.0
    %7165 = vmatprep.subr.mxu0 0.0
    %7166 = vmatpush2.msra.mxu0 0.0
    %7167 = vmatprep.subr.mxu0 0.0
    %7168 = vmatpush2.msra.mxu0 0.0
    %7169 = vmatprep.subr.mxu0 0.0
    %7170 = vmatpush2.msra.mxu0 0.0
    %7171 = vmatprep.subr.mxu0 0.0
    %7172 = vmatpush2.msra.mxu0 0.0
    %7173 = vmatprep.subr.mxu0 0.0
    %7174 = vmatpush2.msra.mxu0 0.0
    %7175 = vmatprep.subr.mxu0 0.0
    %7176 = vmatpush2.msra.mxu0 0.0
    %7177 = vmatprep.subr.mxu0 0.0
    %7178 = vmatpush2.msra.mxu0 0.0
    %7179 = vmatprep.mubr.f32.mxu0 0.0
    %7180 = vmatmul.mubr.f32.gmra.mxu0 %v7113
    %v7181 = vpop.f32.mrf.mxu0
    %v7182 = vadd.f32 0.0, %v7181
    %v7183 = vpop.f32.mrf.mxu0
    %7184 = vdwg.mxu0
    %v7185 = vadd.f32 %v7104, %v7182
    %s7186 = scalar_lea.vmem %s17, 192
    %v7187 = vld [vmem:[%s7186] sm:$0xff]
    %v7188 = vld [vmem:[%s7186 + $0x8] sm:$0xff]
    %v7189 = vld [vmem:[%s7186 + $0x10] sm:$0xff]
    %v7190 = vld [vmem:[%s7186 + $0x18] sm:$0xff]
    %v7191 = vrot.slane %v6590, 6
    %v7192 = vrot.slane %v6591, 5
    %v7193 = vsel %vm6632, %v7192, %v7191
    %v7194 = vsel %vm198, %v7193, 0
    %7196 = vmatprep.subr.mxu0 0.0
    %7197 = vmatpush1.msra.mxu0 0.0
    %7198 = vmatprep.subr.mxu0 0.0
    %7199 = vmatpush1.msra.mxu0 0.0
    %7200 = vmatprep.subr.mxu0 0.0
    %7201 = vmatpush1.msra.mxu0 0.0
    %7202 = vmatprep.subr.mxu0 0.0
    %7203 = vmatpush1.msra.mxu0 0.0
    %7204 = vmatprep.subr.mxu0 0.0
    %7205 = vmatpush1.msra.mxu0 0.0
    %7206 = vmatprep.subr.mxu0 0.0
    %7207 = vmatpush1.msra.mxu0 0.0
    %7208 = vmatprep.subr.mxu0 0.0
    %7209 = vmatpush1.msra.mxu0 0.0
    %7210 = vmatprep.subr.mxu0 0.0
    %7211 = vmatpush1.msra.mxu0 0.0
    %7212 = vmatprep.subr.mxu0 0.0
    %7213 = vmatpush1.msra.mxu0 0.0
    %7214 = vmatprep.subr.mxu0 0.0
    %7215 = vmatpush1.msra.mxu0 0.0
    %7216 = vmatprep.subr.mxu0 0.0
    %7217 = vmatpush1.msra.mxu0 0.0
    %7218 = vmatprep.subr.mxu0 0.0
    %7219 = vmatpush1.msra.mxu0 0.0
    %7220 = vmatprep.subr.mxu0 0.0
    %7221 = vmatpush1.msra.mxu0 %v7190
    %7222 = vmatprep.subr.mxu0 0.0
    %7223 = vmatpush1.msra.mxu0 %v7189
    %7224 = vmatprep.subr.mxu0 0.0
    %7225 = vmatpush1.msra.mxu0 %v7188
    %7226 = vmatprep.subr.mxu0 0.0
    %7227 = vmatpush1.msra.mxu0 %v7187
    %7228 = vmatprep.subr.mxu0 0.0
    %7229 = vmatpush2.msra.mxu0 0.0
    %7230 = vmatprep.subr.mxu0 0.0
    %7231 = vmatpush2.msra.mxu0 0.0
    %7232 = vmatprep.subr.mxu0 0.0
    %7233 = vmatpush2.msra.mxu0 0.0
    %7234 = vmatprep.subr.mxu0 0.0
    %7235 = vmatpush2.msra.mxu0 0.0
    %7236 = vmatprep.subr.mxu0 0.0
    %7237 = vmatpush2.msra.mxu0 0.0
    %7238 = vmatprep.subr.mxu0 0.0
    %7239 = vmatpush2.msra.mxu0 0.0
    %7240 = vmatprep.subr.mxu0 0.0
    %7241 = vmatpush2.msra.mxu0 0.0
    %7242 = vmatprep.subr.mxu0 0.0
    %7243 = vmatpush2.msra.mxu0 0.0
    %7244 = vmatprep.subr.mxu0 0.0
    %7245 = vmatpush2.msra.mxu0 0.0
    %7246 = vmatprep.subr.mxu0 0.0
    %7247 = vmatpush2.msra.mxu0 0.0
    %7248 = vmatprep.subr.mxu0 0.0
    %7249 = vmatpush2.msra.mxu0 0.0
    %7250 = vmatprep.subr.mxu0 0.0
    %7251 = vmatpush2.msra.mxu0 0.0
    %7252 = vmatprep.subr.mxu0 0.0
    %7253 = vmatpush2.msra.mxu0 0.0
    %7254 = vmatprep.subr.mxu0 0.0
    %7255 = vmatpush2.msra.mxu0 0.0
    %7256 = vmatprep.subr.mxu0 0.0
    %7257 = vmatpush2.msra.mxu0 0.0
    %7258 = vmatprep.subr.mxu0 0.0
    %7259 = vmatpush2.msra.mxu0 0.0
    %7260 = vmatprep.mubr.f32.mxu0 0.0
    %7261 = vmatmul.mubr.f32.gmra.mxu0 %v7194
    %v7262 = vpop.f32.mrf.mxu0
    %v7263 = vadd.f32 0.0, %v7262
    %v7264 = vpop.f32.mrf.mxu0
    %7265 = vdwg.mxu0
    %v7266 = vadd.f32 %v7185, %v7263
    %s7267 = scalar_lea.vmem %s17, 224
    %v7268 = vld [vmem:[%s7267] sm:$0xff]
    %v7269 = vld [vmem:[%s7267 + $0x8] sm:$0xff]
    %v7270 = vld [vmem:[%s7267 + $0x10] sm:$0xff]
    %v7271 = vld [vmem:[%s7267 + $0x18] sm:$0xff]
    %v7272 = vrot.slane %v6590, 7
    %v7273 = vrot.slane %v6591, 6
    %v7274 = vsel %vm6632, %v7273, %v7272
    %v7275 = vsel %vm198, %v7274, 0
    %7277 = vmatprep.subr.mxu0 0.0
    %7278 = vmatpush1.msra.mxu0 0.0
    %7279 = vmatprep.subr.mxu0 0.0
    %7280 = vmatpush1.msra.mxu0 0.0
    %7281 = vmatprep.subr.mxu0 0.0
    %7282 = vmatpush1.msra.mxu0 0.0
    %7283 = vmatprep.subr.mxu0 0.0
    %7284 = vmatpush1.msra.mxu0 0.0
    %7285 = vmatprep.subr.mxu0 0.0
    %7286 = vmatpush1.msra.mxu0 0.0
    %7287 = vmatprep.subr.mxu0 0.0
    %7288 = vmatpush1.msra.mxu0 0.0
    %7289 = vmatprep.subr.mxu0 0.0
    %7290 = vmatpush1.msra.mxu0 0.0
    %7291 = vmatprep.subr.mxu0 0.0
    %7292 = vmatpush1.msra.mxu0 0.0
    %7293 = vmatprep.subr.mxu0 0.0
    %7294 = vmatpush1.msra.mxu0 0.0
    %7295 = vmatprep.subr.mxu0 0.0
    %7296 = vmatpush1.msra.mxu0 0.0
    %7297 = vmatprep.subr.mxu0 0.0
    %7298 = vmatpush1.msra.mxu0 0.0
    %7299 = vmatprep.subr.mxu0 0.0
    %7300 = vmatpush1.msra.mxu0 0.0
    %7301 = vmatprep.subr.mxu0 0.0
    %7302 = vmatpush1.msra.mxu0 %v7271
    %7303 = vmatprep.subr.mxu0 0.0
    %7304 = vmatpush1.msra.mxu0 %v7270
    %7305 = vmatprep.subr.mxu0 0.0
    %7306 = vmatpush1.msra.mxu0 %v7269
    %7307 = vmatprep.subr.mxu0 0.0
    %7308 = vmatpush1.msra.mxu0 %v7268
    %7309 = vmatprep.subr.mxu0 0.0
    %7310 = vmatpush2.msra.mxu0 0.0
    %7311 = vmatprep.subr.mxu0 0.0
    %7312 = vmatpush2.msra.mxu0 0.0
    %7313 = vmatprep.subr.mxu0 0.0
    %7314 = vmatpush2.msra.mxu0 0.0
    %7315 = vmatprep.subr.mxu0 0.0
    %7316 = vmatpush2.msra.mxu0 0.0
    %7317 = vmatprep.subr.mxu0 0.0
    %7318 = vmatpush2.msra.mxu0 0.0
    %7319 = vmatprep.subr.mxu0 0.0
    %7320 = vmatpush2.msra.mxu0 0.0
    %7321 = vmatprep.subr.mxu0 0.0
    %7322 = vmatpush2.msra.mxu0 0.0
    %7323 = vmatprep.subr.mxu0 0.0
    %7324 = vmatpush2.msra.mxu0 0.0
    %7325 = vmatprep.subr.mxu0 0.0
    %7326 = vmatpush2.msra.mxu0 0.0
    %7327 = vmatprep.subr.mxu0 0.0
    %7328 = vmatpush2.msra.mxu0 0.0
    %7329 = vmatprep.subr.mxu0 0.0
    %7330 = vmatpush2.msra.mxu0 0.0
    %7331 = vmatprep.subr.mxu0 0.0
    %7332 = vmatpush2.msra.mxu0 0.0
    %7333 = vmatprep.subr.mxu0 0.0
    %7334 = vmatpush2.msra.mxu0 0.0
    %7335 = vmatprep.subr.mxu0 0.0
    %7336 = vmatpush2.msra.mxu0 0.0
    %7337 = vmatprep.subr.mxu0 0.0
    %7338 = vmatpush2.msra.mxu0 0.0
    %7339 = vmatprep.subr.mxu0 0.0
    %7340 = vmatpush2.msra.mxu0 0.0
    %7341 = vmatprep.mubr.f32.mxu0 0.0
    %7342 = vmatmul.mubr.f32.gmra.mxu0 %v7275
    %v7343 = vpop.f32.mrf.mxu0
    %v7344 = vadd.f32 0.0, %v7343
    %v7345 = vpop.f32.mrf.mxu0
    %7346 = vdwg.mxu0
    %v7347 = vadd.f32 %v7266, %v7344
    %v7348 = vld [vmem:[%s19] sm:$0x1]
    %v7350 = vlaneseq
    %v7351 = vshrl.u32 %v7350, 7
    %v7352 = vsub.s32 0, %v7351
    %v7353 = vrot.slane %v7348, %v7352
    %v7355 = vadd.f32 %v7347, %v7353
    %v7356 = vmax.f32 %v7355, 0.0
    %v7357 = vld [vmem:[%s20] sm:$0xff]
    %v7358 = vld [vmem:[%s20 + $0x8] sm:$0xff]
    %v7359 = vld [vmem:[%s20 + $0x10] sm:$0xff]
    %v7360 = vld [vmem:[%s20 + $0x18] sm:$0xff]
    %v7361 = vld [vmem:[%s20 + $0x20] sm:$0xff]
    %v7362 = vld [vmem:[%s20 + $0x28] sm:$0xff]
    %v7363 = vld [vmem:[%s20 + $0x30] sm:$0xff]
    %v7364 = vld [vmem:[%s20 + $0x38] sm:$0xff]
    %v7365 = vld [vmem:[%s21] sm:$0x1]
    %v7367 = vlaneseq
    %v7368 = vshrl.u32 %v7367, 7
    %v7369 = vsub.s32 0, %v7368
    %v7370 = vrot.slane %v7365, %v7369
    %vm7372 = vcmask 523264
    %v7374 = vsel %vm7372, %v7356, 0
    %7376 = vmatprep.subr.mxu0 0.0
    %7377 = vmatpush1.msra.mxu0 0.0
    %7378 = vmatprep.subr.mxu0 0.0
    %7379 = vmatpush1.msra.mxu0 0.0
    %7380 = vmatprep.subr.mxu0 0.0
    %7381 = vmatpush1.msra.mxu0 0.0
    %7382 = vmatprep.subr.mxu0 0.0
    %7383 = vmatpush1.msra.mxu0 0.0
    %7384 = vmatprep.subr.mxu0 0.0
    %7385 = vmatpush1.msra.mxu0 0.0
    %7386 = vmatprep.subr.mxu0 0.0
    %7387 = vmatpush1.msra.mxu0 0.0
    %7388 = vmatprep.subr.mxu0 0.0
    %7389 = vmatpush1.msra.mxu0 0.0
    %7390 = vmatprep.subr.mxu0 0.0
    %7391 = vmatpush1.msra.mxu0 0.0
    %7392 = vmatprep.subr.mxu0 0.0
    %7393 = vmatpush1.msra.mxu0 %v7364
    %7394 = vmatprep.subr.mxu0 0.0
    %7395 = vmatpush1.msra.mxu0 %v7363
    %7396 = vmatprep.subr.mxu0 0.0
    %7397 = vmatpush1.msra.mxu0 %v7362
    %7398 = vmatprep.subr.mxu0 0.0
    %7399 = vmatpush1.msra.mxu0 %v7361
    %7400 = vmatprep.subr.mxu0 0.0
    %7401 = vmatpush1.msra.mxu0 %v7360
    %7402 = vmatprep.subr.mxu0 0.0
    %7403 = vmatpush1.msra.mxu0 %v7359
    %7404 = vmatprep.subr.mxu0 0.0
    %7405 = vmatpush1.msra.mxu0 %v7358
    %7406 = vmatprep.subr.mxu0 0.0
    %7407 = vmatpush1.msra.mxu0 %v7357
    %7408 = vmatprep.subr.mxu0 0.0
    %7409 = vmatpush2.msra.mxu0 0.0
    %7410 = vmatprep.subr.mxu0 0.0
    %7411 = vmatpush2.msra.mxu0 0.0
    %7412 = vmatprep.subr.mxu0 0.0
    %7413 = vmatpush2.msra.mxu0 0.0
    %7414 = vmatprep.subr.mxu0 0.0
    %7415 = vmatpush2.msra.mxu0 0.0
    %7416 = vmatprep.subr.mxu0 0.0
    %7417 = vmatpush2.msra.mxu0 0.0
    %7418 = vmatprep.subr.mxu0 0.0
    %7419 = vmatpush2.msra.mxu0 0.0
    %7420 = vmatprep.subr.mxu0 0.0
    %7421 = vmatpush2.msra.mxu0 0.0
    %7422 = vmatprep.subr.mxu0 0.0
    %7423 = vmatpush2.msra.mxu0 0.0
    %7424 = vmatprep.subr.mxu0 0.0
    %7425 = vmatpush2.msra.mxu0 0.0
    %7426 = vmatprep.subr.mxu0 0.0
    %7427 = vmatpush2.msra.mxu0 0.0
    %7428 = vmatprep.subr.mxu0 0.0
    %7429 = vmatpush2.msra.mxu0 0.0
    %7430 = vmatprep.subr.mxu0 0.0
    %7431 = vmatpush2.msra.mxu0 0.0
    %7432 = vmatprep.subr.mxu0 0.0
    %7433 = vmatpush2.msra.mxu0 0.0
    %7434 = vmatprep.subr.mxu0 0.0
    %7435 = vmatpush2.msra.mxu0 0.0
    %7436 = vmatprep.subr.mxu0 0.0
    %7437 = vmatpush2.msra.mxu0 0.0
    %7438 = vmatprep.subr.mxu0 0.0
    %7439 = vmatpush2.msra.mxu0 0.0
    %7440 = vmatprep.mubr.f32.mxu0 0.0
    %7441 = vmatmul.mubr.f32.gmra.mxu0 %v7374
    %v7442 = vpop.f32.mrf.mxu0
    %v7443 = vadd.f32 %v7370, %v7442
    %v7444 = vpop.f32.mrf.mxu0
    %7445 = vdwg.mxu0
    %vm7446 = vcmask 9216
    %7447 = vst.msk [vmem:[#allocation2] sm:$0x3] %vm7446, %v7443
    // Predicated region
    $region90: #{tab_transformer_forward.1} parent=1 // pred_check
      _
    $region91: #{tab_transformer_forward.1} parent=1 // pred_check_branch
      %7449 = sbr.rel (0) target = $region93
    $region92: #{tab_transformer_forward.1} parent=1 // pred_region
      %s7451 = ssub.s32 32, 32
      %7452 = vsyncadd [#allocation3], %s7451
      %s7454 = sshll.u32 [#allocation2], 4
      %s7455 = int_to_ptr.vmem [resolvable:$true] %s7454
      %7457 = dma.vmem_to_hbm [thread:$0]  %s7455, 32, %s22, [#allocation3]
    $region93: #{tab_transformer_forward.1} parent=1 // pred_fallthru
      _
    // Predicated region
    $region94: #{tab_transformer_forward.1} parent=1 // pred_check
      _
    $region95: #{tab_transformer_forward.1} parent=1 // pred_check_branch
      %7459 = sbr.rel (0) target = $region97
    $region96: #{tab_transformer_forward.1} parent=1 // pred_region
      %7460 = dma.done [#allocation3], 32
    $region97: #{tab_transformer_forward.1} parent=1 // pred_fallthru
      _
    %7461 = vsyncpa [#allocation3], 1

</llo_original>
